<compile_context>
chip_gen: v5e
topology: v5e:2x2
jax: 0.10.0
libtpu: 0.0.40
codegen_flags: <defaults>
</compile_context>

<pallas_src>
import functools

import numpy as np
import jax
import jax.numpy as jnp
from jax.experimental import pallas as pl
from jax.experimental.pallas import tpu as pltpu


# ----------------------------------------------------------------------------
# One-time parameter prep (host side): BN folding + banded conv weight layout
# ----------------------------------------------------------------------------
def _bn_fold(key, c, eps=1e-5):
    """Fabricate eval-mode BN stats (test harness) and fold to (scale, shift)."""
    k1, k2, k3, k4 = jax.random.split(key, 4)
    gamma = 1.0 + 0.1 * jax.random.normal(k1, (c,), jnp.float32)
    beta = 0.1 * jax.random.normal(k2, (c,), jnp.float32)
    mean = 0.1 * jax.random.normal(k3, (c,), jnp.float32)
    var = 1.0 + 0.1 * jnp.abs(jax.random.normal(k4, (c,), jnp.float32))
    scale = gamma / jnp.sqrt(var + eps)
    shift = beta - mean * scale
    return np.asarray(scale), np.asarray(shift)


def _band_depth(w_tap, bias_vec, d_in, pad):
    """Banded matrix for a 1-D conv along depth; columns = (d, c), zero-pad folded in.

    w_tap: (Cout, Cin, kd) BN-scaled. Returns ((d_in*Cin, d_out*Cout), (1, d_out*Cout), d_out).
    """
    cout, cin, kd = w_tap.shape
    d_out = d_in + 2 * pad - kd + 1
    band = np.zeros((d_in * cin, d_out * cout), np.float32)
    for do in range(d_out):
        for kz in range(kd):
            di = do + kz - pad
            if 0 <= di < d_in:
                band[di * cin:(di + 1) * cin, do * cout:(do + 1) * cout] = w_tap[:, :, kz].T
    return band, np.tile(bias_vec, d_out)[None, :].astype(np.float32), d_out


def _prep_conv3d_p1(w, b, scale, shift, d_in):
    """Conv3d + folded BN for patch_size=1: only the centre (kh//2, kw//2) tap is live."""
    w, b = np.asarray(w), np.asarray(b)
    _, _, _, kh, kw = w.shape
    w_c = w[:, :, :, kh // 2, kw // 2] * scale[:, None, None]      # (Cout, Cin, kd)
    return _band_depth(w_c, b * scale + shift, d_in, pad=1)


def _prep_conv2d1_p1(w, b, scale, shift, c3, d3):
    """conv2d1 after the NCDHW->NCHW view (torch in-channel = c*d3 + d), patch_size=1."""
    w, b = np.asarray(w), np.asarray(b)
    cout = w.shape[0]
    w_c = (w[:, :, 1, 1] * scale[:, None]).reshape(cout, c3, d3)   # [co, c, d]
    wm = np.transpose(w_c, (2, 1, 0)).reshape(d3 * c3, cout)       # rows = d*c3 + c
    return wm, ((b * scale + shift)[None, :]).astype(np.float32)


def _prep_conv2d_banded(w, b, scale, shift, w_in, pad_w):
    """Conv2d + folded BN as per-h-tap banded matrices over the (padded) W axis.

    Activation layout: rows = h*B + b, columns = w*Cin + c.
    Returns stacked (kh, w_in*Cin, w_out*Cout) mats and (1, w_out*Cout) tiled bias.
    """
    w, b = np.asarray(w), np.asarray(b)
    cout, cin, kh, kw = w.shape
    ws = w * scale[:, None, None, None]
    w_out = w_in + 2 * pad_w - kw + 1
    mats = np.zeros((kh, w_in * cin, w_out * cout), np.float32)
    for dh in range(kh):
        for wo in range(w_out):
            for kx in range(kw):
                wi = wo + kx - pad_w
                if 0 <= wi < w_in:
                    mats[dh, wi * cin:(wi + 1) * cin, wo * cout:(wo + 1) * cout] = ws[:, :, dh, kx].T
    return mats, np.tile(b * scale + shift, w_out)[None, :].astype(np.float32), w_out


def _prep_bfc(w, b, c, h, wd):
    """B_fc Linear split into per-h blocks matching the kernel's (w, c) column order."""
    w, b = np.asarray(w), np.asarray(b)
    out = w.shape[0]
    wr = w.reshape(out, c, h, wd)                                  # torch (c, h, w) flatten
    blocks = np.stack([np.transpose(wr[:, :, hh, :], (2, 1, 0)).reshape(wd * c, out)
                       for hh in range(h)], axis=0)
    return blocks.astype(np.float32), b[None, :].astype(np.float32)


_CONV_KEYS = ("w11", "w12", "w13", "w2d", "wB1", "wB2", "wB3")
_ARG_ORDER = ("w11", "b11", "w12", "b12", "w13", "b13", "w2d", "b2d",
              "wB1", "bB1", "wB2", "bB2", "wB3", "bB3",
              "wbf", "bbf", "w1a", "w1b", "b1", "w2", "b2", "w3", "b3")


def init_params(key, bands, sim_n, patch, out_dim, conv_dtype=jnp.bfloat16):
    assert patch == 1, "kernel is specialized for patch_size=1 (module default)"
    keys = iter(jax.random.split(key, 64))
    nrm = lambda shape, s=0.05: np.asarray(s * jax.random.normal(next(keys), shape, jnp.float32))

    p = {}
    # conv3dseq: (Conv3d + BN(eval) + ReLU) x3, depth-banded (patch_size=1)
    w, b = nrm((8, 1, 7, 3, 3)), nrm((8,))
    p["w11"], p["b11"], d1 = _prep_conv3d_p1(w, b, *_bn_fold(next(keys), 8), d_in=bands)
    w, b = nrm((16, 8, 5, 3, 3)), nrm((16,))
    p["w12"], p["b12"], d2 = _prep_conv3d_p1(w, b, *_bn_fold(next(keys), 16), d_in=d1)
    w, b = nrm((32, 16, 3, 3, 3)), nrm((32,))
    p["w13"], p["b13"], d3 = _prep_conv3d_p1(w, b, *_bn_fold(next(keys), 32), d_in=d2)
    # conv2d1 on the (B, 32*d3, P, P) view
    w, b = nrm((64, 32 * d3, 3, 3)), nrm((64,))
    p["w2d"], p["b2d"] = _prep_conv2d1_p1(w, b, *_bn_fold(next(keys), 64), c3=32, d3=d3)
    # conv2dBseq
    w, b = nrm((64, 1, 7, 3)), nrm((64,))
    p["wB1"], p["bB1"], _ = _prep_conv2d_banded(w, b, *_bn_fold(next(keys), 64), w_in=sim_n, pad_w=1)
    w, b = nrm((32, 64, 5, 3)), nrm((32,))
    p["wB2"], p["bB2"], _ = _prep_conv2d_banded(w, b, *_bn_fold(next(keys), 32), w_in=sim_n, pad_w=1)
    w, b = nrm((16, 32, 3, 3)), nrm((16,))
    p["wB3"], p["bB3"], _ = _prep_conv2d_banded(w, b, *_bn_fold(next(keys), 16), w_in=sim_n, pad_w=1)
    # FC tail
    hb3 = bands - 12
    fc_in = 64 * patch * patch
    b_fea = 16 * hb3 * sim_n
    w, b = nrm((fc_in, b_fea)), nrm((fc_in,))
    p["wbf"], p["bbf"] = _prep_bfc(w, b, c=16, h=hb3, wd=sim_n)
    w, b = nrm((256, 2 * fc_in)), nrm((256,))
    p["w1a"] = np.ascontiguousarray(w[:, :fc_in].T)   # patch_size=1: x1 flatten == channel order
    p["w1b"] = np.ascontiguousarray(w[:, fc_in:].T)
    p["b1"] = b[None, :]
    w, b = nrm((128, 256)), nrm((128,))
    p["w2"], p["b2"] = np.ascontiguousarray(w.T), b[None, :]
    w, b = nrm((out_dim, 128)), nrm((out_dim,))
    p["w3"], p["b3"] = np.ascontiguousarray(w.T), b[None, :]

    # Conv weights -> bf16 (halves the per-call weight DMA); FC tail stays f32.
    return {k: jnp.asarray(v, conv_dtype if k in _CONV_KEYS else jnp.float32)
            for k, v in p.items()}


# ----------------------------------------------------------------------------
# The fused forward kernel (single pallas_call, grid=(1,), everything in VMEM)
# ----------------------------------------------------------------------------
def _mynet_kernel(x1_ref, xb_ref,
                  w11_ref, b11_ref, w12_ref, b12_ref, w13_ref, b13_ref,
                  w2d_ref, b2d_ref,
                  wB1_ref, bB1_ref, wB2_ref, bB2_ref, wB3_ref, bB3_ref,
                  wbf_ref, bbf_ref,
                  w1a_ref, w1b_ref, b1_ref, w2_ref, b2_ref, w3_ref, b3_ref,
                  o_ref, sB1_ref, sB2_ref, sB3_ref, *, B, hs):
    f32 = jnp.float32
    cdt = w11_ref.dtype                      # conv-weight compute dtype (bf16)

    def dense(x, w_ref, b_ref):
        y = jnp.dot(x, w_ref[...], preferred_element_type=f32) + b_ref[...]
        return jnp.maximum(y, 0.0)

    # ---- X1 branch: conv3dseq (depth-banded) + conv2d1; 4 chained matmuls ----
    a = x1_ref[...].astype(cdt)                            # (B, D0)
    a = dense(a, w11_ref, b11_ref).astype(cdt)             # (B, D1*8)
    a = dense(a, w12_ref, b12_ref).astype(cdt)             # (B, D2*16)
    a = dense(a, w13_ref, b13_ref).astype(cdt)             # (B, D3*32)
    x1f = dense(a, w2d_ref, b2d_ref)                       # (B, 64)  f32

    # ---- XB branch: conv2dBseq; rows = h*B + b, cols = w*C + c ---------------
    def conv_rows(src_ref, w_ref, b_ref, kh, h_out, dst_ref):
        acc = b_ref[...]                                   # (1, W*Cout), broadcasts
        for dh in range(kh):                               # static unroll over H taps
            slab = src_ref[dh * B:(dh + h_out) * B, :].astype(w_ref.dtype)
            acc = acc + jnp.dot(slab, w_ref[dh], preferred_element_type=f32)
        dst_ref[...] = jnp.maximum(acc, 0.0).astype(dst_ref.dtype)

    _, h1, h2, h3 = hs
    conv_rows(xb_ref, wB1_ref, bB1_ref, 7, h1, sB1_ref)    # (H1*B, W*64) bf16
    conv_rows(sB1_ref, wB2_ref, bB2_ref, 5, h2, sB2_ref)   # (H2*B, W*32) bf16
    conv_rows(sB2_ref, wB3_ref, bB3_ref, 3, h3, sB3_ref)   # (H3*B, W*16) f32

    # ---- B_fc (Linear + ReLU): per-h blocks fold the torch NCHW flatten ------
    hb = bbf_ref[...]                                      # (1, fc_in)
    for hh in range(h3):
        hb = hb + jnp.dot(sB3_ref[hh * B:(hh + 1) * B, :], wbf_ref[hh],
                          preferred_element_type=f32)
    hb = jnp.maximum(hb, 0.0)                              # (B, fc_in) f32

    # ---- fcseq; concat folded into (w1a, w1b); Dropout = identity (eval) -----
    t = jnp.dot(x1f, w1a_ref[...], preferred_element_type=f32)
    t = t + jnp.dot(hb, w1b_ref[...], preferred_element_type=f32)
    t = jnp.maximum(t + b1_ref[...], 0.0)
    t = jnp.maximum(jnp.dot(t, w2_ref[...], preferred_element_type=f32) + b2_ref[...], 0.0)
    o_ref[...] = jnp.dot(t, w3_ref[...], preferred_element_type=f32) + b3_ref[...]


# ----------------------------------------------------------------------------
# Wrapper: boundary relayout (two tiny XLA ops) + the single pallas_call
# ----------------------------------------------------------------------------
def _full_spec(shape):
    nd = len(shape)
    return pl.BlockSpec(tuple(shape), lambda i, _nd=nd: (0,) * _nd)


def _cost_estimate(params, flat, B, hs, out_dim):
    _, h1, h2, h3 = hs
    flops = 0
    for k in ("w11", "w12", "w13", "w2d"):
        flops += 2 * B * params[k].shape[0] * params[k].shape[1]
    for k, kh, ho in (("wB1", 7, h1), ("wB2", 5, h2), ("wB3", 3, h3)):
        flops += kh * 2 * (ho * B) * params[k].shape[1] * params[k].shape[2]
    flops += params["wbf"].shape[0] * 2 * B * params["wbf"].shape[1] * params["wbf"].shape[2]
    for k in ("w1a", "w1b", "w2", "w3"):
        flops += 2 * B * params[k].shape[0] * params[k].shape[1]
    bytes_accessed = sum(int(a.size) * a.dtype.itemsize for a in flat) + B * out_dim * 4
    return pl.CostEstimate(flops=int(flops), transcendentals=0,
                           bytes_accessed=int(bytes_accessed))


def mynet_forward(params, X1, XB):
    """MyNet.forward (eval).  X1: (B,1,bands,P,P) NCDHW, XB: (B,1,bands,sim_n) NCHW."""
    B, _, bands, ph, pw = X1.shape
    sim_n = XB.shape[3]
    assert ph == 1 and pw == 1, "kernel specialized for patch_size=1"
    hs = (bands, bands - 6, bands - 10, bands - 12)        # conv2dBseq H sizes
    out_dim = params["w3"].shape[1]

    # Boundary relayout only (inputs are tiny): X1 -> (B, bands); XB -> rows = h*B + b.
    x1p = X1.reshape(B, bands).astype(jnp.float32)
    xbp = jnp.transpose(XB.reshape(B, bands, sim_n), (1, 0, 2))
    xbp = xbp.reshape(bands * B, sim_n).astype(jnp.float32)

    flat = [x1p, xbp] + [params[k] for k in _ARG_ORDER]
    cdt = params["wB1"].dtype
    kernel = functools.partial(_mynet_kernel, B=B, hs=hs)
    return pl.pallas_call(
        kernel,
        out_shape=jax.ShapeDtypeStruct((B, out_dim), jnp.float32),
        grid=(1,),
        in_specs=[_full_spec(a.shape) for a in flat],
        out_specs=_full_spec((B, out_dim)),
        scratch_shapes=[
            pltpu.VMEM((hs[1] * B, sim_n * 64), cdt),
            pltpu.VMEM((hs[2] * B, sim_n * 32), cdt),
            pltpu.VMEM((hs[3] * B, sim_n * 16), jnp.float32),
        ],
        compiler_params=pltpu.CompilerParams(
            dimension_semantics=("arbitrary",),
            vmem_limit_bytes=32 * 1024 * 1024),
        cost_estimate=_cost_estimate(params, flat, B, hs, out_dim),
    )(*flat)


if __name__ == "__main__":
    batch, bands, sim_n, patch, out_dim = 2, 16, 9, 1, 10

    key = jax.random.PRNGKey(0)
    kp, kx1, kxb = jax.random.split(key, 3)
    params = init_params(kp, bands, sim_n, patch, out_dim)

    X1 = jax.random.normal(kx1, (batch, 1, bands, patch, patch), jnp.float32)
    XB = jax.random.normal(kxb, (batch, 1, bands, sim_n), jnp.float32)

    fwd = jax.jit(mynet_forward)
    out = jax.block_until_ready(fwd(params, X1, XB))
    assert out.shape == (batch, out_dim), out.shape
    assert bool(jnp.all(jnp.isfinite(out)))
    print("KERNEL_OK")
</pallas_src>

<mosaic_0001>
module attributes {stable_mosaic.version = 11 : i64} {
  func.func @_mynet_kernel(%arg0: i32, %arg1: memref<2x16xf32, #tpu.memory_space<vmem>>, %arg2: memref<32x9xf32, #tpu.memory_space<vmem>>, %arg3: memref<16x96xbf16, #tpu.memory_space<vmem>>, %arg4: memref<1x96xf32, #tpu.memory_space<vmem>>, %arg5: memref<96x160xbf16, #tpu.memory_space<vmem>>, %arg6: memref<1x160xf32, #tpu.memory_space<vmem>>, %arg7: memref<160x320xbf16, #tpu.memory_space<vmem>>, %arg8: memref<1x320xf32, #tpu.memory_space<vmem>>, %arg9: memref<320x64xbf16, #tpu.memory_space<vmem>>, %arg10: memref<1x64xf32, #tpu.memory_space<vmem>>, %arg11: memref<7x9x576xbf16, #tpu.memory_space<vmem>>, %arg12: memref<1x576xf32, #tpu.memory_space<vmem>>, %arg13: memref<5x576x288xbf16, #tpu.memory_space<vmem>>, %arg14: memref<1x288xf32, #tpu.memory_space<vmem>>, %arg15: memref<3x288x144xbf16, #tpu.memory_space<vmem>>, %arg16: memref<1x144xf32, #tpu.memory_space<vmem>>, %arg17: memref<4x144x64xf32, #tpu.memory_space<vmem>>, %arg18: memref<1x64xf32, #tpu.memory_space<vmem>>, %arg19: memref<64x256xf32, #tpu.memory_space<vmem>>, %arg20: memref<64x256xf32, #tpu.memory_space<vmem>>, %arg21: memref<1x256xf32, #tpu.memory_space<vmem>>, %arg22: memref<256x128xf32, #tpu.memory_space<vmem>>, %arg23: memref<1x128xf32, #tpu.memory_space<vmem>>, %arg24: memref<128x10xf32, #tpu.memory_space<vmem>>, %arg25: memref<1x10xf32, #tpu.memory_space<vmem>>, %arg26: memref<2x10xf32, #tpu.memory_space<vmem>>, %arg27: memref<20x576xbf16, #tpu.memory_space<vmem>>, %arg28: memref<12x288xbf16, #tpu.memory_space<vmem>>, %arg29: memref<8x144xf32, #tpu.memory_space<vmem>>) attributes {dimension_semantics = [#tpu.dimension_semantics<arbitrary>], iteration_bounds = array<i64: 1>, scalar_prefetch = 0 : i64, scratch_operands = 3 : i64, tpu.core_type = #tpu.core_type<tc>, window_params = [{pipeline_mode = #tpu.pipeline_mode<synchronous>, transform_indices = @transform_0, window_bounds = array<i64: 2, 16>}, {pipeline_mode = #tpu.pipeline_mode<synchronous>, transform_indices = @transform_1, window_bounds = array<i64: 32, 9>}, {pipeline_mode = #tpu.pipeline_mode<synchronous>, transform_indices = @transform_2, window_bounds = array<i64: 16, 96>}, {pipeline_mode = #tpu.pipeline_mode<synchronous>, transform_indices = @transform_3, window_bounds = array<i64: 1, 96>}, {pipeline_mode = #tpu.pipeline_mode<synchronous>, transform_indices = @transform_4, window_bounds = array<i64: 96, 160>}, {pipeline_mode = #tpu.pipeline_mode<synchronous>, transform_indices = @transform_5, window_bounds = array<i64: 1, 160>}, {pipeline_mode = #tpu.pipeline_mode<synchronous>, transform_indices = @transform_6, window_bounds = array<i64: 160, 320>}, {pipeline_mode = #tpu.pipeline_mode<synchronous>, transform_indices = @transform_7, window_bounds = array<i64: 1, 320>}, {pipeline_mode = #tpu.pipeline_mode<synchronous>, transform_indices = @transform_8, window_bounds = array<i64: 320, 64>}, {pipeline_mode = #tpu.pipeline_mode<synchronous>, transform_indices = @transform_9, window_bounds = array<i64: 1, 64>}, {pipeline_mode = #tpu.pipeline_mode<synchronous>, transform_indices = @transform_10, window_bounds = array<i64: 7, 9, 576>}, {pipeline_mode = #tpu.pipeline_mode<synchronous>, transform_indices = @transform_11, window_bounds = array<i64: 1, 576>}, {pipeline_mode = #tpu.pipeline_mode<synchronous>, transform_indices = @transform_12, window_bounds = array<i64: 5, 576, 288>}, {pipeline_mode = #tpu.pipeline_mode<synchronous>, transform_indices = @transform_13, window_bounds = array<i64: 1, 288>}, {pipeline_mode = #tpu.pipeline_mode<synchronous>, transform_indices = @transform_14, window_bounds = array<i64: 3, 288, 144>}, {pipeline_mode = #tpu.pipeline_mode<synchronous>, transform_indices = @transform_15, window_bounds = array<i64: 1, 144>}, {pipeline_mode = #tpu.pipeline_mode<synchronous>, transform_indices = @transform_16, window_bounds = array<i64: 4, 144, 64>}, {pipeline_mode = #tpu.pipeline_mode<synchronous>, transform_indices = @transform_17, window_bounds = array<i64: 1, 64>}, {pipeline_mode = #tpu.pipeline_mode<synchronous>, transform_indices = @transform_18, window_bounds = array<i64: 64, 256>}, {pipeline_mode = #tpu.pipeline_mode<synchronous>, transform_indices = @transform_19, window_bounds = array<i64: 64, 256>}, {pipeline_mode = #tpu.pipeline_mode<synchronous>, transform_indices = @transform_20, window_bounds = array<i64: 1, 256>}, {pipeline_mode = #tpu.pipeline_mode<synchronous>, transform_indices = @transform_21, window_bounds = array<i64: 256, 128>}, {pipeline_mode = #tpu.pipeline_mode<synchronous>, transform_indices = @transform_22, window_bounds = array<i64: 1, 128>}, {pipeline_mode = #tpu.pipeline_mode<synchronous>, transform_indices = @transform_23, window_bounds = array<i64: 128, 10>}, {pipeline_mode = #tpu.pipeline_mode<synchronous>, transform_indices = @transform_24, window_bounds = array<i64: 1, 10>}, {pipeline_mode = #tpu.pipeline_mode<synchronous>, transform_indices = @transform_25, window_bounds = array<i64: 2, 10>}]} {
    %c0 = arith.constant 0 : index
    %c0_0 = arith.constant 0 : index
    %0 = vector.load %arg1[%c0, %c0_0] : memref<2x16xf32, #tpu.memory_space<vmem>>, vector<2x16xf32>
    %1 = arith.truncf %0 : vector<2x16xf32> to vector<2x16xbf16>
    %c0_1 = arith.constant 0 : index
    %c0_2 = arith.constant 0 : index
    %2 = vector.load %arg3[%c0_1, %c0_2] : memref<16x96xbf16, #tpu.memory_space<vmem>>, vector<16x96xbf16>
    %cst = arith.constant dense<0.000000e+00> : vector<2x96xf32>
    %3 = tpu.matmul %1, %2, %cst {dimension_numbers = #tpu.dot_dimension_numbers<[1], [0], [0], [1], [0, 0, 1, 1], [], []>} : vector<2x16xbf16>, vector<16x96xbf16>, vector<2x96xf32> -> vector<2x96xf32>
    %c0_3 = arith.constant 0 : index
    %c0_4 = arith.constant 0 : index
    %4 = vector.load %arg4[%c0_3, %c0_4] : memref<1x96xf32, #tpu.memory_space<vmem>>, vector<1x96xf32>
    %5 = vector.broadcast %4 : vector<1x96xf32> to vector<2x96xf32>
    %6 = arith.addf %3, %5 : vector<2x96xf32>
    %cst_5 = arith.constant 0.000000e+00 : f32
    %7 = vector.broadcast %cst_5 : f32 to vector<2x96xf32>
    %8 = arith.maximumf %6, %7 : vector<2x96xf32>
    %9 = arith.truncf %8 : vector<2x96xf32> to vector<2x96xbf16>
    %c0_6 = arith.constant 0 : index
    %c0_7 = arith.constant 0 : index
    %10 = vector.load %arg5[%c0_6, %c0_7] : memref<96x160xbf16, #tpu.memory_space<vmem>>, vector<96x160xbf16>
    %cst_8 = arith.constant dense<0.000000e+00> : vector<2x160xf32>
    %11 = tpu.matmul %9, %10, %cst_8 {dimension_numbers = #tpu.dot_dimension_numbers<[1], [0], [0], [1], [0, 0, 1, 1], [], []>} : vector<2x96xbf16>, vector<96x160xbf16>, vector<2x160xf32> -> vector<2x160xf32>
    %c0_9 = arith.constant 0 : index
    %c0_10 = arith.constant 0 : index
    %12 = vector.load %arg6[%c0_9, %c0_10] : memref<1x160xf32, #tpu.memory_space<vmem>>, vector<1x160xf32>
    %13 = vector.broadcast %12 : vector<1x160xf32> to vector<2x160xf32>
    %14 = arith.addf %11, %13 : vector<2x160xf32>
    %cst_11 = arith.constant 0.000000e+00 : f32
    %15 = vector.broadcast %cst_11 : f32 to vector<2x160xf32>
    %16 = arith.maximumf %14, %15 : vector<2x160xf32>
    %17 = arith.truncf %16 : vector<2x160xf32> to vector<2x160xbf16>
    %c0_12 = arith.constant 0 : index
    %c0_13 = arith.constant 0 : index
    %18 = vector.load %arg7[%c0_12, %c0_13] : memref<160x320xbf16, #tpu.memory_space<vmem>>, vector<160x320xbf16>
    %cst_14 = arith.constant dense<0.000000e+00> : vector<2x320xf32>
    %19 = tpu.matmul %17, %18, %cst_14 {dimension_numbers = #tpu.dot_dimension_numbers<[1], [0], [0], [1], [0, 0, 1, 1], [], []>} : vector<2x160xbf16>, vector<160x320xbf16>, vector<2x320xf32> -> vector<2x320xf32>
    %c0_15 = arith.constant 0 : index
    %c0_16 = arith.constant 0 : index
    %20 = vector.load %arg8[%c0_15, %c0_16] : memref<1x320xf32, #tpu.memory_space<vmem>>, vector<1x320xf32>
    %21 = vector.broadcast %20 : vector<1x320xf32> to vector<2x320xf32>
    %22 = arith.addf %19, %21 : vector<2x320xf32>
    %cst_17 = arith.constant 0.000000e+00 : f32
    %23 = vector.broadcast %cst_17 : f32 to vector<2x320xf32>
    %24 = arith.maximumf %22, %23 : vector<2x320xf32>
    %25 = arith.truncf %24 : vector<2x320xf32> to vector<2x320xbf16>
    %c0_18 = arith.constant 0 : index
    %c0_19 = arith.constant 0 : index
    %26 = vector.load %arg9[%c0_18, %c0_19] : memref<320x64xbf16, #tpu.memory_space<vmem>>, vector<320x64xbf16>
    %cst_20 = arith.constant dense<0.000000e+00> : vector<2x64xf32>
    %27 = tpu.matmul %25, %26, %cst_20 {dimension_numbers = #tpu.dot_dimension_numbers<[1], [0], [0], [1], [0, 0, 1, 1], [], []>} : vector<2x320xbf16>, vector<320x64xbf16>, vector<2x64xf32> -> vector<2x64xf32>
    %c0_21 = arith.constant 0 : index
    %c0_22 = arith.constant 0 : index
    %28 = vector.load %arg10[%c0_21, %c0_22] : memref<1x64xf32, #tpu.memory_space<vmem>>, vector<1x64xf32>
    %29 = vector.broadcast %28 : vector<1x64xf32> to vector<2x64xf32>
    %30 = arith.addf %27, %29 : vector<2x64xf32>
    %cst_23 = arith.constant 0.000000e+00 : f32
    %31 = vector.broadcast %cst_23 : f32 to vector<2x64xf32>
    %32 = arith.maximumf %30, %31 : vector<2x64xf32>
    %c0_24 = arith.constant 0 : index
    %c0_25 = arith.constant 0 : index
    %33 = vector.load %arg12[%c0_24, %c0_25] : memref<1x576xf32, #tpu.memory_space<vmem>>, vector<1x576xf32>
    %c0_26 = arith.constant 0 : index
    %c0_27 = arith.constant 0 : index
    %34 = vector.load %arg2[%c0_26, %c0_27] : memref<32x9xf32, #tpu.memory_space<vmem>>, vector<20x9xf32>
    %35 = arith.truncf %34 : vector<20x9xf32> to vector<20x9xbf16>
    %c0_28 = arith.constant 0 : index
    %c0_29 = arith.constant 0 : index
    %c0_30 = arith.constant 0 : index
    %36 = vector.load %arg11[%c0_28, %c0_29, %c0_30] : memref<7x9x576xbf16, #tpu.memory_space<vmem>>, vector<1x9x576xbf16>
    %37 = vector.shape_cast %36 : vector<1x9x576xbf16> to vector<9x576xbf16>
    %cst_31 = arith.constant dense<0.000000e+00> : vector<20x576xf32>
    %38 = tpu.matmul %35, %37, %cst_31 {dimension_numbers = #tpu.dot_dimension_numbers<[1], [0], [0], [1], [0, 0, 1, 1], [], []>} : vector<20x9xbf16>, vector<9x576xbf16>, vector<20x576xf32> -> vector<20x576xf32>
    %39 = vector.broadcast %33 : vector<1x576xf32> to vector<20x576xf32>
    %40 = arith.addf %39, %38 : vector<20x576xf32>
    %c2 = arith.constant 2 : index
    %c0_32 = arith.constant 0 : index
    %41 = vector.load %arg2[%c2, %c0_32] : memref<32x9xf32, #tpu.memory_space<vmem>>, vector<20x9xf32>
    %42 = arith.truncf %41 : vector<20x9xf32> to vector<20x9xbf16>
    %c1 = arith.constant 1 : index
    %c0_33 = arith.constant 0 : index
    %c0_34 = arith.constant 0 : index
    %43 = vector.load %arg11[%c1, %c0_33, %c0_34] : memref<7x9x576xbf16, #tpu.memory_space<vmem>>, vector<1x9x576xbf16>
    %44 = vector.shape_cast %43 : vector<1x9x576xbf16> to vector<9x576xbf16>
    %cst_35 = arith.constant dense<0.000000e+00> : vector<20x576xf32>
    %45 = tpu.matmul %42, %44, %cst_35 {dimension_numbers = #tpu.dot_dimension_numbers<[1], [0], [0], [1], [0, 0, 1, 1], [], []>} : vector<20x9xbf16>, vector<9x576xbf16>, vector<20x576xf32> -> vector<20x576xf32>
    %46 = arith.addf %40, %45 : vector<20x576xf32>
    %c4 = arith.constant 4 : index
    %c0_36 = arith.constant 0 : index
    %47 = vector.load %arg2[%c4, %c0_36] : memref<32x9xf32, #tpu.memory_space<vmem>>, vector<20x9xf32>
    %48 = arith.truncf %47 : vector<20x9xf32> to vector<20x9xbf16>
    %c2_37 = arith.constant 2 : index
    %c0_38 = arith.constant 0 : index
    %c0_39 = arith.constant 0 : index
    %49 = vector.load %arg11[%c2_37, %c0_38, %c0_39] : memref<7x9x576xbf16, #tpu.memory_space<vmem>>, vector<1x9x576xbf16>
    %50 = vector.shape_cast %49 : vector<1x9x576xbf16> to vector<9x576xbf16>
    %cst_40 = arith.constant dense<0.000000e+00> : vector<20x576xf32>
    %51 = tpu.matmul %48, %50, %cst_40 {dimension_numbers = #tpu.dot_dimension_numbers<[1], [0], [0], [1], [0, 0, 1, 1], [], []>} : vector<20x9xbf16>, vector<9x576xbf16>, vector<20x576xf32> -> vector<20x576xf32>
    %52 = arith.addf %46, %51 : vector<20x576xf32>
    %c6 = arith.constant 6 : index
    %c0_41 = arith.constant 0 : index
    %53 = vector.load %arg2[%c6, %c0_41] : memref<32x9xf32, #tpu.memory_space<vmem>>, vector<20x9xf32>
    %54 = arith.truncf %53 : vector<20x9xf32> to vector<20x9xbf16>
    %c3 = arith.constant 3 : index
    %c0_42 = arith.constant 0 : index
    %c0_43 = arith.constant 0 : index
    %55 = vector.load %arg11[%c3, %c0_42, %c0_43] : memref<7x9x576xbf16, #tpu.memory_space<vmem>>, vector<1x9x576xbf16>
    %56 = vector.shape_cast %55 : vector<1x9x576xbf16> to vector<9x576xbf16>
    %cst_44 = arith.constant dense<0.000000e+00> : vector<20x576xf32>
    %57 = tpu.matmul %54, %56, %cst_44 {dimension_numbers = #tpu.dot_dimension_numbers<[1], [0], [0], [1], [0, 0, 1, 1], [], []>} : vector<20x9xbf16>, vector<9x576xbf16>, vector<20x576xf32> -> vector<20x576xf32>
    %58 = arith.addf %52, %57 : vector<20x576xf32>
    %c8 = arith.constant 8 : index
    %c0_45 = arith.constant 0 : index
    %59 = vector.load %arg2[%c8, %c0_45] : memref<32x9xf32, #tpu.memory_space<vmem>>, vector<20x9xf32>
    %60 = arith.truncf %59 : vector<20x9xf32> to vector<20x9xbf16>
    %c4_46 = arith.constant 4 : index
    %c0_47 = arith.constant 0 : index
    %c0_48 = arith.constant 0 : index
    %61 = vector.load %arg11[%c4_46, %c0_47, %c0_48] : memref<7x9x576xbf16, #tpu.memory_space<vmem>>, vector<1x9x576xbf16>
    %62 = vector.shape_cast %61 : vector<1x9x576xbf16> to vector<9x576xbf16>
    %cst_49 = arith.constant dense<0.000000e+00> : vector<20x576xf32>
    %63 = tpu.matmul %60, %62, %cst_49 {dimension_numbers = #tpu.dot_dimension_numbers<[1], [0], [0], [1], [0, 0, 1, 1], [], []>} : vector<20x9xbf16>, vector<9x576xbf16>, vector<20x576xf32> -> vector<20x576xf32>
    %64 = arith.addf %58, %63 : vector<20x576xf32>
    %c10 = arith.constant 10 : index
    %c0_50 = arith.constant 0 : index
    %65 = vector.load %arg2[%c10, %c0_50] : memref<32x9xf32, #tpu.memory_space<vmem>>, vector<20x9xf32>
    %66 = arith.truncf %65 : vector<20x9xf32> to vector<20x9xbf16>
    %c5 = arith.constant 5 : index
    %c0_51 = arith.constant 0 : index
    %c0_52 = arith.constant 0 : index
    %67 = vector.load %arg11[%c5, %c0_51, %c0_52] : memref<7x9x576xbf16, #tpu.memory_space<vmem>>, vector<1x9x576xbf16>
    %68 = vector.shape_cast %67 : vector<1x9x576xbf16> to vector<9x576xbf16>
    %cst_53 = arith.constant dense<0.000000e+00> : vector<20x576xf32>
    %69 = tpu.matmul %66, %68, %cst_53 {dimension_numbers = #tpu.dot_dimension_numbers<[1], [0], [0], [1], [0, 0, 1, 1], [], []>} : vector<20x9xbf16>, vector<9x576xbf16>, vector<20x576xf32> -> vector<20x576xf32>
    %70 = arith.addf %64, %69 : vector<20x576xf32>
    %c12 = arith.constant 12 : index
    %c0_54 = arith.constant 0 : index
    %71 = vector.load %arg2[%c12, %c0_54] : memref<32x9xf32, #tpu.memory_space<vmem>>, vector<20x9xf32>
    %72 = arith.truncf %71 : vector<20x9xf32> to vector<20x9xbf16>
    %c6_55 = arith.constant 6 : index
    %c0_56 = arith.constant 0 : index
    %c0_57 = arith.constant 0 : index
    %73 = vector.load %arg11[%c6_55, %c0_56, %c0_57] : memref<7x9x576xbf16, #tpu.memory_space<vmem>>, vector<1x9x576xbf16>
    %74 = vector.shape_cast %73 : vector<1x9x576xbf16> to vector<9x576xbf16>
    %cst_58 = arith.constant dense<0.000000e+00> : vector<20x576xf32>
    %75 = tpu.matmul %72, %74, %cst_58 {dimension_numbers = #tpu.dot_dimension_numbers<[1], [0], [0], [1], [0, 0, 1, 1], [], []>} : vector<20x9xbf16>, vector<9x576xbf16>, vector<20x576xf32> -> vector<20x576xf32>
    %76 = arith.addf %70, %75 : vector<20x576xf32>
    %cst_59 = arith.constant 0.000000e+00 : f32
    %77 = vector.broadcast %cst_59 : f32 to vector<20x576xf32>
    %78 = arith.maximumf %76, %77 : vector<20x576xf32>
    %79 = arith.truncf %78 : vector<20x576xf32> to vector<20x576xbf16>
    %c0_60 = arith.constant 0 : index
    %c0_61 = arith.constant 0 : index
    %80 = vector.load %arg27[%c0_60, %c0_61] : memref<20x576xbf16, #tpu.memory_space<vmem>>, vector<20x576xbf16>
    tpu.vector_store %arg27[%c0_60, %c0_61], %79 {strides = array<i32>} : memref<20x576xbf16, #tpu.memory_space<vmem>>, vector<20x576xbf16>,
    %c0_62 = arith.constant 0 : index
    %c0_63 = arith.constant 0 : index
    %81 = vector.load %arg14[%c0_62, %c0_63] : memref<1x288xf32, #tpu.memory_space<vmem>>, vector<1x288xf32>
    %c0_64 = arith.constant 0 : index
    %c0_65 = arith.constant 0 : index
    %82 = vector.load %arg27[%c0_64, %c0_65] : memref<20x576xbf16, #tpu.memory_space<vmem>>, vector<12x576xbf16>
    %c0_66 = arith.constant 0 : index
    %c0_67 = arith.constant 0 : index
    %c0_68 = arith.constant 0 : index
    %83 = vector.load %arg13[%c0_66, %c0_67, %c0_68] : memref<5x576x288xbf16, #tpu.memory_space<vmem>>, vector<1x576x288xbf16>
    %84 = vector.shape_cast %83 : vector<1x576x288xbf16> to vector<576x288xbf16>
    %cst_69 = arith.constant dense<0.000000e+00> : vector<12x288xf32>
    %85 = tpu.matmul %82, %84, %cst_69 {dimension_numbers = #tpu.dot_dimension_numbers<[1], [0], [0], [1], [0, 0, 1, 1], [], []>} : vector<12x576xbf16>, vector<576x288xbf16>, vector<12x288xf32> -> vector<12x288xf32>
    %86 = vector.broadcast %81 : vector<1x288xf32> to vector<12x288xf32>
    %87 = arith.addf %86, %85 : vector<12x288xf32>
    %c2_70 = arith.constant 2 : index
    %c0_71 = arith.constant 0 : index
    %88 = vector.load %arg27[%c2_70, %c0_71] : memref<20x576xbf16, #tpu.memory_space<vmem>>, vector<12x576xbf16>
    %c1_72 = arith.constant 1 : index
    %c0_73 = arith.constant 0 : index
    %c0_74 = arith.constant 0 : index
    %89 = vector.load %arg13[%c1_72, %c0_73, %c0_74] : memref<5x576x288xbf16, #tpu.memory_space<vmem>>, vector<1x576x288xbf16>
    %90 = vector.shape_cast %89 : vector<1x576x288xbf16> to vector<576x288xbf16>
    %cst_75 = arith.constant dense<0.000000e+00> : vector<12x288xf32>
    %91 = tpu.matmul %88, %90, %cst_75 {dimension_numbers = #tpu.dot_dimension_numbers<[1], [0], [0], [1], [0, 0, 1, 1], [], []>} : vector<12x576xbf16>, vector<576x288xbf16>, vector<12x288xf32> -> vector<12x288xf32>
    %92 = arith.addf %87, %91 : vector<12x288xf32>
    %c4_76 = arith.constant 4 : index
    %c0_77 = arith.constant 0 : index
    %93 = vector.load %arg27[%c4_76, %c0_77] : memref<20x576xbf16, #tpu.memory_space<vmem>>, vector<12x576xbf16>
    %c2_78 = arith.constant 2 : index
    %c0_79 = arith.constant 0 : index
    %c0_80 = arith.constant 0 : index
    %94 = vector.load %arg13[%c2_78, %c0_79, %c0_80] : memref<5x576x288xbf16, #tpu.memory_space<vmem>>, vector<1x576x288xbf16>
    %95 = vector.shape_cast %94 : vector<1x576x288xbf16> to vector<576x288xbf16>
    %cst_81 = arith.constant dense<0.000000e+00> : vector<12x288xf32>
    %96 = tpu.matmul %93, %95, %cst_81 {dimension_numbers = #tpu.dot_dimension_numbers<[1], [0], [0], [1], [0, 0, 1, 1], [], []>} : vector<12x576xbf16>, vector<576x288xbf16>, vector<12x288xf32> -> vector<12x288xf32>
    %97 = arith.addf %92, %96 : vector<12x288xf32>
    %c6_82 = arith.constant 6 : index
    %c0_83 = arith.constant 0 : index
    %98 = vector.load %arg27[%c6_82, %c0_83] : memref<20x576xbf16, #tpu.memory_space<vmem>>, vector<12x576xbf16>
    %c3_84 = arith.constant 3 : index
    %c0_85 = arith.constant 0 : index
    %c0_86 = arith.constant 0 : index
    %99 = vector.load %arg13[%c3_84, %c0_85, %c0_86] : memref<5x576x288xbf16, #tpu.memory_space<vmem>>, vector<1x576x288xbf16>
    %100 = vector.shape_cast %99 : vector<1x576x288xbf16> to vector<576x288xbf16>
    %cst_87 = arith.constant dense<0.000000e+00> : vector<12x288xf32>
    %101 = tpu.matmul %98, %100, %cst_87 {dimension_numbers = #tpu.dot_dimension_numbers<[1], [0], [0], [1], [0, 0, 1, 1], [], []>} : vector<12x576xbf16>, vector<576x288xbf16>, vector<12x288xf32> -> vector<12x288xf32>
    %102 = arith.addf %97, %101 : vector<12x288xf32>
    %c8_88 = arith.constant 8 : index
    %c0_89 = arith.constant 0 : index
    %103 = vector.load %arg27[%c8_88, %c0_89] : memref<20x576xbf16, #tpu.memory_space<vmem>>, vector<12x576xbf16>
    %c4_90 = arith.constant 4 : index
    %c0_91 = arith.constant 0 : index
    %c0_92 = arith.constant 0 : index
    %104 = vector.load %arg13[%c4_90, %c0_91, %c0_92] : memref<5x576x288xbf16, #tpu.memory_space<vmem>>, vector<1x576x288xbf16>
    %105 = vector.shape_cast %104 : vector<1x576x288xbf16> to vector<576x288xbf16>
    %cst_93 = arith.constant dense<0.000000e+00> : vector<12x288xf32>
    %106 = tpu.matmul %103, %105, %cst_93 {dimension_numbers = #tpu.dot_dimension_numbers<[1], [0], [0], [1], [0, 0, 1, 1], [], []>} : vector<12x576xbf16>, vector<576x288xbf16>, vector<12x288xf32> -> vector<12x288xf32>
    %107 = arith.addf %102, %106 : vector<12x288xf32>
    %cst_94 = arith.constant 0.000000e+00 : f32
    %108 = vector.broadcast %cst_94 : f32 to vector<12x288xf32>
    %109 = arith.maximumf %107, %108 : vector<12x288xf32>
    %110 = arith.truncf %109 : vector<12x288xf32> to vector<12x288xbf16>
    %c0_95 = arith.constant 0 : index
    %c0_96 = arith.constant 0 : index
    %111 = vector.load %arg28[%c0_95, %c0_96] : memref<12x288xbf16, #tpu.memory_space<vmem>>, vector<12x288xbf16>
    tpu.vector_store %arg28[%c0_95, %c0_96], %110 {strides = array<i32>} : memref<12x288xbf16, #tpu.memory_space<vmem>>, vector<12x288xbf16>,
    %c0_97 = arith.constant 0 : index
    %c0_98 = arith.constant 0 : index
    %112 = vector.load %arg16[%c0_97, %c0_98] : memref<1x144xf32, #tpu.memory_space<vmem>>, vector<1x144xf32>
    %c0_99 = arith.constant 0 : index
    %c0_100 = arith.constant 0 : index
    %113 = vector.load %arg28[%c0_99, %c0_100] : memref<12x288xbf16, #tpu.memory_space<vmem>>, vector<8x288xbf16>
    %c0_101 = arith.constant 0 : index
    %c0_102 = arith.constant 0 : index
    %c0_103 = arith.constant 0 : index
    %114 = vector.load %arg15[%c0_101, %c0_102, %c0_103] : memref<3x288x144xbf16, #tpu.memory_space<vmem>>, vector<1x288x144xbf16>
    %115 = vector.shape_cast %114 : vector<1x288x144xbf16> to vector<288x144xbf16>
    %cst_104 = arith.constant dense<0.000000e+00> : vector<8x144xf32>
    %116 = tpu.matmul %113, %115, %cst_104 {dimension_numbers = #tpu.dot_dimension_numbers<[1], [0], [0], [1], [0, 0, 1, 1], [], []>} : vector<8x288xbf16>, vector<288x144xbf16>, vector<8x144xf32> -> vector<8x144xf32>
    %117 = vector.broadcast %112 : vector<1x144xf32> to vector<8x144xf32>
    %118 = arith.addf %117, %116 : vector<8x144xf32>
    %c2_105 = arith.constant 2 : index
    %c0_106 = arith.constant 0 : index
    %119 = vector.load %arg28[%c2_105, %c0_106] : memref<12x288xbf16, #tpu.memory_space<vmem>>, vector<8x288xbf16>
    %c1_107 = arith.constant 1 : index
    %c0_108 = arith.constant 0 : index
    %c0_109 = arith.constant 0 : index
    %120 = vector.load %arg15[%c1_107, %c0_108, %c0_109] : memref<3x288x144xbf16, #tpu.memory_space<vmem>>, vector<1x288x144xbf16>
    %121 = vector.shape_cast %120 : vector<1x288x144xbf16> to vector<288x144xbf16>
    %cst_110 = arith.constant dense<0.000000e+00> : vector<8x144xf32>
    %122 = tpu.matmul %119, %121, %cst_110 {dimension_numbers = #tpu.dot_dimension_numbers<[1], [0], [0], [1], [0, 0, 1, 1], [], []>} : vector<8x288xbf16>, vector<288x144xbf16>, vector<8x144xf32> -> vector<8x144xf32>
    %123 = arith.addf %118, %122 : vector<8x144xf32>
    %c4_111 = arith.constant 4 : index
    %c0_112 = arith.constant 0 : index
    %124 = vector.load %arg28[%c4_111, %c0_112] : memref<12x288xbf16, #tpu.memory_space<vmem>>, vector<8x288xbf16>
    %c2_113 = arith.constant 2 : index
    %c0_114 = arith.constant 0 : index
    %c0_115 = arith.constant 0 : index
    %125 = vector.load %arg15[%c2_113, %c0_114, %c0_115] : memref<3x288x144xbf16, #tpu.memory_space<vmem>>, vector<1x288x144xbf16>
    %126 = vector.shape_cast %125 : vector<1x288x144xbf16> to vector<288x144xbf16>
    %cst_116 = arith.constant dense<0.000000e+00> : vector<8x144xf32>
    %127 = tpu.matmul %124, %126, %cst_116 {dimension_numbers = #tpu.dot_dimension_numbers<[1], [0], [0], [1], [0, 0, 1, 1], [], []>} : vector<8x288xbf16>, vector<288x144xbf16>, vector<8x144xf32> -> vector<8x144xf32>
    %128 = arith.addf %123, %127 : vector<8x144xf32>
    %cst_117 = arith.constant 0.000000e+00 : f32
    %129 = vector.broadcast %cst_117 : f32 to vector<8x144xf32>
    %130 = arith.maximumf %128, %129 : vector<8x144xf32>
    %c0_118 = arith.constant 0 : index
    %c0_119 = arith.constant 0 : index
    %131 = vector.load %arg29[%c0_118, %c0_119] : memref<8x144xf32, #tpu.memory_space<vmem>>, vector<8x144xf32>
    tpu.vector_store %arg29[%c0_118, %c0_119], %130 {strides = array<i32>} : memref<8x144xf32, #tpu.memory_space<vmem>>, vector<8x144xf32>,
    %c0_120 = arith.constant 0 : index
    %c0_121 = arith.constant 0 : index
    %132 = vector.load %arg18[%c0_120, %c0_121] : memref<1x64xf32, #tpu.memory_space<vmem>>, vector<1x64xf32>
    %c0_122 = arith.constant 0 : index
    %c0_123 = arith.constant 0 : index
    %133 = vector.load %arg29[%c0_122, %c0_123] : memref<8x144xf32, #tpu.memory_space<vmem>>, vector<2x144xf32>
    %c0_124 = arith.constant 0 : index
    %c0_125 = arith.constant 0 : index
    %c0_126 = arith.constant 0 : index
    %134 = vector.load %arg17[%c0_124, %c0_125, %c0_126] : memref<4x144x64xf32, #tpu.memory_space<vmem>>, vector<1x144x64xf32>
    %135 = vector.shape_cast %134 : vector<1x144x64xf32> to vector<144x64xf32>
    %cst_127 = arith.constant dense<0.000000e+00> : vector<2x64xf32>
    %136 = tpu.matmul %133, %135, %cst_127 {dimension_numbers = #tpu.dot_dimension_numbers<[1], [0], [0], [1], [0, 0, 1, 1], [], []>} : vector<2x144xf32>, vector<144x64xf32>, vector<2x64xf32> -> vector<2x64xf32>
    %137 = vector.broadcast %132 : vector<1x64xf32> to vector<2x64xf32>
    %138 = arith.addf %137, %136 : vector<2x64xf32>
    %c2_128 = arith.constant 2 : index
    %c0_129 = arith.constant 0 : index
    %139 = vector.load %arg29[%c2_128, %c0_129] : memref<8x144xf32, #tpu.memory_space<vmem>>, vector<2x144xf32>
    %c1_130 = arith.constant 1 : index
    %c0_131 = arith.constant 0 : index
    %c0_132 = arith.constant 0 : index
    %140 = vector.load %arg17[%c1_130, %c0_131, %c0_132] : memref<4x144x64xf32, #tpu.memory_space<vmem>>, vector<1x144x64xf32>
    %141 = vector.shape_cast %140 : vector<1x144x64xf32> to vector<144x64xf32>
    %cst_133 = arith.constant dense<0.000000e+00> : vector<2x64xf32>
    %142 = tpu.matmul %139, %141, %cst_133 {dimension_numbers = #tpu.dot_dimension_numbers<[1], [0], [0], [1], [0, 0, 1, 1], [], []>} : vector<2x144xf32>, vector<144x64xf32>, vector<2x64xf32> -> vector<2x64xf32>
    %143 = arith.addf %138, %142 : vector<2x64xf32>
    %c4_134 = arith.constant 4 : index
    %c0_135 = arith.constant 0 : index
    %144 = vector.load %arg29[%c4_134, %c0_135] : memref<8x144xf32, #tpu.memory_space<vmem>>, vector<2x144xf32>
    %c2_136 = arith.constant 2 : index
    %c0_137 = arith.constant 0 : index
    %c0_138 = arith.constant 0 : index
    %145 = vector.load %arg17[%c2_136, %c0_137, %c0_138] : memref<4x144x64xf32, #tpu.memory_space<vmem>>, vector<1x144x64xf32>
    %146 = vector.shape_cast %145 : vector<1x144x64xf32> to vector<144x64xf32>
    %cst_139 = arith.constant dense<0.000000e+00> : vector<2x64xf32>
    %147 = tpu.matmul %144, %146, %cst_139 {dimension_numbers = #tpu.dot_dimension_numbers<[1], [0], [0], [1], [0, 0, 1, 1], [], []>} : vector<2x144xf32>, vector<144x64xf32>, vector<2x64xf32> -> vector<2x64xf32>
    %148 = arith.addf %143, %147 : vector<2x64xf32>
    %c6_140 = arith.constant 6 : index
    %c0_141 = arith.constant 0 : index
    %149 = vector.load %arg29[%c6_140, %c0_141] : memref<8x144xf32, #tpu.memory_space<vmem>>, vector<2x144xf32>
    %c3_142 = arith.constant 3 : index
    %c0_143 = arith.constant 0 : index
    %c0_144 = arith.constant 0 : index
    %150 = vector.load %arg17[%c3_142, %c0_143, %c0_144] : memref<4x144x64xf32, #tpu.memory_space<vmem>>, vector<1x144x64xf32>
    %151 = vector.shape_cast %150 : vector<1x144x64xf32> to vector<144x64xf32>
    %cst_145 = arith.constant dense<0.000000e+00> : vector<2x64xf32>
    %152 = tpu.matmul %149, %151, %cst_145 {dimension_numbers = #tpu.dot_dimension_numbers<[1], [0], [0], [1], [0, 0, 1, 1], [], []>} : vector<2x144xf32>, vector<144x64xf32>, vector<2x64xf32> -> vector<2x64xf32>
    %153 = arith.addf %148, %152 : vector<2x64xf32>
    %cst_146 = arith.constant 0.000000e+00 : f32
    %154 = vector.broadcast %cst_146 : f32 to vector<2x64xf32>
    %155 = arith.maximumf %153, %154 : vector<2x64xf32>
    %c0_147 = arith.constant 0 : index
    %c0_148 = arith.constant 0 : index
    %156 = vector.load %arg19[%c0_147, %c0_148] : memref<64x256xf32, #tpu.memory_space<vmem>>, vector<64x256xf32>
    %cst_149 = arith.constant dense<0.000000e+00> : vector<2x256xf32>
    %157 = tpu.matmul %32, %156, %cst_149 {dimension_numbers = #tpu.dot_dimension_numbers<[1], [0], [0], [1], [0, 0, 1, 1], [], []>} : vector<2x64xf32>, vector<64x256xf32>, vector<2x256xf32> -> vector<2x256xf32>
    %c0_150 = arith.constant 0 : index
    %c0_151 = arith.constant 0 : index
    %158 = vector.load %arg20[%c0_150, %c0_151] : memref<64x256xf32, #tpu.memory_space<vmem>>, vector<64x256xf32>
    %cst_152 = arith.constant dense<0.000000e+00> : vector<2x256xf32>
    %159 = tpu.matmul %155, %158, %cst_152 {dimension_numbers = #tpu.dot_dimension_numbers<[1], [0], [0], [1], [0, 0, 1, 1], [], []>} : vector<2x64xf32>, vector<64x256xf32>, vector<2x256xf32> -> vector<2x256xf32>
    %160 = arith.addf %157, %159 : vector<2x256xf32>
    %c0_153 = arith.constant 0 : index
    %c0_154 = arith.constant 0 : index
    %161 = vector.load %arg21[%c0_153, %c0_154] : memref<1x256xf32, #tpu.memory_space<vmem>>, vector<1x256xf32>
    %162 = vector.broadcast %161 : vector<1x256xf32> to vector<2x256xf32>
    %163 = arith.addf %160, %162 : vector<2x256xf32>
    %cst_155 = arith.constant 0.000000e+00 : f32
    %164 = vector.broadcast %cst_155 : f32 to vector<2x256xf32>
    %165 = arith.maximumf %163, %164 : vector<2x256xf32>
    %c0_156 = arith.constant 0 : index
    %c0_157 = arith.constant 0 : index
    %166 = vector.load %arg22[%c0_156, %c0_157] : memref<256x128xf32, #tpu.memory_space<vmem>>, vector<256x128xf32>
    %cst_158 = arith.constant dense<0.000000e+00> : vector<2x128xf32>
    %167 = tpu.matmul %165, %166, %cst_158 {dimension_numbers = #tpu.dot_dimension_numbers<[1], [0], [0], [1], [0, 0, 1, 1], [], []>} : vector<2x256xf32>, vector<256x128xf32>, vector<2x128xf32> -> vector<2x128xf32>
    %c0_159 = arith.constant 0 : index
    %c0_160 = arith.constant 0 : index
    %168 = vector.load %arg23[%c0_159, %c0_160] : memref<1x128xf32, #tpu.memory_space<vmem>>, vector<1x128xf32>
    %169 = vector.broadcast %168 : vector<1x128xf32> to vector<2x128xf32>
    %170 = arith.addf %167, %169 : vector<2x128xf32>
    %cst_161 = arith.constant 0.000000e+00 : f32
    %171 = vector.broadcast %cst_161 : f32 to vector<2x128xf32>
    %172 = arith.maximumf %170, %171 : vector<2x128xf32>
    %c0_162 = arith.constant 0 : index
    %c0_163 = arith.constant 0 : index
    %173 = vector.load %arg24[%c0_162, %c0_163] : memref<128x10xf32, #tpu.memory_space<vmem>>, vector<128x10xf32>
    %cst_164 = arith.constant dense<0.000000e+00> : vector<2x10xf32>
    %174 = tpu.matmul %172, %173, %cst_164 {dimension_numbers = #tpu.dot_dimension_numbers<[1], [0], [0], [1], [0, 0, 1, 1], [], []>} : vector<2x128xf32>, vector<128x10xf32>, vector<2x10xf32> -> vector<2x10xf32>
    %c0_165 = arith.constant 0 : index
    %c0_166 = arith.constant 0 : index
    %175 = vector.load %arg25[%c0_165, %c0_166] : memref<1x10xf32, #tpu.memory_space<vmem>>, vector<1x10xf32>
    %176 = vector.broadcast %175 : vector<1x10xf32> to vector<2x10xf32>
    %177 = arith.addf %174, %176 : vector<2x10xf32>
    %c0_167 = arith.constant 0 : index
    %c0_168 = arith.constant 0 : index
    %178 = vector.load %arg26[%c0_167, %c0_168] : memref<2x10xf32, #tpu.memory_space<vmem>>, vector<2x10xf32>
    tpu.vector_store %arg26[%c0_167, %c0_168], %177 {strides = array<i32>} : memref<2x10xf32, #tpu.memory_space<vmem>>, vector<2x10xf32>,
    return
  }
  func.func @transform_0(%arg0: i32) -> (i32, i32) {
    %c0_i32 = arith.constant 0 : i32
    %c0_i32_0 = arith.constant 0 : i32
    %c0_i32_1 = arith.constant 0 : i32
    return %c0_i32, %c0_i32_0 : i32, i32
  }
  func.func @transform_1(%arg0: i32) -> (i32, i32) {
    %c0_i32 = arith.constant 0 : i32
    %c0_i32_0 = arith.constant 0 : i32
    %c0_i32_1 = arith.constant 0 : i32
    return %c0_i32, %c0_i32_0 : i32, i32
  }
  func.func @transform_2(%arg0: i32) -> (i32, i32) {
    %c0_i32 = arith.constant 0 : i32
    %c0_i32_0 = arith.constant 0 : i32
    %c0_i32_1 = arith.constant 0 : i32
    return %c0_i32, %c0_i32_0 : i32, i32
  }
  func.func @transform_3(%arg0: i32) -> (i32, i32) {
    %c0_i32 = arith.constant 0 : i32
    %c0_i32_0 = arith.constant 0 : i32
    %c0_i32_1 = arith.constant 0 : i32
    return %c0_i32, %c0_i32_0 : i32, i32
  }
  func.func @transform_4(%arg0: i32) -> (i32, i32) {
    %c0_i32 = arith.constant 0 : i32
    %c0_i32_0 = arith.constant 0 : i32
    %c0_i32_1 = arith.constant 0 : i32
    return %c0_i32, %c0_i32_0 : i32, i32
  }
  func.func @transform_5(%arg0: i32) -> (i32, i32) {
    %c0_i32 = arith.constant 0 : i32
    %c0_i32_0 = arith.constant 0 : i32
    %c0_i32_1 = arith.constant 0 : i32
    return %c0_i32, %c0_i32_0 : i32, i32
  }
  func.func @transform_6(%arg0: i32) -> (i32, i32) {
    %c0_i32 = arith.constant 0 : i32
    %c0_i32_0 = arith.constant 0 : i32
    %c0_i32_1 = arith.constant 0 : i32
    return %c0_i32, %c0_i32_0 : i32, i32
  }
  func.func @transform_7(%arg0: i32) -> (i32, i32) {
    %c0_i32 = arith.constant 0 : i32
    %c0_i32_0 = arith.constant 0 : i32
    %c0_i32_1 = arith.constant 0 : i32
    return %c0_i32, %c0_i32_0 : i32, i32
  }
  func.func @transform_8(%arg0: i32) -> (i32, i32) {
    %c0_i32 = arith.constant 0 : i32
    %c0_i32_0 = arith.constant 0 : i32
    %c0_i32_1 = arith.constant 0 : i32
    return %c0_i32, %c0_i32_0 : i32, i32
  }
  func.func @transform_9(%arg0: i32) -> (i32, i32) {
    %c0_i32 = arith.constant 0 : i32
    %c0_i32_0 = arith.constant 0 : i32
    %c0_i32_1 = arith.constant 0 : i32
    return %c0_i32, %c0_i32_0 : i32, i32
  }
  func.func @transform_10(%arg0: i32) -> (i32, i32, i32) {
    %c0_i32 = arith.constant 0 : i32
    %c0_i32_0 = arith.constant 0 : i32
    %c0_i32_1 = arith.constant 0 : i32
    %c0_i32_2 = arith.constant 0 : i32
    return %c0_i32, %c0_i32_0, %c0_i32_1 : i32, i32, i32
  }
  func.func @transform_11(%arg0: i32) -> (i32, i32) {
    %c0_i32 = arith.constant 0 : i32
    %c0_i32_0 = arith.constant 0 : i32
    %c0_i32_1 = arith.constant 0 : i32
    return %c0_i32, %c0_i32_0 : i32, i32
  }
  func.func @transform_12(%arg0: i32) -> (i32, i32, i32) {
    %c0_i32 = arith.constant 0 : i32
    %c0_i32_0 = arith.constant 0 : i32
    %c0_i32_1 = arith.constant 0 : i32
    %c0_i32_2 = arith.constant 0 : i32
    return %c0_i32, %c0_i32_0, %c0_i32_1 : i32, i32, i32
  }
  func.func @transform_13(%arg0: i32) -> (i32, i32) {
    %c0_i32 = arith.constant 0 : i32
    %c0_i32_0 = arith.constant 0 : i32
    %c0_i32_1 = arith.constant 0 : i32
    return %c0_i32, %c0_i32_0 : i32, i32
  }
  func.func @transform_14(%arg0: i32) -> (i32, i32, i32) {
    %c0_i32 = arith.constant 0 : i32
    %c0_i32_0 = arith.constant 0 : i32
    %c0_i32_1 = arith.constant 0 : i32
    %c0_i32_2 = arith.constant 0 : i32
    return %c0_i32, %c0_i32_0, %c0_i32_1 : i32, i32, i32
  }
  func.func @transform_15(%arg0: i32) -> (i32, i32) {
    %c0_i32 = arith.constant 0 : i32
    %c0_i32_0 = arith.constant 0 : i32
    %c0_i32_1 = arith.constant 0 : i32
    return %c0_i32, %c0_i32_0 : i32, i32
  }
  func.func @transform_16(%arg0: i32) -> (i32, i32, i32) {
    %c0_i32 = arith.constant 0 : i32
    %c0_i32_0 = arith.constant 0 : i32
    %c0_i32_1 = arith.constant 0 : i32
    %c0_i32_2 = arith.constant 0 : i32
    return %c0_i32, %c0_i32_0, %c0_i32_1 : i32, i32, i32
  }
  func.func @transform_17(%arg0: i32) -> (i32, i32) {
    %c0_i32 = arith.constant 0 : i32
    %c0_i32_0 = arith.constant 0 : i32
    %c0_i32_1 = arith.constant 0 : i32
    return %c0_i32, %c0_i32_0 : i32, i32
  }
  func.func @transform_18(%arg0: i32) -> (i32, i32) {
    %c0_i32 = arith.constant 0 : i32
    %c0_i32_0 = arith.constant 0 : i32
    %c0_i32_1 = arith.constant 0 : i32
    return %c0_i32, %c0_i32_0 : i32, i32
  }
  func.func @transform_19(%arg0: i32) -> (i32, i32) {
    %c0_i32 = arith.constant 0 : i32
    %c0_i32_0 = arith.constant 0 : i32
    %c0_i32_1 = arith.constant 0 : i32
    return %c0_i32, %c0_i32_0 : i32, i32
  }
  func.func @transform_20(%arg0: i32) -> (i32, i32) {
    %c0_i32 = arith.constant 0 : i32
    %c0_i32_0 = arith.constant 0 : i32
    %c0_i32_1 = arith.constant 0 : i32
    return %c0_i32, %c0_i32_0 : i32, i32
  }
  func.func @transform_21(%arg0: i32) -> (i32, i32) {
    %c0_i32 = arith.constant 0 : i32
    %c0_i32_0 = arith.constant 0 : i32
    %c0_i32_1 = arith.constant 0 : i32
    return %c0_i32, %c0_i32_0 : i32, i32
  }
  func.func @transform_22(%arg0: i32) -> (i32, i32) {
    %c0_i32 = arith.constant 0 : i32
    %c0_i32_0 = arith.constant 0 : i32
    %c0_i32_1 = arith.constant 0 : i32
    return %c0_i32, %c0_i32_0 : i32, i32
  }
  func.func @transform_23(%arg0: i32) -> (i32, i32) {
    %c0_i32 = arith.constant 0 : i32
    %c0_i32_0 = arith.constant 0 : i32
    %c0_i32_1 = arith.constant 0 : i32
    return %c0_i32, %c0_i32_0 : i32, i32
  }
  func.func @transform_24(%arg0: i32) -> (i32, i32) {
    %c0_i32 = arith.constant 0 : i32
    %c0_i32_0 = arith.constant 0 : i32
    %c0_i32_1 = arith.constant 0 : i32
    return %c0_i32, %c0_i32_0 : i32, i32
  }
  func.func @transform_25(%arg0: i32) -> (i32, i32) {
    %c0_i32 = arith.constant 0 : i32
    %c0_i32_0 = arith.constant 0 : i32
    %c0_i32_1 = arith.constant 0 : i32
    return %c0_i32, %c0_i32_0 : i32, i32
  }
}

</mosaic_0001>

<llo_original>
// kernel: mynet_forward.1
$region0: #{mynet_forward.1}
  #allocation0 [shape = 'u32[]', space=smem, size = 0x4, offset = 0x4, fixed_abs, tag = 'smem constant byte address 0x4 - core index']
  #allocation1 [shape = 'u32[72,128]{1,0:T(1,128)}', space=vmem, size = 0x9000, scoped, tag = 'internal scratch']
  #allocation2 [shape = 'bf16[20,576]{1,0:T(8,128)(2,1)}', space=vmem, size = 0x7800, scoped, tag = 'scratch operand']
  #allocation3 [shape = 'bf16[12,288]{1,0:T(8,128)(2,1)}', space=vmem, size = 0x3000, scoped, tag = 'scratch operand']
  #allocation4 [shape = 'f32[8,144]{1,0:T(8,128)}', space=vmem, size = 0x2000, scoped, tag = 'scratch operand']
  %s0 = inlined_call_operand.vmem [shape: f32[2,16], index: 0, kind: input, shape index: {}]
  %s1 = inlined_call_operand.vmem [shape: f32[32,9], index: 1, kind: input, shape index: {}]
  %s2 = inlined_call_operand.vmem [shape: bf16[16,96], index: 2, kind: input, shape index: {}]
  %s3 = inlined_call_operand.vmem [shape: f32[1,96], index: 3, kind: input, shape index: {}]
  %s4 = inlined_call_operand.vmem [shape: bf16[96,160], index: 4, kind: input, shape index: {}]
  %s5 = inlined_call_operand.vmem [shape: f32[1,160], index: 5, kind: input, shape index: {}]
  %s6 = inlined_call_operand.vmem [shape: bf16[160,320], index: 6, kind: input, shape index: {}]
  %s7 = inlined_call_operand.vmem [shape: f32[1,320], index: 7, kind: input, shape index: {}]
  %s8 = inlined_call_operand.vmem [shape: bf16[320,64], index: 8, kind: input, shape index: {}]
  %s9 = inlined_call_operand.vmem [shape: f32[1,64], index: 9, kind: input, shape index: {}]
  %s10 = inlined_call_operand.vmem [shape: bf16[7,9,576], index: 10, kind: input, shape index: {}]
  %s11 = inlined_call_operand.vmem [shape: f32[1,576], index: 11, kind: input, shape index: {}]
  %s12 = inlined_call_operand.vmem [shape: bf16[5,576,288], index: 12, kind: input, shape index: {}]
  %s13 = inlined_call_operand.vmem [shape: f32[1,288], index: 13, kind: input, shape index: {}]
  %s14 = inlined_call_operand.vmem [shape: bf16[3,288,144], index: 14, kind: input, shape index: {}]
  %s15 = inlined_call_operand.vmem [shape: f32[1,144], index: 15, kind: input, shape index: {}]
  %s16 = inlined_call_operand.vmem [shape: f32[4,144,64], index: 16, kind: input, shape index: {}]
  %s17 = inlined_call_operand.vmem [shape: f32[1,64], index: 17, kind: input, shape index: {}]
  %s18 = inlined_call_operand.vmem [shape: f32[64,256], index: 18, kind: input, shape index: {}]
  %s19 = inlined_call_operand.vmem [shape: f32[64,256], index: 19, kind: input, shape index: {}]
  %s20 = inlined_call_operand.vmem [shape: f32[1,256], index: 20, kind: input, shape index: {}]
  %s21 = inlined_call_operand.vmem [shape: f32[256,128], index: 21, kind: input, shape index: {}]
  %s22 = inlined_call_operand.vmem [shape: f32[1,128], index: 22, kind: input, shape index: {}]
  %s23 = inlined_call_operand.vmem [shape: f32[128,10], index: 23, kind: input, shape index: {}]
  %s24 = inlined_call_operand.vmem [shape: f32[1,10], index: 24, kind: input, shape index: {}]
  %s25 = inlined_call_operand.hbm [shape: f32[2,10], index: 25, kind: output, shape index: {}]
  %s26 = sld [smem:[#allocation0]]
  $region110: #{mynet_forward.1} parent=0
    _
  %s28 = ssub.s32 1, %s26
  %s29 = scalar_select 0, %s28, %s26
  $region1: #{mynet_forward.1} parent=0
    #allocation5 [shape = 'u8[1024]{0}', space=vmem, size = 0x400, scoped, tag = 'output window, operand 0, single buffered']
    #allocation6 [shape = 's32[1]{0}', space=sflag, size = 0x4, scoped, tag = 'scoped memory for mynet_forward.1']
    %30 = vsyncpa [#allocation6], 0
    // Predicated region
    $region2: #{mynet_forward.1} parent=1 // pred_check
      _
    $region3: #{mynet_forward.1} parent=1 // pred_check_branch
      %32 = sbr.rel (0) target = $region5
    $region4: #{mynet_forward.1} parent=1 // pred_region
      _
    $region5: #{mynet_forward.1} parent=1 // pred_fallthru
      _
    // Predicated region
    $region6: #{mynet_forward.1} parent=1 // pred_check
      _
    $region7: #{mynet_forward.1} parent=1 // pred_check_branch
      %34 = sbr.rel (0) target = $region9
    $region8: #{mynet_forward.1} parent=1 // pred_region
      _
    $region9: #{mynet_forward.1} parent=1 // pred_fallthru
      _
    // Predicated region
    $region10: #{mynet_forward.1} parent=1 // pred_check
      _
    $region11: #{mynet_forward.1} parent=1 // pred_check_branch
      %36 = sbr.rel (0) target = $region13
    $region12: #{mynet_forward.1} parent=1 // pred_region
      _
    $region13: #{mynet_forward.1} parent=1 // pred_fallthru
      _
    // Predicated region
    $region14: #{mynet_forward.1} parent=1 // pred_check
      _
    $region15: #{mynet_forward.1} parent=1 // pred_check_branch
      %38 = sbr.rel (0) target = $region17
    $region16: #{mynet_forward.1} parent=1 // pred_region
      _
    $region17: #{mynet_forward.1} parent=1 // pred_fallthru
      _
    // Predicated region
    $region18: #{mynet_forward.1} parent=1 // pred_check
      _
    $region19: #{mynet_forward.1} parent=1 // pred_check_branch
      %40 = sbr.rel (0) target = $region21
    $region20: #{mynet_forward.1} parent=1 // pred_region
      _
    $region21: #{mynet_forward.1} parent=1 // pred_fallthru
      _
    // Predicated region
    $region22: #{mynet_forward.1} parent=1 // pred_check
      _
    $region23: #{mynet_forward.1} parent=1 // pred_check_branch
      %42 = sbr.rel (0) target = $region25
    $region24: #{mynet_forward.1} parent=1 // pred_region
      _
    $region25: #{mynet_forward.1} parent=1 // pred_fallthru
      _
    // Predicated region
    $region26: #{mynet_forward.1} parent=1 // pred_check
      _
    $region27: #{mynet_forward.1} parent=1 // pred_check_branch
      %44 = sbr.rel (0) target = $region29
    $region28: #{mynet_forward.1} parent=1 // pred_region
      _
    $region29: #{mynet_forward.1} parent=1 // pred_fallthru
      _
    // Predicated region
    $region30: #{mynet_forward.1} parent=1 // pred_check
      _
    $region31: #{mynet_forward.1} parent=1 // pred_check_branch
      %46 = sbr.rel (0) target = $region33
    $region32: #{mynet_forward.1} parent=1 // pred_region
      _
    $region33: #{mynet_forward.1} parent=1 // pred_fallthru
      _
    // Predicated region
    $region34: #{mynet_forward.1} parent=1 // pred_check
      _
    $region35: #{mynet_forward.1} parent=1 // pred_check_branch
      %48 = sbr.rel (0) target = $region37
    $region36: #{mynet_forward.1} parent=1 // pred_region
      _
    $region37: #{mynet_forward.1} parent=1 // pred_fallthru
      _
    // Predicated region
    $region38: #{mynet_forward.1} parent=1 // pred_check
      _
    $region39: #{mynet_forward.1} parent=1 // pred_check_branch
      %50 = sbr.rel (0) target = $region41
    $region40: #{mynet_forward.1} parent=1 // pred_region
      _
    $region41: #{mynet_forward.1} parent=1 // pred_fallthru
      _
    // Predicated region
    $region42: #{mynet_forward.1} parent=1 // pred_check
      _
    $region43: #{mynet_forward.1} parent=1 // pred_check_branch
      %52 = sbr.rel (0) target = $region45
    $region44: #{mynet_forward.1} parent=1 // pred_region
      _
    $region45: #{mynet_forward.1} parent=1 // pred_fallthru
      _
    // Predicated region
    $region46: #{mynet_forward.1} parent=1 // pred_check
      _
    $region47: #{mynet_forward.1} parent=1 // pred_check_branch
      %54 = sbr.rel (0) target = $region49
    $region48: #{mynet_forward.1} parent=1 // pred_region
      _
    $region49: #{mynet_forward.1} parent=1 // pred_fallthru
      _
    // Predicated region
    $region50: #{mynet_forward.1} parent=1 // pred_check
      _
    $region51: #{mynet_forward.1} parent=1 // pred_check_branch
      %56 = sbr.rel (0) target = $region53
    $region52: #{mynet_forward.1} parent=1 // pred_region
      _
    $region53: #{mynet_forward.1} parent=1 // pred_fallthru
      _
    // Predicated region
    $region54: #{mynet_forward.1} parent=1 // pred_check
      _
    $region55: #{mynet_forward.1} parent=1 // pred_check_branch
      %58 = sbr.rel (0) target = $region57
    $region56: #{mynet_forward.1} parent=1 // pred_region
      _
    $region57: #{mynet_forward.1} parent=1 // pred_fallthru
      _
    // Predicated region
    $region58: #{mynet_forward.1} parent=1 // pred_check
      _
    $region59: #{mynet_forward.1} parent=1 // pred_check_branch
      %60 = sbr.rel (0) target = $region61
    $region60: #{mynet_forward.1} parent=1 // pred_region
      _
    $region61: #{mynet_forward.1} parent=1 // pred_fallthru
      _
    // Predicated region
    $region62: #{mynet_forward.1} parent=1 // pred_check
      _
    $region63: #{mynet_forward.1} parent=1 // pred_check_branch
      %62 = sbr.rel (0) target = $region65
    $region64: #{mynet_forward.1} parent=1 // pred_region
      _
    $region65: #{mynet_forward.1} parent=1 // pred_fallthru
      _
    // Predicated region
    $region66: #{mynet_forward.1} parent=1 // pred_check
      _
    $region67: #{mynet_forward.1} parent=1 // pred_check_branch
      %64 = sbr.rel (0) target = $region69
    $region68: #{mynet_forward.1} parent=1 // pred_region
      _
    $region69: #{mynet_forward.1} parent=1 // pred_fallthru
      _
    // Predicated region
    $region70: #{mynet_forward.1} parent=1 // pred_check
      _
    $region71: #{mynet_forward.1} parent=1 // pred_check_branch
      %66 = sbr.rel (0) target = $region73
    $region72: #{mynet_forward.1} parent=1 // pred_region
      _
    $region73: #{mynet_forward.1} parent=1 // pred_fallthru
      _
    // Predicated region
    $region74: #{mynet_forward.1} parent=1 // pred_check
      _
    $region75: #{mynet_forward.1} parent=1 // pred_check_branch
      %68 = sbr.rel (0) target = $region77
    $region76: #{mynet_forward.1} parent=1 // pred_region
      _
    $region77: #{mynet_forward.1} parent=1 // pred_fallthru
      _
    // Predicated region
    $region78: #{mynet_forward.1} parent=1 // pred_check
      _
    $region79: #{mynet_forward.1} parent=1 // pred_check_branch
      %70 = sbr.rel (0) target = $region81
    $region80: #{mynet_forward.1} parent=1 // pred_region
      _
    $region81: #{mynet_forward.1} parent=1 // pred_fallthru
      _
    // Predicated region
    $region82: #{mynet_forward.1} parent=1 // pred_check
      _
    $region83: #{mynet_forward.1} parent=1 // pred_check_branch
      %72 = sbr.rel (0) target = $region85
    $region84: #{mynet_forward.1} parent=1 // pred_region
      _
    $region85: #{mynet_forward.1} parent=1 // pred_fallthru
      _
    // Predicated region
    $region86: #{mynet_forward.1} parent=1 // pred_check
      _
    $region87: #{mynet_forward.1} parent=1 // pred_check_branch
      %74 = sbr.rel (0) target = $region89
    $region88: #{mynet_forward.1} parent=1 // pred_region
      _
    $region89: #{mynet_forward.1} parent=1 // pred_fallthru
      _
    // Predicated region
    $region90: #{mynet_forward.1} parent=1 // pred_check
      _
    $region91: #{mynet_forward.1} parent=1 // pred_check_branch
      %76 = sbr.rel (0) target = $region93
    $region92: #{mynet_forward.1} parent=1 // pred_region
      _
    $region93: #{mynet_forward.1} parent=1 // pred_fallthru
      _
    // Predicated region
    $region94: #{mynet_forward.1} parent=1 // pred_check
      _
    $region95: #{mynet_forward.1} parent=1 // pred_check_branch
      %78 = sbr.rel (0) target = $region97
    $region96: #{mynet_forward.1} parent=1 // pred_region
      _
    $region97: #{mynet_forward.1} parent=1 // pred_fallthru
      _
    // Predicated region
    $region98: #{mynet_forward.1} parent=1 // pred_check
      _
    $region99: #{mynet_forward.1} parent=1 // pred_check_branch
      %80 = sbr.rel (0) target = $region101
    $region100: #{mynet_forward.1} parent=1 // pred_region
      _
    $region101: #{mynet_forward.1} parent=1 // pred_fallthru
      _
    %v82 = vld [vmem:[%s0] sm:$0x3]
    %v83 = vpack.c.bf16 %v82, %v82
    %v84 = vld [vmem:[%s2] sm:$0xf]
    %v85 = vld [vmem:[%s2 + $0x4] sm:$0xf]
    %v86 = vld [vmem:[%s3] sm:$0x1]
    %v88 = vperm.slane %v86, 0
    %v92 = vunpack.c.l.b16 %v84
    %v93 = vunpack.c.l.b16 %v85
    %v94 = vpack.c.b16 %v93, %v92
    %vm96 = vcmask 130048
    %v98 = vsel %vm96, %v83, 0
    %100 = vmatpush.bf16.msra.mxu0 0
    %101 = vmatpush.bf16.msra.mxu0 0
    %102 = vmatpush.bf16.msra.mxu0 0
    %103 = vmatpush.bf16.msra.mxu0 0
    %104 = vmatpush.bf16.msra.mxu0 0
    %105 = vmatpush.bf16.msra.mxu0 0
    %106 = vmatpush.bf16.msra.mxu0 0
    %107 = vmatpush.bf16.msra.mxu0 %v94
    %108 = vmatmul.bf16.gmra.mxu0 %v98
    %v109 = vpop.f32.mrf.mxu0
    %v110 = vadd.f32 %v88, %v109
    %v111 = vpop.f32.mrf.mxu0
    %112 = vdwg.mxu0
    %v113 = vmax.f32 %v110, 0.0
    %v114 = vpack.c.bf16 %v113, %v113
    %v115 = vld [vmem:[%s4] sm:$0xff]
    %v116 = vld [vmem:[%s4 + $0x8] sm:$0xff]
    %v117 = vld [vmem:[%s4 + $0x10] sm:$0xff]
    %v118 = vld [vmem:[%s4 + $0x18] sm:$0xff]
    %v119 = vld [vmem:[%s4 + $0x20] sm:$0xff]
    %v120 = vld [vmem:[%s4 + $0x28] sm:$0xff]
    %v121 = vld [vmem:[%s4 + $0x30] sm:$0xff]
    %v122 = vld [vmem:[%s4 + $0x38] sm:$0xff]
    %v123 = vld [vmem:[%s4 + $0x40] sm:$0xff]
    %v124 = vld [vmem:[%s4 + $0x48] sm:$0xff]
    %v125 = vld [vmem:[%s4 + $0x50] sm:$0xff]
    %v126 = vld [vmem:[%s4 + $0x58] sm:$0xff]
    %v127 = vld [vmem:[%s5] sm:$0x3]
    %v129 = vperm.slane %v127, 0
    %v130 = vperm.slane %v127, 1
    %v145 = vunpack.c.l.b16 %v115
    %v146 = vunpack.c.h.b16 %v115
    %v147 = vunpack.c.l.b16 %v116
    %v148 = vunpack.c.h.b16 %v116
    %v149 = vunpack.c.l.b16 %v117
    %v150 = vunpack.c.h.b16 %v117
    %v151 = vunpack.c.l.b16 %v118
    %v152 = vunpack.c.h.b16 %v118
    %v153 = vunpack.c.l.b16 %v119
    %v154 = vunpack.c.h.b16 %v119
    %v155 = vunpack.c.l.b16 %v120
    %v156 = vunpack.c.h.b16 %v120
    %v157 = vunpack.c.l.b16 %v121
    %v158 = vunpack.c.h.b16 %v121
    %v159 = vunpack.c.l.b16 %v122
    %v160 = vunpack.c.h.b16 %v122
    %v161 = vunpack.c.l.b16 %v123
    %v162 = vunpack.c.h.b16 %v123
    %v163 = vunpack.c.l.b16 %v124
    %v164 = vunpack.c.h.b16 %v124
    %v165 = vunpack.c.l.b16 %v125
    %v166 = vunpack.c.h.b16 %v125
    %v167 = vunpack.c.l.b16 %v126
    %v168 = vunpack.c.h.b16 %v126
    %v169 = vpack.c.b16 %v147, %v145
    %v170 = vpack.c.b16 %v148, %v146
    %v171 = vpack.c.b16 %v151, %v149
    %v172 = vpack.c.b16 %v152, %v150
    %v173 = vpack.c.b16 %v155, %v153
    %v174 = vpack.c.b16 %v156, %v154
    %v175 = vpack.c.b16 %v159, %v157
    %v176 = vpack.c.b16 %v160, %v158
    %v177 = vpack.c.b16 %v163, %v161
    %v178 = vpack.c.b16 %v164, %v162
    %v179 = vpack.c.b16 %v167, %v165
    %v180 = vpack.c.b16 %v168, %v166
    %vm193 = vcmask 785408
    %v195 = vsel %vm193, %v114, 0
    %197 = vmatpush.bf16.msra.mxu0 0
    %198 = vmatpush.bf16.msra.mxu0 0
    %199 = vmatpush.bf16.msra.mxu0 %v179
    %200 = vmatpush.bf16.msra.mxu0 %v177
    %201 = vmatpush.bf16.msra.mxu0 %v175
    %202 = vmatpush.bf16.msra.mxu0 %v173
    %203 = vmatpush.bf16.msra.mxu0 %v171
    %204 = vmatpush.bf16.msra.mxu0 %v169
    %205 = vmatmul.bf16.gmra.mxu0 %v195
    %v206 = vpop.f32.mrf.mxu0
    %v207 = vadd.f32 %v129, %v206
    %v208 = vpop.f32.mrf.mxu0
    %209 = vdwg.mxu0
    %210 = vmatpush.bf16.msra.mxu0 0
    %211 = vmatpush.bf16.msra.mxu0 0
    %212 = vmatpush.bf16.msra.mxu0 %v180
    %213 = vmatpush.bf16.msra.mxu0 %v178
    %214 = vmatpush.bf16.msra.mxu0 %v176
    %215 = vmatpush.bf16.msra.mxu0 %v174
    %216 = vmatpush.bf16.msra.mxu0 %v172
    %217 = vmatpush.bf16.msra.mxu0 %v170
    %218 = vmatmul.bf16.gmra.mxu0 %v195
    %v219 = vpop.f32.mrf.mxu0
    %v220 = vadd.f32 %v130, %v219
    %v221 = vpop.f32.mrf.mxu0
    %222 = vdwg.mxu0
    %v223 = vmax.f32 %v207, 0.0
    %v224 = vmax.f32 %v220, 0.0
    %v225 = vpack.c.bf16 %v223, %v223
    %v226 = vpack.c.bf16 %v224, %v224
    %v227 = vld [vmem:[%s6] sm:$0xff]
    %v228 = vld [vmem:[%s6 + $0x8] sm:$0xf]
    %v229 = vld [vmem:[%s6 + $0xc] sm:$0xff]
    %v230 = vld [vmem:[%s6 + $0x14] sm:$0xf]
    %v231 = vld [vmem:[%s6 + $0x18] sm:$0xff]
    %v232 = vld [vmem:[%s6 + $0x20] sm:$0xf]
    %v233 = vld [vmem:[%s6 + $0x24] sm:$0xff]
    %v234 = vld [vmem:[%s6 + $0x2c] sm:$0xf]
    %v235 = vld [vmem:[%s6 + $0x30] sm:$0xff]
    %v236 = vld [vmem:[%s6 + $0x38] sm:$0xf]
    %v237 = vld [vmem:[%s6 + $0x3c] sm:$0xff]
    %v238 = vld [vmem:[%s6 + $0x44] sm:$0xf]
    %v239 = vld [vmem:[%s6 + $0x48] sm:$0xff]
    %v240 = vld [vmem:[%s6 + $0x50] sm:$0xf]
    %v241 = vld [vmem:[%s6 + $0x54] sm:$0xff]
    %v242 = vld [vmem:[%s6 + $0x5c] sm:$0xf]
    %v243 = vld [vmem:[%s6 + $0x60] sm:$0xff]
    %v244 = vld [vmem:[%s6 + $0x68] sm:$0xf]
    %v245 = vld [vmem:[%s6 + $0x6c] sm:$0xff]
    %v246 = vld [vmem:[%s6 + $0x74] sm:$0xf]
    %v247 = vld [vmem:[%s6 + $0x78] sm:$0xff]
    %v248 = vld [vmem:[%s6 + $0x80] sm:$0xf]
    %v249 = vld [vmem:[%s6 + $0x84] sm:$0xff]
    %v250 = vld [vmem:[%s6 + $0x8c] sm:$0xf]
    %v251 = vld [vmem:[%s6 + $0x90] sm:$0xff]
    %v252 = vld [vmem:[%s6 + $0x98] sm:$0xf]
    %v253 = vld [vmem:[%s6 + $0x9c] sm:$0xff]
    %v254 = vld [vmem:[%s6 + $0xa4] sm:$0xf]
    %v255 = vld [vmem:[%s6 + $0xa8] sm:$0xff]
    %v256 = vld [vmem:[%s6 + $0xb0] sm:$0xf]
    %v257 = vld [vmem:[%s6 + $0xb4] sm:$0xff]
    %v258 = vld [vmem:[%s6 + $0xbc] sm:$0xf]
    %v259 = vld [vmem:[%s6 + $0xc0] sm:$0xff]
    %v260 = vld [vmem:[%s6 + $0xc8] sm:$0xf]
    %v261 = vld [vmem:[%s6 + $0xcc] sm:$0xff]
    %v262 = vld [vmem:[%s6 + $0xd4] sm:$0xf]
    %v263 = vld [vmem:[%s6 + $0xd8] sm:$0xff]
    %v264 = vld [vmem:[%s6 + $0xe0] sm:$0xf]
    %v265 = vld [vmem:[%s6 + $0xe4] sm:$0xff]
    %v266 = vld [vmem:[%s6 + $0xec] sm:$0xf]
    %v267 = vld [vmem:[%s7] sm:$0x7]
    %v269 = vperm.slane %v267, 0
    %v270 = vperm.slane %v267, 1
    %v271 = vperm.slane %v267, 2
    %v315 = vunpack.c.l.b16 %v227
    %v316 = vunpack.c.h.b16 %v227
    %v317 = vunpack.c.l.b16 %v228
    %v318 = vunpack.c.l.b16 %v229
    %v319 = vunpack.c.h.b16 %v229
    %v320 = vunpack.c.l.b16 %v230
    %v321 = vunpack.c.l.b16 %v231
    %v322 = vunpack.c.h.b16 %v231
    %v323 = vunpack.c.l.b16 %v232
    %v324 = vunpack.c.l.b16 %v233
    %v325 = vunpack.c.h.b16 %v233
    %v326 = vunpack.c.l.b16 %v234
    %v327 = vunpack.c.l.b16 %v235
    %v328 = vunpack.c.h.b16 %v235
    %v329 = vunpack.c.l.b16 %v236
    %v330 = vunpack.c.l.b16 %v237
    %v331 = vunpack.c.h.b16 %v237
    %v332 = vunpack.c.l.b16 %v238
    %v333 = vunpack.c.l.b16 %v239
    %v334 = vunpack.c.h.b16 %v239
    %v335 = vunpack.c.l.b16 %v240
    %v336 = vunpack.c.l.b16 %v241
    %v337 = vunpack.c.h.b16 %v241
    %v338 = vunpack.c.l.b16 %v242
    %v339 = vunpack.c.l.b16 %v243
    %v340 = vunpack.c.h.b16 %v243
    %v341 = vunpack.c.l.b16 %v244
    %v342 = vunpack.c.l.b16 %v245
    %v343 = vunpack.c.h.b16 %v245
    %v344 = vunpack.c.l.b16 %v246
    %v345 = vunpack.c.l.b16 %v247
    %v346 = vunpack.c.h.b16 %v247
    %v347 = vunpack.c.l.b16 %v248
    %v348 = vunpack.c.l.b16 %v249
    %v349 = vunpack.c.h.b16 %v249
    %v350 = vunpack.c.l.b16 %v250
    %v351 = vunpack.c.l.b16 %v251
    %v352 = vunpack.c.h.b16 %v251
    %v353 = vunpack.c.l.b16 %v252
    %v354 = vunpack.c.l.b16 %v253
    %v355 = vunpack.c.h.b16 %v253
    %v356 = vunpack.c.l.b16 %v254
    %v357 = vunpack.c.l.b16 %v255
    %v358 = vunpack.c.h.b16 %v255
    %v359 = vunpack.c.l.b16 %v256
    %v360 = vunpack.c.l.b16 %v257
    %v361 = vunpack.c.h.b16 %v257
    %v362 = vunpack.c.l.b16 %v258
    %v363 = vunpack.c.l.b16 %v259
    %v364 = vunpack.c.h.b16 %v259
    %v365 = vunpack.c.l.b16 %v260
    %v366 = vunpack.c.l.b16 %v261
    %v367 = vunpack.c.h.b16 %v261
    %v368 = vunpack.c.l.b16 %v262
    %v369 = vunpack.c.l.b16 %v263
    %v370 = vunpack.c.h.b16 %v263
    %v371 = vunpack.c.l.b16 %v264
    %v372 = vunpack.c.l.b16 %v265
    %v373 = vunpack.c.h.b16 %v265
    %v374 = vunpack.c.l.b16 %v266
    %v375 = vpack.c.b16 %v318, %v315
    %v376 = vpack.c.b16 %v319, %v316
    %v377 = vpack.c.b16 %v320, %v317
    %v378 = vpack.c.b16 %v324, %v321
    %v379 = vpack.c.b16 %v325, %v322
    %v380 = vpack.c.b16 %v326, %v323
    %v381 = vpack.c.b16 %v330, %v327
    %v382 = vpack.c.b16 %v331, %v328
    %v383 = vpack.c.b16 %v332, %v329
    %v384 = vpack.c.b16 %v336, %v333
    %v385 = vpack.c.b16 %v337, %v334
    %v386 = vpack.c.b16 %v338, %v335
    %v387 = vpack.c.b16 %v342, %v339
    %v388 = vpack.c.b16 %v343, %v340
    %v389 = vpack.c.b16 %v344, %v341
    %v390 = vpack.c.b16 %v348, %v345
    %v391 = vpack.c.b16 %v349, %v346
    %v392 = vpack.c.b16 %v350, %v347
    %v393 = vpack.c.b16 %v354, %v351
    %v394 = vpack.c.b16 %v355, %v352
    %v395 = vpack.c.b16 %v356, %v353
    %v396 = vpack.c.b16 %v360, %v357
    %v397 = vpack.c.b16 %v361, %v358
    %v398 = vpack.c.b16 %v362, %v359
    %v399 = vpack.c.b16 %v366, %v363
    %v400 = vpack.c.b16 %v367, %v364
    %v401 = vpack.c.b16 %v368, %v365
    %v402 = vpack.c.b16 %v372, %v369
    %v403 = vpack.c.b16 %v373, %v370
    %v404 = vpack.c.b16 %v374, %v371
    %vm435 = vcmask 261120
    %v437 = vsel %vm435, %v226, 0
    %439 = vmatpush.bf16.msra.mxu0 %v396
    %440 = vmatpush.bf16.msra.mxu0 %v393
    %441 = vmatpush.bf16.msra.mxu0 %v390
    %442 = vmatpush.bf16.msra.mxu0 %v387
    %443 = vmatpush.bf16.msra.mxu0 %v384
    %444 = vmatpush.bf16.msra.mxu0 %v381
    %445 = vmatpush.bf16.msra.mxu0 %v378
    %446 = vmatpush.bf16.msra.mxu0 %v375
    %447 = vmatmul.bf16.gmra.mxu0 %v225
    %v448 = vpop.f32.mrf.mxu0
    %v449 = vadd.f32 %v269, %v448
    %v450 = vpop.f32.mrf.mxu0
    %451 = vdwg.mxu0
    %452 = vmatpush.bf16.msra.mxu0 0
    %453 = vmatpush.bf16.msra.mxu0 0
    %454 = vmatpush.bf16.msra.mxu0 0
    %455 = vmatpush.bf16.msra.mxu0 0
    %456 = vmatpush.bf16.msra.mxu0 0
    %457 = vmatpush.bf16.msra.mxu0 0
    %458 = vmatpush.bf16.msra.mxu0 %v402
    %459 = vmatpush.bf16.msra.mxu0 %v399
    %460 = vmatmul.bf16.gmra.mxu0 %v437
    %v461 = vpop.f32.mrf.mxu0
    %v462 = vadd.f32 %v449, %v461
    %v463 = vpop.f32.mrf.mxu0
    %464 = vdwg.mxu0
    %465 = vmatpush.bf16.msra.mxu0 %v397
    %466 = vmatpush.bf16.msra.mxu0 %v394
    %467 = vmatpush.bf16.msra.mxu0 %v391
    %468 = vmatpush.bf16.msra.mxu0 %v388
    %469 = vmatpush.bf16.msra.mxu0 %v385
    %470 = vmatpush.bf16.msra.mxu0 %v382
    %471 = vmatpush.bf16.msra.mxu0 %v379
    %472 = vmatpush.bf16.msra.mxu0 %v376
    %473 = vmatmul.bf16.gmra.mxu0 %v225
    %v474 = vpop.f32.mrf.mxu0
    %v475 = vadd.f32 %v270, %v474
    %v476 = vpop.f32.mrf.mxu0
    %477 = vdwg.mxu0
    %478 = vmatpush.bf16.msra.mxu0 0
    %479 = vmatpush.bf16.msra.mxu0 0
    %480 = vmatpush.bf16.msra.mxu0 0
    %481 = vmatpush.bf16.msra.mxu0 0
    %482 = vmatpush.bf16.msra.mxu0 0
    %483 = vmatpush.bf16.msra.mxu0 0
    %484 = vmatpush.bf16.msra.mxu0 %v403
    %485 = vmatpush.bf16.msra.mxu0 %v400
    %486 = vmatmul.bf16.gmra.mxu0 %v437
    %v487 = vpop.f32.mrf.mxu0
    %v488 = vadd.f32 %v475, %v487
    %v489 = vpop.f32.mrf.mxu0
    %490 = vdwg.mxu0
    %491 = vmatpush.bf16.msra.mxu0 %v398
    %492 = vmatpush.bf16.msra.mxu0 %v395
    %493 = vmatpush.bf16.msra.mxu0 %v392
    %494 = vmatpush.bf16.msra.mxu0 %v389
    %495 = vmatpush.bf16.msra.mxu0 %v386
    %496 = vmatpush.bf16.msra.mxu0 %v383
    %497 = vmatpush.bf16.msra.mxu0 %v380
    %498 = vmatpush.bf16.msra.mxu0 %v377
    %499 = vmatmul.bf16.gmra.mxu0 %v225
    %v500 = vpop.f32.mrf.mxu0
    %v501 = vadd.f32 %v271, %v500
    %v502 = vpop.f32.mrf.mxu0
    %503 = vdwg.mxu0
    %504 = vmatpush.bf16.msra.mxu0 0
    %505 = vmatpush.bf16.msra.mxu0 0
    %506 = vmatpush.bf16.msra.mxu0 0
    %507 = vmatpush.bf16.msra.mxu0 0
    %508 = vmatpush.bf16.msra.mxu0 0
    %509 = vmatpush.bf16.msra.mxu0 0
    %510 = vmatpush.bf16.msra.mxu0 %v404
    %511 = vmatpush.bf16.msra.mxu0 %v401
    %512 = vmatmul.bf16.gmra.mxu0 %v437
    %v513 = vpop.f32.mrf.mxu0
    %v514 = vadd.f32 %v501, %v513
    %v515 = vpop.f32.mrf.mxu0
    %516 = vdwg.mxu0
    %v517 = vmax.f32 %v462, 0.0
    %v518 = vmax.f32 %v488, 0.0
    %v519 = vmax.f32 %v514, 0.0
    %v520 = vpack.c.bf16 %v517, %v517
    %v521 = vpack.c.bf16 %v518, %v518
    %v522 = vpack.c.bf16 %v519, %v519
    %v523 = vld [vmem:[%s8] sm:$0xf]
    %v524 = vld [vmem:[%s8 + $0x4] sm:$0xf]
    %v525 = vld [vmem:[%s8 + $0x8] sm:$0xf]
    %v526 = vld [vmem:[%s8 + $0xc] sm:$0xf]
    %v527 = vld [vmem:[%s8 + $0x10] sm:$0xf]
    %v528 = vld [vmem:[%s8 + $0x14] sm:$0xf]
    %v529 = vld [vmem:[%s8 + $0x18] sm:$0xf]
    %v530 = vld [vmem:[%s8 + $0x1c] sm:$0xf]
    %v531 = vld [vmem:[%s8 + $0x20] sm:$0xf]
    %v532 = vld [vmem:[%s8 + $0x24] sm:$0xf]
    %v533 = vld [vmem:[%s8 + $0x28] sm:$0xf]
    %v534 = vld [vmem:[%s8 + $0x2c] sm:$0xf]
    %v535 = vld [vmem:[%s8 + $0x30] sm:$0xf]
    %v536 = vld [vmem:[%s8 + $0x34] sm:$0xf]
    %v537 = vld [vmem:[%s8 + $0x38] sm:$0xf]
    %v538 = vld [vmem:[%s8 + $0x3c] sm:$0xf]
    %v539 = vld [vmem:[%s8 + $0x40] sm:$0xf]
    %v540 = vld [vmem:[%s8 + $0x44] sm:$0xf]
    %v541 = vld [vmem:[%s8 + $0x48] sm:$0xf]
    %v542 = vld [vmem:[%s8 + $0x4c] sm:$0xf]
    %v543 = vld [vmem:[%s8 + $0x50] sm:$0xf]
    %v544 = vld [vmem:[%s8 + $0x54] sm:$0xf]
    %v545 = vld [vmem:[%s8 + $0x58] sm:$0xf]
    %v546 = vld [vmem:[%s8 + $0x5c] sm:$0xf]
    %v547 = vld [vmem:[%s8 + $0x60] sm:$0xf]
    %v548 = vld [vmem:[%s8 + $0x64] sm:$0xf]
    %v549 = vld [vmem:[%s8 + $0x68] sm:$0xf]
    %v550 = vld [vmem:[%s8 + $0x6c] sm:$0xf]
    %v551 = vld [vmem:[%s8 + $0x70] sm:$0xf]
    %v552 = vld [vmem:[%s8 + $0x74] sm:$0xf]
    %v553 = vld [vmem:[%s8 + $0x78] sm:$0xf]
    %v554 = vld [vmem:[%s8 + $0x7c] sm:$0xf]
    %v555 = vld [vmem:[%s8 + $0x80] sm:$0xf]
    %v556 = vld [vmem:[%s8 + $0x84] sm:$0xf]
    %v557 = vld [vmem:[%s8 + $0x88] sm:$0xf]
    %v558 = vld [vmem:[%s8 + $0x8c] sm:$0xf]
    %v559 = vld [vmem:[%s8 + $0x90] sm:$0xf]
    %v560 = vld [vmem:[%s8 + $0x94] sm:$0xf]
    %v561 = vld [vmem:[%s8 + $0x98] sm:$0xf]
    %v562 = vld [vmem:[%s8 + $0x9c] sm:$0xf]
    %v563 = vld [vmem:[%s9] sm:$0x1]
    %v565 = vperm.slane %v563, 0
    %v607 = vunpack.c.l.b16 %v523
    %v608 = vunpack.c.l.b16 %v524
    %v609 = vunpack.c.l.b16 %v525
    %v610 = vunpack.c.l.b16 %v526
    %v611 = vunpack.c.l.b16 %v527
    %v612 = vunpack.c.l.b16 %v528
    %v613 = vunpack.c.l.b16 %v529
    %v614 = vunpack.c.l.b16 %v530
    %v615 = vunpack.c.l.b16 %v531
    %v616 = vunpack.c.l.b16 %v532
    %v617 = vunpack.c.l.b16 %v533
    %v618 = vunpack.c.l.b16 %v534
    %v619 = vunpack.c.l.b16 %v535
    %v620 = vunpack.c.l.b16 %v536
    %v621 = vunpack.c.l.b16 %v537
    %v622 = vunpack.c.l.b16 %v538
    %v623 = vunpack.c.l.b16 %v539
    %v624 = vunpack.c.l.b16 %v540
    %v625 = vunpack.c.l.b16 %v541
    %v626 = vunpack.c.l.b16 %v542
    %v627 = vunpack.c.l.b16 %v543
    %v628 = vunpack.c.l.b16 %v544
    %v629 = vunpack.c.l.b16 %v545
    %v630 = vunpack.c.l.b16 %v546
    %v631 = vunpack.c.l.b16 %v547
    %v632 = vunpack.c.l.b16 %v548
    %v633 = vunpack.c.l.b16 %v549
    %v634 = vunpack.c.l.b16 %v550
    %v635 = vunpack.c.l.b16 %v551
    %v636 = vunpack.c.l.b16 %v552
    %v637 = vunpack.c.l.b16 %v553
    %v638 = vunpack.c.l.b16 %v554
    %v639 = vunpack.c.l.b16 %v555
    %v640 = vunpack.c.l.b16 %v556
    %v641 = vunpack.c.l.b16 %v557
    %v642 = vunpack.c.l.b16 %v558
    %v643 = vunpack.c.l.b16 %v559
    %v644 = vunpack.c.l.b16 %v560
    %v645 = vunpack.c.l.b16 %v561
    %v646 = vunpack.c.l.b16 %v562
    %v647 = vpack.c.b16 %v608, %v607
    %v648 = vpack.c.b16 %v610, %v609
    %v649 = vpack.c.b16 %v612, %v611
    %v650 = vpack.c.b16 %v614, %v613
    %v651 = vpack.c.b16 %v616, %v615
    %v652 = vpack.c.b16 %v618, %v617
    %v653 = vpack.c.b16 %v620, %v619
    %v654 = vpack.c.b16 %v622, %v621
    %v655 = vpack.c.b16 %v624, %v623
    %v656 = vpack.c.b16 %v626, %v625
    %v657 = vpack.c.b16 %v628, %v627
    %v658 = vpack.c.b16 %v630, %v629
    %v659 = vpack.c.b16 %v632, %v631
    %v660 = vpack.c.b16 %v634, %v633
    %v661 = vpack.c.b16 %v636, %v635
    %v662 = vpack.c.b16 %v638, %v637
    %v663 = vpack.c.b16 %v640, %v639
    %v664 = vpack.c.b16 %v642, %v641
    %v665 = vpack.c.b16 %v644, %v643
    %v666 = vpack.c.b16 %v646, %v645
    %vm687 = vcmask 523264
    %v689 = vsel %vm687, %v522, 0
    %691 = vmatpush.bf16.msra.mxu0 %v654
    %692 = vmatpush.bf16.msra.mxu0 %v653
    %693 = vmatpush.bf16.msra.mxu0 %v652
    %694 = vmatpush.bf16.msra.mxu0 %v651
    %695 = vmatpush.bf16.msra.mxu0 %v650
    %696 = vmatpush.bf16.msra.mxu0 %v649
    %697 = vmatpush.bf16.msra.mxu0 %v648
    %698 = vmatpush.bf16.msra.mxu0 %v647
    %699 = vmatmul.bf16.gmra.mxu0 %v520
    %v700 = vpop.f32.mrf.mxu0
    %v701 = vadd.f32 %v565, %v700
    %v702 = vpop.f32.mrf.mxu0
    %703 = vdwg.mxu0
    %704 = vmatpush.bf16.msra.mxu0 %v662
    %705 = vmatpush.bf16.msra.mxu0 %v661
    %706 = vmatpush.bf16.msra.mxu0 %v660
    %707 = vmatpush.bf16.msra.mxu0 %v659
    %708 = vmatpush.bf16.msra.mxu0 %v658
    %709 = vmatpush.bf16.msra.mxu0 %v657
    %710 = vmatpush.bf16.msra.mxu0 %v656
    %711 = vmatpush.bf16.msra.mxu0 %v655
    %712 = vmatmul.bf16.gmra.mxu0 %v521
    %v713 = vpop.f32.mrf.mxu0
    %v714 = vadd.f32 %v701, %v713
    %v715 = vpop.f32.mrf.mxu0
    %716 = vdwg.mxu0
    %717 = vmatpush.bf16.msra.mxu0 0
    %718 = vmatpush.bf16.msra.mxu0 0
    %719 = vmatpush.bf16.msra.mxu0 0
    %720 = vmatpush.bf16.msra.mxu0 0
    %721 = vmatpush.bf16.msra.mxu0 %v666
    %722 = vmatpush.bf16.msra.mxu0 %v665
    %723 = vmatpush.bf16.msra.mxu0 %v664
    %724 = vmatpush.bf16.msra.mxu0 %v663
    %725 = vmatmul.bf16.gmra.mxu0 %v689
    %v726 = vpop.f32.mrf.mxu0
    %v727 = vadd.f32 %v714, %v726
    %v728 = vpop.f32.mrf.mxu0
    %729 = vdwg.mxu0
    %v730 = vmax.f32 %v727, 0.0
    %v731 = vld [vmem:[%s11] sm:$0x1f]
    %v732 = vld [vmem:[%s1] sm:$0xff]
    %v733 = vld [vmem:[%s1 + $0x8] sm:$0xff]
    %v734 = vld [vmem:[%s1 + $0x10] sm:$0xf]
    %v735 = vpack.c.bf16 %v733, %v732
    %v736 = vpack.c.bf16 %v734, %v734
    %v737 = vld [vmem:[%s10] sm:$0xff]
    %v738 = vld [vmem:[%s10 + $0x8] sm:$0xff]
    %v739 = vld [vmem:[%s10 + $0x10] sm:$0xf]
    %v740 = vld [vmem:[%s10 + $0x14] sm:$0x11]
    %v741 = vld [vmem:[%s10 + $0x1c] sm:$0x11]
    %v742 = vld [vmem:[%s10 + $0x24] sm:$0x1]
    %v749 = vunpack.c.l.b16 %v737
    %v750 = vunpack.c.h.b16 %v737
    %v751 = vunpack.c.l.b16 %v738
    %v752 = vunpack.c.h.b16 %v738
    %v753 = vunpack.c.l.b16 %v739
    %v754 = vunpack.c.l.b16 %v740
    %v755 = vunpack.c.h.b16 %v740
    %v756 = vunpack.c.l.b16 %v741
    %v757 = vunpack.c.h.b16 %v741
    %v758 = vunpack.c.l.b16 %v742
    %v759 = vpack.c.b16 %v754, %v749
    %v760 = vpack.c.b16 %v755, %v750
    %v761 = vpack.c.b16 %v756, %v751
    %v762 = vpack.c.b16 %v757, %v752
    %v763 = vpack.c.b16 %v758, %v753
    %vm764 = vcmask 72704
    %v766 = vsel %vm764, %v735, 0
    %v769 = vsel %vm764, %v736, 0
    %vm771 = vcmask 1043456
    %vm772 = vcmask 1044480
    %v773 = vsel %vm771, 4294967295, 65535
    %v774 = vsel %vm772, %v773, 0
    %v776 = vand.u32 %v759, %v774
    %v779 = vand.u32 %v760, %v774
    %v782 = vand.u32 %v761, %v774
    %v785 = vand.u32 %v762, %v774
    %v788 = vand.u32 %v763, %v774
    %790 = vmatpush.bf16.msra.mxu0 0
    %791 = vmatpush.bf16.msra.mxu0 0
    %792 = vmatpush.bf16.msra.mxu0 0
    %793 = vmatpush.bf16.msra.mxu0 0
    %794 = vmatpush.bf16.msra.mxu0 0
    %795 = vmatpush.bf16.msra.mxu0 0
    %796 = vmatpush.bf16.msra.mxu0 0
    %797 = vmatpush.bf16.msra.mxu0 %v776
    %798 = vmatmul.bf16.gmra.mxu0 %v766
    %v799 = vpop.f32.mrf.mxu0
    %v800 = vadd.f32 0.0, %v799
    %v801 = vpop.f32.mrf.mxu0
    %v802 = vadd.f32 0.0, %v801
    %803 = vmatmul.bf16.gmra.mxu0 %v769
    %v804 = vpop.f32.mrf.mxu0
    %v805 = vadd.f32 0.0, %v804
    %v806 = vpop.f32.mrf.mxu0
    %807 = vdwg.mxu0
    %808 = vmatpush.bf16.msra.mxu0 0
    %809 = vmatpush.bf16.msra.mxu0 0
    %810 = vmatpush.bf16.msra.mxu0 0
    %811 = vmatpush.bf16.msra.mxu0 0
    %812 = vmatpush.bf16.msra.mxu0 0
    %813 = vmatpush.bf16.msra.mxu0 0
    %814 = vmatpush.bf16.msra.mxu0 0
    %815 = vmatpush.bf16.msra.mxu0 %v779
    %816 = vmatmul.bf16.gmra.mxu0 %v766
    %v817 = vpop.f32.mrf.mxu0
    %v818 = vadd.f32 0.0, %v817
    %v819 = vpop.f32.mrf.mxu0
    %v820 = vadd.f32 0.0, %v819
    %821 = vmatmul.bf16.gmra.mxu0 %v769
    %v822 = vpop.f32.mrf.mxu0
    %v823 = vadd.f32 0.0, %v822
    %v824 = vpop.f32.mrf.mxu0
    %825 = vdwg.mxu0
    %826 = vmatpush.bf16.msra.mxu0 0
    %827 = vmatpush.bf16.msra.mxu0 0
    %828 = vmatpush.bf16.msra.mxu0 0
    %829 = vmatpush.bf16.msra.mxu0 0
    %830 = vmatpush.bf16.msra.mxu0 0
    %831 = vmatpush.bf16.msra.mxu0 0
    %832 = vmatpush.bf16.msra.mxu0 0
    %833 = vmatpush.bf16.msra.mxu0 %v782
    %834 = vmatmul.bf16.gmra.mxu0 %v766
    %v835 = vpop.f32.mrf.mxu0
    %v836 = vadd.f32 0.0, %v835
    %v837 = vpop.f32.mrf.mxu0
    %v838 = vadd.f32 0.0, %v837
    %839 = vmatmul.bf16.gmra.mxu0 %v769
    %v840 = vpop.f32.mrf.mxu0
    %v841 = vadd.f32 0.0, %v840
    %v842 = vpop.f32.mrf.mxu0
    %843 = vdwg.mxu0
    %844 = vmatpush.bf16.msra.mxu0 0
    %845 = vmatpush.bf16.msra.mxu0 0
    %846 = vmatpush.bf16.msra.mxu0 0
    %847 = vmatpush.bf16.msra.mxu0 0
    %848 = vmatpush.bf16.msra.mxu0 0
    %849 = vmatpush.bf16.msra.mxu0 0
    %850 = vmatpush.bf16.msra.mxu0 0
    %851 = vmatpush.bf16.msra.mxu0 %v785
    %852 = vmatmul.bf16.gmra.mxu0 %v766
    %v853 = vpop.f32.mrf.mxu0
    %v854 = vadd.f32 0.0, %v853
    %v855 = vpop.f32.mrf.mxu0
    %v856 = vadd.f32 0.0, %v855
    %857 = vmatmul.bf16.gmra.mxu0 %v769
    %v858 = vpop.f32.mrf.mxu0
    %v859 = vadd.f32 0.0, %v858
    %v860 = vpop.f32.mrf.mxu0
    %861 = vdwg.mxu0
    %862 = vmatpush.bf16.msra.mxu0 0
    %863 = vmatpush.bf16.msra.mxu0 0
    %864 = vmatpush.bf16.msra.mxu0 0
    %865 = vmatpush.bf16.msra.mxu0 0
    %866 = vmatpush.bf16.msra.mxu0 0
    %867 = vmatpush.bf16.msra.mxu0 0
    %868 = vmatpush.bf16.msra.mxu0 0
    %869 = vmatpush.bf16.msra.mxu0 %v788
    %870 = vmatmul.bf16.gmra.mxu0 %v766
    %v871 = vpop.f32.mrf.mxu0
    %v872 = vadd.f32 0.0, %v871
    %v873 = vpop.f32.mrf.mxu0
    %v874 = vadd.f32 0.0, %v873
    %875 = vmatmul.bf16.gmra.mxu0 %v769
    %v876 = vpop.f32.mrf.mxu0
    %v877 = vadd.f32 0.0, %v876
    %v878 = vpop.f32.mrf.mxu0
    %879 = vdwg.mxu0
    %v881 = vperm.slane %v731, 0
    %v882 = vperm.slane %v731, 1
    %v883 = vperm.slane %v731, 2
    %v884 = vperm.slane %v731, 3
    %v885 = vperm.slane %v731, 4
    %v891 = vadd.f32 %v881, %v800
    %v892 = vadd.f32 %v882, %v818
    %v893 = vadd.f32 %v883, %v836
    %v894 = vadd.f32 %v884, %v854
    %v895 = vadd.f32 %v885, %v872
    %v896 = vadd.f32 %v881, %v802
    %v897 = vadd.f32 %v882, %v820
    %v898 = vadd.f32 %v883, %v838
    %v899 = vadd.f32 %v884, %v856
    %v900 = vadd.f32 %v885, %v874
    %v901 = vadd.f32 %v881, %v805
    %v902 = vadd.f32 %v882, %v823
    %v903 = vadd.f32 %v883, %v841
    %v904 = vadd.f32 %v884, %v859
    %v905 = vadd.f32 %v885, %v877
    %v906 = vld [vmem:[%s1 + $0x2] sm:$0xff]
    %v907 = vld [vmem:[%s1 + $0xa] sm:$0xff]
    %v908 = vld [vmem:[%s1 + $0x12] sm:$0xf]
    %v909 = vpack.c.bf16 %v907, %v906
    %v910 = vpack.c.bf16 %v908, %v908
    %s911 = scalar_lea.vmem %s10, 40
    %v912 = vld [vmem:[%s911] sm:$0xff]
    %v913 = vld [vmem:[%s911 + $0x8] sm:$0xff]
    %v914 = vld [vmem:[%s911 + $0x10] sm:$0xf]
    %v915 = vld [vmem:[%s911 + $0x14] sm:$0x11]
    %v916 = vld [vmem:[%s911 + $0x1c] sm:$0x11]
    %v917 = vld [vmem:[%s911 + $0x24] sm:$0x1]
    %v924 = vunpack.c.l.b16 %v912
    %v925 = vunpack.c.h.b16 %v912
    %v926 = vunpack.c.l.b16 %v913
    %v927 = vunpack.c.h.b16 %v913
    %v928 = vunpack.c.l.b16 %v914
    %v929 = vunpack.c.l.b16 %v915
    %v930 = vunpack.c.h.b16 %v915
    %v931 = vunpack.c.l.b16 %v916
    %v932 = vunpack.c.h.b16 %v916
    %v933 = vunpack.c.l.b16 %v917
    %v934 = vpack.c.b16 %v929, %v924
    %v935 = vpack.c.b16 %v930, %v925
    %v936 = vpack.c.b16 %v931, %v926
    %v937 = vpack.c.b16 %v932, %v927
    %v938 = vpack.c.b16 %v933, %v928
    %v940 = vsel %vm764, %v909, 0
    %v943 = vsel %vm764, %v910, 0
    %v946 = vand.u32 %v934, %v774
    %v949 = vand.u32 %v935, %v774
    %v952 = vand.u32 %v936, %v774
    %v955 = vand.u32 %v937, %v774
    %v958 = vand.u32 %v938, %v774
    %960 = vmatpush.bf16.msra.mxu0 0
    %961 = vmatpush.bf16.msra.mxu0 0
    %962 = vmatpush.bf16.msra.mxu0 0
    %963 = vmatpush.bf16.msra.mxu0 0
    %964 = vmatpush.bf16.msra.mxu0 0
    %965 = vmatpush.bf16.msra.mxu0 0
    %966 = vmatpush.bf16.msra.mxu0 0
    %967 = vmatpush.bf16.msra.mxu0 %v946
    %968 = vmatmul.bf16.gmra.mxu0 %v940
    %v969 = vpop.f32.mrf.mxu0
    %v970 = vadd.f32 0.0, %v969
    %v971 = vpop.f32.mrf.mxu0
    %v972 = vadd.f32 0.0, %v971
    %973 = vmatmul.bf16.gmra.mxu0 %v943
    %v974 = vpop.f32.mrf.mxu0
    %v975 = vadd.f32 0.0, %v974
    %v976 = vpop.f32.mrf.mxu0
    %977 = vdwg.mxu0
    %978 = vmatpush.bf16.msra.mxu0 0
    %979 = vmatpush.bf16.msra.mxu0 0
    %980 = vmatpush.bf16.msra.mxu0 0
    %981 = vmatpush.bf16.msra.mxu0 0
    %982 = vmatpush.bf16.msra.mxu0 0
    %983 = vmatpush.bf16.msra.mxu0 0
    %984 = vmatpush.bf16.msra.mxu0 0
    %985 = vmatpush.bf16.msra.mxu0 %v949
    %986 = vmatmul.bf16.gmra.mxu0 %v940
    %v987 = vpop.f32.mrf.mxu0
    %v988 = vadd.f32 0.0, %v987
    %v989 = vpop.f32.mrf.mxu0
    %v990 = vadd.f32 0.0, %v989
    %991 = vmatmul.bf16.gmra.mxu0 %v943
    %v992 = vpop.f32.mrf.mxu0
    %v993 = vadd.f32 0.0, %v992
    %v994 = vpop.f32.mrf.mxu0
    %995 = vdwg.mxu0
    %996 = vmatpush.bf16.msra.mxu0 0
    %997 = vmatpush.bf16.msra.mxu0 0
    %998 = vmatpush.bf16.msra.mxu0 0
    %999 = vmatpush.bf16.msra.mxu0 0
    %1000 = vmatpush.bf16.msra.mxu0 0
    %1001 = vmatpush.bf16.msra.mxu0 0
    %1002 = vmatpush.bf16.msra.mxu0 0
    %1003 = vmatpush.bf16.msra.mxu0 %v952
    %1004 = vmatmul.bf16.gmra.mxu0 %v940
    %v1005 = vpop.f32.mrf.mxu0
    %v1006 = vadd.f32 0.0, %v1005
    %v1007 = vpop.f32.mrf.mxu0
    %v1008 = vadd.f32 0.0, %v1007
    %1009 = vmatmul.bf16.gmra.mxu0 %v943
    %v1010 = vpop.f32.mrf.mxu0
    %v1011 = vadd.f32 0.0, %v1010
    %v1012 = vpop.f32.mrf.mxu0
    %1013 = vdwg.mxu0
    %1014 = vmatpush.bf16.msra.mxu0 0
    %1015 = vmatpush.bf16.msra.mxu0 0
    %1016 = vmatpush.bf16.msra.mxu0 0
    %1017 = vmatpush.bf16.msra.mxu0 0
    %1018 = vmatpush.bf16.msra.mxu0 0
    %1019 = vmatpush.bf16.msra.mxu0 0
    %1020 = vmatpush.bf16.msra.mxu0 0
    %1021 = vmatpush.bf16.msra.mxu0 %v955
    %1022 = vmatmul.bf16.gmra.mxu0 %v940
    %v1023 = vpop.f32.mrf.mxu0
    %v1024 = vadd.f32 0.0, %v1023
    %v1025 = vpop.f32.mrf.mxu0
    %v1026 = vadd.f32 0.0, %v1025
    %1027 = vmatmul.bf16.gmra.mxu0 %v943
    %v1028 = vpop.f32.mrf.mxu0
    %v1029 = vadd.f32 0.0, %v1028
    %v1030 = vpop.f32.mrf.mxu0
    %1031 = vdwg.mxu0
    %1032 = vmatpush.bf16.msra.mxu0 0
    %1033 = vmatpush.bf16.msra.mxu0 0
    %1034 = vmatpush.bf16.msra.mxu0 0
    %1035 = vmatpush.bf16.msra.mxu0 0
    %1036 = vmatpush.bf16.msra.mxu0 0
    %1037 = vmatpush.bf16.msra.mxu0 0
    %1038 = vmatpush.bf16.msra.mxu0 0
    %1039 = vmatpush.bf16.msra.mxu0 %v958
    %1040 = vmatmul.bf16.gmra.mxu0 %v940
    %v1041 = vpop.f32.mrf.mxu0
    %v1042 = vadd.f32 0.0, %v1041
    %v1043 = vpop.f32.mrf.mxu0
    %v1044 = vadd.f32 0.0, %v1043
    %1045 = vmatmul.bf16.gmra.mxu0 %v943
    %v1046 = vpop.f32.mrf.mxu0
    %v1047 = vadd.f32 0.0, %v1046
    %v1048 = vpop.f32.mrf.mxu0
    %1049 = vdwg.mxu0
    %v1050 = vadd.f32 %v891, %v970
    %v1051 = vadd.f32 %v892, %v988
    %v1052 = vadd.f32 %v893, %v1006
    %v1053 = vadd.f32 %v894, %v1024
    %v1054 = vadd.f32 %v895, %v1042
    %v1055 = vadd.f32 %v896, %v972
    %v1056 = vadd.f32 %v897, %v990
    %v1057 = vadd.f32 %v898, %v1008
    %v1058 = vadd.f32 %v899, %v1026
    %v1059 = vadd.f32 %v900, %v1044
    %v1060 = vadd.f32 %v901, %v975
    %v1061 = vadd.f32 %v902, %v993
    %v1062 = vadd.f32 %v903, %v1011
    %v1063 = vadd.f32 %v904, %v1029
    %v1064 = vadd.f32 %v905, %v1047
    %v1065 = vld [vmem:[%s1 + $0x4] sm:$0xff]
    %v1066 = vld [vmem:[%s1 + $0xc] sm:$0xff]
    %v1067 = vld [vmem:[%s1 + $0x14] sm:$0xf]
    %v1068 = vpack.c.bf16 %v1066, %v1065
    %v1069 = vpack.c.bf16 %v1067, %v1067
    %s1070 = scalar_lea.vmem %s10, 80
    %v1071 = vld [vmem:[%s1070] sm:$0xff]
    %v1072 = vld [vmem:[%s1070 + $0x8] sm:$0xff]
    %v1073 = vld [vmem:[%s1070 + $0x10] sm:$0xf]
    %v1074 = vld [vmem:[%s1070 + $0x14] sm:$0x11]
    %v1075 = vld [vmem:[%s1070 + $0x1c] sm:$0x11]
    %v1076 = vld [vmem:[%s1070 + $0x24] sm:$0x1]
    %v1083 = vunpack.c.l.b16 %v1071
    %v1084 = vunpack.c.h.b16 %v1071
    %v1085 = vunpack.c.l.b16 %v1072
    %v1086 = vunpack.c.h.b16 %v1072
    %v1087 = vunpack.c.l.b16 %v1073
    %v1088 = vunpack.c.l.b16 %v1074
    %v1089 = vunpack.c.h.b16 %v1074
    %v1090 = vunpack.c.l.b16 %v1075
    %v1091 = vunpack.c.h.b16 %v1075
    %v1092 = vunpack.c.l.b16 %v1076
    %v1093 = vpack.c.b16 %v1088, %v1083
    %v1094 = vpack.c.b16 %v1089, %v1084
    %v1095 = vpack.c.b16 %v1090, %v1085
    %v1096 = vpack.c.b16 %v1091, %v1086
    %v1097 = vpack.c.b16 %v1092, %v1087
    %v1099 = vsel %vm764, %v1068, 0
    %v1102 = vsel %vm764, %v1069, 0
    %v1105 = vand.u32 %v1093, %v774
    %v1108 = vand.u32 %v1094, %v774
    %v1111 = vand.u32 %v1095, %v774
    %v1114 = vand.u32 %v1096, %v774
    %v1117 = vand.u32 %v1097, %v774
    %1119 = vmatpush.bf16.msra.mxu0 0
    %1120 = vmatpush.bf16.msra.mxu0 0
    %1121 = vmatpush.bf16.msra.mxu0 0
    %1122 = vmatpush.bf16.msra.mxu0 0
    %1123 = vmatpush.bf16.msra.mxu0 0
    %1124 = vmatpush.bf16.msra.mxu0 0
    %1125 = vmatpush.bf16.msra.mxu0 0
    %1126 = vmatpush.bf16.msra.mxu0 %v1105
    %1127 = vmatmul.bf16.gmra.mxu0 %v1099
    %v1128 = vpop.f32.mrf.mxu0
    %v1129 = vadd.f32 0.0, %v1128
    %v1130 = vpop.f32.mrf.mxu0
    %v1131 = vadd.f32 0.0, %v1130
    %1132 = vmatmul.bf16.gmra.mxu0 %v1102
    %v1133 = vpop.f32.mrf.mxu0
    %v1134 = vadd.f32 0.0, %v1133
    %v1135 = vpop.f32.mrf.mxu0
    %1136 = vdwg.mxu0
    %1137 = vmatpush.bf16.msra.mxu0 0
    %1138 = vmatpush.bf16.msra.mxu0 0
    %1139 = vmatpush.bf16.msra.mxu0 0
    %1140 = vmatpush.bf16.msra.mxu0 0
    %1141 = vmatpush.bf16.msra.mxu0 0
    %1142 = vmatpush.bf16.msra.mxu0 0
    %1143 = vmatpush.bf16.msra.mxu0 0
    %1144 = vmatpush.bf16.msra.mxu0 %v1108
    %1145 = vmatmul.bf16.gmra.mxu0 %v1099
    %v1146 = vpop.f32.mrf.mxu0
    %v1147 = vadd.f32 0.0, %v1146
    %v1148 = vpop.f32.mrf.mxu0
    %v1149 = vadd.f32 0.0, %v1148
    %1150 = vmatmul.bf16.gmra.mxu0 %v1102
    %v1151 = vpop.f32.mrf.mxu0
    %v1152 = vadd.f32 0.0, %v1151
    %v1153 = vpop.f32.mrf.mxu0
    %1154 = vdwg.mxu0
    %1155 = vmatpush.bf16.msra.mxu0 0
    %1156 = vmatpush.bf16.msra.mxu0 0
    %1157 = vmatpush.bf16.msra.mxu0 0
    %1158 = vmatpush.bf16.msra.mxu0 0
    %1159 = vmatpush.bf16.msra.mxu0 0
    %1160 = vmatpush.bf16.msra.mxu0 0
    %1161 = vmatpush.bf16.msra.mxu0 0
    %1162 = vmatpush.bf16.msra.mxu0 %v1111
    %1163 = vmatmul.bf16.gmra.mxu0 %v1099
    %v1164 = vpop.f32.mrf.mxu0
    %v1165 = vadd.f32 0.0, %v1164
    %v1166 = vpop.f32.mrf.mxu0
    %v1167 = vadd.f32 0.0, %v1166
    %1168 = vmatmul.bf16.gmra.mxu0 %v1102
    %v1169 = vpop.f32.mrf.mxu0
    %v1170 = vadd.f32 0.0, %v1169
    %v1171 = vpop.f32.mrf.mxu0
    %1172 = vdwg.mxu0
    %1173 = vmatpush.bf16.msra.mxu0 0
    %1174 = vmatpush.bf16.msra.mxu0 0
    %1175 = vmatpush.bf16.msra.mxu0 0
    %1176 = vmatpush.bf16.msra.mxu0 0
    %1177 = vmatpush.bf16.msra.mxu0 0
    %1178 = vmatpush.bf16.msra.mxu0 0
    %1179 = vmatpush.bf16.msra.mxu0 0
    %1180 = vmatpush.bf16.msra.mxu0 %v1114
    %1181 = vmatmul.bf16.gmra.mxu0 %v1099
    %v1182 = vpop.f32.mrf.mxu0
    %v1183 = vadd.f32 0.0, %v1182
    %v1184 = vpop.f32.mrf.mxu0
    %v1185 = vadd.f32 0.0, %v1184
    %1186 = vmatmul.bf16.gmra.mxu0 %v1102
    %v1187 = vpop.f32.mrf.mxu0
    %v1188 = vadd.f32 0.0, %v1187
    %v1189 = vpop.f32.mrf.mxu0
    %1190 = vdwg.mxu0
    %1191 = vmatpush.bf16.msra.mxu0 0
    %1192 = vmatpush.bf16.msra.mxu0 0
    %1193 = vmatpush.bf16.msra.mxu0 0
    %1194 = vmatpush.bf16.msra.mxu0 0
    %1195 = vmatpush.bf16.msra.mxu0 0
    %1196 = vmatpush.bf16.msra.mxu0 0
    %1197 = vmatpush.bf16.msra.mxu0 0
    %1198 = vmatpush.bf16.msra.mxu0 %v1117
    %1199 = vmatmul.bf16.gmra.mxu0 %v1099
    %v1200 = vpop.f32.mrf.mxu0
    %v1201 = vadd.f32 0.0, %v1200
    %v1202 = vpop.f32.mrf.mxu0
    %v1203 = vadd.f32 0.0, %v1202
    %1204 = vmatmul.bf16.gmra.mxu0 %v1102
    %v1205 = vpop.f32.mrf.mxu0
    %v1206 = vadd.f32 0.0, %v1205
    %v1207 = vpop.f32.mrf.mxu0
    %1208 = vdwg.mxu0
    %v1209 = vadd.f32 %v1050, %v1129
    %v1210 = vadd.f32 %v1051, %v1147
    %v1211 = vadd.f32 %v1052, %v1165
    %v1212 = vadd.f32 %v1053, %v1183
    %v1213 = vadd.f32 %v1054, %v1201
    %v1214 = vadd.f32 %v1055, %v1131
    %v1215 = vadd.f32 %v1056, %v1149
    %v1216 = vadd.f32 %v1057, %v1167
    %v1217 = vadd.f32 %v1058, %v1185
    %v1218 = vadd.f32 %v1059, %v1203
    %v1219 = vadd.f32 %v1060, %v1134
    %v1220 = vadd.f32 %v1061, %v1152
    %v1221 = vadd.f32 %v1062, %v1170
    %v1222 = vadd.f32 %v1063, %v1188
    %v1223 = vadd.f32 %v1064, %v1206
    %v1224 = vld [vmem:[%s1 + $0x6] sm:$0xff]
    %v1225 = vld [vmem:[%s1 + $0xe] sm:$0xff]
    %v1226 = vld [vmem:[%s1 + $0x16] sm:$0xf]
    %v1227 = vpack.c.bf16 %v1225, %v1224
    %v1228 = vpack.c.bf16 %v1226, %v1226
    %s1229 = scalar_lea.vmem %s10, 120
    %v1230 = vld [vmem:[%s1229] sm:$0xff]
    %v1231 = vld [vmem:[%s1229 + $0x8] sm:$0xff]
    %v1232 = vld [vmem:[%s1229 + $0x10] sm:$0xf]
    %v1233 = vld [vmem:[%s1229 + $0x14] sm:$0x11]
    %v1234 = vld [vmem:[%s1229 + $0x1c] sm:$0x11]
    %v1235 = vld [vmem:[%s1229 + $0x24] sm:$0x1]
    %v1242 = vunpack.c.l.b16 %v1230
    %v1243 = vunpack.c.h.b16 %v1230
    %v1244 = vunpack.c.l.b16 %v1231
    %v1245 = vunpack.c.h.b16 %v1231
    %v1246 = vunpack.c.l.b16 %v1232
    %v1247 = vunpack.c.l.b16 %v1233
    %v1248 = vunpack.c.h.b16 %v1233
    %v1249 = vunpack.c.l.b16 %v1234
    %v1250 = vunpack.c.h.b16 %v1234
    %v1251 = vunpack.c.l.b16 %v1235
    %v1252 = vpack.c.b16 %v1247, %v1242
    %v1253 = vpack.c.b16 %v1248, %v1243
    %v1254 = vpack.c.b16 %v1249, %v1244
    %v1255 = vpack.c.b16 %v1250, %v1245
    %v1256 = vpack.c.b16 %v1251, %v1246
    %v1258 = vsel %vm764, %v1227, 0
    %v1261 = vsel %vm764, %v1228, 0
    %v1264 = vand.u32 %v1252, %v774
    %v1267 = vand.u32 %v1253, %v774
    %v1270 = vand.u32 %v1254, %v774
    %v1273 = vand.u32 %v1255, %v774
    %v1276 = vand.u32 %v1256, %v774
    %1278 = vmatpush.bf16.msra.mxu0 0
    %1279 = vmatpush.bf16.msra.mxu0 0
    %1280 = vmatpush.bf16.msra.mxu0 0
    %1281 = vmatpush.bf16.msra.mxu0 0
    %1282 = vmatpush.bf16.msra.mxu0 0
    %1283 = vmatpush.bf16.msra.mxu0 0
    %1284 = vmatpush.bf16.msra.mxu0 0
    %1285 = vmatpush.bf16.msra.mxu0 %v1264
    %1286 = vmatmul.bf16.gmra.mxu0 %v1258
    %v1287 = vpop.f32.mrf.mxu0
    %v1288 = vadd.f32 0.0, %v1287
    %v1289 = vpop.f32.mrf.mxu0
    %v1290 = vadd.f32 0.0, %v1289
    %1291 = vmatmul.bf16.gmra.mxu0 %v1261
    %v1292 = vpop.f32.mrf.mxu0
    %v1293 = vadd.f32 0.0, %v1292
    %v1294 = vpop.f32.mrf.mxu0
    %1295 = vdwg.mxu0
    %1296 = vmatpush.bf16.msra.mxu0 0
    %1297 = vmatpush.bf16.msra.mxu0 0
    %1298 = vmatpush.bf16.msra.mxu0 0
    %1299 = vmatpush.bf16.msra.mxu0 0
    %1300 = vmatpush.bf16.msra.mxu0 0
    %1301 = vmatpush.bf16.msra.mxu0 0
    %1302 = vmatpush.bf16.msra.mxu0 0
    %1303 = vmatpush.bf16.msra.mxu0 %v1267
    %1304 = vmatmul.bf16.gmra.mxu0 %v1258
    %v1305 = vpop.f32.mrf.mxu0
    %v1306 = vadd.f32 0.0, %v1305
    %v1307 = vpop.f32.mrf.mxu0
    %v1308 = vadd.f32 0.0, %v1307
    %1309 = vmatmul.bf16.gmra.mxu0 %v1261
    %v1310 = vpop.f32.mrf.mxu0
    %v1311 = vadd.f32 0.0, %v1310
    %v1312 = vpop.f32.mrf.mxu0
    %1313 = vdwg.mxu0
    %1314 = vmatpush.bf16.msra.mxu0 0
    %1315 = vmatpush.bf16.msra.mxu0 0
    %1316 = vmatpush.bf16.msra.mxu0 0
    %1317 = vmatpush.bf16.msra.mxu0 0
    %1318 = vmatpush.bf16.msra.mxu0 0
    %1319 = vmatpush.bf16.msra.mxu0 0
    %1320 = vmatpush.bf16.msra.mxu0 0
    %1321 = vmatpush.bf16.msra.mxu0 %v1270
    %1322 = vmatmul.bf16.gmra.mxu0 %v1258
    %v1323 = vpop.f32.mrf.mxu0
    %v1324 = vadd.f32 0.0, %v1323
    %v1325 = vpop.f32.mrf.mxu0
    %v1326 = vadd.f32 0.0, %v1325
    %1327 = vmatmul.bf16.gmra.mxu0 %v1261
    %v1328 = vpop.f32.mrf.mxu0
    %v1329 = vadd.f32 0.0, %v1328
    %v1330 = vpop.f32.mrf.mxu0
    %1331 = vdwg.mxu0
    %1332 = vmatpush.bf16.msra.mxu0 0
    %1333 = vmatpush.bf16.msra.mxu0 0
    %1334 = vmatpush.bf16.msra.mxu0 0
    %1335 = vmatpush.bf16.msra.mxu0 0
    %1336 = vmatpush.bf16.msra.mxu0 0
    %1337 = vmatpush.bf16.msra.mxu0 0
    %1338 = vmatpush.bf16.msra.mxu0 0
    %1339 = vmatpush.bf16.msra.mxu0 %v1273
    %1340 = vmatmul.bf16.gmra.mxu0 %v1258
    %v1341 = vpop.f32.mrf.mxu0
    %v1342 = vadd.f32 0.0, %v1341
    %v1343 = vpop.f32.mrf.mxu0
    %v1344 = vadd.f32 0.0, %v1343
    %1345 = vmatmul.bf16.gmra.mxu0 %v1261
    %v1346 = vpop.f32.mrf.mxu0
    %v1347 = vadd.f32 0.0, %v1346
    %v1348 = vpop.f32.mrf.mxu0
    %1349 = vdwg.mxu0
    %1350 = vmatpush.bf16.msra.mxu0 0
    %1351 = vmatpush.bf16.msra.mxu0 0
    %1352 = vmatpush.bf16.msra.mxu0 0
    %1353 = vmatpush.bf16.msra.mxu0 0
    %1354 = vmatpush.bf16.msra.mxu0 0
    %1355 = vmatpush.bf16.msra.mxu0 0
    %1356 = vmatpush.bf16.msra.mxu0 0
    %1357 = vmatpush.bf16.msra.mxu0 %v1276
    %1358 = vmatmul.bf16.gmra.mxu0 %v1258
    %v1359 = vpop.f32.mrf.mxu0
    %v1360 = vadd.f32 0.0, %v1359
    %v1361 = vpop.f32.mrf.mxu0
    %v1362 = vadd.f32 0.0, %v1361
    %1363 = vmatmul.bf16.gmra.mxu0 %v1261
    %v1364 = vpop.f32.mrf.mxu0
    %v1365 = vadd.f32 0.0, %v1364
    %v1366 = vpop.f32.mrf.mxu0
    %1367 = vdwg.mxu0
    %v1368 = vadd.f32 %v1209, %v1288
    %v1369 = vadd.f32 %v1210, %v1306
    %v1370 = vadd.f32 %v1211, %v1324
    %v1371 = vadd.f32 %v1212, %v1342
    %v1372 = vadd.f32 %v1213, %v1360
    %v1373 = vadd.f32 %v1214, %v1290
    %v1374 = vadd.f32 %v1215, %v1308
    %v1375 = vadd.f32 %v1216, %v1326
    %v1376 = vadd.f32 %v1217, %v1344
    %v1377 = vadd.f32 %v1218, %v1362
    %v1378 = vadd.f32 %v1219, %v1293
    %v1379 = vadd.f32 %v1220, %v1311
    %v1380 = vadd.f32 %v1221, %v1329
    %v1381 = vadd.f32 %v1222, %v1347
    %v1382 = vadd.f32 %v1223, %v1365
    %v1383 = vld [vmem:[%s1 + $0x8] sm:$0xff]
    %v1384 = vld [vmem:[%s1 + $0x10] sm:$0xff]
    %v1385 = vld [vmem:[%s1 + $0x18] sm:$0xf]
    %v1386 = vpack.c.bf16 %v1384, %v1383
    %v1387 = vpack.c.bf16 %v1385, %v1385
    %s1388 = scalar_lea.vmem %s10, 160
    %v1389 = vld [vmem:[%s1388] sm:$0xff]
    %v1390 = vld [vmem:[%s1388 + $0x8] sm:$0xff]
    %v1391 = vld [vmem:[%s1388 + $0x10] sm:$0xf]
    %v1392 = vld [vmem:[%s1388 + $0x14] sm:$0x11]
    %v1393 = vld [vmem:[%s1388 + $0x1c] sm:$0x11]
    %v1394 = vld [vmem:[%s1388 + $0x24] sm:$0x1]
    %v1401 = vunpack.c.l.b16 %v1389
    %v1402 = vunpack.c.h.b16 %v1389
    %v1403 = vunpack.c.l.b16 %v1390
    %v1404 = vunpack.c.h.b16 %v1390
    %v1405 = vunpack.c.l.b16 %v1391
    %v1406 = vunpack.c.l.b16 %v1392
    %v1407 = vunpack.c.h.b16 %v1392
    %v1408 = vunpack.c.l.b16 %v1393
    %v1409 = vunpack.c.h.b16 %v1393
    %v1410 = vunpack.c.l.b16 %v1394
    %v1411 = vpack.c.b16 %v1406, %v1401
    %v1412 = vpack.c.b16 %v1407, %v1402
    %v1413 = vpack.c.b16 %v1408, %v1403
    %v1414 = vpack.c.b16 %v1409, %v1404
    %v1415 = vpack.c.b16 %v1410, %v1405
    %v1417 = vsel %vm764, %v1386, 0
    %v1420 = vsel %vm764, %v1387, 0
    %v1423 = vand.u32 %v1411, %v774
    %v1426 = vand.u32 %v1412, %v774
    %v1429 = vand.u32 %v1413, %v774
    %v1432 = vand.u32 %v1414, %v774
    %v1435 = vand.u32 %v1415, %v774
    %1437 = vmatpush.bf16.msra.mxu0 0
    %1438 = vmatpush.bf16.msra.mxu0 0
    %1439 = vmatpush.bf16.msra.mxu0 0
    %1440 = vmatpush.bf16.msra.mxu0 0
    %1441 = vmatpush.bf16.msra.mxu0 0
    %1442 = vmatpush.bf16.msra.mxu0 0
    %1443 = vmatpush.bf16.msra.mxu0 0
    %1444 = vmatpush.bf16.msra.mxu0 %v1423
    %1445 = vmatmul.bf16.gmra.mxu0 %v1417
    %v1446 = vpop.f32.mrf.mxu0
    %v1447 = vadd.f32 0.0, %v1446
    %v1448 = vpop.f32.mrf.mxu0
    %v1449 = vadd.f32 0.0, %v1448
    %1450 = vmatmul.bf16.gmra.mxu0 %v1420
    %v1451 = vpop.f32.mrf.mxu0
    %v1452 = vadd.f32 0.0, %v1451
    %v1453 = vpop.f32.mrf.mxu0
    %1454 = vdwg.mxu0
    %1455 = vmatpush.bf16.msra.mxu0 0
    %1456 = vmatpush.bf16.msra.mxu0 0
    %1457 = vmatpush.bf16.msra.mxu0 0
    %1458 = vmatpush.bf16.msra.mxu0 0
    %1459 = vmatpush.bf16.msra.mxu0 0
    %1460 = vmatpush.bf16.msra.mxu0 0
    %1461 = vmatpush.bf16.msra.mxu0 0
    %1462 = vmatpush.bf16.msra.mxu0 %v1426
    %1463 = vmatmul.bf16.gmra.mxu0 %v1417
    %v1464 = vpop.f32.mrf.mxu0
    %v1465 = vadd.f32 0.0, %v1464
    %v1466 = vpop.f32.mrf.mxu0
    %v1467 = vadd.f32 0.0, %v1466
    %1468 = vmatmul.bf16.gmra.mxu0 %v1420
    %v1469 = vpop.f32.mrf.mxu0
    %v1470 = vadd.f32 0.0, %v1469
    %v1471 = vpop.f32.mrf.mxu0
    %1472 = vdwg.mxu0
    %1473 = vmatpush.bf16.msra.mxu0 0
    %1474 = vmatpush.bf16.msra.mxu0 0
    %1475 = vmatpush.bf16.msra.mxu0 0
    %1476 = vmatpush.bf16.msra.mxu0 0
    %1477 = vmatpush.bf16.msra.mxu0 0
    %1478 = vmatpush.bf16.msra.mxu0 0
    %1479 = vmatpush.bf16.msra.mxu0 0
    %1480 = vmatpush.bf16.msra.mxu0 %v1429
    %1481 = vmatmul.bf16.gmra.mxu0 %v1417
    %v1482 = vpop.f32.mrf.mxu0
    %v1483 = vadd.f32 0.0, %v1482
    %v1484 = vpop.f32.mrf.mxu0
    %v1485 = vadd.f32 0.0, %v1484
    %1486 = vmatmul.bf16.gmra.mxu0 %v1420
    %v1487 = vpop.f32.mrf.mxu0
    %v1488 = vadd.f32 0.0, %v1487
    %v1489 = vpop.f32.mrf.mxu0
    %1490 = vdwg.mxu0
    %1491 = vmatpush.bf16.msra.mxu0 0
    %1492 = vmatpush.bf16.msra.mxu0 0
    %1493 = vmatpush.bf16.msra.mxu0 0
    %1494 = vmatpush.bf16.msra.mxu0 0
    %1495 = vmatpush.bf16.msra.mxu0 0
    %1496 = vmatpush.bf16.msra.mxu0 0
    %1497 = vmatpush.bf16.msra.mxu0 0
    %1498 = vmatpush.bf16.msra.mxu0 %v1432
    %1499 = vmatmul.bf16.gmra.mxu0 %v1417
    %v1500 = vpop.f32.mrf.mxu0
    %v1501 = vadd.f32 0.0, %v1500
    %v1502 = vpop.f32.mrf.mxu0
    %v1503 = vadd.f32 0.0, %v1502
    %1504 = vmatmul.bf16.gmra.mxu0 %v1420
    %v1505 = vpop.f32.mrf.mxu0
    %v1506 = vadd.f32 0.0, %v1505
    %v1507 = vpop.f32.mrf.mxu0
    %1508 = vdwg.mxu0
    %1509 = vmatpush.bf16.msra.mxu0 0
    %1510 = vmatpush.bf16.msra.mxu0 0
    %1511 = vmatpush.bf16.msra.mxu0 0
    %1512 = vmatpush.bf16.msra.mxu0 0
    %1513 = vmatpush.bf16.msra.mxu0 0
    %1514 = vmatpush.bf16.msra.mxu0 0
    %1515 = vmatpush.bf16.msra.mxu0 0
    %1516 = vmatpush.bf16.msra.mxu0 %v1435
    %1517 = vmatmul.bf16.gmra.mxu0 %v1417
    %v1518 = vpop.f32.mrf.mxu0
    %v1519 = vadd.f32 0.0, %v1518
    %v1520 = vpop.f32.mrf.mxu0
    %v1521 = vadd.f32 0.0, %v1520
    %1522 = vmatmul.bf16.gmra.mxu0 %v1420
    %v1523 = vpop.f32.mrf.mxu0
    %v1524 = vadd.f32 0.0, %v1523
    %v1525 = vpop.f32.mrf.mxu0
    %1526 = vdwg.mxu0
    %v1527 = vadd.f32 %v1368, %v1447
    %v1528 = vadd.f32 %v1369, %v1465
    %v1529 = vadd.f32 %v1370, %v1483
    %v1530 = vadd.f32 %v1371, %v1501
    %v1531 = vadd.f32 %v1372, %v1519
    %v1532 = vadd.f32 %v1373, %v1449
    %v1533 = vadd.f32 %v1374, %v1467
    %v1534 = vadd.f32 %v1375, %v1485
    %v1535 = vadd.f32 %v1376, %v1503
    %v1536 = vadd.f32 %v1377, %v1521
    %v1537 = vadd.f32 %v1378, %v1452
    %v1538 = vadd.f32 %v1379, %v1470
    %v1539 = vadd.f32 %v1380, %v1488
    %v1540 = vadd.f32 %v1381, %v1506
    %v1541 = vadd.f32 %v1382, %v1524
    %v1542 = vld [vmem:[%s1 + $0xa] sm:$0xff]
    %v1543 = vld [vmem:[%s1 + $0x12] sm:$0xff]
    %v1544 = vld [vmem:[%s1 + $0x1a] sm:$0xf]
    %v1545 = vpack.c.bf16 %v1543, %v1542
    %v1546 = vpack.c.bf16 %v1544, %v1544
    %s1547 = scalar_lea.vmem %s10, 200
    %v1548 = vld [vmem:[%s1547] sm:$0xff]
    %v1549 = vld [vmem:[%s1547 + $0x8] sm:$0xff]
    %v1550 = vld [vmem:[%s1547 + $0x10] sm:$0xf]
    %v1551 = vld [vmem:[%s1547 + $0x14] sm:$0x11]
    %v1552 = vld [vmem:[%s1547 + $0x1c] sm:$0x11]
    %v1553 = vld [vmem:[%s1547 + $0x24] sm:$0x1]
    %v1560 = vunpack.c.l.b16 %v1548
    %v1561 = vunpack.c.h.b16 %v1548
    %v1562 = vunpack.c.l.b16 %v1549
    %v1563 = vunpack.c.h.b16 %v1549
    %v1564 = vunpack.c.l.b16 %v1550
    %v1565 = vunpack.c.l.b16 %v1551
    %v1566 = vunpack.c.h.b16 %v1551
    %v1567 = vunpack.c.l.b16 %v1552
    %v1568 = vunpack.c.h.b16 %v1552
    %v1569 = vunpack.c.l.b16 %v1553
    %v1570 = vpack.c.b16 %v1565, %v1560
    %v1571 = vpack.c.b16 %v1566, %v1561
    %v1572 = vpack.c.b16 %v1567, %v1562
    %v1573 = vpack.c.b16 %v1568, %v1563
    %v1574 = vpack.c.b16 %v1569, %v1564
    %v1576 = vsel %vm764, %v1545, 0
    %v1579 = vsel %vm764, %v1546, 0
    %v1582 = vand.u32 %v1570, %v774
    %v1585 = vand.u32 %v1571, %v774
    %v1588 = vand.u32 %v1572, %v774
    %v1591 = vand.u32 %v1573, %v774
    %v1594 = vand.u32 %v1574, %v774
    %1596 = vmatpush.bf16.msra.mxu0 0
    %1597 = vmatpush.bf16.msra.mxu0 0
    %1598 = vmatpush.bf16.msra.mxu0 0
    %1599 = vmatpush.bf16.msra.mxu0 0
    %1600 = vmatpush.bf16.msra.mxu0 0
    %1601 = vmatpush.bf16.msra.mxu0 0
    %1602 = vmatpush.bf16.msra.mxu0 0
    %1603 = vmatpush.bf16.msra.mxu0 %v1582
    %1604 = vmatmul.bf16.gmra.mxu0 %v1576
    %v1605 = vpop.f32.mrf.mxu0
    %v1606 = vadd.f32 0.0, %v1605
    %v1607 = vpop.f32.mrf.mxu0
    %v1608 = vadd.f32 0.0, %v1607
    %1609 = vmatmul.bf16.gmra.mxu0 %v1579
    %v1610 = vpop.f32.mrf.mxu0
    %v1611 = vadd.f32 0.0, %v1610
    %v1612 = vpop.f32.mrf.mxu0
    %1613 = vdwg.mxu0
    %1614 = vmatpush.bf16.msra.mxu0 0
    %1615 = vmatpush.bf16.msra.mxu0 0
    %1616 = vmatpush.bf16.msra.mxu0 0
    %1617 = vmatpush.bf16.msra.mxu0 0
    %1618 = vmatpush.bf16.msra.mxu0 0
    %1619 = vmatpush.bf16.msra.mxu0 0
    %1620 = vmatpush.bf16.msra.mxu0 0
    %1621 = vmatpush.bf16.msra.mxu0 %v1585
    %1622 = vmatmul.bf16.gmra.mxu0 %v1576
    %v1623 = vpop.f32.mrf.mxu0
    %v1624 = vadd.f32 0.0, %v1623
    %v1625 = vpop.f32.mrf.mxu0
    %v1626 = vadd.f32 0.0, %v1625
    %1627 = vmatmul.bf16.gmra.mxu0 %v1579
    %v1628 = vpop.f32.mrf.mxu0
    %v1629 = vadd.f32 0.0, %v1628
    %v1630 = vpop.f32.mrf.mxu0
    %1631 = vdwg.mxu0
    %1632 = vmatpush.bf16.msra.mxu0 0
    %1633 = vmatpush.bf16.msra.mxu0 0
    %1634 = vmatpush.bf16.msra.mxu0 0
    %1635 = vmatpush.bf16.msra.mxu0 0
    %1636 = vmatpush.bf16.msra.mxu0 0
    %1637 = vmatpush.bf16.msra.mxu0 0
    %1638 = vmatpush.bf16.msra.mxu0 0
    %1639 = vmatpush.bf16.msra.mxu0 %v1588
    %1640 = vmatmul.bf16.gmra.mxu0 %v1576
    %v1641 = vpop.f32.mrf.mxu0
    %v1642 = vadd.f32 0.0, %v1641
    %v1643 = vpop.f32.mrf.mxu0
    %v1644 = vadd.f32 0.0, %v1643
    %1645 = vmatmul.bf16.gmra.mxu0 %v1579
    %v1646 = vpop.f32.mrf.mxu0
    %v1647 = vadd.f32 0.0, %v1646
    %v1648 = vpop.f32.mrf.mxu0
    %1649 = vdwg.mxu0
    %1650 = vmatpush.bf16.msra.mxu0 0
    %1651 = vmatpush.bf16.msra.mxu0 0
    %1652 = vmatpush.bf16.msra.mxu0 0
    %1653 = vmatpush.bf16.msra.mxu0 0
    %1654 = vmatpush.bf16.msra.mxu0 0
    %1655 = vmatpush.bf16.msra.mxu0 0
    %1656 = vmatpush.bf16.msra.mxu0 0
    %1657 = vmatpush.bf16.msra.mxu0 %v1591
    %1658 = vmatmul.bf16.gmra.mxu0 %v1576
    %v1659 = vpop.f32.mrf.mxu0
    %v1660 = vadd.f32 0.0, %v1659
    %v1661 = vpop.f32.mrf.mxu0
    %v1662 = vadd.f32 0.0, %v1661
    %1663 = vmatmul.bf16.gmra.mxu0 %v1579
    %v1664 = vpop.f32.mrf.mxu0
    %v1665 = vadd.f32 0.0, %v1664
    %v1666 = vpop.f32.mrf.mxu0
    %1667 = vdwg.mxu0
    %1668 = vmatpush.bf16.msra.mxu0 0
    %1669 = vmatpush.bf16.msra.mxu0 0
    %1670 = vmatpush.bf16.msra.mxu0 0
    %1671 = vmatpush.bf16.msra.mxu0 0
    %1672 = vmatpush.bf16.msra.mxu0 0
    %1673 = vmatpush.bf16.msra.mxu0 0
    %1674 = vmatpush.bf16.msra.mxu0 0
    %1675 = vmatpush.bf16.msra.mxu0 %v1594
    %1676 = vmatmul.bf16.gmra.mxu0 %v1576
    %v1677 = vpop.f32.mrf.mxu0
    %v1678 = vadd.f32 0.0, %v1677
    %v1679 = vpop.f32.mrf.mxu0
    %v1680 = vadd.f32 0.0, %v1679
    %1681 = vmatmul.bf16.gmra.mxu0 %v1579
    %v1682 = vpop.f32.mrf.mxu0
    %v1683 = vadd.f32 0.0, %v1682
    %v1684 = vpop.f32.mrf.mxu0
    %1685 = vdwg.mxu0
    %v1686 = vadd.f32 %v1527, %v1606
    %v1687 = vadd.f32 %v1528, %v1624
    %v1688 = vadd.f32 %v1529, %v1642
    %v1689 = vadd.f32 %v1530, %v1660
    %v1690 = vadd.f32 %v1531, %v1678
    %v1691 = vadd.f32 %v1532, %v1608
    %v1692 = vadd.f32 %v1533, %v1626
    %v1693 = vadd.f32 %v1534, %v1644
    %v1694 = vadd.f32 %v1535, %v1662
    %v1695 = vadd.f32 %v1536, %v1680
    %v1696 = vadd.f32 %v1537, %v1611
    %v1697 = vadd.f32 %v1538, %v1629
    %v1698 = vadd.f32 %v1539, %v1647
    %v1699 = vadd.f32 %v1540, %v1665
    %v1700 = vadd.f32 %v1541, %v1683
    %v1701 = vld [vmem:[%s1 + $0xc] sm:$0xff]
    %v1702 = vld [vmem:[%s1 + $0x14] sm:$0xff]
    %v1703 = vld [vmem:[%s1 + $0x1c] sm:$0xf]
    %v1704 = vpack.c.bf16 %v1702, %v1701
    %v1705 = vpack.c.bf16 %v1703, %v1703
    %s1706 = scalar_lea.vmem %s10, 240
    %v1707 = vld [vmem:[%s1706] sm:$0xff]
    %v1708 = vld [vmem:[%s1706 + $0x8] sm:$0xff]
    %v1709 = vld [vmem:[%s1706 + $0x10] sm:$0xf]
    %v1710 = vld [vmem:[%s1706 + $0x14] sm:$0x11]
    %v1711 = vld [vmem:[%s1706 + $0x1c] sm:$0x11]
    %v1712 = vld [vmem:[%s1706 + $0x24] sm:$0x1]
    %v1719 = vunpack.c.l.b16 %v1707
    %v1720 = vunpack.c.h.b16 %v1707
    %v1721 = vunpack.c.l.b16 %v1708
    %v1722 = vunpack.c.h.b16 %v1708
    %v1723 = vunpack.c.l.b16 %v1709
    %v1724 = vunpack.c.l.b16 %v1710
    %v1725 = vunpack.c.h.b16 %v1710
    %v1726 = vunpack.c.l.b16 %v1711
    %v1727 = vunpack.c.h.b16 %v1711
    %v1728 = vunpack.c.l.b16 %v1712
    %v1729 = vpack.c.b16 %v1724, %v1719
    %v1730 = vpack.c.b16 %v1725, %v1720
    %v1731 = vpack.c.b16 %v1726, %v1721
    %v1732 = vpack.c.b16 %v1727, %v1722
    %v1733 = vpack.c.b16 %v1728, %v1723
    %v1735 = vsel %vm764, %v1704, 0
    %v1738 = vsel %vm764, %v1705, 0
    %v1741 = vand.u32 %v1729, %v774
    %v1744 = vand.u32 %v1730, %v774
    %v1747 = vand.u32 %v1731, %v774
    %v1750 = vand.u32 %v1732, %v774
    %v1753 = vand.u32 %v1733, %v774
    %1755 = vmatpush.bf16.msra.mxu0 0
    %1756 = vmatpush.bf16.msra.mxu0 0
    %1757 = vmatpush.bf16.msra.mxu0 0
    %1758 = vmatpush.bf16.msra.mxu0 0
    %1759 = vmatpush.bf16.msra.mxu0 0
    %1760 = vmatpush.bf16.msra.mxu0 0
    %1761 = vmatpush.bf16.msra.mxu0 0
    %1762 = vmatpush.bf16.msra.mxu0 %v1741
    %1763 = vmatmul.bf16.gmra.mxu0 %v1735
    %v1764 = vpop.f32.mrf.mxu0
    %v1765 = vadd.f32 0.0, %v1764
    %v1766 = vpop.f32.mrf.mxu0
    %v1767 = vadd.f32 0.0, %v1766
    %1768 = vmatmul.bf16.gmra.mxu0 %v1738
    %v1769 = vpop.f32.mrf.mxu0
    %v1770 = vadd.f32 0.0, %v1769
    %v1771 = vpop.f32.mrf.mxu0
    %1772 = vdwg.mxu0
    %1773 = vmatpush.bf16.msra.mxu0 0
    %1774 = vmatpush.bf16.msra.mxu0 0
    %1775 = vmatpush.bf16.msra.mxu0 0
    %1776 = vmatpush.bf16.msra.mxu0 0
    %1777 = vmatpush.bf16.msra.mxu0 0
    %1778 = vmatpush.bf16.msra.mxu0 0
    %1779 = vmatpush.bf16.msra.mxu0 0
    %1780 = vmatpush.bf16.msra.mxu0 %v1744
    %1781 = vmatmul.bf16.gmra.mxu0 %v1735
    %v1782 = vpop.f32.mrf.mxu0
    %v1783 = vadd.f32 0.0, %v1782
    %v1784 = vpop.f32.mrf.mxu0
    %v1785 = vadd.f32 0.0, %v1784
    %1786 = vmatmul.bf16.gmra.mxu0 %v1738
    %v1787 = vpop.f32.mrf.mxu0
    %v1788 = vadd.f32 0.0, %v1787
    %v1789 = vpop.f32.mrf.mxu0
    %1790 = vdwg.mxu0
    %1791 = vmatpush.bf16.msra.mxu0 0
    %1792 = vmatpush.bf16.msra.mxu0 0
    %1793 = vmatpush.bf16.msra.mxu0 0
    %1794 = vmatpush.bf16.msra.mxu0 0
    %1795 = vmatpush.bf16.msra.mxu0 0
    %1796 = vmatpush.bf16.msra.mxu0 0
    %1797 = vmatpush.bf16.msra.mxu0 0
    %1798 = vmatpush.bf16.msra.mxu0 %v1747
    %1799 = vmatmul.bf16.gmra.mxu0 %v1735
    %v1800 = vpop.f32.mrf.mxu0
    %v1801 = vadd.f32 0.0, %v1800
    %v1802 = vpop.f32.mrf.mxu0
    %v1803 = vadd.f32 0.0, %v1802
    %1804 = vmatmul.bf16.gmra.mxu0 %v1738
    %v1805 = vpop.f32.mrf.mxu0
    %v1806 = vadd.f32 0.0, %v1805
    %v1807 = vpop.f32.mrf.mxu0
    %1808 = vdwg.mxu0
    %1809 = vmatpush.bf16.msra.mxu0 0
    %1810 = vmatpush.bf16.msra.mxu0 0
    %1811 = vmatpush.bf16.msra.mxu0 0
    %1812 = vmatpush.bf16.msra.mxu0 0
    %1813 = vmatpush.bf16.msra.mxu0 0
    %1814 = vmatpush.bf16.msra.mxu0 0
    %1815 = vmatpush.bf16.msra.mxu0 0
    %1816 = vmatpush.bf16.msra.mxu0 %v1750
    %1817 = vmatmul.bf16.gmra.mxu0 %v1735
    %v1818 = vpop.f32.mrf.mxu0
    %v1819 = vadd.f32 0.0, %v1818
    %v1820 = vpop.f32.mrf.mxu0
    %v1821 = vadd.f32 0.0, %v1820
    %1822 = vmatmul.bf16.gmra.mxu0 %v1738
    %v1823 = vpop.f32.mrf.mxu0
    %v1824 = vadd.f32 0.0, %v1823
    %v1825 = vpop.f32.mrf.mxu0
    %1826 = vdwg.mxu0
    %1827 = vmatpush.bf16.msra.mxu0 0
    %1828 = vmatpush.bf16.msra.mxu0 0
    %1829 = vmatpush.bf16.msra.mxu0 0
    %1830 = vmatpush.bf16.msra.mxu0 0
    %1831 = vmatpush.bf16.msra.mxu0 0
    %1832 = vmatpush.bf16.msra.mxu0 0
    %1833 = vmatpush.bf16.msra.mxu0 0
    %1834 = vmatpush.bf16.msra.mxu0 %v1753
    %1835 = vmatmul.bf16.gmra.mxu0 %v1735
    %v1836 = vpop.f32.mrf.mxu0
    %v1837 = vadd.f32 0.0, %v1836
    %v1838 = vpop.f32.mrf.mxu0
    %v1839 = vadd.f32 0.0, %v1838
    %1840 = vmatmul.bf16.gmra.mxu0 %v1738
    %v1841 = vpop.f32.mrf.mxu0
    %v1842 = vadd.f32 0.0, %v1841
    %v1843 = vpop.f32.mrf.mxu0
    %1844 = vdwg.mxu0
    %v1845 = vadd.f32 %v1686, %v1765
    %v1846 = vadd.f32 %v1687, %v1783
    %v1847 = vadd.f32 %v1688, %v1801
    %v1848 = vadd.f32 %v1689, %v1819
    %v1849 = vadd.f32 %v1690, %v1837
    %v1850 = vadd.f32 %v1691, %v1767
    %v1851 = vadd.f32 %v1692, %v1785
    %v1852 = vadd.f32 %v1693, %v1803
    %v1853 = vadd.f32 %v1694, %v1821
    %v1854 = vadd.f32 %v1695, %v1839
    %v1855 = vadd.f32 %v1696, %v1770
    %v1856 = vadd.f32 %v1697, %v1788
    %v1857 = vadd.f32 %v1698, %v1806
    %v1858 = vadd.f32 %v1699, %v1824
    %v1859 = vadd.f32 %v1700, %v1842
    %v1860 = vmax.f32 %v1845, 0.0
    %v1861 = vmax.f32 %v1846, 0.0
    %v1862 = vmax.f32 %v1847, 0.0
    %v1863 = vmax.f32 %v1848, 0.0
    %v1864 = vmax.f32 %v1849, 0.0
    %v1865 = vmax.f32 %v1850, 0.0
    %v1866 = vmax.f32 %v1851, 0.0
    %v1867 = vmax.f32 %v1852, 0.0
    %v1868 = vmax.f32 %v1853, 0.0
    %v1869 = vmax.f32 %v1854, 0.0
    %v1870 = vmax.f32 %v1855, 0.0
    %v1871 = vmax.f32 %v1856, 0.0
    %v1872 = vmax.f32 %v1857, 0.0
    %v1873 = vmax.f32 %v1858, 0.0
    %v1874 = vmax.f32 %v1859, 0.0
    %v1875 = vpack.c.bf16 %v1861, %v1860
    %v1876 = vpack.c.bf16 %v1863, %v1862
    %v1877 = vpack.c.bf16 %v1864, %v1864
    %v1878 = vpack.c.bf16 %v1866, %v1865
    %v1879 = vpack.c.bf16 %v1868, %v1867
    %v1880 = vpack.c.bf16 %v1869, %v1869
    %v1881 = vpack.c.bf16 %v1871, %v1870
    %v1882 = vpack.c.bf16 %v1873, %v1872
    %v1883 = vpack.c.bf16 %v1874, %v1874
    %1884 = vst [vmem:[#allocation2] sm:$0xff] %v1875
    %1885 = vst [vmem:[#allocation2 + $0x8] sm:$0xff] %v1876
    %vm1886 = vcmask 519168
    %1887 = vst.msk [vmem:[#allocation2 + $0x10] sm:$0xf] %vm1886, %v1877
    %1888 = vst [vmem:[#allocation2 + $0x14] sm:$0xff] %v1878
    %1889 = vst [vmem:[#allocation2 + $0x1c] sm:$0xff] %v1879
    %1890 = vst.msk [vmem:[#allocation2 + $0x24] sm:$0xf] %vm1886, %v1880
    %1891 = vst [vmem:[#allocation2 + $0x28] sm:$0x33] %v1881
    %1892 = vst [vmem:[#allocation2 + $0x30] sm:$0x33] %v1882
    %vm1893 = vcmask 517120
    %1894 = vst.msk [vmem:[#allocation2 + $0x38] sm:$0x3] %vm1893, %v1883
    %v1895 = vld [vmem:[%s13] sm:$0x7]
    %v1896 = vld [vmem:[#allocation2] sm:$0xff]
    %v1897 = vld [vmem:[#allocation2 + $0x8] sm:$0xff]
    %v1898 = vld [vmem:[#allocation2 + $0x10] sm:$0xf]
    %v1899 = vld [vmem:[#allocation2 + $0x14] sm:$0x33]
    %v1900 = vld [vmem:[#allocation2 + $0x1c] sm:$0x33]
    %v1901 = vld [vmem:[#allocation2 + $0x24] sm:$0x3]
    %v1902 = vld [vmem:[%s12] sm:$0xff]
    %v1903 = vld [vmem:[%s12 + $0x8] sm:$0xf]
    %v1904 = vld [vmem:[%s12 + $0xc] sm:$0xff]
    %v1905 = vld [vmem:[%s12 + $0x14] sm:$0xf]
    %v1906 = vld [vmem:[%s12 + $0x18] sm:$0xff]
    %v1907 = vld [vmem:[%s12 + $0x20] sm:$0xf]
    %v1908 = vld [vmem:[%s12 + $0x24] sm:$0xff]
    %v1909 = vld [vmem:[%s12 + $0x2c] sm:$0xf]
    %v1910 = vld [vmem:[%s12 + $0x30] sm:$0xff]
    %v1911 = vld [vmem:[%s12 + $0x38] sm:$0xf]
    %v1912 = vld [vmem:[%s12 + $0x3c] sm:$0xff]
    %v1913 = vld [vmem:[%s12 + $0x44] sm:$0xf]
    %v1914 = vld [vmem:[%s12 + $0x48] sm:$0xff]
    %v1915 = vld [vmem:[%s12 + $0x50] sm:$0xf]
    %v1916 = vld [vmem:[%s12 + $0x54] sm:$0xff]
    %v1917 = vld [vmem:[%s12 + $0x5c] sm:$0xf]
    %v1918 = vld [vmem:[%s12 + $0x60] sm:$0xff]
    %v1919 = vld [vmem:[%s12 + $0x68] sm:$0xf]
    %v1920 = vld [vmem:[%s12 + $0x6c] sm:$0xff]
    %v1921 = vld [vmem:[%s12 + $0x74] sm:$0xf]
    %v1922 = vld [vmem:[%s12 + $0x78] sm:$0xff]
    %v1923 = vld [vmem:[%s12 + $0x80] sm:$0xf]
    %v1924 = vld [vmem:[%s12 + $0x84] sm:$0xff]
    %v1925 = vld [vmem:[%s12 + $0x8c] sm:$0xf]
    %v1926 = vld [vmem:[%s12 + $0x90] sm:$0xff]
    %v1927 = vld [vmem:[%s12 + $0x98] sm:$0xf]
    %v1928 = vld [vmem:[%s12 + $0x9c] sm:$0xff]
    %v1929 = vld [vmem:[%s12 + $0xa4] sm:$0xf]
    %v1930 = vld [vmem:[%s12 + $0xa8] sm:$0xff]
    %v1931 = vld [vmem:[%s12 + $0xb0] sm:$0xf]
    %v1932 = vld [vmem:[%s12 + $0xb4] sm:$0xff]
    %v1933 = vld [vmem:[%s12 + $0xbc] sm:$0xf]
    %v1934 = vld [vmem:[%s12 + $0xc0] sm:$0xff]
    %v1935 = vld [vmem:[%s12 + $0xc8] sm:$0xf]
    %v1936 = vld [vmem:[%s12 + $0xcc] sm:$0xff]
    %v1937 = vld [vmem:[%s12 + $0xd4] sm:$0xf]
    %v1938 = vld [vmem:[%s12 + $0xd8] sm:$0xff]
    %v1939 = vld [vmem:[%s12 + $0xe0] sm:$0xf]
    %v1940 = vld [vmem:[%s12 + $0xe4] sm:$0xff]
    %v1941 = vld [vmem:[%s12 + $0xec] sm:$0xf]
    %v1942 = vld [vmem:[%s12 + $0xf0] sm:$0xff]
    %v1943 = vld [vmem:[%s12 + $0xf8] sm:$0xf]
    %v1944 = vld [vmem:[%s12 + $0xfc] sm:$0xff]
    %v1945 = vld [vmem:[%s12 + $0x104] sm:$0xf]
    %v1946 = vld [vmem:[%s12 + $0x108] sm:$0xff]
    %v1947 = vld [vmem:[%s12 + $0x110] sm:$0xf]
    %v1948 = vld [vmem:[%s12 + $0x114] sm:$0xff]
    %v1949 = vld [vmem:[%s12 + $0x11c] sm:$0xf]
    %v1950 = vld [vmem:[%s12 + $0x120] sm:$0xff]
    %v1951 = vld [vmem:[%s12 + $0x128] sm:$0xf]
    %v1952 = vld [vmem:[%s12 + $0x12c] sm:$0xff]
    %v1953 = vld [vmem:[%s12 + $0x134] sm:$0xf]
    %v1954 = vld [vmem:[%s12 + $0x138] sm:$0xff]
    %v1955 = vld [vmem:[%s12 + $0x140] sm:$0xf]
    %v1956 = vld [vmem:[%s12 + $0x144] sm:$0xff]
    %v1957 = vld [vmem:[%s12 + $0x14c] sm:$0xf]
    %v1958 = vld [vmem:[%s12 + $0x150] sm:$0xff]
    %v1959 = vld [vmem:[%s12 + $0x158] sm:$0xf]
    %v1960 = vld [vmem:[%s12 + $0x15c] sm:$0xff]
    %v1961 = vld [vmem:[%s12 + $0x164] sm:$0xf]
    %v1962 = vld [vmem:[%s12 + $0x168] sm:$0xff]
    %v1963 = vld [vmem:[%s12 + $0x170] sm:$0xf]
    %v1964 = vld [vmem:[%s12 + $0x174] sm:$0xff]
    %v1965 = vld [vmem:[%s12 + $0x17c] sm:$0xf]
    %v1966 = vld [vmem:[%s12 + $0x180] sm:$0xff]
    %v1967 = vld [vmem:[%s12 + $0x188] sm:$0xf]
    %v1968 = vld [vmem:[%s12 + $0x18c] sm:$0xff]
    %v1969 = vld [vmem:[%s12 + $0x194] sm:$0xf]
    %v1970 = vld [vmem:[%s12 + $0x198] sm:$0xff]
    %v1971 = vld [vmem:[%s12 + $0x1a0] sm:$0xf]
    %v1972 = vld [vmem:[%s12 + $0x1a4] sm:$0xff]
    %v1973 = vld [vmem:[%s12 + $0x1ac] sm:$0xf]
    %v1974 = vld [vmem:[%s12 + $0x1b0] sm:$0xff]
    %v1975 = vld [vmem:[%s12 + $0x1b8] sm:$0xf]
    %v1976 = vld [vmem:[%s12 + $0x1bc] sm:$0xff]
    %v1977 = vld [vmem:[%s12 + $0x1c4] sm:$0xf]
    %v1978 = vld [vmem:[%s12 + $0x1c8] sm:$0xff]
    %v1979 = vld [vmem:[%s12 + $0x1d0] sm:$0xf]
    %v1980 = vld [vmem:[%s12 + $0x1d4] sm:$0xff]
    %v1981 = vld [vmem:[%s12 + $0x1dc] sm:$0xf]
    %v1982 = vld [vmem:[%s12 + $0x1e0] sm:$0xff]
    %v1983 = vld [vmem:[%s12 + $0x1e8] sm:$0xf]
    %v1984 = vld [vmem:[%s12 + $0x1ec] sm:$0xff]
    %v1985 = vld [vmem:[%s12 + $0x1f4] sm:$0xf]
    %v1986 = vld [vmem:[%s12 + $0x1f8] sm:$0xff]
    %v1987 = vld [vmem:[%s12 + $0x200] sm:$0xf]
    %v1988 = vld [vmem:[%s12 + $0x204] sm:$0xff]
    %v1989 = vld [vmem:[%s12 + $0x20c] sm:$0xf]
    %v1990 = vld [vmem:[%s12 + $0x210] sm:$0xff]
    %v1991 = vld [vmem:[%s12 + $0x218] sm:$0xf]
    %v1992 = vld [vmem:[%s12 + $0x21c] sm:$0xff]
    %v1993 = vld [vmem:[%s12 + $0x224] sm:$0xf]
    %v1994 = vld [vmem:[%s12 + $0x228] sm:$0xff]
    %v1995 = vld [vmem:[%s12 + $0x230] sm:$0xf]
    %v1996 = vld [vmem:[%s12 + $0x234] sm:$0xff]
    %v1997 = vld [vmem:[%s12 + $0x23c] sm:$0xf]
    %v1998 = vld [vmem:[%s12 + $0x240] sm:$0xff]
    %v1999 = vld [vmem:[%s12 + $0x248] sm:$0xf]
    %v2000 = vld [vmem:[%s12 + $0x24c] sm:$0xff]
    %v2001 = vld [vmem:[%s12 + $0x254] sm:$0xf]
    %v2002 = vld [vmem:[%s12 + $0x258] sm:$0xff]
    %v2003 = vld [vmem:[%s12 + $0x260] sm:$0xf]
    %v2004 = vld [vmem:[%s12 + $0x264] sm:$0xff]
    %v2005 = vld [vmem:[%s12 + $0x26c] sm:$0xf]
    %v2006 = vld [vmem:[%s12 + $0x270] sm:$0xff]
    %v2007 = vld [vmem:[%s12 + $0x278] sm:$0xf]
    %v2008 = vld [vmem:[%s12 + $0x27c] sm:$0xff]
    %v2009 = vld [vmem:[%s12 + $0x284] sm:$0xf]
    %v2010 = vld [vmem:[%s12 + $0x288] sm:$0xff]
    %v2011 = vld [vmem:[%s12 + $0x290] sm:$0xf]
    %v2012 = vld [vmem:[%s12 + $0x294] sm:$0xff]
    %v2013 = vld [vmem:[%s12 + $0x29c] sm:$0xf]
    %v2014 = vld [vmem:[%s12 + $0x2a0] sm:$0xff]
    %v2015 = vld [vmem:[%s12 + $0x2a8] sm:$0xf]
    %v2016 = vld [vmem:[%s12 + $0x2ac] sm:$0xff]
    %v2017 = vld [vmem:[%s12 + $0x2b4] sm:$0xf]
    %v2018 = vld [vmem:[%s12 + $0x2b8] sm:$0xff]
    %v2019 = vld [vmem:[%s12 + $0x2c0] sm:$0xf]
    %v2020 = vld [vmem:[%s12 + $0x2c4] sm:$0xff]
    %v2021 = vld [vmem:[%s12 + $0x2cc] sm:$0xf]
    %v2022 = vld [vmem:[%s12 + $0x2d0] sm:$0xff]
    %v2023 = vld [vmem:[%s12 + $0x2d8] sm:$0xf]
    %v2024 = vld [vmem:[%s12 + $0x2dc] sm:$0xff]
    %v2025 = vld [vmem:[%s12 + $0x2e4] sm:$0xf]
    %v2026 = vld [vmem:[%s12 + $0x2e8] sm:$0xff]
    %v2027 = vld [vmem:[%s12 + $0x2f0] sm:$0xf]
    %v2028 = vld [vmem:[%s12 + $0x2f4] sm:$0xff]
    %v2029 = vld [vmem:[%s12 + $0x2fc] sm:$0xf]
    %v2030 = vld [vmem:[%s12 + $0x300] sm:$0xff]
    %v2031 = vld [vmem:[%s12 + $0x308] sm:$0xf]
    %v2032 = vld [vmem:[%s12 + $0x30c] sm:$0xff]
    %v2033 = vld [vmem:[%s12 + $0x314] sm:$0xf]
    %v2034 = vld [vmem:[%s12 + $0x318] sm:$0xff]
    %v2035 = vld [vmem:[%s12 + $0x320] sm:$0xf]
    %v2036 = vld [vmem:[%s12 + $0x324] sm:$0xff]
    %v2037 = vld [vmem:[%s12 + $0x32c] sm:$0xf]
    %v2038 = vld [vmem:[%s12 + $0x330] sm:$0xff]
    %v2039 = vld [vmem:[%s12 + $0x338] sm:$0xf]
    %v2040 = vld [vmem:[%s12 + $0x33c] sm:$0xff]
    %v2041 = vld [vmem:[%s12 + $0x344] sm:$0xf]
    %v2042 = vld [vmem:[%s12 + $0x348] sm:$0xff]
    %v2043 = vld [vmem:[%s12 + $0x350] sm:$0xf]
    %v2044 = vld [vmem:[%s12 + $0x354] sm:$0xff]
    %v2045 = vld [vmem:[%s12 + $0x35c] sm:$0xf]
    %v2052 = vunpack.c.l.b16 %v1896
    %v2053 = vunpack.c.h.b16 %v1896
    %v2054 = vunpack.c.l.b16 %v1897
    %v2055 = vunpack.c.h.b16 %v1897
    %v2056 = vunpack.c.l.b16 %v1898
    %v2057 = vunpack.c.l.b16 %v1899
    %v2058 = vunpack.c.h.b16 %v1899
    %v2059 = vunpack.c.l.b16 %v1900
    %v2060 = vunpack.c.h.b16 %v1900
    %v2061 = vunpack.c.l.b16 %v1901
    %v2062 = vpack.c.b16 %v2057, %v2052
    %v2063 = vpack.c.b16 %v2058, %v2053
    %v2064 = vpack.c.b16 %v2059, %v2054
    %v2065 = vpack.c.b16 %v2060, %v2055
    %v2066 = vpack.c.b16 %v2061, %v2056
    %v2215 = vunpack.c.l.b16 %v1902
    %v2216 = vunpack.c.h.b16 %v1902
    %v2217 = vunpack.c.l.b16 %v1903
    %v2218 = vunpack.c.l.b16 %v1904
    %v2219 = vunpack.c.h.b16 %v1904
    %v2220 = vunpack.c.l.b16 %v1905
    %v2221 = vunpack.c.l.b16 %v1906
    %v2222 = vunpack.c.h.b16 %v1906
    %v2223 = vunpack.c.l.b16 %v1907
    %v2224 = vunpack.c.l.b16 %v1908
    %v2225 = vunpack.c.h.b16 %v1908
    %v2226 = vunpack.c.l.b16 %v1909
    %v2227 = vunpack.c.l.b16 %v1910
    %v2228 = vunpack.c.h.b16 %v1910
    %v2229 = vunpack.c.l.b16 %v1911
    %v2230 = vunpack.c.l.b16 %v1912
    %v2231 = vunpack.c.h.b16 %v1912
    %v2232 = vunpack.c.l.b16 %v1913
    %v2233 = vunpack.c.l.b16 %v1914
    %v2234 = vunpack.c.h.b16 %v1914
    %v2235 = vunpack.c.l.b16 %v1915
    %v2236 = vunpack.c.l.b16 %v1916
    %v2237 = vunpack.c.h.b16 %v1916
    %v2238 = vunpack.c.l.b16 %v1917
    %v2239 = vunpack.c.l.b16 %v1918
    %v2240 = vunpack.c.h.b16 %v1918
    %v2241 = vunpack.c.l.b16 %v1919
    %v2242 = vunpack.c.l.b16 %v1920
    %v2243 = vunpack.c.h.b16 %v1920
    %v2244 = vunpack.c.l.b16 %v1921
    %v2245 = vunpack.c.l.b16 %v1922
    %v2246 = vunpack.c.h.b16 %v1922
    %v2247 = vunpack.c.l.b16 %v1923
    %v2248 = vunpack.c.l.b16 %v1924
    %v2249 = vunpack.c.h.b16 %v1924
    %v2250 = vunpack.c.l.b16 %v1925
    %v2251 = vunpack.c.l.b16 %v1926
    %v2252 = vunpack.c.h.b16 %v1926
    %v2253 = vunpack.c.l.b16 %v1927
    %v2254 = vunpack.c.l.b16 %v1928
    %v2255 = vunpack.c.h.b16 %v1928
    %v2256 = vunpack.c.l.b16 %v1929
    %v2257 = vunpack.c.l.b16 %v1930
    %v2258 = vunpack.c.h.b16 %v1930
    %v2259 = vunpack.c.l.b16 %v1931
    %v2260 = vunpack.c.l.b16 %v1932
    %v2261 = vunpack.c.h.b16 %v1932
    %v2262 = vunpack.c.l.b16 %v1933
    %v2263 = vunpack.c.l.b16 %v1934
    %v2264 = vunpack.c.h.b16 %v1934
    %v2265 = vunpack.c.l.b16 %v1935
    %v2266 = vunpack.c.l.b16 %v1936
    %v2267 = vunpack.c.h.b16 %v1936
    %v2268 = vunpack.c.l.b16 %v1937
    %v2269 = vunpack.c.l.b16 %v1938
    %v2270 = vunpack.c.h.b16 %v1938
    %v2271 = vunpack.c.l.b16 %v1939
    %v2272 = vunpack.c.l.b16 %v1940
    %v2273 = vunpack.c.h.b16 %v1940
    %v2274 = vunpack.c.l.b16 %v1941
    %v2275 = vunpack.c.l.b16 %v1942
    %v2276 = vunpack.c.h.b16 %v1942
    %v2277 = vunpack.c.l.b16 %v1943
    %v2278 = vunpack.c.l.b16 %v1944
    %v2279 = vunpack.c.h.b16 %v1944
    %v2280 = vunpack.c.l.b16 %v1945
    %v2281 = vunpack.c.l.b16 %v1946
    %v2282 = vunpack.c.h.b16 %v1946
    %v2283 = vunpack.c.l.b16 %v1947
    %v2284 = vunpack.c.l.b16 %v1948
    %v2285 = vunpack.c.h.b16 %v1948
    %v2286 = vunpack.c.l.b16 %v1949
    %v2287 = vunpack.c.l.b16 %v1950
    %v2288 = vunpack.c.h.b16 %v1950
    %v2289 = vunpack.c.l.b16 %v1951
    %v2290 = vunpack.c.l.b16 %v1952
    %v2291 = vunpack.c.h.b16 %v1952
    %v2292 = vunpack.c.l.b16 %v1953
    %v2293 = vunpack.c.l.b16 %v1954
    %v2294 = vunpack.c.h.b16 %v1954
    %v2295 = vunpack.c.l.b16 %v1955
    %v2296 = vunpack.c.l.b16 %v1956
    %v2297 = vunpack.c.h.b16 %v1956
    %v2298 = vunpack.c.l.b16 %v1957
    %v2299 = vunpack.c.l.b16 %v1958
    %v2300 = vunpack.c.h.b16 %v1958
    %v2301 = vunpack.c.l.b16 %v1959
    %v2302 = vunpack.c.l.b16 %v1960
    %v2303 = vunpack.c.h.b16 %v1960
    %v2304 = vunpack.c.l.b16 %v1961
    %v2305 = vunpack.c.l.b16 %v1962
    %v2306 = vunpack.c.h.b16 %v1962
    %v2307 = vunpack.c.l.b16 %v1963
    %v2308 = vunpack.c.l.b16 %v1964
    %v2309 = vunpack.c.h.b16 %v1964
    %v2310 = vunpack.c.l.b16 %v1965
    %v2311 = vunpack.c.l.b16 %v1966
    %v2312 = vunpack.c.h.b16 %v1966
    %v2313 = vunpack.c.l.b16 %v1967
    %v2314 = vunpack.c.l.b16 %v1968
    %v2315 = vunpack.c.h.b16 %v1968
    %v2316 = vunpack.c.l.b16 %v1969
    %v2317 = vunpack.c.l.b16 %v1970
    %v2318 = vunpack.c.h.b16 %v1970
    %v2319 = vunpack.c.l.b16 %v1971
    %v2320 = vunpack.c.l.b16 %v1972
    %v2321 = vunpack.c.h.b16 %v1972
    %v2322 = vunpack.c.l.b16 %v1973
    %v2323 = vunpack.c.l.b16 %v1974
    %v2324 = vunpack.c.h.b16 %v1974
    %v2325 = vunpack.c.l.b16 %v1975
    %v2326 = vunpack.c.l.b16 %v1976
    %v2327 = vunpack.c.h.b16 %v1976
    %v2328 = vunpack.c.l.b16 %v1977
    %v2329 = vunpack.c.l.b16 %v1978
    %v2330 = vunpack.c.h.b16 %v1978
    %v2331 = vunpack.c.l.b16 %v1979
    %v2332 = vunpack.c.l.b16 %v1980
    %v2333 = vunpack.c.h.b16 %v1980
    %v2334 = vunpack.c.l.b16 %v1981
    %v2335 = vunpack.c.l.b16 %v1982
    %v2336 = vunpack.c.h.b16 %v1982
    %v2337 = vunpack.c.l.b16 %v1983
    %v2338 = vunpack.c.l.b16 %v1984
    %v2339 = vunpack.c.h.b16 %v1984
    %v2340 = vunpack.c.l.b16 %v1985
    %v2341 = vunpack.c.l.b16 %v1986
    %v2342 = vunpack.c.h.b16 %v1986
    %v2343 = vunpack.c.l.b16 %v1987
    %v2344 = vunpack.c.l.b16 %v1988
    %v2345 = vunpack.c.h.b16 %v1988
    %v2346 = vunpack.c.l.b16 %v1989
    %v2347 = vunpack.c.l.b16 %v1990
    %v2348 = vunpack.c.h.b16 %v1990
    %v2349 = vunpack.c.l.b16 %v1991
    %v2350 = vunpack.c.l.b16 %v1992
    %v2351 = vunpack.c.h.b16 %v1992
    %v2352 = vunpack.c.l.b16 %v1993
    %v2353 = vunpack.c.l.b16 %v1994
    %v2354 = vunpack.c.h.b16 %v1994
    %v2355 = vunpack.c.l.b16 %v1995
    %v2356 = vunpack.c.l.b16 %v1996
    %v2357 = vunpack.c.h.b16 %v1996
    %v2358 = vunpack.c.l.b16 %v1997
    %v2359 = vunpack.c.l.b16 %v1998
    %v2360 = vunpack.c.h.b16 %v1998
    %v2361 = vunpack.c.l.b16 %v1999
    %v2362 = vunpack.c.l.b16 %v2000
    %v2363 = vunpack.c.h.b16 %v2000
    %v2364 = vunpack.c.l.b16 %v2001
    %v2365 = vunpack.c.l.b16 %v2002
    %v2366 = vunpack.c.h.b16 %v2002
    %v2367 = vunpack.c.l.b16 %v2003
    %v2368 = vunpack.c.l.b16 %v2004
    %v2369 = vunpack.c.h.b16 %v2004
    %v2370 = vunpack.c.l.b16 %v2005
    %v2371 = vunpack.c.l.b16 %v2006
    %v2372 = vunpack.c.h.b16 %v2006
    %v2373 = vunpack.c.l.b16 %v2007
    %v2374 = vunpack.c.l.b16 %v2008
    %v2375 = vunpack.c.h.b16 %v2008
    %v2376 = vunpack.c.l.b16 %v2009
    %v2377 = vunpack.c.l.b16 %v2010
    %v2378 = vunpack.c.h.b16 %v2010
    %v2379 = vunpack.c.l.b16 %v2011
    %v2380 = vunpack.c.l.b16 %v2012
    %v2381 = vunpack.c.h.b16 %v2012
    %v2382 = vunpack.c.l.b16 %v2013
    %v2383 = vunpack.c.l.b16 %v2014
    %v2384 = vunpack.c.h.b16 %v2014
    %v2385 = vunpack.c.l.b16 %v2015
    %v2386 = vunpack.c.l.b16 %v2016
    %v2387 = vunpack.c.h.b16 %v2016
    %v2388 = vunpack.c.l.b16 %v2017
    %v2389 = vunpack.c.l.b16 %v2018
    %v2390 = vunpack.c.h.b16 %v2018
    %v2391 = vunpack.c.l.b16 %v2019
    %v2392 = vunpack.c.l.b16 %v2020
    %v2393 = vunpack.c.h.b16 %v2020
    %v2394 = vunpack.c.l.b16 %v2021
    %v2395 = vunpack.c.l.b16 %v2022
    %v2396 = vunpack.c.h.b16 %v2022
    %v2397 = vunpack.c.l.b16 %v2023
    %v2398 = vunpack.c.l.b16 %v2024
    %v2399 = vunpack.c.h.b16 %v2024
    %v2400 = vunpack.c.l.b16 %v2025
    %v2401 = vunpack.c.l.b16 %v2026
    %v2402 = vunpack.c.h.b16 %v2026
    %v2403 = vunpack.c.l.b16 %v2027
    %v2404 = vunpack.c.l.b16 %v2028
    %v2405 = vunpack.c.h.b16 %v2028
    %v2406 = vunpack.c.l.b16 %v2029
    %v2407 = vunpack.c.l.b16 %v2030
    %v2408 = vunpack.c.h.b16 %v2030
    %v2409 = vunpack.c.l.b16 %v2031
    %v2410 = vunpack.c.l.b16 %v2032
    %v2411 = vunpack.c.h.b16 %v2032
    %v2412 = vunpack.c.l.b16 %v2033
    %v2413 = vunpack.c.l.b16 %v2034
    %v2414 = vunpack.c.h.b16 %v2034
    %v2415 = vunpack.c.l.b16 %v2035
    %v2416 = vunpack.c.l.b16 %v2036
    %v2417 = vunpack.c.h.b16 %v2036
    %v2418 = vunpack.c.l.b16 %v2037
    %v2419 = vunpack.c.l.b16 %v2038
    %v2420 = vunpack.c.h.b16 %v2038
    %v2421 = vunpack.c.l.b16 %v2039
    %v2422 = vunpack.c.l.b16 %v2040
    %v2423 = vunpack.c.h.b16 %v2040
    %v2424 = vunpack.c.l.b16 %v2041
    %v2425 = vunpack.c.l.b16 %v2042
    %v2426 = vunpack.c.h.b16 %v2042
    %v2427 = vunpack.c.l.b16 %v2043
    %v2428 = vunpack.c.l.b16 %v2044
    %v2429 = vunpack.c.h.b16 %v2044
    %v2430 = vunpack.c.l.b16 %v2045
    %v2431 = vpack.c.b16 %v2218, %v2215
    %v2432 = vpack.c.b16 %v2219, %v2216
    %v2433 = vpack.c.b16 %v2220, %v2217
    %v2434 = vpack.c.b16 %v2224, %v2221
    %v2435 = vpack.c.b16 %v2225, %v2222
    %v2436 = vpack.c.b16 %v2226, %v2223
    %v2437 = vpack.c.b16 %v2230, %v2227
    %v2438 = vpack.c.b16 %v2231, %v2228
    %v2439 = vpack.c.b16 %v2232, %v2229
    %v2440 = vpack.c.b16 %v2236, %v2233
    %v2441 = vpack.c.b16 %v2237, %v2234
    %v2442 = vpack.c.b16 %v2238, %v2235
    %v2443 = vpack.c.b16 %v2242, %v2239
    %v2444 = vpack.c.b16 %v2243, %v2240
    %v2445 = vpack.c.b16 %v2244, %v2241
    %v2446 = vpack.c.b16 %v2248, %v2245
    %v2447 = vpack.c.b16 %v2249, %v2246
    %v2448 = vpack.c.b16 %v2250, %v2247
    %v2449 = vpack.c.b16 %v2254, %v2251
    %v2450 = vpack.c.b16 %v2255, %v2252
    %v2451 = vpack.c.b16 %v2256, %v2253
    %v2452 = vpack.c.b16 %v2260, %v2257
    %v2453 = vpack.c.b16 %v2261, %v2258
    %v2454 = vpack.c.b16 %v2262, %v2259
    %v2455 = vpack.c.b16 %v2266, %v2263
    %v2456 = vpack.c.b16 %v2267, %v2264
    %v2457 = vpack.c.b16 %v2268, %v2265
    %v2458 = vpack.c.b16 %v2272, %v2269
    %v2459 = vpack.c.b16 %v2273, %v2270
    %v2460 = vpack.c.b16 %v2274, %v2271
    %v2461 = vpack.c.b16 %v2278, %v2275
    %v2462 = vpack.c.b16 %v2279, %v2276
    %v2463 = vpack.c.b16 %v2280, %v2277
    %v2464 = vpack.c.b16 %v2284, %v2281
    %v2465 = vpack.c.b16 %v2285, %v2282
    %v2466 = vpack.c.b16 %v2286, %v2283
    %v2467 = vpack.c.b16 %v2290, %v2287
    %v2468 = vpack.c.b16 %v2291, %v2288
    %v2469 = vpack.c.b16 %v2292, %v2289
    %v2470 = vpack.c.b16 %v2296, %v2293
    %v2471 = vpack.c.b16 %v2297, %v2294
    %v2472 = vpack.c.b16 %v2298, %v2295
    %v2473 = vpack.c.b16 %v2302, %v2299
    %v2474 = vpack.c.b16 %v2303, %v2300
    %v2475 = vpack.c.b16 %v2304, %v2301
    %v2476 = vpack.c.b16 %v2308, %v2305
    %v2477 = vpack.c.b16 %v2309, %v2306
    %v2478 = vpack.c.b16 %v2310, %v2307
    %v2479 = vpack.c.b16 %v2314, %v2311
    %v2480 = vpack.c.b16 %v2315, %v2312
    %v2481 = vpack.c.b16 %v2316, %v2313
    %v2482 = vpack.c.b16 %v2320, %v2317
    %v2483 = vpack.c.b16 %v2321, %v2318
    %v2484 = vpack.c.b16 %v2322, %v2319
    %v2485 = vpack.c.b16 %v2326, %v2323
    %v2486 = vpack.c.b16 %v2327, %v2324
    %v2487 = vpack.c.b16 %v2328, %v2325
    %v2488 = vpack.c.b16 %v2332, %v2329
    %v2489 = vpack.c.b16 %v2333, %v2330
    %v2490 = vpack.c.b16 %v2334, %v2331
    %v2491 = vpack.c.b16 %v2338, %v2335
    %v2492 = vpack.c.b16 %v2339, %v2336
    %v2493 = vpack.c.b16 %v2340, %v2337
    %v2494 = vpack.c.b16 %v2344, %v2341
    %v2495 = vpack.c.b16 %v2345, %v2342
    %v2496 = vpack.c.b16 %v2346, %v2343
    %v2497 = vpack.c.b16 %v2350, %v2347
    %v2498 = vpack.c.b16 %v2351, %v2348
    %v2499 = vpack.c.b16 %v2352, %v2349
    %v2500 = vpack.c.b16 %v2356, %v2353
    %v2501 = vpack.c.b16 %v2357, %v2354
    %v2502 = vpack.c.b16 %v2358, %v2355
    %v2503 = vpack.c.b16 %v2362, %v2359
    %v2504 = vpack.c.b16 %v2363, %v2360
    %v2505 = vpack.c.b16 %v2364, %v2361
    %v2506 = vpack.c.b16 %v2368, %v2365
    %v2507 = vpack.c.b16 %v2369, %v2366
    %v2508 = vpack.c.b16 %v2370, %v2367
    %v2509 = vpack.c.b16 %v2374, %v2371
    %v2510 = vpack.c.b16 %v2375, %v2372
    %v2511 = vpack.c.b16 %v2376, %v2373
    %v2512 = vpack.c.b16 %v2380, %v2377
    %v2513 = vpack.c.b16 %v2381, %v2378
    %v2514 = vpack.c.b16 %v2382, %v2379
    %v2515 = vpack.c.b16 %v2386, %v2383
    %v2516 = vpack.c.b16 %v2387, %v2384
    %v2517 = vpack.c.b16 %v2388, %v2385
    %v2518 = vpack.c.b16 %v2392, %v2389
    %v2519 = vpack.c.b16 %v2393, %v2390
    %v2520 = vpack.c.b16 %v2394, %v2391
    %v2521 = vpack.c.b16 %v2398, %v2395
    %v2522 = vpack.c.b16 %v2399, %v2396
    %v2523 = vpack.c.b16 %v2400, %v2397
    %v2524 = vpack.c.b16 %v2404, %v2401
    %v2525 = vpack.c.b16 %v2405, %v2402
    %v2526 = vpack.c.b16 %v2406, %v2403
    %v2527 = vpack.c.b16 %v2410, %v2407
    %v2528 = vpack.c.b16 %v2411, %v2408
    %v2529 = vpack.c.b16 %v2412, %v2409
    %v2530 = vpack.c.b16 %v2416, %v2413
    %v2531 = vpack.c.b16 %v2417, %v2414
    %v2532 = vpack.c.b16 %v2418, %v2415
    %v2533 = vpack.c.b16 %v2422, %v2419
    %v2534 = vpack.c.b16 %v2423, %v2420
    %v2535 = vpack.c.b16 %v2424, %v2421
    %v2536 = vpack.c.b16 %v2428, %v2425
    %v2537 = vpack.c.b16 %v2429, %v2426
    %v2538 = vpack.c.b16 %v2430, %v2427
    %v2648 = vsel %vm687, %v2066, 0
    %2650 = vmatpush.bf16.msra.mxu0 %v2452
    %2651 = vmatpush.bf16.msra.mxu0 %v2449
    %2652 = vmatpush.bf16.msra.mxu0 %v2446
    %2653 = vmatpush.bf16.msra.mxu0 %v2443
    %2654 = vmatpush.bf16.msra.mxu0 %v2440
    %2655 = vmatpush.bf16.msra.mxu0 %v2437
    %2656 = vmatpush.bf16.msra.mxu0 %v2434
    %2657 = vmatpush.bf16.msra.mxu0 %v2431
    %2658 = vmatmul.bf16.gmra.mxu0 %v2062
    %v2659 = vpop.f32.mrf.mxu0
    %v2660 = vadd.f32 0.0, %v2659
    %v2661 = vpop.f32.mrf.mxu0
    %v2662 = vadd.f32 0.0, %v2661
    %2663 = vdwg.mxu0
    %2664 = vmatpush.bf16.msra.mxu0 %v2476
    %2665 = vmatpush.bf16.msra.mxu0 %v2473
    %2666 = vmatpush.bf16.msra.mxu0 %v2470
    %2667 = vmatpush.bf16.msra.mxu0 %v2467
    %2668 = vmatpush.bf16.msra.mxu0 %v2464
    %2669 = vmatpush.bf16.msra.mxu0 %v2461
    %2670 = vmatpush.bf16.msra.mxu0 %v2458
    %2671 = vmatpush.bf16.msra.mxu0 %v2455
    %2672 = vmatmul.bf16.gmra.mxu0 %v2063
    %v2673 = vpop.f32.mrf.mxu0
    %v2674 = vadd.f32 %v2660, %v2673
    %v2675 = vpop.f32.mrf.mxu0
    %v2676 = vadd.f32 %v2662, %v2675
    %2677 = vdwg.mxu0
    %2678 = vmatpush.bf16.msra.mxu0 %v2500
    %2679 = vmatpush.bf16.msra.mxu0 %v2497
    %2680 = vmatpush.bf16.msra.mxu0 %v2494
    %2681 = vmatpush.bf16.msra.mxu0 %v2491
    %2682 = vmatpush.bf16.msra.mxu0 %v2488
    %2683 = vmatpush.bf16.msra.mxu0 %v2485
    %2684 = vmatpush.bf16.msra.mxu0 %v2482
    %2685 = vmatpush.bf16.msra.mxu0 %v2479
    %2686 = vmatmul.bf16.gmra.mxu0 %v2064
    %v2687 = vpop.f32.mrf.mxu0
    %v2688 = vadd.f32 %v2674, %v2687
    %v2689 = vpop.f32.mrf.mxu0
    %v2690 = vadd.f32 %v2676, %v2689
    %2691 = vdwg.mxu0
    %2692 = vmatpush.bf16.msra.mxu0 %v2524
    %2693 = vmatpush.bf16.msra.mxu0 %v2521
    %2694 = vmatpush.bf16.msra.mxu0 %v2518
    %2695 = vmatpush.bf16.msra.mxu0 %v2515
    %2696 = vmatpush.bf16.msra.mxu0 %v2512
    %2697 = vmatpush.bf16.msra.mxu0 %v2509
    %2698 = vmatpush.bf16.msra.mxu0 %v2506
    %2699 = vmatpush.bf16.msra.mxu0 %v2503
    %2700 = vmatmul.bf16.gmra.mxu0 %v2065
    %v2701 = vpop.f32.mrf.mxu0
    %v2702 = vadd.f32 %v2688, %v2701
    %v2703 = vpop.f32.mrf.mxu0
    %v2704 = vadd.f32 %v2690, %v2703
    %2705 = vdwg.mxu0
    %2706 = vmatpush.bf16.msra.mxu0 0
    %2707 = vmatpush.bf16.msra.mxu0 0
    %2708 = vmatpush.bf16.msra.mxu0 0
    %2709 = vmatpush.bf16.msra.mxu0 0
    %2710 = vmatpush.bf16.msra.mxu0 %v2536
    %2711 = vmatpush.bf16.msra.mxu0 %v2533
    %2712 = vmatpush.bf16.msra.mxu0 %v2530
    %2713 = vmatpush.bf16.msra.mxu0 %v2527
    %2714 = vmatmul.bf16.gmra.mxu0 %v2648
    %v2715 = vpop.f32.mrf.mxu0
    %v2716 = vadd.f32 %v2702, %v2715
    %v2717 = vpop.f32.mrf.mxu0
    %v2718 = vadd.f32 %v2704, %v2717
    %2719 = vdwg.mxu0
    %2720 = vmatpush.bf16.msra.mxu0 %v2453
    %2721 = vmatpush.bf16.msra.mxu0 %v2450
    %2722 = vmatpush.bf16.msra.mxu0 %v2447
    %2723 = vmatpush.bf16.msra.mxu0 %v2444
    %2724 = vmatpush.bf16.msra.mxu0 %v2441
    %2725 = vmatpush.bf16.msra.mxu0 %v2438
    %2726 = vmatpush.bf16.msra.mxu0 %v2435
    %2727 = vmatpush.bf16.msra.mxu0 %v2432
    %2728 = vmatmul.bf16.gmra.mxu0 %v2062
    %v2729 = vpop.f32.mrf.mxu0
    %v2730 = vadd.f32 0.0, %v2729
    %v2731 = vpop.f32.mrf.mxu0
    %v2732 = vadd.f32 0.0, %v2731
    %2733 = vdwg.mxu0
    %2734 = vmatpush.bf16.msra.mxu0 %v2477
    %2735 = vmatpush.bf16.msra.mxu0 %v2474
    %2736 = vmatpush.bf16.msra.mxu0 %v2471
    %2737 = vmatpush.bf16.msra.mxu0 %v2468
    %2738 = vmatpush.bf16.msra.mxu0 %v2465
    %2739 = vmatpush.bf16.msra.mxu0 %v2462
    %2740 = vmatpush.bf16.msra.mxu0 %v2459
    %2741 = vmatpush.bf16.msra.mxu0 %v2456
    %2742 = vmatmul.bf16.gmra.mxu0 %v2063
    %v2743 = vpop.f32.mrf.mxu0
    %v2744 = vadd.f32 %v2730, %v2743
    %v2745 = vpop.f32.mrf.mxu0
    %v2746 = vadd.f32 %v2732, %v2745
    %2747 = vdwg.mxu0
    %2748 = vmatpush.bf16.msra.mxu0 %v2501
    %2749 = vmatpush.bf16.msra.mxu0 %v2498
    %2750 = vmatpush.bf16.msra.mxu0 %v2495
    %2751 = vmatpush.bf16.msra.mxu0 %v2492
    %2752 = vmatpush.bf16.msra.mxu0 %v2489
    %2753 = vmatpush.bf16.msra.mxu0 %v2486
    %2754 = vmatpush.bf16.msra.mxu0 %v2483
    %2755 = vmatpush.bf16.msra.mxu0 %v2480
    %2756 = vmatmul.bf16.gmra.mxu0 %v2064
    %v2757 = vpop.f32.mrf.mxu0
    %v2758 = vadd.f32 %v2744, %v2757
    %v2759 = vpop.f32.mrf.mxu0
    %v2760 = vadd.f32 %v2746, %v2759
    %2761 = vdwg.mxu0
    %2762 = vmatpush.bf16.msra.mxu0 %v2525
    %2763 = vmatpush.bf16.msra.mxu0 %v2522
    %2764 = vmatpush.bf16.msra.mxu0 %v2519
    %2765 = vmatpush.bf16.msra.mxu0 %v2516
    %2766 = vmatpush.bf16.msra.mxu0 %v2513
    %2767 = vmatpush.bf16.msra.mxu0 %v2510
    %2768 = vmatpush.bf16.msra.mxu0 %v2507
    %2769 = vmatpush.bf16.msra.mxu0 %v2504
    %2770 = vmatmul.bf16.gmra.mxu0 %v2065
    %v2771 = vpop.f32.mrf.mxu0
    %v2772 = vadd.f32 %v2758, %v2771
    %v2773 = vpop.f32.mrf.mxu0
    %v2774 = vadd.f32 %v2760, %v2773
    %2775 = vdwg.mxu0
    %2776 = vmatpush.bf16.msra.mxu0 0
    %2777 = vmatpush.bf16.msra.mxu0 0
    %2778 = vmatpush.bf16.msra.mxu0 0
    %2779 = vmatpush.bf16.msra.mxu0 0
    %2780 = vmatpush.bf16.msra.mxu0 %v2537
    %2781 = vmatpush.bf16.msra.mxu0 %v2534
    %2782 = vmatpush.bf16.msra.mxu0 %v2531
    %2783 = vmatpush.bf16.msra.mxu0 %v2528
    %2784 = vmatmul.bf16.gmra.mxu0 %v2648
    %v2785 = vpop.f32.mrf.mxu0
    %v2786 = vadd.f32 %v2772, %v2785
    %v2787 = vpop.f32.mrf.mxu0
    %v2788 = vadd.f32 %v2774, %v2787
    %2789 = vdwg.mxu0
    %2790 = vmatpush.bf16.msra.mxu0 %v2454
    %2791 = vmatpush.bf16.msra.mxu0 %v2451
    %2792 = vmatpush.bf16.msra.mxu0 %v2448
    %2793 = vmatpush.bf16.msra.mxu0 %v2445
    %2794 = vmatpush.bf16.msra.mxu0 %v2442
    %2795 = vmatpush.bf16.msra.mxu0 %v2439
    %2796 = vmatpush.bf16.msra.mxu0 %v2436
    %2797 = vmatpush.bf16.msra.mxu0 %v2433
    %2798 = vmatmul.bf16.gmra.mxu0 %v2062
    %v2799 = vpop.f32.mrf.mxu0
    %v2800 = vadd.f32 0.0, %v2799
    %v2801 = vpop.f32.mrf.mxu0
    %v2802 = vadd.f32 0.0, %v2801
    %2803 = vdwg.mxu0
    %2804 = vmatpush.bf16.msra.mxu0 %v2478
    %2805 = vmatpush.bf16.msra.mxu0 %v2475
    %2806 = vmatpush.bf16.msra.mxu0 %v2472
    %2807 = vmatpush.bf16.msra.mxu0 %v2469
    %2808 = vmatpush.bf16.msra.mxu0 %v2466
    %2809 = vmatpush.bf16.msra.mxu0 %v2463
    %2810 = vmatpush.bf16.msra.mxu0 %v2460
    %2811 = vmatpush.bf16.msra.mxu0 %v2457
    %2812 = vmatmul.bf16.gmra.mxu0 %v2063
    %v2813 = vpop.f32.mrf.mxu0
    %v2814 = vadd.f32 %v2800, %v2813
    %v2815 = vpop.f32.mrf.mxu0
    %v2816 = vadd.f32 %v2802, %v2815
    %2817 = vdwg.mxu0
    %2818 = vmatpush.bf16.msra.mxu0 %v2502
    %2819 = vmatpush.bf16.msra.mxu0 %v2499
    %2820 = vmatpush.bf16.msra.mxu0 %v2496
    %2821 = vmatpush.bf16.msra.mxu0 %v2493
    %2822 = vmatpush.bf16.msra.mxu0 %v2490
    %2823 = vmatpush.bf16.msra.mxu0 %v2487
    %2824 = vmatpush.bf16.msra.mxu0 %v2484
    %2825 = vmatpush.bf16.msra.mxu0 %v2481
    %2826 = vmatmul.bf16.gmra.mxu0 %v2064
    %v2827 = vpop.f32.mrf.mxu0
    %v2828 = vadd.f32 %v2814, %v2827
    %v2829 = vpop.f32.mrf.mxu0
    %v2830 = vadd.f32 %v2816, %v2829
    %2831 = vdwg.mxu0
    %2832 = vmatpush.bf16.msra.mxu0 %v2526
    %2833 = vmatpush.bf16.msra.mxu0 %v2523
    %2834 = vmatpush.bf16.msra.mxu0 %v2520
    %2835 = vmatpush.bf16.msra.mxu0 %v2517
    %2836 = vmatpush.bf16.msra.mxu0 %v2514
    %2837 = vmatpush.bf16.msra.mxu0 %v2511
    %2838 = vmatpush.bf16.msra.mxu0 %v2508
    %2839 = vmatpush.bf16.msra.mxu0 %v2505
    %2840 = vmatmul.bf16.gmra.mxu0 %v2065
    %v2841 = vpop.f32.mrf.mxu0
    %v2842 = vadd.f32 %v2828, %v2841
    %v2843 = vpop.f32.mrf.mxu0
    %v2844 = vadd.f32 %v2830, %v2843
    %2845 = vdwg.mxu0
    %2846 = vmatpush.bf16.msra.mxu0 0
    %2847 = vmatpush.bf16.msra.mxu0 0
    %2848 = vmatpush.bf16.msra.mxu0 0
    %2849 = vmatpush.bf16.msra.mxu0 0
    %2850 = vmatpush.bf16.msra.mxu0 %v2538
    %2851 = vmatpush.bf16.msra.mxu0 %v2535
    %2852 = vmatpush.bf16.msra.mxu0 %v2532
    %2853 = vmatpush.bf16.msra.mxu0 %v2529
    %2854 = vmatmul.bf16.gmra.mxu0 %v2648
    %v2855 = vpop.f32.mrf.mxu0
    %v2856 = vadd.f32 %v2842, %v2855
    %v2857 = vpop.f32.mrf.mxu0
    %v2858 = vadd.f32 %v2844, %v2857
    %2859 = vdwg.mxu0
    %v2861 = vperm.slane %v1895, 0
    %v2862 = vperm.slane %v1895, 1
    %v2863 = vperm.slane %v1895, 2
    %v2867 = vadd.f32 %v2861, %v2716
    %v2868 = vadd.f32 %v2862, %v2786
    %v2869 = vadd.f32 %v2863, %v2856
    %v2870 = vadd.f32 %v2861, %v2718
    %v2871 = vadd.f32 %v2862, %v2788
    %v2872 = vadd.f32 %v2863, %v2858
    %v2873 = vld [vmem:[#allocation2] sm:$0xee]
    %v2874 = vld [vmem:[#allocation2 + $0x8] sm:$0xee]
    %v2875 = vld [vmem:[#allocation2 + $0x10] sm:$0xe]
    %v2876 = vld [vmem:[#allocation2 + $0x14] sm:$0x77]
    %v2877 = vld [vmem:[#allocation2 + $0x1c] sm:$0x77]
    %v2878 = vld [vmem:[#allocation2 + $0x24] sm:$0x7]
    %s2879 = scalar_lea.vmem %s12, 864
    %v2880 = vld [vmem:[%s2879] sm:$0xff]
    %v2881 = vld [vmem:[%s2879 + $0x8] sm:$0xf]
    %v2882 = vld [vmem:[%s2879 + $0xc] sm:$0xff]
    %v2883 = vld [vmem:[%s2879 + $0x14] sm:$0xf]
    %v2884 = vld [vmem:[%s2879 + $0x18] sm:$0xff]
    %v2885 = vld [vmem:[%s2879 + $0x20] sm:$0xf]
    %v2886 = vld [vmem:[%s2879 + $0x24] sm:$0xff]
    %v2887 = vld [vmem:[%s2879 + $0x2c] sm:$0xf]
    %v2888 = vld [vmem:[%s2879 + $0x30] sm:$0xff]
    %v2889 = vld [vmem:[%s2879 + $0x38] sm:$0xf]
    %v2890 = vld [vmem:[%s2879 + $0x3c] sm:$0xff]
    %v2891 = vld [vmem:[%s2879 + $0x44] sm:$0xf]
    %v2892 = vld [vmem:[%s2879 + $0x48] sm:$0xff]
    %v2893 = vld [vmem:[%s2879 + $0x50] sm:$0xf]
    %v2894 = vld [vmem:[%s2879 + $0x54] sm:$0xff]
    %v2895 = vld [vmem:[%s2879 + $0x5c] sm:$0xf]
    %v2896 = vld [vmem:[%s2879 + $0x60] sm:$0xff]
    %v2897 = vld [vmem:[%s2879 + $0x68] sm:$0xf]
    %v2898 = vld [vmem:[%s2879 + $0x6c] sm:$0xff]
    %v2899 = vld [vmem:[%s2879 + $0x74] sm:$0xf]
    %v2900 = vld [vmem:[%s2879 + $0x78] sm:$0xff]
    %v2901 = vld [vmem:[%s2879 + $0x80] sm:$0xf]
    %v2902 = vld [vmem:[%s2879 + $0x84] sm:$0xff]
    %v2903 = vld [vmem:[%s2879 + $0x8c] sm:$0xf]
    %v2904 = vld [vmem:[%s2879 + $0x90] sm:$0xff]
    %v2905 = vld [vmem:[%s2879 + $0x98] sm:$0xf]
    %v2906 = vld [vmem:[%s2879 + $0x9c] sm:$0xff]
    %v2907 = vld [vmem:[%s2879 + $0xa4] sm:$0xf]
    %v2908 = vld [vmem:[%s2879 + $0xa8] sm:$0xff]
    %v2909 = vld [vmem:[%s2879 + $0xb0] sm:$0xf]
    %v2910 = vld [vmem:[%s2879 + $0xb4] sm:$0xff]
    %v2911 = vld [vmem:[%s2879 + $0xbc] sm:$0xf]
    %v2912 = vld [vmem:[%s2879 + $0xc0] sm:$0xff]
    %v2913 = vld [vmem:[%s2879 + $0xc8] sm:$0xf]
    %v2914 = vld [vmem:[%s2879 + $0xcc] sm:$0xff]
    %v2915 = vld [vmem:[%s2879 + $0xd4] sm:$0xf]
    %v2916 = vld [vmem:[%s2879 + $0xd8] sm:$0xff]
    %v2917 = vld [vmem:[%s2879 + $0xe0] sm:$0xf]
    %v2918 = vld [vmem:[%s2879 + $0xe4] sm:$0xff]
    %v2919 = vld [vmem:[%s2879 + $0xec] sm:$0xf]
    %v2920 = vld [vmem:[%s2879 + $0xf0] sm:$0xff]
    %v2921 = vld [vmem:[%s2879 + $0xf8] sm:$0xf]
    %v2922 = vld [vmem:[%s2879 + $0xfc] sm:$0xff]
    %v2923 = vld [vmem:[%s2879 + $0x104] sm:$0xf]
    %v2924 = vld [vmem:[%s2879 + $0x108] sm:$0xff]
    %v2925 = vld [vmem:[%s2879 + $0x110] sm:$0xf]
    %v2926 = vld [vmem:[%s2879 + $0x114] sm:$0xff]
    %v2927 = vld [vmem:[%s2879 + $0x11c] sm:$0xf]
    %v2928 = vld [vmem:[%s2879 + $0x120] sm:$0xff]
    %v2929 = vld [vmem:[%s2879 + $0x128] sm:$0xf]
    %v2930 = vld [vmem:[%s2879 + $0x12c] sm:$0xff]
    %v2931 = vld [vmem:[%s2879 + $0x134] sm:$0xf]
    %v2932 = vld [vmem:[%s2879 + $0x138] sm:$0xff]
    %v2933 = vld [vmem:[%s2879 + $0x140] sm:$0xf]
    %v2934 = vld [vmem:[%s2879 + $0x144] sm:$0xff]
    %v2935 = vld [vmem:[%s2879 + $0x14c] sm:$0xf]
    %v2936 = vld [vmem:[%s2879 + $0x150] sm:$0xff]
    %v2937 = vld [vmem:[%s2879 + $0x158] sm:$0xf]
    %v2938 = vld [vmem:[%s2879 + $0x15c] sm:$0xff]
    %v2939 = vld [vmem:[%s2879 + $0x164] sm:$0xf]
    %v2940 = vld [vmem:[%s2879 + $0x168] sm:$0xff]
    %v2941 = vld [vmem:[%s2879 + $0x170] sm:$0xf]
    %v2942 = vld [vmem:[%s2879 + $0x174] sm:$0xff]
    %v2943 = vld [vmem:[%s2879 + $0x17c] sm:$0xf]
    %v2944 = vld [vmem:[%s2879 + $0x180] sm:$0xff]
    %v2945 = vld [vmem:[%s2879 + $0x188] sm:$0xf]
    %v2946 = vld [vmem:[%s2879 + $0x18c] sm:$0xff]
    %v2947 = vld [vmem:[%s2879 + $0x194] sm:$0xf]
    %v2948 = vld [vmem:[%s2879 + $0x198] sm:$0xff]
    %v2949 = vld [vmem:[%s2879 + $0x1a0] sm:$0xf]
    %v2950 = vld [vmem:[%s2879 + $0x1a4] sm:$0xff]
    %v2951 = vld [vmem:[%s2879 + $0x1ac] sm:$0xf]
    %v2952 = vld [vmem:[%s2879 + $0x1b0] sm:$0xff]
    %v2953 = vld [vmem:[%s2879 + $0x1b8] sm:$0xf]
    %v2954 = vld [vmem:[%s2879 + $0x1bc] sm:$0xff]
    %v2955 = vld [vmem:[%s2879 + $0x1c4] sm:$0xf]
    %v2956 = vld [vmem:[%s2879 + $0x1c8] sm:$0xff]
    %v2957 = vld [vmem:[%s2879 + $0x1d0] sm:$0xf]
    %v2958 = vld [vmem:[%s2879 + $0x1d4] sm:$0xff]
    %v2959 = vld [vmem:[%s2879 + $0x1dc] sm:$0xf]
    %v2960 = vld [vmem:[%s2879 + $0x1e0] sm:$0xff]
    %v2961 = vld [vmem:[%s2879 + $0x1e8] sm:$0xf]
    %v2962 = vld [vmem:[%s2879 + $0x1ec] sm:$0xff]
    %v2963 = vld [vmem:[%s2879 + $0x1f4] sm:$0xf]
    %v2964 = vld [vmem:[%s2879 + $0x1f8] sm:$0xff]
    %v2965 = vld [vmem:[%s2879 + $0x200] sm:$0xf]
    %v2966 = vld [vmem:[%s2879 + $0x204] sm:$0xff]
    %v2967 = vld [vmem:[%s2879 + $0x20c] sm:$0xf]
    %v2968 = vld [vmem:[%s2879 + $0x210] sm:$0xff]
    %v2969 = vld [vmem:[%s2879 + $0x218] sm:$0xf]
    %v2970 = vld [vmem:[%s2879 + $0x21c] sm:$0xff]
    %v2971 = vld [vmem:[%s2879 + $0x224] sm:$0xf]
    %v2972 = vld [vmem:[%s2879 + $0x228] sm:$0xff]
    %v2973 = vld [vmem:[%s2879 + $0x230] sm:$0xf]
    %v2974 = vld [vmem:[%s2879 + $0x234] sm:$0xff]
    %v2975 = vld [vmem:[%s2879 + $0x23c] sm:$0xf]
    %v2976 = vld [vmem:[%s2879 + $0x240] sm:$0xff]
    %v2977 = vld [vmem:[%s2879 + $0x248] sm:$0xf]
    %v2978 = vld [vmem:[%s2879 + $0x24c] sm:$0xff]
    %v2979 = vld [vmem:[%s2879 + $0x254] sm:$0xf]
    %v2980 = vld [vmem:[%s2879 + $0x258] sm:$0xff]
    %v2981 = vld [vmem:[%s2879 + $0x260] sm:$0xf]
    %v2982 = vld [vmem:[%s2879 + $0x264] sm:$0xff]
    %v2983 = vld [vmem:[%s2879 + $0x26c] sm:$0xf]
    %v2984 = vld [vmem:[%s2879 + $0x270] sm:$0xff]
    %v2985 = vld [vmem:[%s2879 + $0x278] sm:$0xf]
    %v2986 = vld [vmem:[%s2879 + $0x27c] sm:$0xff]
    %v2987 = vld [vmem:[%s2879 + $0x284] sm:$0xf]
    %v2988 = vld [vmem:[%s2879 + $0x288] sm:$0xff]
    %v2989 = vld [vmem:[%s2879 + $0x290] sm:$0xf]
    %v2990 = vld [vmem:[%s2879 + $0x294] sm:$0xff]
    %v2991 = vld [vmem:[%s2879 + $0x29c] sm:$0xf]
    %v2992 = vld [vmem:[%s2879 + $0x2a0] sm:$0xff]
    %v2993 = vld [vmem:[%s2879 + $0x2a8] sm:$0xf]
    %v2994 = vld [vmem:[%s2879 + $0x2ac] sm:$0xff]
    %v2995 = vld [vmem:[%s2879 + $0x2b4] sm:$0xf]
    %v2996 = vld [vmem:[%s2879 + $0x2b8] sm:$0xff]
    %v2997 = vld [vmem:[%s2879 + $0x2c0] sm:$0xf]
    %v2998 = vld [vmem:[%s2879 + $0x2c4] sm:$0xff]
    %v2999 = vld [vmem:[%s2879 + $0x2cc] sm:$0xf]
    %v3000 = vld [vmem:[%s2879 + $0x2d0] sm:$0xff]
    %v3001 = vld [vmem:[%s2879 + $0x2d8] sm:$0xf]
    %v3002 = vld [vmem:[%s2879 + $0x2dc] sm:$0xff]
    %v3003 = vld [vmem:[%s2879 + $0x2e4] sm:$0xf]
    %v3004 = vld [vmem:[%s2879 + $0x2e8] sm:$0xff]
    %v3005 = vld [vmem:[%s2879 + $0x2f0] sm:$0xf]
    %v3006 = vld [vmem:[%s2879 + $0x2f4] sm:$0xff]
    %v3007 = vld [vmem:[%s2879 + $0x2fc] sm:$0xf]
    %v3008 = vld [vmem:[%s2879 + $0x300] sm:$0xff]
    %v3009 = vld [vmem:[%s2879 + $0x308] sm:$0xf]
    %v3010 = vld [vmem:[%s2879 + $0x30c] sm:$0xff]
    %v3011 = vld [vmem:[%s2879 + $0x314] sm:$0xf]
    %v3012 = vld [vmem:[%s2879 + $0x318] sm:$0xff]
    %v3013 = vld [vmem:[%s2879 + $0x320] sm:$0xf]
    %v3014 = vld [vmem:[%s2879 + $0x324] sm:$0xff]
    %v3015 = vld [vmem:[%s2879 + $0x32c] sm:$0xf]
    %v3016 = vld [vmem:[%s2879 + $0x330] sm:$0xff]
    %v3017 = vld [vmem:[%s2879 + $0x338] sm:$0xf]
    %v3018 = vld [vmem:[%s2879 + $0x33c] sm:$0xff]
    %v3019 = vld [vmem:[%s2879 + $0x344] sm:$0xf]
    %v3020 = vld [vmem:[%s2879 + $0x348] sm:$0xff]
    %v3021 = vld [vmem:[%s2879 + $0x350] sm:$0xf]
    %v3022 = vld [vmem:[%s2879 + $0x354] sm:$0xff]
    %v3023 = vld [vmem:[%s2879 + $0x35c] sm:$0xf]
    %v3030 = vunpack.c.l.b16 %v2873
    %v3031 = vunpack.c.h.b16 %v2873
    %v3032 = vunpack.c.l.b16 %v2874
    %v3033 = vunpack.c.h.b16 %v2874
    %v3034 = vunpack.c.l.b16 %v2875
    %v3035 = vunpack.c.l.b16 %v2876
    %v3036 = vunpack.c.h.b16 %v2876
    %v3037 = vunpack.c.l.b16 %v2877
    %v3038 = vunpack.c.h.b16 %v2877
    %v3039 = vunpack.c.l.b16 %v2878
    %v3040 = vpack.c.b16 %v3035, %v3030
    %v3041 = vpack.c.b16 %v3036, %v3031
    %v3042 = vpack.c.b16 %v3037, %v3032
    %v3043 = vpack.c.b16 %v3038, %v3033
    %v3044 = vpack.c.b16 %v3039, %v3034
    %v3045 = vrot.slane %v3040, 1
    %v3046 = vrot.slane %v3041, 1
    %v3047 = vrot.slane %v3042, 1
    %v3048 = vrot.slane %v3043, 1
    %v3049 = vrot.slane %v3044, 1
    %v3198 = vunpack.c.l.b16 %v2880
    %v3199 = vunpack.c.h.b16 %v2880
    %v3200 = vunpack.c.l.b16 %v2881
    %v3201 = vunpack.c.l.b16 %v2882
    %v3202 = vunpack.c.h.b16 %v2882
    %v3203 = vunpack.c.l.b16 %v2883
    %v3204 = vunpack.c.l.b16 %v2884
    %v3205 = vunpack.c.h.b16 %v2884
    %v3206 = vunpack.c.l.b16 %v2885
    %v3207 = vunpack.c.l.b16 %v2886
    %v3208 = vunpack.c.h.b16 %v2886
    %v3209 = vunpack.c.l.b16 %v2887
    %v3210 = vunpack.c.l.b16 %v2888
    %v3211 = vunpack.c.h.b16 %v2888
    %v3212 = vunpack.c.l.b16 %v2889
    %v3213 = vunpack.c.l.b16 %v2890
    %v3214 = vunpack.c.h.b16 %v2890
    %v3215 = vunpack.c.l.b16 %v2891
    %v3216 = vunpack.c.l.b16 %v2892
    %v3217 = vunpack.c.h.b16 %v2892
    %v3218 = vunpack.c.l.b16 %v2893
    %v3219 = vunpack.c.l.b16 %v2894
    %v3220 = vunpack.c.h.b16 %v2894
    %v3221 = vunpack.c.l.b16 %v2895
    %v3222 = vunpack.c.l.b16 %v2896
    %v3223 = vunpack.c.h.b16 %v2896
    %v3224 = vunpack.c.l.b16 %v2897
    %v3225 = vunpack.c.l.b16 %v2898
    %v3226 = vunpack.c.h.b16 %v2898
    %v3227 = vunpack.c.l.b16 %v2899
    %v3228 = vunpack.c.l.b16 %v2900
    %v3229 = vunpack.c.h.b16 %v2900
    %v3230 = vunpack.c.l.b16 %v2901
    %v3231 = vunpack.c.l.b16 %v2902
    %v3232 = vunpack.c.h.b16 %v2902
    %v3233 = vunpack.c.l.b16 %v2903
    %v3234 = vunpack.c.l.b16 %v2904
    %v3235 = vunpack.c.h.b16 %v2904
    %v3236 = vunpack.c.l.b16 %v2905
    %v3237 = vunpack.c.l.b16 %v2906
    %v3238 = vunpack.c.h.b16 %v2906
    %v3239 = vunpack.c.l.b16 %v2907
    %v3240 = vunpack.c.l.b16 %v2908
    %v3241 = vunpack.c.h.b16 %v2908
    %v3242 = vunpack.c.l.b16 %v2909
    %v3243 = vunpack.c.l.b16 %v2910
    %v3244 = vunpack.c.h.b16 %v2910
    %v3245 = vunpack.c.l.b16 %v2911
    %v3246 = vunpack.c.l.b16 %v2912
    %v3247 = vunpack.c.h.b16 %v2912
    %v3248 = vunpack.c.l.b16 %v2913
    %v3249 = vunpack.c.l.b16 %v2914
    %v3250 = vunpack.c.h.b16 %v2914
    %v3251 = vunpack.c.l.b16 %v2915
    %v3252 = vunpack.c.l.b16 %v2916
    %v3253 = vunpack.c.h.b16 %v2916
    %v3254 = vunpack.c.l.b16 %v2917
    %v3255 = vunpack.c.l.b16 %v2918
    %v3256 = vunpack.c.h.b16 %v2918
    %v3257 = vunpack.c.l.b16 %v2919
    %v3258 = vunpack.c.l.b16 %v2920
    %v3259 = vunpack.c.h.b16 %v2920
    %v3260 = vunpack.c.l.b16 %v2921
    %v3261 = vunpack.c.l.b16 %v2922
    %v3262 = vunpack.c.h.b16 %v2922
    %v3263 = vunpack.c.l.b16 %v2923
    %v3264 = vunpack.c.l.b16 %v2924
    %v3265 = vunpack.c.h.b16 %v2924
    %v3266 = vunpack.c.l.b16 %v2925
    %v3267 = vunpack.c.l.b16 %v2926
    %v3268 = vunpack.c.h.b16 %v2926
    %v3269 = vunpack.c.l.b16 %v2927
    %v3270 = vunpack.c.l.b16 %v2928
    %v3271 = vunpack.c.h.b16 %v2928
    %v3272 = vunpack.c.l.b16 %v2929
    %v3273 = vunpack.c.l.b16 %v2930
    %v3274 = vunpack.c.h.b16 %v2930
    %v3275 = vunpack.c.l.b16 %v2931
    %v3276 = vunpack.c.l.b16 %v2932
    %v3277 = vunpack.c.h.b16 %v2932
    %v3278 = vunpack.c.l.b16 %v2933
    %v3279 = vunpack.c.l.b16 %v2934
    %v3280 = vunpack.c.h.b16 %v2934
    %v3281 = vunpack.c.l.b16 %v2935
    %v3282 = vunpack.c.l.b16 %v2936
    %v3283 = vunpack.c.h.b16 %v2936
    %v3284 = vunpack.c.l.b16 %v2937
    %v3285 = vunpack.c.l.b16 %v2938
    %v3286 = vunpack.c.h.b16 %v2938
    %v3287 = vunpack.c.l.b16 %v2939
    %v3288 = vunpack.c.l.b16 %v2940
    %v3289 = vunpack.c.h.b16 %v2940
    %v3290 = vunpack.c.l.b16 %v2941
    %v3291 = vunpack.c.l.b16 %v2942
    %v3292 = vunpack.c.h.b16 %v2942
    %v3293 = vunpack.c.l.b16 %v2943
    %v3294 = vunpack.c.l.b16 %v2944
    %v3295 = vunpack.c.h.b16 %v2944
    %v3296 = vunpack.c.l.b16 %v2945
    %v3297 = vunpack.c.l.b16 %v2946
    %v3298 = vunpack.c.h.b16 %v2946
    %v3299 = vunpack.c.l.b16 %v2947
    %v3300 = vunpack.c.l.b16 %v2948
    %v3301 = vunpack.c.h.b16 %v2948
    %v3302 = vunpack.c.l.b16 %v2949
    %v3303 = vunpack.c.l.b16 %v2950
    %v3304 = vunpack.c.h.b16 %v2950
    %v3305 = vunpack.c.l.b16 %v2951
    %v3306 = vunpack.c.l.b16 %v2952
    %v3307 = vunpack.c.h.b16 %v2952
    %v3308 = vunpack.c.l.b16 %v2953
    %v3309 = vunpack.c.l.b16 %v2954
    %v3310 = vunpack.c.h.b16 %v2954
    %v3311 = vunpack.c.l.b16 %v2955
    %v3312 = vunpack.c.l.b16 %v2956
    %v3313 = vunpack.c.h.b16 %v2956
    %v3314 = vunpack.c.l.b16 %v2957
    %v3315 = vunpack.c.l.b16 %v2958
    %v3316 = vunpack.c.h.b16 %v2958
    %v3317 = vunpack.c.l.b16 %v2959
    %v3318 = vunpack.c.l.b16 %v2960
    %v3319 = vunpack.c.h.b16 %v2960
    %v3320 = vunpack.c.l.b16 %v2961
    %v3321 = vunpack.c.l.b16 %v2962
    %v3322 = vunpack.c.h.b16 %v2962
    %v3323 = vunpack.c.l.b16 %v2963
    %v3324 = vunpack.c.l.b16 %v2964
    %v3325 = vunpack.c.h.b16 %v2964
    %v3326 = vunpack.c.l.b16 %v2965
    %v3327 = vunpack.c.l.b16 %v2966
    %v3328 = vunpack.c.h.b16 %v2966
    %v3329 = vunpack.c.l.b16 %v2967
    %v3330 = vunpack.c.l.b16 %v2968
    %v3331 = vunpack.c.h.b16 %v2968
    %v3332 = vunpack.c.l.b16 %v2969
    %v3333 = vunpack.c.l.b16 %v2970
    %v3334 = vunpack.c.h.b16 %v2970
    %v3335 = vunpack.c.l.b16 %v2971
    %v3336 = vunpack.c.l.b16 %v2972
    %v3337 = vunpack.c.h.b16 %v2972
    %v3338 = vunpack.c.l.b16 %v2973
    %v3339 = vunpack.c.l.b16 %v2974
    %v3340 = vunpack.c.h.b16 %v2974
    %v3341 = vunpack.c.l.b16 %v2975
    %v3342 = vunpack.c.l.b16 %v2976
    %v3343 = vunpack.c.h.b16 %v2976
    %v3344 = vunpack.c.l.b16 %v2977
    %v3345 = vunpack.c.l.b16 %v2978
    %v3346 = vunpack.c.h.b16 %v2978
    %v3347 = vunpack.c.l.b16 %v2979
    %v3348 = vunpack.c.l.b16 %v2980
    %v3349 = vunpack.c.h.b16 %v2980
    %v3350 = vunpack.c.l.b16 %v2981
    %v3351 = vunpack.c.l.b16 %v2982
    %v3352 = vunpack.c.h.b16 %v2982
    %v3353 = vunpack.c.l.b16 %v2983
    %v3354 = vunpack.c.l.b16 %v2984
    %v3355 = vunpack.c.h.b16 %v2984
    %v3356 = vunpack.c.l.b16 %v2985
    %v3357 = vunpack.c.l.b16 %v2986
    %v3358 = vunpack.c.h.b16 %v2986
    %v3359 = vunpack.c.l.b16 %v2987
    %v3360 = vunpack.c.l.b16 %v2988
    %v3361 = vunpack.c.h.b16 %v2988
    %v3362 = vunpack.c.l.b16 %v2989
    %v3363 = vunpack.c.l.b16 %v2990
    %v3364 = vunpack.c.h.b16 %v2990
    %v3365 = vunpack.c.l.b16 %v2991
    %v3366 = vunpack.c.l.b16 %v2992
    %v3367 = vunpack.c.h.b16 %v2992
    %v3368 = vunpack.c.l.b16 %v2993
    %v3369 = vunpack.c.l.b16 %v2994
    %v3370 = vunpack.c.h.b16 %v2994
    %v3371 = vunpack.c.l.b16 %v2995
    %v3372 = vunpack.c.l.b16 %v2996
    %v3373 = vunpack.c.h.b16 %v2996
    %v3374 = vunpack.c.l.b16 %v2997
    %v3375 = vunpack.c.l.b16 %v2998
    %v3376 = vunpack.c.h.b16 %v2998
    %v3377 = vunpack.c.l.b16 %v2999
    %v3378 = vunpack.c.l.b16 %v3000
    %v3379 = vunpack.c.h.b16 %v3000
    %v3380 = vunpack.c.l.b16 %v3001
    %v3381 = vunpack.c.l.b16 %v3002
    %v3382 = vunpack.c.h.b16 %v3002
    %v3383 = vunpack.c.l.b16 %v3003
    %v3384 = vunpack.c.l.b16 %v3004
    %v3385 = vunpack.c.h.b16 %v3004
    %v3386 = vunpack.c.l.b16 %v3005
    %v3387 = vunpack.c.l.b16 %v3006
    %v3388 = vunpack.c.h.b16 %v3006
    %v3389 = vunpack.c.l.b16 %v3007
    %v3390 = vunpack.c.l.b16 %v3008
    %v3391 = vunpack.c.h.b16 %v3008
    %v3392 = vunpack.c.l.b16 %v3009
    %v3393 = vunpack.c.l.b16 %v3010
    %v3394 = vunpack.c.h.b16 %v3010
    %v3395 = vunpack.c.l.b16 %v3011
    %v3396 = vunpack.c.l.b16 %v3012
    %v3397 = vunpack.c.h.b16 %v3012
    %v3398 = vunpack.c.l.b16 %v3013
    %v3399 = vunpack.c.l.b16 %v3014
    %v3400 = vunpack.c.h.b16 %v3014
    %v3401 = vunpack.c.l.b16 %v3015
    %v3402 = vunpack.c.l.b16 %v3016
    %v3403 = vunpack.c.h.b16 %v3016
    %v3404 = vunpack.c.l.b16 %v3017
    %v3405 = vunpack.c.l.b16 %v3018
    %v3406 = vunpack.c.h.b16 %v3018
    %v3407 = vunpack.c.l.b16 %v3019
    %v3408 = vunpack.c.l.b16 %v3020
    %v3409 = vunpack.c.h.b16 %v3020
    %v3410 = vunpack.c.l.b16 %v3021
    %v3411 = vunpack.c.l.b16 %v3022
    %v3412 = vunpack.c.h.b16 %v3022
    %v3413 = vunpack.c.l.b16 %v3023
    %v3414 = vpack.c.b16 %v3201, %v3198
    %v3415 = vpack.c.b16 %v3202, %v3199
    %v3416 = vpack.c.b16 %v3203, %v3200
    %v3417 = vpack.c.b16 %v3207, %v3204
    %v3418 = vpack.c.b16 %v3208, %v3205
    %v3419 = vpack.c.b16 %v3209, %v3206
    %v3420 = vpack.c.b16 %v3213, %v3210
    %v3421 = vpack.c.b16 %v3214, %v3211
    %v3422 = vpack.c.b16 %v3215, %v3212
    %v3423 = vpack.c.b16 %v3219, %v3216
    %v3424 = vpack.c.b16 %v3220, %v3217
    %v3425 = vpack.c.b16 %v3221, %v3218
    %v3426 = vpack.c.b16 %v3225, %v3222
    %v3427 = vpack.c.b16 %v3226, %v3223
    %v3428 = vpack.c.b16 %v3227, %v3224
    %v3429 = vpack.c.b16 %v3231, %v3228
    %v3430 = vpack.c.b16 %v3232, %v3229
    %v3431 = vpack.c.b16 %v3233, %v3230
    %v3432 = vpack.c.b16 %v3237, %v3234
    %v3433 = vpack.c.b16 %v3238, %v3235
    %v3434 = vpack.c.b16 %v3239, %v3236
    %v3435 = vpack.c.b16 %v3243, %v3240
    %v3436 = vpack.c.b16 %v3244, %v3241
    %v3437 = vpack.c.b16 %v3245, %v3242
    %v3438 = vpack.c.b16 %v3249, %v3246
    %v3439 = vpack.c.b16 %v3250, %v3247
    %v3440 = vpack.c.b16 %v3251, %v3248
    %v3441 = vpack.c.b16 %v3255, %v3252
    %v3442 = vpack.c.b16 %v3256, %v3253
    %v3443 = vpack.c.b16 %v3257, %v3254
    %v3444 = vpack.c.b16 %v3261, %v3258
    %v3445 = vpack.c.b16 %v3262, %v3259
    %v3446 = vpack.c.b16 %v3263, %v3260
    %v3447 = vpack.c.b16 %v3267, %v3264
    %v3448 = vpack.c.b16 %v3268, %v3265
    %v3449 = vpack.c.b16 %v3269, %v3266
    %v3450 = vpack.c.b16 %v3273, %v3270
    %v3451 = vpack.c.b16 %v3274, %v3271
    %v3452 = vpack.c.b16 %v3275, %v3272
    %v3453 = vpack.c.b16 %v3279, %v3276
    %v3454 = vpack.c.b16 %v3280, %v3277
    %v3455 = vpack.c.b16 %v3281, %v3278
    %v3456 = vpack.c.b16 %v3285, %v3282
    %v3457 = vpack.c.b16 %v3286, %v3283
    %v3458 = vpack.c.b16 %v3287, %v3284
    %v3459 = vpack.c.b16 %v3291, %v3288
    %v3460 = vpack.c.b16 %v3292, %v3289
    %v3461 = vpack.c.b16 %v3293, %v3290
    %v3462 = vpack.c.b16 %v3297, %v3294
    %v3463 = vpack.c.b16 %v3298, %v3295
    %v3464 = vpack.c.b16 %v3299, %v3296
    %v3465 = vpack.c.b16 %v3303, %v3300
    %v3466 = vpack.c.b16 %v3304, %v3301
    %v3467 = vpack.c.b16 %v3305, %v3302
    %v3468 = vpack.c.b16 %v3309, %v3306
    %v3469 = vpack.c.b16 %v3310, %v3307
    %v3470 = vpack.c.b16 %v3311, %v3308
    %v3471 = vpack.c.b16 %v3315, %v3312
    %v3472 = vpack.c.b16 %v3316, %v3313
    %v3473 = vpack.c.b16 %v3317, %v3314
    %v3474 = vpack.c.b16 %v3321, %v3318
    %v3475 = vpack.c.b16 %v3322, %v3319
    %v3476 = vpack.c.b16 %v3323, %v3320
    %v3477 = vpack.c.b16 %v3327, %v3324
    %v3478 = vpack.c.b16 %v3328, %v3325
    %v3479 = vpack.c.b16 %v3329, %v3326
    %v3480 = vpack.c.b16 %v3333, %v3330
    %v3481 = vpack.c.b16 %v3334, %v3331
    %v3482 = vpack.c.b16 %v3335, %v3332
    %v3483 = vpack.c.b16 %v3339, %v3336
    %v3484 = vpack.c.b16 %v3340, %v3337
    %v3485 = vpack.c.b16 %v3341, %v3338
    %v3486 = vpack.c.b16 %v3345, %v3342
    %v3487 = vpack.c.b16 %v3346, %v3343
    %v3488 = vpack.c.b16 %v3347, %v3344
    %v3489 = vpack.c.b16 %v3351, %v3348
    %v3490 = vpack.c.b16 %v3352, %v3349
    %v3491 = vpack.c.b16 %v3353, %v3350
    %v3492 = vpack.c.b16 %v3357, %v3354
    %v3493 = vpack.c.b16 %v3358, %v3355
    %v3494 = vpack.c.b16 %v3359, %v3356
    %v3495 = vpack.c.b16 %v3363, %v3360
    %v3496 = vpack.c.b16 %v3364, %v3361
    %v3497 = vpack.c.b16 %v3365, %v3362
    %v3498 = vpack.c.b16 %v3369, %v3366
    %v3499 = vpack.c.b16 %v3370, %v3367
    %v3500 = vpack.c.b16 %v3371, %v3368
    %v3501 = vpack.c.b16 %v3375, %v3372
    %v3502 = vpack.c.b16 %v3376, %v3373
    %v3503 = vpack.c.b16 %v3377, %v3374
    %v3504 = vpack.c.b16 %v3381, %v3378
    %v3505 = vpack.c.b16 %v3382, %v3379
    %v3506 = vpack.c.b16 %v3383, %v3380
    %v3507 = vpack.c.b16 %v3387, %v3384
    %v3508 = vpack.c.b16 %v3388, %v3385
    %v3509 = vpack.c.b16 %v3389, %v3386
    %v3510 = vpack.c.b16 %v3393, %v3390
    %v3511 = vpack.c.b16 %v3394, %v3391
    %v3512 = vpack.c.b16 %v3395, %v3392
    %v3513 = vpack.c.b16 %v3399, %v3396
    %v3514 = vpack.c.b16 %v3400, %v3397
    %v3515 = vpack.c.b16 %v3401, %v3398
    %v3516 = vpack.c.b16 %v3405, %v3402
    %v3517 = vpack.c.b16 %v3406, %v3403
    %v3518 = vpack.c.b16 %v3407, %v3404
    %v3519 = vpack.c.b16 %v3411, %v3408
    %v3520 = vpack.c.b16 %v3412, %v3409
    %v3521 = vpack.c.b16 %v3413, %v3410
    %v3631 = vsel %vm687, %v3049, 0
    %3633 = vmatpush.bf16.msra.mxu0 %v3435
    %3634 = vmatpush.bf16.msra.mxu0 %v3432
    %3635 = vmatpush.bf16.msra.mxu0 %v3429
    %3636 = vmatpush.bf16.msra.mxu0 %v3426
    %3637 = vmatpush.bf16.msra.mxu0 %v3423
    %3638 = vmatpush.bf16.msra.mxu0 %v3420
    %3639 = vmatpush.bf16.msra.mxu0 %v3417
    %3640 = vmatpush.bf16.msra.mxu0 %v3414
    %3641 = vmatmul.bf16.gmra.mxu0 %v3045
    %v3642 = vpop.f32.mrf.mxu0
    %v3643 = vadd.f32 0.0, %v3642
    %v3644 = vpop.f32.mrf.mxu0
    %v3645 = vadd.f32 0.0, %v3644
    %3646 = vdwg.mxu0
    %3647 = vmatpush.bf16.msra.mxu0 %v3459
    %3648 = vmatpush.bf16.msra.mxu0 %v3456
    %3649 = vmatpush.bf16.msra.mxu0 %v3453
    %3650 = vmatpush.bf16.msra.mxu0 %v3450
    %3651 = vmatpush.bf16.msra.mxu0 %v3447
    %3652 = vmatpush.bf16.msra.mxu0 %v3444
    %3653 = vmatpush.bf16.msra.mxu0 %v3441
    %3654 = vmatpush.bf16.msra.mxu0 %v3438
    %3655 = vmatmul.bf16.gmra.mxu0 %v3046
    %v3656 = vpop.f32.mrf.mxu0
    %v3657 = vadd.f32 %v3643, %v3656
    %v3658 = vpop.f32.mrf.mxu0
    %v3659 = vadd.f32 %v3645, %v3658
    %3660 = vdwg.mxu0
    %3661 = vmatpush.bf16.msra.mxu0 %v3483
    %3662 = vmatpush.bf16.msra.mxu0 %v3480
    %3663 = vmatpush.bf16.msra.mxu0 %v3477
    %3664 = vmatpush.bf16.msra.mxu0 %v3474
    %3665 = vmatpush.bf16.msra.mxu0 %v3471
    %3666 = vmatpush.bf16.msra.mxu0 %v3468
    %3667 = vmatpush.bf16.msra.mxu0 %v3465
    %3668 = vmatpush.bf16.msra.mxu0 %v3462
    %3669 = vmatmul.bf16.gmra.mxu0 %v3047
    %v3670 = vpop.f32.mrf.mxu0
    %v3671 = vadd.f32 %v3657, %v3670
    %v3672 = vpop.f32.mrf.mxu0
    %v3673 = vadd.f32 %v3659, %v3672
    %3674 = vdwg.mxu0
    %3675 = vmatpush.bf16.msra.mxu0 %v3507
    %3676 = vmatpush.bf16.msra.mxu0 %v3504
    %3677 = vmatpush.bf16.msra.mxu0 %v3501
    %3678 = vmatpush.bf16.msra.mxu0 %v3498
    %3679 = vmatpush.bf16.msra.mxu0 %v3495
    %3680 = vmatpush.bf16.msra.mxu0 %v3492
    %3681 = vmatpush.bf16.msra.mxu0 %v3489
    %3682 = vmatpush.bf16.msra.mxu0 %v3486
    %3683 = vmatmul.bf16.gmra.mxu0 %v3048
    %v3684 = vpop.f32.mrf.mxu0
    %v3685 = vadd.f32 %v3671, %v3684
    %v3686 = vpop.f32.mrf.mxu0
    %v3687 = vadd.f32 %v3673, %v3686
    %3688 = vdwg.mxu0
    %3689 = vmatpush.bf16.msra.mxu0 0
    %3690 = vmatpush.bf16.msra.mxu0 0
    %3691 = vmatpush.bf16.msra.mxu0 0
    %3692 = vmatpush.bf16.msra.mxu0 0
    %3693 = vmatpush.bf16.msra.mxu0 %v3519
    %3694 = vmatpush.bf16.msra.mxu0 %v3516
    %3695 = vmatpush.bf16.msra.mxu0 %v3513
    %3696 = vmatpush.bf16.msra.mxu0 %v3510
    %3697 = vmatmul.bf16.gmra.mxu0 %v3631
    %v3698 = vpop.f32.mrf.mxu0
    %v3699 = vadd.f32 %v3685, %v3698
    %v3700 = vpop.f32.mrf.mxu0
    %v3701 = vadd.f32 %v3687, %v3700
    %3702 = vdwg.mxu0
    %3703 = vmatpush.bf16.msra.mxu0 %v3436
    %3704 = vmatpush.bf16.msra.mxu0 %v3433
    %3705 = vmatpush.bf16.msra.mxu0 %v3430
    %3706 = vmatpush.bf16.msra.mxu0 %v3427
    %3707 = vmatpush.bf16.msra.mxu0 %v3424
    %3708 = vmatpush.bf16.msra.mxu0 %v3421
    %3709 = vmatpush.bf16.msra.mxu0 %v3418
    %3710 = vmatpush.bf16.msra.mxu0 %v3415
    %3711 = vmatmul.bf16.gmra.mxu0 %v3045
    %v3712 = vpop.f32.mrf.mxu0
    %v3713 = vadd.f32 0.0, %v3712
    %v3714 = vpop.f32.mrf.mxu0
    %v3715 = vadd.f32 0.0, %v3714
    %3716 = vdwg.mxu0
    %3717 = vmatpush.bf16.msra.mxu0 %v3460
    %3718 = vmatpush.bf16.msra.mxu0 %v3457
    %3719 = vmatpush.bf16.msra.mxu0 %v3454
    %3720 = vmatpush.bf16.msra.mxu0 %v3451
    %3721 = vmatpush.bf16.msra.mxu0 %v3448
    %3722 = vmatpush.bf16.msra.mxu0 %v3445
    %3723 = vmatpush.bf16.msra.mxu0 %v3442
    %3724 = vmatpush.bf16.msra.mxu0 %v3439
    %3725 = vmatmul.bf16.gmra.mxu0 %v3046
    %v3726 = vpop.f32.mrf.mxu0
    %v3727 = vadd.f32 %v3713, %v3726
    %v3728 = vpop.f32.mrf.mxu0
    %v3729 = vadd.f32 %v3715, %v3728
    %3730 = vdwg.mxu0
    %3731 = vmatpush.bf16.msra.mxu0 %v3484
    %3732 = vmatpush.bf16.msra.mxu0 %v3481
    %3733 = vmatpush.bf16.msra.mxu0 %v3478
    %3734 = vmatpush.bf16.msra.mxu0 %v3475
    %3735 = vmatpush.bf16.msra.mxu0 %v3472
    %3736 = vmatpush.bf16.msra.mxu0 %v3469
    %3737 = vmatpush.bf16.msra.mxu0 %v3466
    %3738 = vmatpush.bf16.msra.mxu0 %v3463
    %3739 = vmatmul.bf16.gmra.mxu0 %v3047
    %v3740 = vpop.f32.mrf.mxu0
    %v3741 = vadd.f32 %v3727, %v3740
    %v3742 = vpop.f32.mrf.mxu0
    %v3743 = vadd.f32 %v3729, %v3742
    %3744 = vdwg.mxu0
    %3745 = vmatpush.bf16.msra.mxu0 %v3508
    %3746 = vmatpush.bf16.msra.mxu0 %v3505
    %3747 = vmatpush.bf16.msra.mxu0 %v3502
    %3748 = vmatpush.bf16.msra.mxu0 %v3499
    %3749 = vmatpush.bf16.msra.mxu0 %v3496
    %3750 = vmatpush.bf16.msra.mxu0 %v3493
    %3751 = vmatpush.bf16.msra.mxu0 %v3490
    %3752 = vmatpush.bf16.msra.mxu0 %v3487
    %3753 = vmatmul.bf16.gmra.mxu0 %v3048
    %v3754 = vpop.f32.mrf.mxu0
    %v3755 = vadd.f32 %v3741, %v3754
    %v3756 = vpop.f32.mrf.mxu0
    %v3757 = vadd.f32 %v3743, %v3756
    %3758 = vdwg.mxu0
    %3759 = vmatpush.bf16.msra.mxu0 0
    %3760 = vmatpush.bf16.msra.mxu0 0
    %3761 = vmatpush.bf16.msra.mxu0 0
    %3762 = vmatpush.bf16.msra.mxu0 0
    %3763 = vmatpush.bf16.msra.mxu0 %v3520
    %3764 = vmatpush.bf16.msra.mxu0 %v3517
    %3765 = vmatpush.bf16.msra.mxu0 %v3514
    %3766 = vmatpush.bf16.msra.mxu0 %v3511
    %3767 = vmatmul.bf16.gmra.mxu0 %v3631
    %v3768 = vpop.f32.mrf.mxu0
    %v3769 = vadd.f32 %v3755, %v3768
    %v3770 = vpop.f32.mrf.mxu0
    %v3771 = vadd.f32 %v3757, %v3770
    %3772 = vdwg.mxu0
    %3773 = vmatpush.bf16.msra.mxu0 %v3437
    %3774 = vmatpush.bf16.msra.mxu0 %v3434
    %3775 = vmatpush.bf16.msra.mxu0 %v3431
    %3776 = vmatpush.bf16.msra.mxu0 %v3428
    %3777 = vmatpush.bf16.msra.mxu0 %v3425
    %3778 = vmatpush.bf16.msra.mxu0 %v3422
    %3779 = vmatpush.bf16.msra.mxu0 %v3419
    %3780 = vmatpush.bf16.msra.mxu0 %v3416
    %3781 = vmatmul.bf16.gmra.mxu0 %v3045
    %v3782 = vpop.f32.mrf.mxu0
    %v3783 = vadd.f32 0.0, %v3782
    %v3784 = vpop.f32.mrf.mxu0
    %v3785 = vadd.f32 0.0, %v3784
    %3786 = vdwg.mxu0
    %3787 = vmatpush.bf16.msra.mxu0 %v3461
    %3788 = vmatpush.bf16.msra.mxu0 %v3458
    %3789 = vmatpush.bf16.msra.mxu0 %v3455
    %3790 = vmatpush.bf16.msra.mxu0 %v3452
    %3791 = vmatpush.bf16.msra.mxu0 %v3449
    %3792 = vmatpush.bf16.msra.mxu0 %v3446
    %3793 = vmatpush.bf16.msra.mxu0 %v3443
    %3794 = vmatpush.bf16.msra.mxu0 %v3440
    %3795 = vmatmul.bf16.gmra.mxu0 %v3046
    %v3796 = vpop.f32.mrf.mxu0
    %v3797 = vadd.f32 %v3783, %v3796
    %v3798 = vpop.f32.mrf.mxu0
    %v3799 = vadd.f32 %v3785, %v3798
    %3800 = vdwg.mxu0
    %3801 = vmatpush.bf16.msra.mxu0 %v3485
    %3802 = vmatpush.bf16.msra.mxu0 %v3482
    %3803 = vmatpush.bf16.msra.mxu0 %v3479
    %3804 = vmatpush.bf16.msra.mxu0 %v3476
    %3805 = vmatpush.bf16.msra.mxu0 %v3473
    %3806 = vmatpush.bf16.msra.mxu0 %v3470
    %3807 = vmatpush.bf16.msra.mxu0 %v3467
    %3808 = vmatpush.bf16.msra.mxu0 %v3464
    %3809 = vmatmul.bf16.gmra.mxu0 %v3047
    %v3810 = vpop.f32.mrf.mxu0
    %v3811 = vadd.f32 %v3797, %v3810
    %v3812 = vpop.f32.mrf.mxu0
    %v3813 = vadd.f32 %v3799, %v3812
    %3814 = vdwg.mxu0
    %3815 = vmatpush.bf16.msra.mxu0 %v3509
    %3816 = vmatpush.bf16.msra.mxu0 %v3506
    %3817 = vmatpush.bf16.msra.mxu0 %v3503
    %3818 = vmatpush.bf16.msra.mxu0 %v3500
    %3819 = vmatpush.bf16.msra.mxu0 %v3497
    %3820 = vmatpush.bf16.msra.mxu0 %v3494
    %3821 = vmatpush.bf16.msra.mxu0 %v3491
    %3822 = vmatpush.bf16.msra.mxu0 %v3488
    %3823 = vmatmul.bf16.gmra.mxu0 %v3048
    %v3824 = vpop.f32.mrf.mxu0
    %v3825 = vadd.f32 %v3811, %v3824
    %v3826 = vpop.f32.mrf.mxu0
    %v3827 = vadd.f32 %v3813, %v3826
    %3828 = vdwg.mxu0
    %3829 = vmatpush.bf16.msra.mxu0 0
    %3830 = vmatpush.bf16.msra.mxu0 0
    %3831 = vmatpush.bf16.msra.mxu0 0
    %3832 = vmatpush.bf16.msra.mxu0 0
    %3833 = vmatpush.bf16.msra.mxu0 %v3521
    %3834 = vmatpush.bf16.msra.mxu0 %v3518
    %3835 = vmatpush.bf16.msra.mxu0 %v3515
    %3836 = vmatpush.bf16.msra.mxu0 %v3512
    %3837 = vmatmul.bf16.gmra.mxu0 %v3631
    %v3838 = vpop.f32.mrf.mxu0
    %v3839 = vadd.f32 %v3825, %v3838
    %v3840 = vpop.f32.mrf.mxu0
    %v3841 = vadd.f32 %v3827, %v3840
    %3842 = vdwg.mxu0
    %v3843 = vadd.f32 %v2867, %v3699
    %v3844 = vadd.f32 %v2868, %v3769
    %v3845 = vadd.f32 %v2869, %v3839
    %v3846 = vadd.f32 %v2870, %v3701
    %v3847 = vadd.f32 %v2871, %v3771
    %v3848 = vadd.f32 %v2872, %v3841
    %v3849 = vld [vmem:[#allocation2] sm:$0xcc]
    %v3850 = vld [vmem:[#allocation2 + $0x8] sm:$0xcc]
    %v3851 = vld [vmem:[#allocation2 + $0x10] sm:$0xc]
    %v3852 = vld [vmem:[#allocation2 + $0x14] sm:$0xff]
    %v3853 = vld [vmem:[#allocation2 + $0x1c] sm:$0xff]
    %v3854 = vld [vmem:[#allocation2 + $0x24] sm:$0xf]
    %s3855 = scalar_lea.vmem %s12, 1728
    %v3856 = vld [vmem:[%s3855] sm:$0xff]
    %v3857 = vld [vmem:[%s3855 + $0x8] sm:$0xf]
    %v3858 = vld [vmem:[%s3855 + $0xc] sm:$0xff]
    %v3859 = vld [vmem:[%s3855 + $0x14] sm:$0xf]
    %v3860 = vld [vmem:[%s3855 + $0x18] sm:$0xff]
    %v3861 = vld [vmem:[%s3855 + $0x20] sm:$0xf]
    %v3862 = vld [vmem:[%s3855 + $0x24] sm:$0xff]
    %v3863 = vld [vmem:[%s3855 + $0x2c] sm:$0xf]
    %v3864 = vld [vmem:[%s3855 + $0x30] sm:$0xff]
    %v3865 = vld [vmem:[%s3855 + $0x38] sm:$0xf]
    %v3866 = vld [vmem:[%s3855 + $0x3c] sm:$0xff]
    %v3867 = vld [vmem:[%s3855 + $0x44] sm:$0xf]
    %v3868 = vld [vmem:[%s3855 + $0x48] sm:$0xff]
    %v3869 = vld [vmem:[%s3855 + $0x50] sm:$0xf]
    %v3870 = vld [vmem:[%s3855 + $0x54] sm:$0xff]
    %v3871 = vld [vmem:[%s3855 + $0x5c] sm:$0xf]
    %v3872 = vld [vmem:[%s3855 + $0x60] sm:$0xff]
    %v3873 = vld [vmem:[%s3855 + $0x68] sm:$0xf]
    %v3874 = vld [vmem:[%s3855 + $0x6c] sm:$0xff]
    %v3875 = vld [vmem:[%s3855 + $0x74] sm:$0xf]
    %v3876 = vld [vmem:[%s3855 + $0x78] sm:$0xff]
    %v3877 = vld [vmem:[%s3855 + $0x80] sm:$0xf]
    %v3878 = vld [vmem:[%s3855 + $0x84] sm:$0xff]
    %v3879 = vld [vmem:[%s3855 + $0x8c] sm:$0xf]
    %v3880 = vld [vmem:[%s3855 + $0x90] sm:$0xff]
    %v3881 = vld [vmem:[%s3855 + $0x98] sm:$0xf]
    %v3882 = vld [vmem:[%s3855 + $0x9c] sm:$0xff]
    %v3883 = vld [vmem:[%s3855 + $0xa4] sm:$0xf]
    %v3884 = vld [vmem:[%s3855 + $0xa8] sm:$0xff]
    %v3885 = vld [vmem:[%s3855 + $0xb0] sm:$0xf]
    %v3886 = vld [vmem:[%s3855 + $0xb4] sm:$0xff]
    %v3887 = vld [vmem:[%s3855 + $0xbc] sm:$0xf]
    %v3888 = vld [vmem:[%s3855 + $0xc0] sm:$0xff]
    %v3889 = vld [vmem:[%s3855 + $0xc8] sm:$0xf]
    %v3890 = vld [vmem:[%s3855 + $0xcc] sm:$0xff]
    %v3891 = vld [vmem:[%s3855 + $0xd4] sm:$0xf]
    %v3892 = vld [vmem:[%s3855 + $0xd8] sm:$0xff]
    %v3893 = vld [vmem:[%s3855 + $0xe0] sm:$0xf]
    %v3894 = vld [vmem:[%s3855 + $0xe4] sm:$0xff]
    %v3895 = vld [vmem:[%s3855 + $0xec] sm:$0xf]
    %v3896 = vld [vmem:[%s3855 + $0xf0] sm:$0xff]
    %v3897 = vld [vmem:[%s3855 + $0xf8] sm:$0xf]
    %v3898 = vld [vmem:[%s3855 + $0xfc] sm:$0xff]
    %v3899 = vld [vmem:[%s3855 + $0x104] sm:$0xf]
    %v3900 = vld [vmem:[%s3855 + $0x108] sm:$0xff]
    %v3901 = vld [vmem:[%s3855 + $0x110] sm:$0xf]
    %v3902 = vld [vmem:[%s3855 + $0x114] sm:$0xff]
    %v3903 = vld [vmem:[%s3855 + $0x11c] sm:$0xf]
    %v3904 = vld [vmem:[%s3855 + $0x120] sm:$0xff]
    %v3905 = vld [vmem:[%s3855 + $0x128] sm:$0xf]
    %v3906 = vld [vmem:[%s3855 + $0x12c] sm:$0xff]
    %v3907 = vld [vmem:[%s3855 + $0x134] sm:$0xf]
    %v3908 = vld [vmem:[%s3855 + $0x138] sm:$0xff]
    %v3909 = vld [vmem:[%s3855 + $0x140] sm:$0xf]
    %v3910 = vld [vmem:[%s3855 + $0x144] sm:$0xff]
    %v3911 = vld [vmem:[%s3855 + $0x14c] sm:$0xf]
    %v3912 = vld [vmem:[%s3855 + $0x150] sm:$0xff]
    %v3913 = vld [vmem:[%s3855 + $0x158] sm:$0xf]
    %v3914 = vld [vmem:[%s3855 + $0x15c] sm:$0xff]
    %v3915 = vld [vmem:[%s3855 + $0x164] sm:$0xf]
    %v3916 = vld [vmem:[%s3855 + $0x168] sm:$0xff]
    %v3917 = vld [vmem:[%s3855 + $0x170] sm:$0xf]
    %v3918 = vld [vmem:[%s3855 + $0x174] sm:$0xff]
    %v3919 = vld [vmem:[%s3855 + $0x17c] sm:$0xf]
    %v3920 = vld [vmem:[%s3855 + $0x180] sm:$0xff]
    %v3921 = vld [vmem:[%s3855 + $0x188] sm:$0xf]
    %v3922 = vld [vmem:[%s3855 + $0x18c] sm:$0xff]
    %v3923 = vld [vmem:[%s3855 + $0x194] sm:$0xf]
    %v3924 = vld [vmem:[%s3855 + $0x198] sm:$0xff]
    %v3925 = vld [vmem:[%s3855 + $0x1a0] sm:$0xf]
    %v3926 = vld [vmem:[%s3855 + $0x1a4] sm:$0xff]
    %v3927 = vld [vmem:[%s3855 + $0x1ac] sm:$0xf]
    %v3928 = vld [vmem:[%s3855 + $0x1b0] sm:$0xff]
    %v3929 = vld [vmem:[%s3855 + $0x1b8] sm:$0xf]
    %v3930 = vld [vmem:[%s3855 + $0x1bc] sm:$0xff]
    %v3931 = vld [vmem:[%s3855 + $0x1c4] sm:$0xf]
    %v3932 = vld [vmem:[%s3855 + $0x1c8] sm:$0xff]
    %v3933 = vld [vmem:[%s3855 + $0x1d0] sm:$0xf]
    %v3934 = vld [vmem:[%s3855 + $0x1d4] sm:$0xff]
    %v3935 = vld [vmem:[%s3855 + $0x1dc] sm:$0xf]
    %v3936 = vld [vmem:[%s3855 + $0x1e0] sm:$0xff]
    %v3937 = vld [vmem:[%s3855 + $0x1e8] sm:$0xf]
    %v3938 = vld [vmem:[%s3855 + $0x1ec] sm:$0xff]
    %v3939 = vld [vmem:[%s3855 + $0x1f4] sm:$0xf]
    %v3940 = vld [vmem:[%s3855 + $0x1f8] sm:$0xff]
    %v3941 = vld [vmem:[%s3855 + $0x200] sm:$0xf]
    %v3942 = vld [vmem:[%s3855 + $0x204] sm:$0xff]
    %v3943 = vld [vmem:[%s3855 + $0x20c] sm:$0xf]
    %v3944 = vld [vmem:[%s3855 + $0x210] sm:$0xff]
    %v3945 = vld [vmem:[%s3855 + $0x218] sm:$0xf]
    %v3946 = vld [vmem:[%s3855 + $0x21c] sm:$0xff]
    %v3947 = vld [vmem:[%s3855 + $0x224] sm:$0xf]
    %v3948 = vld [vmem:[%s3855 + $0x228] sm:$0xff]
    %v3949 = vld [vmem:[%s3855 + $0x230] sm:$0xf]
    %v3950 = vld [vmem:[%s3855 + $0x234] sm:$0xff]
    %v3951 = vld [vmem:[%s3855 + $0x23c] sm:$0xf]
    %v3952 = vld [vmem:[%s3855 + $0x240] sm:$0xff]
    %v3953 = vld [vmem:[%s3855 + $0x248] sm:$0xf]
    %v3954 = vld [vmem:[%s3855 + $0x24c] sm:$0xff]
    %v3955 = vld [vmem:[%s3855 + $0x254] sm:$0xf]
    %v3956 = vld [vmem:[%s3855 + $0x258] sm:$0xff]
    %v3957 = vld [vmem:[%s3855 + $0x260] sm:$0xf]
    %v3958 = vld [vmem:[%s3855 + $0x264] sm:$0xff]
    %v3959 = vld [vmem:[%s3855 + $0x26c] sm:$0xf]
    %v3960 = vld [vmem:[%s3855 + $0x270] sm:$0xff]
    %v3961 = vld [vmem:[%s3855 + $0x278] sm:$0xf]
    %v3962 = vld [vmem:[%s3855 + $0x27c] sm:$0xff]
    %v3963 = vld [vmem:[%s3855 + $0x284] sm:$0xf]
    %v3964 = vld [vmem:[%s3855 + $0x288] sm:$0xff]
    %v3965 = vld [vmem:[%s3855 + $0x290] sm:$0xf]
    %v3966 = vld [vmem:[%s3855 + $0x294] sm:$0xff]
    %v3967 = vld [vmem:[%s3855 + $0x29c] sm:$0xf]
    %v3968 = vld [vmem:[%s3855 + $0x2a0] sm:$0xff]
    %v3969 = vld [vmem:[%s3855 + $0x2a8] sm:$0xf]
    %v3970 = vld [vmem:[%s3855 + $0x2ac] sm:$0xff]
    %v3971 = vld [vmem:[%s3855 + $0x2b4] sm:$0xf]
    %v3972 = vld [vmem:[%s3855 + $0x2b8] sm:$0xff]
    %v3973 = vld [vmem:[%s3855 + $0x2c0] sm:$0xf]
    %v3974 = vld [vmem:[%s3855 + $0x2c4] sm:$0xff]
    %v3975 = vld [vmem:[%s3855 + $0x2cc] sm:$0xf]
    %v3976 = vld [vmem:[%s3855 + $0x2d0] sm:$0xff]
    %v3977 = vld [vmem:[%s3855 + $0x2d8] sm:$0xf]
    %v3978 = vld [vmem:[%s3855 + $0x2dc] sm:$0xff]
    %v3979 = vld [vmem:[%s3855 + $0x2e4] sm:$0xf]
    %v3980 = vld [vmem:[%s3855 + $0x2e8] sm:$0xff]
    %v3981 = vld [vmem:[%s3855 + $0x2f0] sm:$0xf]
    %v3982 = vld [vmem:[%s3855 + $0x2f4] sm:$0xff]
    %v3983 = vld [vmem:[%s3855 + $0x2fc] sm:$0xf]
    %v3984 = vld [vmem:[%s3855 + $0x300] sm:$0xff]
    %v3985 = vld [vmem:[%s3855 + $0x308] sm:$0xf]
    %v3986 = vld [vmem:[%s3855 + $0x30c] sm:$0xff]
    %v3987 = vld [vmem:[%s3855 + $0x314] sm:$0xf]
    %v3988 = vld [vmem:[%s3855 + $0x318] sm:$0xff]
    %v3989 = vld [vmem:[%s3855 + $0x320] sm:$0xf]
    %v3990 = vld [vmem:[%s3855 + $0x324] sm:$0xff]
    %v3991 = vld [vmem:[%s3855 + $0x32c] sm:$0xf]
    %v3992 = vld [vmem:[%s3855 + $0x330] sm:$0xff]
    %v3993 = vld [vmem:[%s3855 + $0x338] sm:$0xf]
    %v3994 = vld [vmem:[%s3855 + $0x33c] sm:$0xff]
    %v3995 = vld [vmem:[%s3855 + $0x344] sm:$0xf]
    %v3996 = vld [vmem:[%s3855 + $0x348] sm:$0xff]
    %v3997 = vld [vmem:[%s3855 + $0x350] sm:$0xf]
    %v3998 = vld [vmem:[%s3855 + $0x354] sm:$0xff]
    %v3999 = vld [vmem:[%s3855 + $0x35c] sm:$0xf]
    %v4006 = vunpack.c.l.b16 %v3849
    %v4007 = vunpack.c.h.b16 %v3849
    %v4008 = vunpack.c.l.b16 %v3850
    %v4009 = vunpack.c.h.b16 %v3850
    %v4010 = vunpack.c.l.b16 %v3851
    %v4011 = vunpack.c.l.b16 %v3852
    %v4012 = vunpack.c.h.b16 %v3852
    %v4013 = vunpack.c.l.b16 %v3853
    %v4014 = vunpack.c.h.b16 %v3853
    %v4015 = vunpack.c.l.b16 %v3854
    %v4016 = vpack.c.b16 %v4011, %v4006
    %v4017 = vpack.c.b16 %v4012, %v4007
    %v4018 = vpack.c.b16 %v4013, %v4008
    %v4019 = vpack.c.b16 %v4014, %v4009
    %v4020 = vpack.c.b16 %v4015, %v4010
    %v4021 = vrot.slane %v4016, 2
    %v4022 = vrot.slane %v4017, 2
    %v4023 = vrot.slane %v4018, 2
    %v4024 = vrot.slane %v4019, 2
    %v4025 = vrot.slane %v4020, 2
    %v4174 = vunpack.c.l.b16 %v3856
    %v4175 = vunpack.c.h.b16 %v3856
    %v4176 = vunpack.c.l.b16 %v3857
    %v4177 = vunpack.c.l.b16 %v3858
    %v4178 = vunpack.c.h.b16 %v3858
    %v4179 = vunpack.c.l.b16 %v3859
    %v4180 = vunpack.c.l.b16 %v3860
    %v4181 = vunpack.c.h.b16 %v3860
    %v4182 = vunpack.c.l.b16 %v3861
    %v4183 = vunpack.c.l.b16 %v3862
    %v4184 = vunpack.c.h.b16 %v3862
    %v4185 = vunpack.c.l.b16 %v3863
    %v4186 = vunpack.c.l.b16 %v3864
    %v4187 = vunpack.c.h.b16 %v3864
    %v4188 = vunpack.c.l.b16 %v3865
    %v4189 = vunpack.c.l.b16 %v3866
    %v4190 = vunpack.c.h.b16 %v3866
    %v4191 = vunpack.c.l.b16 %v3867
    %v4192 = vunpack.c.l.b16 %v3868
    %v4193 = vunpack.c.h.b16 %v3868
    %v4194 = vunpack.c.l.b16 %v3869
    %v4195 = vunpack.c.l.b16 %v3870
    %v4196 = vunpack.c.h.b16 %v3870
    %v4197 = vunpack.c.l.b16 %v3871
    %v4198 = vunpack.c.l.b16 %v3872
    %v4199 = vunpack.c.h.b16 %v3872
    %v4200 = vunpack.c.l.b16 %v3873
    %v4201 = vunpack.c.l.b16 %v3874
    %v4202 = vunpack.c.h.b16 %v3874
    %v4203 = vunpack.c.l.b16 %v3875
    %v4204 = vunpack.c.l.b16 %v3876
    %v4205 = vunpack.c.h.b16 %v3876
    %v4206 = vunpack.c.l.b16 %v3877
    %v4207 = vunpack.c.l.b16 %v3878
    %v4208 = vunpack.c.h.b16 %v3878
    %v4209 = vunpack.c.l.b16 %v3879
    %v4210 = vunpack.c.l.b16 %v3880
    %v4211 = vunpack.c.h.b16 %v3880
    %v4212 = vunpack.c.l.b16 %v3881
    %v4213 = vunpack.c.l.b16 %v3882
    %v4214 = vunpack.c.h.b16 %v3882
    %v4215 = vunpack.c.l.b16 %v3883
    %v4216 = vunpack.c.l.b16 %v3884
    %v4217 = vunpack.c.h.b16 %v3884
    %v4218 = vunpack.c.l.b16 %v3885
    %v4219 = vunpack.c.l.b16 %v3886
    %v4220 = vunpack.c.h.b16 %v3886
    %v4221 = vunpack.c.l.b16 %v3887
    %v4222 = vunpack.c.l.b16 %v3888
    %v4223 = vunpack.c.h.b16 %v3888
    %v4224 = vunpack.c.l.b16 %v3889
    %v4225 = vunpack.c.l.b16 %v3890
    %v4226 = vunpack.c.h.b16 %v3890
    %v4227 = vunpack.c.l.b16 %v3891
    %v4228 = vunpack.c.l.b16 %v3892
    %v4229 = vunpack.c.h.b16 %v3892
    %v4230 = vunpack.c.l.b16 %v3893
    %v4231 = vunpack.c.l.b16 %v3894
    %v4232 = vunpack.c.h.b16 %v3894
    %v4233 = vunpack.c.l.b16 %v3895
    %v4234 = vunpack.c.l.b16 %v3896
    %v4235 = vunpack.c.h.b16 %v3896
    %v4236 = vunpack.c.l.b16 %v3897
    %v4237 = vunpack.c.l.b16 %v3898
    %v4238 = vunpack.c.h.b16 %v3898
    %v4239 = vunpack.c.l.b16 %v3899
    %v4240 = vunpack.c.l.b16 %v3900
    %v4241 = vunpack.c.h.b16 %v3900
    %v4242 = vunpack.c.l.b16 %v3901
    %v4243 = vunpack.c.l.b16 %v3902
    %v4244 = vunpack.c.h.b16 %v3902
    %v4245 = vunpack.c.l.b16 %v3903
    %v4246 = vunpack.c.l.b16 %v3904
    %v4247 = vunpack.c.h.b16 %v3904
    %v4248 = vunpack.c.l.b16 %v3905
    %v4249 = vunpack.c.l.b16 %v3906
    %v4250 = vunpack.c.h.b16 %v3906
    %v4251 = vunpack.c.l.b16 %v3907
    %v4252 = vunpack.c.l.b16 %v3908
    %v4253 = vunpack.c.h.b16 %v3908
    %v4254 = vunpack.c.l.b16 %v3909
    %v4255 = vunpack.c.l.b16 %v3910
    %v4256 = vunpack.c.h.b16 %v3910
    %v4257 = vunpack.c.l.b16 %v3911
    %v4258 = vunpack.c.l.b16 %v3912
    %v4259 = vunpack.c.h.b16 %v3912
    %v4260 = vunpack.c.l.b16 %v3913
    %v4261 = vunpack.c.l.b16 %v3914
    %v4262 = vunpack.c.h.b16 %v3914
    %v4263 = vunpack.c.l.b16 %v3915
    %v4264 = vunpack.c.l.b16 %v3916
    %v4265 = vunpack.c.h.b16 %v3916
    %v4266 = vunpack.c.l.b16 %v3917
    %v4267 = vunpack.c.l.b16 %v3918
    %v4268 = vunpack.c.h.b16 %v3918
    %v4269 = vunpack.c.l.b16 %v3919
    %v4270 = vunpack.c.l.b16 %v3920
    %v4271 = vunpack.c.h.b16 %v3920
    %v4272 = vunpack.c.l.b16 %v3921
    %v4273 = vunpack.c.l.b16 %v3922
    %v4274 = vunpack.c.h.b16 %v3922
    %v4275 = vunpack.c.l.b16 %v3923
    %v4276 = vunpack.c.l.b16 %v3924
    %v4277 = vunpack.c.h.b16 %v3924
    %v4278 = vunpack.c.l.b16 %v3925
    %v4279 = vunpack.c.l.b16 %v3926
    %v4280 = vunpack.c.h.b16 %v3926
    %v4281 = vunpack.c.l.b16 %v3927
    %v4282 = vunpack.c.l.b16 %v3928
    %v4283 = vunpack.c.h.b16 %v3928
    %v4284 = vunpack.c.l.b16 %v3929
    %v4285 = vunpack.c.l.b16 %v3930
    %v4286 = vunpack.c.h.b16 %v3930
    %v4287 = vunpack.c.l.b16 %v3931
    %v4288 = vunpack.c.l.b16 %v3932
    %v4289 = vunpack.c.h.b16 %v3932
    %v4290 = vunpack.c.l.b16 %v3933
    %v4291 = vunpack.c.l.b16 %v3934
    %v4292 = vunpack.c.h.b16 %v3934
    %v4293 = vunpack.c.l.b16 %v3935
    %v4294 = vunpack.c.l.b16 %v3936
    %v4295 = vunpack.c.h.b16 %v3936
    %v4296 = vunpack.c.l.b16 %v3937
    %v4297 = vunpack.c.l.b16 %v3938
    %v4298 = vunpack.c.h.b16 %v3938
    %v4299 = vunpack.c.l.b16 %v3939
    %v4300 = vunpack.c.l.b16 %v3940
    %v4301 = vunpack.c.h.b16 %v3940
    %v4302 = vunpack.c.l.b16 %v3941
    %v4303 = vunpack.c.l.b16 %v3942
    %v4304 = vunpack.c.h.b16 %v3942
    %v4305 = vunpack.c.l.b16 %v3943
    %v4306 = vunpack.c.l.b16 %v3944
    %v4307 = vunpack.c.h.b16 %v3944
    %v4308 = vunpack.c.l.b16 %v3945
    %v4309 = vunpack.c.l.b16 %v3946
    %v4310 = vunpack.c.h.b16 %v3946
    %v4311 = vunpack.c.l.b16 %v3947
    %v4312 = vunpack.c.l.b16 %v3948
    %v4313 = vunpack.c.h.b16 %v3948
    %v4314 = vunpack.c.l.b16 %v3949
    %v4315 = vunpack.c.l.b16 %v3950
    %v4316 = vunpack.c.h.b16 %v3950
    %v4317 = vunpack.c.l.b16 %v3951
    %v4318 = vunpack.c.l.b16 %v3952
    %v4319 = vunpack.c.h.b16 %v3952
    %v4320 = vunpack.c.l.b16 %v3953
    %v4321 = vunpack.c.l.b16 %v3954
    %v4322 = vunpack.c.h.b16 %v3954
    %v4323 = vunpack.c.l.b16 %v3955
    %v4324 = vunpack.c.l.b16 %v3956
    %v4325 = vunpack.c.h.b16 %v3956
    %v4326 = vunpack.c.l.b16 %v3957
    %v4327 = vunpack.c.l.b16 %v3958
    %v4328 = vunpack.c.h.b16 %v3958
    %v4329 = vunpack.c.l.b16 %v3959
    %v4330 = vunpack.c.l.b16 %v3960
    %v4331 = vunpack.c.h.b16 %v3960
    %v4332 = vunpack.c.l.b16 %v3961
    %v4333 = vunpack.c.l.b16 %v3962
    %v4334 = vunpack.c.h.b16 %v3962
    %v4335 = vunpack.c.l.b16 %v3963
    %v4336 = vunpack.c.l.b16 %v3964
    %v4337 = vunpack.c.h.b16 %v3964
    %v4338 = vunpack.c.l.b16 %v3965
    %v4339 = vunpack.c.l.b16 %v3966
    %v4340 = vunpack.c.h.b16 %v3966
    %v4341 = vunpack.c.l.b16 %v3967
    %v4342 = vunpack.c.l.b16 %v3968
    %v4343 = vunpack.c.h.b16 %v3968
    %v4344 = vunpack.c.l.b16 %v3969
    %v4345 = vunpack.c.l.b16 %v3970
    %v4346 = vunpack.c.h.b16 %v3970
    %v4347 = vunpack.c.l.b16 %v3971
    %v4348 = vunpack.c.l.b16 %v3972
    %v4349 = vunpack.c.h.b16 %v3972
    %v4350 = vunpack.c.l.b16 %v3973
    %v4351 = vunpack.c.l.b16 %v3974
    %v4352 = vunpack.c.h.b16 %v3974
    %v4353 = vunpack.c.l.b16 %v3975
    %v4354 = vunpack.c.l.b16 %v3976
    %v4355 = vunpack.c.h.b16 %v3976
    %v4356 = vunpack.c.l.b16 %v3977
    %v4357 = vunpack.c.l.b16 %v3978
    %v4358 = vunpack.c.h.b16 %v3978
    %v4359 = vunpack.c.l.b16 %v3979
    %v4360 = vunpack.c.l.b16 %v3980
    %v4361 = vunpack.c.h.b16 %v3980
    %v4362 = vunpack.c.l.b16 %v3981
    %v4363 = vunpack.c.l.b16 %v3982
    %v4364 = vunpack.c.h.b16 %v3982
    %v4365 = vunpack.c.l.b16 %v3983
    %v4366 = vunpack.c.l.b16 %v3984
    %v4367 = vunpack.c.h.b16 %v3984
    %v4368 = vunpack.c.l.b16 %v3985
    %v4369 = vunpack.c.l.b16 %v3986
    %v4370 = vunpack.c.h.b16 %v3986
    %v4371 = vunpack.c.l.b16 %v3987
    %v4372 = vunpack.c.l.b16 %v3988
    %v4373 = vunpack.c.h.b16 %v3988
    %v4374 = vunpack.c.l.b16 %v3989
    %v4375 = vunpack.c.l.b16 %v3990
    %v4376 = vunpack.c.h.b16 %v3990
    %v4377 = vunpack.c.l.b16 %v3991
    %v4378 = vunpack.c.l.b16 %v3992
    %v4379 = vunpack.c.h.b16 %v3992
    %v4380 = vunpack.c.l.b16 %v3993
    %v4381 = vunpack.c.l.b16 %v3994
    %v4382 = vunpack.c.h.b16 %v3994
    %v4383 = vunpack.c.l.b16 %v3995
    %v4384 = vunpack.c.l.b16 %v3996
    %v4385 = vunpack.c.h.b16 %v3996
    %v4386 = vunpack.c.l.b16 %v3997
    %v4387 = vunpack.c.l.b16 %v3998
    %v4388 = vunpack.c.h.b16 %v3998
    %v4389 = vunpack.c.l.b16 %v3999
    %v4390 = vpack.c.b16 %v4177, %v4174
    %v4391 = vpack.c.b16 %v4178, %v4175
    %v4392 = vpack.c.b16 %v4179, %v4176
    %v4393 = vpack.c.b16 %v4183, %v4180
    %v4394 = vpack.c.b16 %v4184, %v4181
    %v4395 = vpack.c.b16 %v4185, %v4182
    %v4396 = vpack.c.b16 %v4189, %v4186
    %v4397 = vpack.c.b16 %v4190, %v4187
    %v4398 = vpack.c.b16 %v4191, %v4188
    %v4399 = vpack.c.b16 %v4195, %v4192
    %v4400 = vpack.c.b16 %v4196, %v4193
    %v4401 = vpack.c.b16 %v4197, %v4194
    %v4402 = vpack.c.b16 %v4201, %v4198
    %v4403 = vpack.c.b16 %v4202, %v4199
    %v4404 = vpack.c.b16 %v4203, %v4200
    %v4405 = vpack.c.b16 %v4207, %v4204
    %v4406 = vpack.c.b16 %v4208, %v4205
    %v4407 = vpack.c.b16 %v4209, %v4206
    %v4408 = vpack.c.b16 %v4213, %v4210
    %v4409 = vpack.c.b16 %v4214, %v4211
    %v4410 = vpack.c.b16 %v4215, %v4212
    %v4411 = vpack.c.b16 %v4219, %v4216
    %v4412 = vpack.c.b16 %v4220, %v4217
    %v4413 = vpack.c.b16 %v4221, %v4218
    %v4414 = vpack.c.b16 %v4225, %v4222
    %v4415 = vpack.c.b16 %v4226, %v4223
    %v4416 = vpack.c.b16 %v4227, %v4224
    %v4417 = vpack.c.b16 %v4231, %v4228
    %v4418 = vpack.c.b16 %v4232, %v4229
    %v4419 = vpack.c.b16 %v4233, %v4230
    %v4420 = vpack.c.b16 %v4237, %v4234
    %v4421 = vpack.c.b16 %v4238, %v4235
    %v4422 = vpack.c.b16 %v4239, %v4236
    %v4423 = vpack.c.b16 %v4243, %v4240
    %v4424 = vpack.c.b16 %v4244, %v4241
    %v4425 = vpack.c.b16 %v4245, %v4242
    %v4426 = vpack.c.b16 %v4249, %v4246
    %v4427 = vpack.c.b16 %v4250, %v4247
    %v4428 = vpack.c.b16 %v4251, %v4248
    %v4429 = vpack.c.b16 %v4255, %v4252
    %v4430 = vpack.c.b16 %v4256, %v4253
    %v4431 = vpack.c.b16 %v4257, %v4254
    %v4432 = vpack.c.b16 %v4261, %v4258
    %v4433 = vpack.c.b16 %v4262, %v4259
    %v4434 = vpack.c.b16 %v4263, %v4260
    %v4435 = vpack.c.b16 %v4267, %v4264
    %v4436 = vpack.c.b16 %v4268, %v4265
    %v4437 = vpack.c.b16 %v4269, %v4266
    %v4438 = vpack.c.b16 %v4273, %v4270
    %v4439 = vpack.c.b16 %v4274, %v4271
    %v4440 = vpack.c.b16 %v4275, %v4272
    %v4441 = vpack.c.b16 %v4279, %v4276
    %v4442 = vpack.c.b16 %v4280, %v4277
    %v4443 = vpack.c.b16 %v4281, %v4278
    %v4444 = vpack.c.b16 %v4285, %v4282
    %v4445 = vpack.c.b16 %v4286, %v4283
    %v4446 = vpack.c.b16 %v4287, %v4284
    %v4447 = vpack.c.b16 %v4291, %v4288
    %v4448 = vpack.c.b16 %v4292, %v4289
    %v4449 = vpack.c.b16 %v4293, %v4290
    %v4450 = vpack.c.b16 %v4297, %v4294
    %v4451 = vpack.c.b16 %v4298, %v4295
    %v4452 = vpack.c.b16 %v4299, %v4296
    %v4453 = vpack.c.b16 %v4303, %v4300
    %v4454 = vpack.c.b16 %v4304, %v4301
    %v4455 = vpack.c.b16 %v4305, %v4302
    %v4456 = vpack.c.b16 %v4309, %v4306
    %v4457 = vpack.c.b16 %v4310, %v4307
    %v4458 = vpack.c.b16 %v4311, %v4308
    %v4459 = vpack.c.b16 %v4315, %v4312
    %v4460 = vpack.c.b16 %v4316, %v4313
    %v4461 = vpack.c.b16 %v4317, %v4314
    %v4462 = vpack.c.b16 %v4321, %v4318
    %v4463 = vpack.c.b16 %v4322, %v4319
    %v4464 = vpack.c.b16 %v4323, %v4320
    %v4465 = vpack.c.b16 %v4327, %v4324
    %v4466 = vpack.c.b16 %v4328, %v4325
    %v4467 = vpack.c.b16 %v4329, %v4326
    %v4468 = vpack.c.b16 %v4333, %v4330
    %v4469 = vpack.c.b16 %v4334, %v4331
    %v4470 = vpack.c.b16 %v4335, %v4332
    %v4471 = vpack.c.b16 %v4339, %v4336
    %v4472 = vpack.c.b16 %v4340, %v4337
    %v4473 = vpack.c.b16 %v4341, %v4338
    %v4474 = vpack.c.b16 %v4345, %v4342
    %v4475 = vpack.c.b16 %v4346, %v4343
    %v4476 = vpack.c.b16 %v4347, %v4344
    %v4477 = vpack.c.b16 %v4351, %v4348
    %v4478 = vpack.c.b16 %v4352, %v4349
    %v4479 = vpack.c.b16 %v4353, %v4350
    %v4480 = vpack.c.b16 %v4357, %v4354
    %v4481 = vpack.c.b16 %v4358, %v4355
    %v4482 = vpack.c.b16 %v4359, %v4356
    %v4483 = vpack.c.b16 %v4363, %v4360
    %v4484 = vpack.c.b16 %v4364, %v4361
    %v4485 = vpack.c.b16 %v4365, %v4362
    %v4486 = vpack.c.b16 %v4369, %v4366
    %v4487 = vpack.c.b16 %v4370, %v4367
    %v4488 = vpack.c.b16 %v4371, %v4368
    %v4489 = vpack.c.b16 %v4375, %v4372
    %v4490 = vpack.c.b16 %v4376, %v4373
    %v4491 = vpack.c.b16 %v4377, %v4374
    %v4492 = vpack.c.b16 %v4381, %v4378
    %v4493 = vpack.c.b16 %v4382, %v4379
    %v4494 = vpack.c.b16 %v4383, %v4380
    %v4495 = vpack.c.b16 %v4387, %v4384
    %v4496 = vpack.c.b16 %v4388, %v4385
    %v4497 = vpack.c.b16 %v4389, %v4386
    %v4607 = vsel %vm687, %v4025, 0
    %4609 = vmatpush.bf16.msra.mxu0 %v4411
    %4610 = vmatpush.bf16.msra.mxu0 %v4408
    %4611 = vmatpush.bf16.msra.mxu0 %v4405
    %4612 = vmatpush.bf16.msra.mxu0 %v4402
    %4613 = vmatpush.bf16.msra.mxu0 %v4399
    %4614 = vmatpush.bf16.msra.mxu0 %v4396
    %4615 = vmatpush.bf16.msra.mxu0 %v4393
    %4616 = vmatpush.bf16.msra.mxu0 %v4390
    %4617 = vmatmul.bf16.gmra.mxu0 %v4021
    %v4618 = vpop.f32.mrf.mxu0
    %v4619 = vadd.f32 0.0, %v4618
    %v4620 = vpop.f32.mrf.mxu0
    %v4621 = vadd.f32 0.0, %v4620
    %4622 = vdwg.mxu0
    %4623 = vmatpush.bf16.msra.mxu0 %v4435
    %4624 = vmatpush.bf16.msra.mxu0 %v4432
    %4625 = vmatpush.bf16.msra.mxu0 %v4429
    %4626 = vmatpush.bf16.msra.mxu0 %v4426
    %4627 = vmatpush.bf16.msra.mxu0 %v4423
    %4628 = vmatpush.bf16.msra.mxu0 %v4420
    %4629 = vmatpush.bf16.msra.mxu0 %v4417
    %4630 = vmatpush.bf16.msra.mxu0 %v4414
    %4631 = vmatmul.bf16.gmra.mxu0 %v4022
    %v4632 = vpop.f32.mrf.mxu0
    %v4633 = vadd.f32 %v4619, %v4632
    %v4634 = vpop.f32.mrf.mxu0
    %v4635 = vadd.f32 %v4621, %v4634
    %4636 = vdwg.mxu0
    %4637 = vmatpush.bf16.msra.mxu0 %v4459
    %4638 = vmatpush.bf16.msra.mxu0 %v4456
    %4639 = vmatpush.bf16.msra.mxu0 %v4453
    %4640 = vmatpush.bf16.msra.mxu0 %v4450
    %4641 = vmatpush.bf16.msra.mxu0 %v4447
    %4642 = vmatpush.bf16.msra.mxu0 %v4444
    %4643 = vmatpush.bf16.msra.mxu0 %v4441
    %4644 = vmatpush.bf16.msra.mxu0 %v4438
    %4645 = vmatmul.bf16.gmra.mxu0 %v4023
    %v4646 = vpop.f32.mrf.mxu0
    %v4647 = vadd.f32 %v4633, %v4646
    %v4648 = vpop.f32.mrf.mxu0
    %v4649 = vadd.f32 %v4635, %v4648
    %4650 = vdwg.mxu0
    %4651 = vmatpush.bf16.msra.mxu0 %v4483
    %4652 = vmatpush.bf16.msra.mxu0 %v4480
    %4653 = vmatpush.bf16.msra.mxu0 %v4477
    %4654 = vmatpush.bf16.msra.mxu0 %v4474
    %4655 = vmatpush.bf16.msra.mxu0 %v4471
    %4656 = vmatpush.bf16.msra.mxu0 %v4468
    %4657 = vmatpush.bf16.msra.mxu0 %v4465
    %4658 = vmatpush.bf16.msra.mxu0 %v4462
    %4659 = vmatmul.bf16.gmra.mxu0 %v4024
    %v4660 = vpop.f32.mrf.mxu0
    %v4661 = vadd.f32 %v4647, %v4660
    %v4662 = vpop.f32.mrf.mxu0
    %v4663 = vadd.f32 %v4649, %v4662
    %4664 = vdwg.mxu0
    %4665 = vmatpush.bf16.msra.mxu0 0
    %4666 = vmatpush.bf16.msra.mxu0 0
    %4667 = vmatpush.bf16.msra.mxu0 0
    %4668 = vmatpush.bf16.msra.mxu0 0
    %4669 = vmatpush.bf16.msra.mxu0 %v4495
    %4670 = vmatpush.bf16.msra.mxu0 %v4492
    %4671 = vmatpush.bf16.msra.mxu0 %v4489
    %4672 = vmatpush.bf16.msra.mxu0 %v4486
    %4673 = vmatmul.bf16.gmra.mxu0 %v4607
    %v4674 = vpop.f32.mrf.mxu0
    %v4675 = vadd.f32 %v4661, %v4674
    %v4676 = vpop.f32.mrf.mxu0
    %v4677 = vadd.f32 %v4663, %v4676
    %4678 = vdwg.mxu0
    %4679 = vmatpush.bf16.msra.mxu0 %v4412
    %4680 = vmatpush.bf16.msra.mxu0 %v4409
    %4681 = vmatpush.bf16.msra.mxu0 %v4406
    %4682 = vmatpush.bf16.msra.mxu0 %v4403
    %4683 = vmatpush.bf16.msra.mxu0 %v4400
    %4684 = vmatpush.bf16.msra.mxu0 %v4397
    %4685 = vmatpush.bf16.msra.mxu0 %v4394
    %4686 = vmatpush.bf16.msra.mxu0 %v4391
    %4687 = vmatmul.bf16.gmra.mxu0 %v4021
    %v4688 = vpop.f32.mrf.mxu0
    %v4689 = vadd.f32 0.0, %v4688
    %v4690 = vpop.f32.mrf.mxu0
    %v4691 = vadd.f32 0.0, %v4690
    %4692 = vdwg.mxu0
    %4693 = vmatpush.bf16.msra.mxu0 %v4436
    %4694 = vmatpush.bf16.msra.mxu0 %v4433
    %4695 = vmatpush.bf16.msra.mxu0 %v4430
    %4696 = vmatpush.bf16.msra.mxu0 %v4427
    %4697 = vmatpush.bf16.msra.mxu0 %v4424
    %4698 = vmatpush.bf16.msra.mxu0 %v4421
    %4699 = vmatpush.bf16.msra.mxu0 %v4418
    %4700 = vmatpush.bf16.msra.mxu0 %v4415
    %4701 = vmatmul.bf16.gmra.mxu0 %v4022
    %v4702 = vpop.f32.mrf.mxu0
    %v4703 = vadd.f32 %v4689, %v4702
    %v4704 = vpop.f32.mrf.mxu0
    %v4705 = vadd.f32 %v4691, %v4704
    %4706 = vdwg.mxu0
    %4707 = vmatpush.bf16.msra.mxu0 %v4460
    %4708 = vmatpush.bf16.msra.mxu0 %v4457
    %4709 = vmatpush.bf16.msra.mxu0 %v4454
    %4710 = vmatpush.bf16.msra.mxu0 %v4451
    %4711 = vmatpush.bf16.msra.mxu0 %v4448
    %4712 = vmatpush.bf16.msra.mxu0 %v4445
    %4713 = vmatpush.bf16.msra.mxu0 %v4442
    %4714 = vmatpush.bf16.msra.mxu0 %v4439
    %4715 = vmatmul.bf16.gmra.mxu0 %v4023
    %v4716 = vpop.f32.mrf.mxu0
    %v4717 = vadd.f32 %v4703, %v4716
    %v4718 = vpop.f32.mrf.mxu0
    %v4719 = vadd.f32 %v4705, %v4718
    %4720 = vdwg.mxu0
    %4721 = vmatpush.bf16.msra.mxu0 %v4484
    %4722 = vmatpush.bf16.msra.mxu0 %v4481
    %4723 = vmatpush.bf16.msra.mxu0 %v4478
    %4724 = vmatpush.bf16.msra.mxu0 %v4475
    %4725 = vmatpush.bf16.msra.mxu0 %v4472
    %4726 = vmatpush.bf16.msra.mxu0 %v4469
    %4727 = vmatpush.bf16.msra.mxu0 %v4466
    %4728 = vmatpush.bf16.msra.mxu0 %v4463
    %4729 = vmatmul.bf16.gmra.mxu0 %v4024
    %v4730 = vpop.f32.mrf.mxu0
    %v4731 = vadd.f32 %v4717, %v4730
    %v4732 = vpop.f32.mrf.mxu0
    %v4733 = vadd.f32 %v4719, %v4732
    %4734 = vdwg.mxu0
    %4735 = vmatpush.bf16.msra.mxu0 0
    %4736 = vmatpush.bf16.msra.mxu0 0
    %4737 = vmatpush.bf16.msra.mxu0 0
    %4738 = vmatpush.bf16.msra.mxu0 0
    %4739 = vmatpush.bf16.msra.mxu0 %v4496
    %4740 = vmatpush.bf16.msra.mxu0 %v4493
    %4741 = vmatpush.bf16.msra.mxu0 %v4490
    %4742 = vmatpush.bf16.msra.mxu0 %v4487
    %4743 = vmatmul.bf16.gmra.mxu0 %v4607
    %v4744 = vpop.f32.mrf.mxu0
    %v4745 = vadd.f32 %v4731, %v4744
    %v4746 = vpop.f32.mrf.mxu0
    %v4747 = vadd.f32 %v4733, %v4746
    %4748 = vdwg.mxu0
    %4749 = vmatpush.bf16.msra.mxu0 %v4413
    %4750 = vmatpush.bf16.msra.mxu0 %v4410
    %4751 = vmatpush.bf16.msra.mxu0 %v4407
    %4752 = vmatpush.bf16.msra.mxu0 %v4404
    %4753 = vmatpush.bf16.msra.mxu0 %v4401
    %4754 = vmatpush.bf16.msra.mxu0 %v4398
    %4755 = vmatpush.bf16.msra.mxu0 %v4395
    %4756 = vmatpush.bf16.msra.mxu0 %v4392
    %4757 = vmatmul.bf16.gmra.mxu0 %v4021
    %v4758 = vpop.f32.mrf.mxu0
    %v4759 = vadd.f32 0.0, %v4758
    %v4760 = vpop.f32.mrf.mxu0
    %v4761 = vadd.f32 0.0, %v4760
    %4762 = vdwg.mxu0
    %4763 = vmatpush.bf16.msra.mxu0 %v4437
    %4764 = vmatpush.bf16.msra.mxu0 %v4434
    %4765 = vmatpush.bf16.msra.mxu0 %v4431
    %4766 = vmatpush.bf16.msra.mxu0 %v4428
    %4767 = vmatpush.bf16.msra.mxu0 %v4425
    %4768 = vmatpush.bf16.msra.mxu0 %v4422
    %4769 = vmatpush.bf16.msra.mxu0 %v4419
    %4770 = vmatpush.bf16.msra.mxu0 %v4416
    %4771 = vmatmul.bf16.gmra.mxu0 %v4022
    %v4772 = vpop.f32.mrf.mxu0
    %v4773 = vadd.f32 %v4759, %v4772
    %v4774 = vpop.f32.mrf.mxu0
    %v4775 = vadd.f32 %v4761, %v4774
    %4776 = vdwg.mxu0
    %4777 = vmatpush.bf16.msra.mxu0 %v4461
    %4778 = vmatpush.bf16.msra.mxu0 %v4458
    %4779 = vmatpush.bf16.msra.mxu0 %v4455
    %4780 = vmatpush.bf16.msra.mxu0 %v4452
    %4781 = vmatpush.bf16.msra.mxu0 %v4449
    %4782 = vmatpush.bf16.msra.mxu0 %v4446
    %4783 = vmatpush.bf16.msra.mxu0 %v4443
    %4784 = vmatpush.bf16.msra.mxu0 %v4440
    %4785 = vmatmul.bf16.gmra.mxu0 %v4023
    %v4786 = vpop.f32.mrf.mxu0
    %v4787 = vadd.f32 %v4773, %v4786
    %v4788 = vpop.f32.mrf.mxu0
    %v4789 = vadd.f32 %v4775, %v4788
    %4790 = vdwg.mxu0
    %4791 = vmatpush.bf16.msra.mxu0 %v4485
    %4792 = vmatpush.bf16.msra.mxu0 %v4482
    %4793 = vmatpush.bf16.msra.mxu0 %v4479
    %4794 = vmatpush.bf16.msra.mxu0 %v4476
    %4795 = vmatpush.bf16.msra.mxu0 %v4473
    %4796 = vmatpush.bf16.msra.mxu0 %v4470
    %4797 = vmatpush.bf16.msra.mxu0 %v4467
    %4798 = vmatpush.bf16.msra.mxu0 %v4464
    %4799 = vmatmul.bf16.gmra.mxu0 %v4024
    %v4800 = vpop.f32.mrf.mxu0
    %v4801 = vadd.f32 %v4787, %v4800
    %v4802 = vpop.f32.mrf.mxu0
    %v4803 = vadd.f32 %v4789, %v4802
    %4804 = vdwg.mxu0
    %4805 = vmatpush.bf16.msra.mxu0 0
    %4806 = vmatpush.bf16.msra.mxu0 0
    %4807 = vmatpush.bf16.msra.mxu0 0
    %4808 = vmatpush.bf16.msra.mxu0 0
    %4809 = vmatpush.bf16.msra.mxu0 %v4497
    %4810 = vmatpush.bf16.msra.mxu0 %v4494
    %4811 = vmatpush.bf16.msra.mxu0 %v4491
    %4812 = vmatpush.bf16.msra.mxu0 %v4488
    %4813 = vmatmul.bf16.gmra.mxu0 %v4607
    %v4814 = vpop.f32.mrf.mxu0
    %v4815 = vadd.f32 %v4801, %v4814
    %v4816 = vpop.f32.mrf.mxu0
    %v4817 = vadd.f32 %v4803, %v4816
    %4818 = vdwg.mxu0
    %v4819 = vadd.f32 %v3843, %v4675
    %v4820 = vadd.f32 %v3844, %v4745
    %v4821 = vadd.f32 %v3845, %v4815
    %v4822 = vadd.f32 %v3846, %v4677
    %v4823 = vadd.f32 %v3847, %v4747
    %v4824 = vadd.f32 %v3848, %v4817
    %v4825 = vld [vmem:[#allocation2] sm:$0x88]
    %v4826 = vld [vmem:[#allocation2 + $0x8] sm:$0x88]
    %v4827 = vld [vmem:[#allocation2 + $0x10] sm:$0x8]
    %v4828 = vld [vmem:[#allocation2 + $0x14] sm:$0xff]
    %v4829 = vld [vmem:[#allocation2 + $0x1c] sm:$0xff]
    %v4830 = vld [vmem:[#allocation2 + $0x24] sm:$0xf]
    %v4831 = vld [vmem:[#allocation2 + $0x28] sm:$0x11]
    %v4832 = vld [vmem:[#allocation2 + $0x30] sm:$0x11]
    %v4833 = vld [vmem:[#allocation2 + $0x38] sm:$0x1]
    %s4834 = scalar_lea.vmem %s12, 2592
    %v4835 = vld [vmem:[%s4834] sm:$0xff]
    %v4836 = vld [vmem:[%s4834 + $0x8] sm:$0xf]
    %v4837 = vld [vmem:[%s4834 + $0xc] sm:$0xff]
    %v4838 = vld [vmem:[%s4834 + $0x14] sm:$0xf]
    %v4839 = vld [vmem:[%s4834 + $0x18] sm:$0xff]
    %v4840 = vld [vmem:[%s4834 + $0x20] sm:$0xf]
    %v4841 = vld [vmem:[%s4834 + $0x24] sm:$0xff]
    %v4842 = vld [vmem:[%s4834 + $0x2c] sm:$0xf]
    %v4843 = vld [vmem:[%s4834 + $0x30] sm:$0xff]
    %v4844 = vld [vmem:[%s4834 + $0x38] sm:$0xf]
    %v4845 = vld [vmem:[%s4834 + $0x3c] sm:$0xff]
    %v4846 = vld [vmem:[%s4834 + $0x44] sm:$0xf]
    %v4847 = vld [vmem:[%s4834 + $0x48] sm:$0xff]
    %v4848 = vld [vmem:[%s4834 + $0x50] sm:$0xf]
    %v4849 = vld [vmem:[%s4834 + $0x54] sm:$0xff]
    %v4850 = vld [vmem:[%s4834 + $0x5c] sm:$0xf]
    %v4851 = vld [vmem:[%s4834 + $0x60] sm:$0xff]
    %v4852 = vld [vmem:[%s4834 + $0x68] sm:$0xf]
    %v4853 = vld [vmem:[%s4834 + $0x6c] sm:$0xff]
    %v4854 = vld [vmem:[%s4834 + $0x74] sm:$0xf]
    %v4855 = vld [vmem:[%s4834 + $0x78] sm:$0xff]
    %v4856 = vld [vmem:[%s4834 + $0x80] sm:$0xf]
    %v4857 = vld [vmem:[%s4834 + $0x84] sm:$0xff]
    %v4858 = vld [vmem:[%s4834 + $0x8c] sm:$0xf]
    %v4859 = vld [vmem:[%s4834 + $0x90] sm:$0xff]
    %v4860 = vld [vmem:[%s4834 + $0x98] sm:$0xf]
    %v4861 = vld [vmem:[%s4834 + $0x9c] sm:$0xff]
    %v4862 = vld [vmem:[%s4834 + $0xa4] sm:$0xf]
    %v4863 = vld [vmem:[%s4834 + $0xa8] sm:$0xff]
    %v4864 = vld [vmem:[%s4834 + $0xb0] sm:$0xf]
    %v4865 = vld [vmem:[%s4834 + $0xb4] sm:$0xff]
    %v4866 = vld [vmem:[%s4834 + $0xbc] sm:$0xf]
    %v4867 = vld [vmem:[%s4834 + $0xc0] sm:$0xff]
    %v4868 = vld [vmem:[%s4834 + $0xc8] sm:$0xf]
    %v4869 = vld [vmem:[%s4834 + $0xcc] sm:$0xff]
    %v4870 = vld [vmem:[%s4834 + $0xd4] sm:$0xf]
    %v4871 = vld [vmem:[%s4834 + $0xd8] sm:$0xff]
    %v4872 = vld [vmem:[%s4834 + $0xe0] sm:$0xf]
    %v4873 = vld [vmem:[%s4834 + $0xe4] sm:$0xff]
    %v4874 = vld [vmem:[%s4834 + $0xec] sm:$0xf]
    %v4875 = vld [vmem:[%s4834 + $0xf0] sm:$0xff]
    %v4876 = vld [vmem:[%s4834 + $0xf8] sm:$0xf]
    %v4877 = vld [vmem:[%s4834 + $0xfc] sm:$0xff]
    %v4878 = vld [vmem:[%s4834 + $0x104] sm:$0xf]
    %v4879 = vld [vmem:[%s4834 + $0x108] sm:$0xff]
    %v4880 = vld [vmem:[%s4834 + $0x110] sm:$0xf]
    %v4881 = vld [vmem:[%s4834 + $0x114] sm:$0xff]
    %v4882 = vld [vmem:[%s4834 + $0x11c] sm:$0xf]
    %v4883 = vld [vmem:[%s4834 + $0x120] sm:$0xff]
    %v4884 = vld [vmem:[%s4834 + $0x128] sm:$0xf]
    %v4885 = vld [vmem:[%s4834 + $0x12c] sm:$0xff]
    %v4886 = vld [vmem:[%s4834 + $0x134] sm:$0xf]
    %v4887 = vld [vmem:[%s4834 + $0x138] sm:$0xff]
    %v4888 = vld [vmem:[%s4834 + $0x140] sm:$0xf]
    %v4889 = vld [vmem:[%s4834 + $0x144] sm:$0xff]
    %v4890 = vld [vmem:[%s4834 + $0x14c] sm:$0xf]
    %v4891 = vld [vmem:[%s4834 + $0x150] sm:$0xff]
    %v4892 = vld [vmem:[%s4834 + $0x158] sm:$0xf]
    %v4893 = vld [vmem:[%s4834 + $0x15c] sm:$0xff]
    %v4894 = vld [vmem:[%s4834 + $0x164] sm:$0xf]
    %v4895 = vld [vmem:[%s4834 + $0x168] sm:$0xff]
    %v4896 = vld [vmem:[%s4834 + $0x170] sm:$0xf]
    %v4897 = vld [vmem:[%s4834 + $0x174] sm:$0xff]
    %v4898 = vld [vmem:[%s4834 + $0x17c] sm:$0xf]
    %v4899 = vld [vmem:[%s4834 + $0x180] sm:$0xff]
    %v4900 = vld [vmem:[%s4834 + $0x188] sm:$0xf]
    %v4901 = vld [vmem:[%s4834 + $0x18c] sm:$0xff]
    %v4902 = vld [vmem:[%s4834 + $0x194] sm:$0xf]
    %v4903 = vld [vmem:[%s4834 + $0x198] sm:$0xff]
    %v4904 = vld [vmem:[%s4834 + $0x1a0] sm:$0xf]
    %v4905 = vld [vmem:[%s4834 + $0x1a4] sm:$0xff]
    %v4906 = vld [vmem:[%s4834 + $0x1ac] sm:$0xf]
    %v4907 = vld [vmem:[%s4834 + $0x1b0] sm:$0xff]
    %v4908 = vld [vmem:[%s4834 + $0x1b8] sm:$0xf]
    %v4909 = vld [vmem:[%s4834 + $0x1bc] sm:$0xff]
    %v4910 = vld [vmem:[%s4834 + $0x1c4] sm:$0xf]
    %v4911 = vld [vmem:[%s4834 + $0x1c8] sm:$0xff]
    %v4912 = vld [vmem:[%s4834 + $0x1d0] sm:$0xf]
    %v4913 = vld [vmem:[%s4834 + $0x1d4] sm:$0xff]
    %v4914 = vld [vmem:[%s4834 + $0x1dc] sm:$0xf]
    %v4915 = vld [vmem:[%s4834 + $0x1e0] sm:$0xff]
    %v4916 = vld [vmem:[%s4834 + $0x1e8] sm:$0xf]
    %v4917 = vld [vmem:[%s4834 + $0x1ec] sm:$0xff]
    %v4918 = vld [vmem:[%s4834 + $0x1f4] sm:$0xf]
    %v4919 = vld [vmem:[%s4834 + $0x1f8] sm:$0xff]
    %v4920 = vld [vmem:[%s4834 + $0x200] sm:$0xf]
    %v4921 = vld [vmem:[%s4834 + $0x204] sm:$0xff]
    %v4922 = vld [vmem:[%s4834 + $0x20c] sm:$0xf]
    %v4923 = vld [vmem:[%s4834 + $0x210] sm:$0xff]
    %v4924 = vld [vmem:[%s4834 + $0x218] sm:$0xf]
    %v4925 = vld [vmem:[%s4834 + $0x21c] sm:$0xff]
    %v4926 = vld [vmem:[%s4834 + $0x224] sm:$0xf]
    %v4927 = vld [vmem:[%s4834 + $0x228] sm:$0xff]
    %v4928 = vld [vmem:[%s4834 + $0x230] sm:$0xf]
    %v4929 = vld [vmem:[%s4834 + $0x234] sm:$0xff]
    %v4930 = vld [vmem:[%s4834 + $0x23c] sm:$0xf]
    %v4931 = vld [vmem:[%s4834 + $0x240] sm:$0xff]
    %v4932 = vld [vmem:[%s4834 + $0x248] sm:$0xf]
    %v4933 = vld [vmem:[%s4834 + $0x24c] sm:$0xff]
    %v4934 = vld [vmem:[%s4834 + $0x254] sm:$0xf]
    %v4935 = vld [vmem:[%s4834 + $0x258] sm:$0xff]
    %v4936 = vld [vmem:[%s4834 + $0x260] sm:$0xf]
    %v4937 = vld [vmem:[%s4834 + $0x264] sm:$0xff]
    %v4938 = vld [vmem:[%s4834 + $0x26c] sm:$0xf]
    %v4939 = vld [vmem:[%s4834 + $0x270] sm:$0xff]
    %v4940 = vld [vmem:[%s4834 + $0x278] sm:$0xf]
    %v4941 = vld [vmem:[%s4834 + $0x27c] sm:$0xff]
    %v4942 = vld [vmem:[%s4834 + $0x284] sm:$0xf]
    %v4943 = vld [vmem:[%s4834 + $0x288] sm:$0xff]
    %v4944 = vld [vmem:[%s4834 + $0x290] sm:$0xf]
    %v4945 = vld [vmem:[%s4834 + $0x294] sm:$0xff]
    %v4946 = vld [vmem:[%s4834 + $0x29c] sm:$0xf]
    %v4947 = vld [vmem:[%s4834 + $0x2a0] sm:$0xff]
    %v4948 = vld [vmem:[%s4834 + $0x2a8] sm:$0xf]
    %v4949 = vld [vmem:[%s4834 + $0x2ac] sm:$0xff]
    %v4950 = vld [vmem:[%s4834 + $0x2b4] sm:$0xf]
    %v4951 = vld [vmem:[%s4834 + $0x2b8] sm:$0xff]
    %v4952 = vld [vmem:[%s4834 + $0x2c0] sm:$0xf]
    %v4953 = vld [vmem:[%s4834 + $0x2c4] sm:$0xff]
    %v4954 = vld [vmem:[%s4834 + $0x2cc] sm:$0xf]
    %v4955 = vld [vmem:[%s4834 + $0x2d0] sm:$0xff]
    %v4956 = vld [vmem:[%s4834 + $0x2d8] sm:$0xf]
    %v4957 = vld [vmem:[%s4834 + $0x2dc] sm:$0xff]
    %v4958 = vld [vmem:[%s4834 + $0x2e4] sm:$0xf]
    %v4959 = vld [vmem:[%s4834 + $0x2e8] sm:$0xff]
    %v4960 = vld [vmem:[%s4834 + $0x2f0] sm:$0xf]
    %v4961 = vld [vmem:[%s4834 + $0x2f4] sm:$0xff]
    %v4962 = vld [vmem:[%s4834 + $0x2fc] sm:$0xf]
    %v4963 = vld [vmem:[%s4834 + $0x300] sm:$0xff]
    %v4964 = vld [vmem:[%s4834 + $0x308] sm:$0xf]
    %v4965 = vld [vmem:[%s4834 + $0x30c] sm:$0xff]
    %v4966 = vld [vmem:[%s4834 + $0x314] sm:$0xf]
    %v4967 = vld [vmem:[%s4834 + $0x318] sm:$0xff]
    %v4968 = vld [vmem:[%s4834 + $0x320] sm:$0xf]
    %v4969 = vld [vmem:[%s4834 + $0x324] sm:$0xff]
    %v4970 = vld [vmem:[%s4834 + $0x32c] sm:$0xf]
    %v4971 = vld [vmem:[%s4834 + $0x330] sm:$0xff]
    %v4972 = vld [vmem:[%s4834 + $0x338] sm:$0xf]
    %v4973 = vld [vmem:[%s4834 + $0x33c] sm:$0xff]
    %v4974 = vld [vmem:[%s4834 + $0x344] sm:$0xf]
    %v4975 = vld [vmem:[%s4834 + $0x348] sm:$0xff]
    %v4976 = vld [vmem:[%s4834 + $0x350] sm:$0xf]
    %v4977 = vld [vmem:[%s4834 + $0x354] sm:$0xff]
    %v4978 = vld [vmem:[%s4834 + $0x35c] sm:$0xf]
    %v4988 = vunpack.c.l.b16 %v4825
    %v4989 = vunpack.c.h.b16 %v4825
    %v4990 = vunpack.c.l.b16 %v4826
    %v4991 = vunpack.c.h.b16 %v4826
    %v4992 = vunpack.c.l.b16 %v4827
    %v4993 = vunpack.c.l.b16 %v4828
    %v4994 = vunpack.c.h.b16 %v4828
    %v4995 = vunpack.c.l.b16 %v4829
    %v4996 = vunpack.c.h.b16 %v4829
    %v4997 = vunpack.c.l.b16 %v4830
    %v4998 = vunpack.c.l.b16 %v4831
    %v4999 = vunpack.c.h.b16 %v4831
    %v5000 = vunpack.c.l.b16 %v4832
    %v5001 = vunpack.c.h.b16 %v4832
    %v5002 = vunpack.c.l.b16 %v4833
    %v5003 = vpack.c.b16 %v4993, %v4988
    %v5004 = vpack.c.b16 %v4994, %v4989
    %v5005 = vpack.c.b16 %v4995, %v4990
    %v5006 = vpack.c.b16 %v4996, %v4991
    %v5007 = vpack.c.b16 %v4997, %v4992
    %v5008 = vpack.c.b16 %v4998, %v4998
    %v5009 = vpack.c.b16 %v4999, %v4999
    %v5010 = vpack.c.b16 %v5000, %v5000
    %v5011 = vpack.c.b16 %v5001, %v5001
    %v5012 = vpack.c.b16 %v5002, %v5002
    %vm5013 = vcmask 1044480
    %v5014 = vrot.slane %v5003, 3
    %v5015 = vrot.slane %v5008, 3
    %v5016 = vsel %vm5013, %v5014, %v5015
    %v5017 = vrot.slane %v5004, 3
    %v5018 = vrot.slane %v5009, 3
    %v5019 = vsel %vm5013, %v5017, %v5018
    %v5020 = vrot.slane %v5005, 3
    %v5021 = vrot.slane %v5010, 3
    %v5022 = vsel %vm5013, %v5020, %v5021
    %v5023 = vrot.slane %v5006, 3
    %v5024 = vrot.slane %v5011, 3
    %v5025 = vsel %vm5013, %v5023, %v5024
    %v5026 = vrot.slane %v5007, 3
    %v5027 = vrot.slane %v5012, 3
    %v5028 = vsel %vm5013, %v5026, %v5027
    %v5177 = vunpack.c.l.b16 %v4835
    %v5178 = vunpack.c.h.b16 %v4835
    %v5179 = vunpack.c.l.b16 %v4836
    %v5180 = vunpack.c.l.b16 %v4837
    %v5181 = vunpack.c.h.b16 %v4837
    %v5182 = vunpack.c.l.b16 %v4838
    %v5183 = vunpack.c.l.b16 %v4839
    %v5184 = vunpack.c.h.b16 %v4839
    %v5185 = vunpack.c.l.b16 %v4840
    %v5186 = vunpack.c.l.b16 %v4841
    %v5187 = vunpack.c.h.b16 %v4841
    %v5188 = vunpack.c.l.b16 %v4842
    %v5189 = vunpack.c.l.b16 %v4843
    %v5190 = vunpack.c.h.b16 %v4843
    %v5191 = vunpack.c.l.b16 %v4844
    %v5192 = vunpack.c.l.b16 %v4845
    %v5193 = vunpack.c.h.b16 %v4845
    %v5194 = vunpack.c.l.b16 %v4846
    %v5195 = vunpack.c.l.b16 %v4847
    %v5196 = vunpack.c.h.b16 %v4847
    %v5197 = vunpack.c.l.b16 %v4848
    %v5198 = vunpack.c.l.b16 %v4849
    %v5199 = vunpack.c.h.b16 %v4849
    %v5200 = vunpack.c.l.b16 %v4850
    %v5201 = vunpack.c.l.b16 %v4851
    %v5202 = vunpack.c.h.b16 %v4851
    %v5203 = vunpack.c.l.b16 %v4852
    %v5204 = vunpack.c.l.b16 %v4853
    %v5205 = vunpack.c.h.b16 %v4853
    %v5206 = vunpack.c.l.b16 %v4854
    %v5207 = vunpack.c.l.b16 %v4855
    %v5208 = vunpack.c.h.b16 %v4855
    %v5209 = vunpack.c.l.b16 %v4856
    %v5210 = vunpack.c.l.b16 %v4857
    %v5211 = vunpack.c.h.b16 %v4857
    %v5212 = vunpack.c.l.b16 %v4858
    %v5213 = vunpack.c.l.b16 %v4859
    %v5214 = vunpack.c.h.b16 %v4859
    %v5215 = vunpack.c.l.b16 %v4860
    %v5216 = vunpack.c.l.b16 %v4861
    %v5217 = vunpack.c.h.b16 %v4861
    %v5218 = vunpack.c.l.b16 %v4862
    %v5219 = vunpack.c.l.b16 %v4863
    %v5220 = vunpack.c.h.b16 %v4863
    %v5221 = vunpack.c.l.b16 %v4864
    %v5222 = vunpack.c.l.b16 %v4865
    %v5223 = vunpack.c.h.b16 %v4865
    %v5224 = vunpack.c.l.b16 %v4866
    %v5225 = vunpack.c.l.b16 %v4867
    %v5226 = vunpack.c.h.b16 %v4867
    %v5227 = vunpack.c.l.b16 %v4868
    %v5228 = vunpack.c.l.b16 %v4869
    %v5229 = vunpack.c.h.b16 %v4869
    %v5230 = vunpack.c.l.b16 %v4870
    %v5231 = vunpack.c.l.b16 %v4871
    %v5232 = vunpack.c.h.b16 %v4871
    %v5233 = vunpack.c.l.b16 %v4872
    %v5234 = vunpack.c.l.b16 %v4873
    %v5235 = vunpack.c.h.b16 %v4873
    %v5236 = vunpack.c.l.b16 %v4874
    %v5237 = vunpack.c.l.b16 %v4875
    %v5238 = vunpack.c.h.b16 %v4875
    %v5239 = vunpack.c.l.b16 %v4876
    %v5240 = vunpack.c.l.b16 %v4877
    %v5241 = vunpack.c.h.b16 %v4877
    %v5242 = vunpack.c.l.b16 %v4878
    %v5243 = vunpack.c.l.b16 %v4879
    %v5244 = vunpack.c.h.b16 %v4879
    %v5245 = vunpack.c.l.b16 %v4880
    %v5246 = vunpack.c.l.b16 %v4881
    %v5247 = vunpack.c.h.b16 %v4881
    %v5248 = vunpack.c.l.b16 %v4882
    %v5249 = vunpack.c.l.b16 %v4883
    %v5250 = vunpack.c.h.b16 %v4883
    %v5251 = vunpack.c.l.b16 %v4884
    %v5252 = vunpack.c.l.b16 %v4885
    %v5253 = vunpack.c.h.b16 %v4885
    %v5254 = vunpack.c.l.b16 %v4886
    %v5255 = vunpack.c.l.b16 %v4887
    %v5256 = vunpack.c.h.b16 %v4887
    %v5257 = vunpack.c.l.b16 %v4888
    %v5258 = vunpack.c.l.b16 %v4889
    %v5259 = vunpack.c.h.b16 %v4889
    %v5260 = vunpack.c.l.b16 %v4890
    %v5261 = vunpack.c.l.b16 %v4891
    %v5262 = vunpack.c.h.b16 %v4891
    %v5263 = vunpack.c.l.b16 %v4892
    %v5264 = vunpack.c.l.b16 %v4893
    %v5265 = vunpack.c.h.b16 %v4893
    %v5266 = vunpack.c.l.b16 %v4894
    %v5267 = vunpack.c.l.b16 %v4895
    %v5268 = vunpack.c.h.b16 %v4895
    %v5269 = vunpack.c.l.b16 %v4896
    %v5270 = vunpack.c.l.b16 %v4897
    %v5271 = vunpack.c.h.b16 %v4897
    %v5272 = vunpack.c.l.b16 %v4898
    %v5273 = vunpack.c.l.b16 %v4899
    %v5274 = vunpack.c.h.b16 %v4899
    %v5275 = vunpack.c.l.b16 %v4900
    %v5276 = vunpack.c.l.b16 %v4901
    %v5277 = vunpack.c.h.b16 %v4901
    %v5278 = vunpack.c.l.b16 %v4902
    %v5279 = vunpack.c.l.b16 %v4903
    %v5280 = vunpack.c.h.b16 %v4903
    %v5281 = vunpack.c.l.b16 %v4904
    %v5282 = vunpack.c.l.b16 %v4905
    %v5283 = vunpack.c.h.b16 %v4905
    %v5284 = vunpack.c.l.b16 %v4906
    %v5285 = vunpack.c.l.b16 %v4907
    %v5286 = vunpack.c.h.b16 %v4907
    %v5287 = vunpack.c.l.b16 %v4908
    %v5288 = vunpack.c.l.b16 %v4909
    %v5289 = vunpack.c.h.b16 %v4909
    %v5290 = vunpack.c.l.b16 %v4910
    %v5291 = vunpack.c.l.b16 %v4911
    %v5292 = vunpack.c.h.b16 %v4911
    %v5293 = vunpack.c.l.b16 %v4912
    %v5294 = vunpack.c.l.b16 %v4913
    %v5295 = vunpack.c.h.b16 %v4913
    %v5296 = vunpack.c.l.b16 %v4914
    %v5297 = vunpack.c.l.b16 %v4915
    %v5298 = vunpack.c.h.b16 %v4915
    %v5299 = vunpack.c.l.b16 %v4916
    %v5300 = vunpack.c.l.b16 %v4917
    %v5301 = vunpack.c.h.b16 %v4917
    %v5302 = vunpack.c.l.b16 %v4918
    %v5303 = vunpack.c.l.b16 %v4919
    %v5304 = vunpack.c.h.b16 %v4919
    %v5305 = vunpack.c.l.b16 %v4920
    %v5306 = vunpack.c.l.b16 %v4921
    %v5307 = vunpack.c.h.b16 %v4921
    %v5308 = vunpack.c.l.b16 %v4922
    %v5309 = vunpack.c.l.b16 %v4923
    %v5310 = vunpack.c.h.b16 %v4923
    %v5311 = vunpack.c.l.b16 %v4924
    %v5312 = vunpack.c.l.b16 %v4925
    %v5313 = vunpack.c.h.b16 %v4925
    %v5314 = vunpack.c.l.b16 %v4926
    %v5315 = vunpack.c.l.b16 %v4927
    %v5316 = vunpack.c.h.b16 %v4927
    %v5317 = vunpack.c.l.b16 %v4928
    %v5318 = vunpack.c.l.b16 %v4929
    %v5319 = vunpack.c.h.b16 %v4929
    %v5320 = vunpack.c.l.b16 %v4930
    %v5321 = vunpack.c.l.b16 %v4931
    %v5322 = vunpack.c.h.b16 %v4931
    %v5323 = vunpack.c.l.b16 %v4932
    %v5324 = vunpack.c.l.b16 %v4933
    %v5325 = vunpack.c.h.b16 %v4933
    %v5326 = vunpack.c.l.b16 %v4934
    %v5327 = vunpack.c.l.b16 %v4935
    %v5328 = vunpack.c.h.b16 %v4935
    %v5329 = vunpack.c.l.b16 %v4936
    %v5330 = vunpack.c.l.b16 %v4937
    %v5331 = vunpack.c.h.b16 %v4937
    %v5332 = vunpack.c.l.b16 %v4938
    %v5333 = vunpack.c.l.b16 %v4939
    %v5334 = vunpack.c.h.b16 %v4939
    %v5335 = vunpack.c.l.b16 %v4940
    %v5336 = vunpack.c.l.b16 %v4941
    %v5337 = vunpack.c.h.b16 %v4941
    %v5338 = vunpack.c.l.b16 %v4942
    %v5339 = vunpack.c.l.b16 %v4943
    %v5340 = vunpack.c.h.b16 %v4943
    %v5341 = vunpack.c.l.b16 %v4944
    %v5342 = vunpack.c.l.b16 %v4945
    %v5343 = vunpack.c.h.b16 %v4945
    %v5344 = vunpack.c.l.b16 %v4946
    %v5345 = vunpack.c.l.b16 %v4947
    %v5346 = vunpack.c.h.b16 %v4947
    %v5347 = vunpack.c.l.b16 %v4948
    %v5348 = vunpack.c.l.b16 %v4949
    %v5349 = vunpack.c.h.b16 %v4949
    %v5350 = vunpack.c.l.b16 %v4950
    %v5351 = vunpack.c.l.b16 %v4951
    %v5352 = vunpack.c.h.b16 %v4951
    %v5353 = vunpack.c.l.b16 %v4952
    %v5354 = vunpack.c.l.b16 %v4953
    %v5355 = vunpack.c.h.b16 %v4953
    %v5356 = vunpack.c.l.b16 %v4954
    %v5357 = vunpack.c.l.b16 %v4955
    %v5358 = vunpack.c.h.b16 %v4955
    %v5359 = vunpack.c.l.b16 %v4956
    %v5360 = vunpack.c.l.b16 %v4957
    %v5361 = vunpack.c.h.b16 %v4957
    %v5362 = vunpack.c.l.b16 %v4958
    %v5363 = vunpack.c.l.b16 %v4959
    %v5364 = vunpack.c.h.b16 %v4959
    %v5365 = vunpack.c.l.b16 %v4960
    %v5366 = vunpack.c.l.b16 %v4961
    %v5367 = vunpack.c.h.b16 %v4961
    %v5368 = vunpack.c.l.b16 %v4962
    %v5369 = vunpack.c.l.b16 %v4963
    %v5370 = vunpack.c.h.b16 %v4963
    %v5371 = vunpack.c.l.b16 %v4964
    %v5372 = vunpack.c.l.b16 %v4965
    %v5373 = vunpack.c.h.b16 %v4965
    %v5374 = vunpack.c.l.b16 %v4966
    %v5375 = vunpack.c.l.b16 %v4967
    %v5376 = vunpack.c.h.b16 %v4967
    %v5377 = vunpack.c.l.b16 %v4968
    %v5378 = vunpack.c.l.b16 %v4969
    %v5379 = vunpack.c.h.b16 %v4969
    %v5380 = vunpack.c.l.b16 %v4970
    %v5381 = vunpack.c.l.b16 %v4971
    %v5382 = vunpack.c.h.b16 %v4971
    %v5383 = vunpack.c.l.b16 %v4972
    %v5384 = vunpack.c.l.b16 %v4973
    %v5385 = vunpack.c.h.b16 %v4973
    %v5386 = vunpack.c.l.b16 %v4974
    %v5387 = vunpack.c.l.b16 %v4975
    %v5388 = vunpack.c.h.b16 %v4975
    %v5389 = vunpack.c.l.b16 %v4976
    %v5390 = vunpack.c.l.b16 %v4977
    %v5391 = vunpack.c.h.b16 %v4977
    %v5392 = vunpack.c.l.b16 %v4978
    %v5393 = vpack.c.b16 %v5180, %v5177
    %v5394 = vpack.c.b16 %v5181, %v5178
    %v5395 = vpack.c.b16 %v5182, %v5179
    %v5396 = vpack.c.b16 %v5186, %v5183
    %v5397 = vpack.c.b16 %v5187, %v5184
    %v5398 = vpack.c.b16 %v5188, %v5185
    %v5399 = vpack.c.b16 %v5192, %v5189
    %v5400 = vpack.c.b16 %v5193, %v5190
    %v5401 = vpack.c.b16 %v5194, %v5191
    %v5402 = vpack.c.b16 %v5198, %v5195
    %v5403 = vpack.c.b16 %v5199, %v5196
    %v5404 = vpack.c.b16 %v5200, %v5197
    %v5405 = vpack.c.b16 %v5204, %v5201
    %v5406 = vpack.c.b16 %v5205, %v5202
    %v5407 = vpack.c.b16 %v5206, %v5203
    %v5408 = vpack.c.b16 %v5210, %v5207
    %v5409 = vpack.c.b16 %v5211, %v5208
    %v5410 = vpack.c.b16 %v5212, %v5209
    %v5411 = vpack.c.b16 %v5216, %v5213
    %v5412 = vpack.c.b16 %v5217, %v5214
    %v5413 = vpack.c.b16 %v5218, %v5215
    %v5414 = vpack.c.b16 %v5222, %v5219
    %v5415 = vpack.c.b16 %v5223, %v5220
    %v5416 = vpack.c.b16 %v5224, %v5221
    %v5417 = vpack.c.b16 %v5228, %v5225
    %v5418 = vpack.c.b16 %v5229, %v5226
    %v5419 = vpack.c.b16 %v5230, %v5227
    %v5420 = vpack.c.b16 %v5234, %v5231
    %v5421 = vpack.c.b16 %v5235, %v5232
    %v5422 = vpack.c.b16 %v5236, %v5233
    %v5423 = vpack.c.b16 %v5240, %v5237
    %v5424 = vpack.c.b16 %v5241, %v5238
    %v5425 = vpack.c.b16 %v5242, %v5239
    %v5426 = vpack.c.b16 %v5246, %v5243
    %v5427 = vpack.c.b16 %v5247, %v5244
    %v5428 = vpack.c.b16 %v5248, %v5245
    %v5429 = vpack.c.b16 %v5252, %v5249
    %v5430 = vpack.c.b16 %v5253, %v5250
    %v5431 = vpack.c.b16 %v5254, %v5251
    %v5432 = vpack.c.b16 %v5258, %v5255
    %v5433 = vpack.c.b16 %v5259, %v5256
    %v5434 = vpack.c.b16 %v5260, %v5257
    %v5435 = vpack.c.b16 %v5264, %v5261
    %v5436 = vpack.c.b16 %v5265, %v5262
    %v5437 = vpack.c.b16 %v5266, %v5263
    %v5438 = vpack.c.b16 %v5270, %v5267
    %v5439 = vpack.c.b16 %v5271, %v5268
    %v5440 = vpack.c.b16 %v5272, %v5269
    %v5441 = vpack.c.b16 %v5276, %v5273
    %v5442 = vpack.c.b16 %v5277, %v5274
    %v5443 = vpack.c.b16 %v5278, %v5275
    %v5444 = vpack.c.b16 %v5282, %v5279
    %v5445 = vpack.c.b16 %v5283, %v5280
    %v5446 = vpack.c.b16 %v5284, %v5281
    %v5447 = vpack.c.b16 %v5288, %v5285
    %v5448 = vpack.c.b16 %v5289, %v5286
    %v5449 = vpack.c.b16 %v5290, %v5287
    %v5450 = vpack.c.b16 %v5294, %v5291
    %v5451 = vpack.c.b16 %v5295, %v5292
    %v5452 = vpack.c.b16 %v5296, %v5293
    %v5453 = vpack.c.b16 %v5300, %v5297
    %v5454 = vpack.c.b16 %v5301, %v5298
    %v5455 = vpack.c.b16 %v5302, %v5299
    %v5456 = vpack.c.b16 %v5306, %v5303
    %v5457 = vpack.c.b16 %v5307, %v5304
    %v5458 = vpack.c.b16 %v5308, %v5305
    %v5459 = vpack.c.b16 %v5312, %v5309
    %v5460 = vpack.c.b16 %v5313, %v5310
    %v5461 = vpack.c.b16 %v5314, %v5311
    %v5462 = vpack.c.b16 %v5318, %v5315
    %v5463 = vpack.c.b16 %v5319, %v5316
    %v5464 = vpack.c.b16 %v5320, %v5317
    %v5465 = vpack.c.b16 %v5324, %v5321
    %v5466 = vpack.c.b16 %v5325, %v5322
    %v5467 = vpack.c.b16 %v5326, %v5323
    %v5468 = vpack.c.b16 %v5330, %v5327
    %v5469 = vpack.c.b16 %v5331, %v5328
    %v5470 = vpack.c.b16 %v5332, %v5329
    %v5471 = vpack.c.b16 %v5336, %v5333
    %v5472 = vpack.c.b16 %v5337, %v5334
    %v5473 = vpack.c.b16 %v5338, %v5335
    %v5474 = vpack.c.b16 %v5342, %v5339
    %v5475 = vpack.c.b16 %v5343, %v5340
    %v5476 = vpack.c.b16 %v5344, %v5341
    %v5477 = vpack.c.b16 %v5348, %v5345
    %v5478 = vpack.c.b16 %v5349, %v5346
    %v5479 = vpack.c.b16 %v5350, %v5347
    %v5480 = vpack.c.b16 %v5354, %v5351
    %v5481 = vpack.c.b16 %v5355, %v5352
    %v5482 = vpack.c.b16 %v5356, %v5353
    %v5483 = vpack.c.b16 %v5360, %v5357
    %v5484 = vpack.c.b16 %v5361, %v5358
    %v5485 = vpack.c.b16 %v5362, %v5359
    %v5486 = vpack.c.b16 %v5366, %v5363
    %v5487 = vpack.c.b16 %v5367, %v5364
    %v5488 = vpack.c.b16 %v5368, %v5365
    %v5489 = vpack.c.b16 %v5372, %v5369
    %v5490 = vpack.c.b16 %v5373, %v5370
    %v5491 = vpack.c.b16 %v5374, %v5371
    %v5492 = vpack.c.b16 %v5378, %v5375
    %v5493 = vpack.c.b16 %v5379, %v5376
    %v5494 = vpack.c.b16 %v5380, %v5377
    %v5495 = vpack.c.b16 %v5384, %v5381
    %v5496 = vpack.c.b16 %v5385, %v5382
    %v5497 = vpack.c.b16 %v5386, %v5383
    %v5498 = vpack.c.b16 %v5390, %v5387
    %v5499 = vpack.c.b16 %v5391, %v5388
    %v5500 = vpack.c.b16 %v5392, %v5389
    %v5610 = vsel %vm687, %v5028, 0
    %5612 = vmatpush.bf16.msra.mxu0 %v5414
    %5613 = vmatpush.bf16.msra.mxu0 %v5411
    %5614 = vmatpush.bf16.msra.mxu0 %v5408
    %5615 = vmatpush.bf16.msra.mxu0 %v5405
    %5616 = vmatpush.bf16.msra.mxu0 %v5402
    %5617 = vmatpush.bf16.msra.mxu0 %v5399
    %5618 = vmatpush.bf16.msra.mxu0 %v5396
    %5619 = vmatpush.bf16.msra.mxu0 %v5393
    %5620 = vmatmul.bf16.gmra.mxu0 %v5016
    %v5621 = vpop.f32.mrf.mxu0
    %v5622 = vadd.f32 0.0, %v5621
    %v5623 = vpop.f32.mrf.mxu0
    %v5624 = vadd.f32 0.0, %v5623
    %5625 = vdwg.mxu0
    %5626 = vmatpush.bf16.msra.mxu0 %v5438
    %5627 = vmatpush.bf16.msra.mxu0 %v5435
    %5628 = vmatpush.bf16.msra.mxu0 %v5432
    %5629 = vmatpush.bf16.msra.mxu0 %v5429
    %5630 = vmatpush.bf16.msra.mxu0 %v5426
    %5631 = vmatpush.bf16.msra.mxu0 %v5423
    %5632 = vmatpush.bf16.msra.mxu0 %v5420
    %5633 = vmatpush.bf16.msra.mxu0 %v5417
    %5634 = vmatmul.bf16.gmra.mxu0 %v5019
    %v5635 = vpop.f32.mrf.mxu0
    %v5636 = vadd.f32 %v5622, %v5635
    %v5637 = vpop.f32.mrf.mxu0
    %v5638 = vadd.f32 %v5624, %v5637
    %5639 = vdwg.mxu0
    %5640 = vmatpush.bf16.msra.mxu0 %v5462
    %5641 = vmatpush.bf16.msra.mxu0 %v5459
    %5642 = vmatpush.bf16.msra.mxu0 %v5456
    %5643 = vmatpush.bf16.msra.mxu0 %v5453
    %5644 = vmatpush.bf16.msra.mxu0 %v5450
    %5645 = vmatpush.bf16.msra.mxu0 %v5447
    %5646 = vmatpush.bf16.msra.mxu0 %v5444
    %5647 = vmatpush.bf16.msra.mxu0 %v5441
    %5648 = vmatmul.bf16.gmra.mxu0 %v5022
    %v5649 = vpop.f32.mrf.mxu0
    %v5650 = vadd.f32 %v5636, %v5649
    %v5651 = vpop.f32.mrf.mxu0
    %v5652 = vadd.f32 %v5638, %v5651
    %5653 = vdwg.mxu0
    %5654 = vmatpush.bf16.msra.mxu0 %v5486
    %5655 = vmatpush.bf16.msra.mxu0 %v5483
    %5656 = vmatpush.bf16.msra.mxu0 %v5480
    %5657 = vmatpush.bf16.msra.mxu0 %v5477
    %5658 = vmatpush.bf16.msra.mxu0 %v5474
    %5659 = vmatpush.bf16.msra.mxu0 %v5471
    %5660 = vmatpush.bf16.msra.mxu0 %v5468
    %5661 = vmatpush.bf16.msra.mxu0 %v5465
    %5662 = vmatmul.bf16.gmra.mxu0 %v5025
    %v5663 = vpop.f32.mrf.mxu0
    %v5664 = vadd.f32 %v5650, %v5663
    %v5665 = vpop.f32.mrf.mxu0
    %v5666 = vadd.f32 %v5652, %v5665
    %5667 = vdwg.mxu0
    %5668 = vmatpush.bf16.msra.mxu0 0
    %5669 = vmatpush.bf16.msra.mxu0 0
    %5670 = vmatpush.bf16.msra.mxu0 0
    %5671 = vmatpush.bf16.msra.mxu0 0
    %5672 = vmatpush.bf16.msra.mxu0 %v5498
    %5673 = vmatpush.bf16.msra.mxu0 %v5495
    %5674 = vmatpush.bf16.msra.mxu0 %v5492
    %5675 = vmatpush.bf16.msra.mxu0 %v5489
    %5676 = vmatmul.bf16.gmra.mxu0 %v5610
    %v5677 = vpop.f32.mrf.mxu0
    %v5678 = vadd.f32 %v5664, %v5677
    %v5679 = vpop.f32.mrf.mxu0
    %v5680 = vadd.f32 %v5666, %v5679
    %5681 = vdwg.mxu0
    %5682 = vmatpush.bf16.msra.mxu0 %v5415
    %5683 = vmatpush.bf16.msra.mxu0 %v5412
    %5684 = vmatpush.bf16.msra.mxu0 %v5409
    %5685 = vmatpush.bf16.msra.mxu0 %v5406
    %5686 = vmatpush.bf16.msra.mxu0 %v5403
    %5687 = vmatpush.bf16.msra.mxu0 %v5400
    %5688 = vmatpush.bf16.msra.mxu0 %v5397
    %5689 = vmatpush.bf16.msra.mxu0 %v5394
    %5690 = vmatmul.bf16.gmra.mxu0 %v5016
    %v5691 = vpop.f32.mrf.mxu0
    %v5692 = vadd.f32 0.0, %v5691
    %v5693 = vpop.f32.mrf.mxu0
    %v5694 = vadd.f32 0.0, %v5693
    %5695 = vdwg.mxu0
    %5696 = vmatpush.bf16.msra.mxu0 %v5439
    %5697 = vmatpush.bf16.msra.mxu0 %v5436
    %5698 = vmatpush.bf16.msra.mxu0 %v5433
    %5699 = vmatpush.bf16.msra.mxu0 %v5430
    %5700 = vmatpush.bf16.msra.mxu0 %v5427
    %5701 = vmatpush.bf16.msra.mxu0 %v5424
    %5702 = vmatpush.bf16.msra.mxu0 %v5421
    %5703 = vmatpush.bf16.msra.mxu0 %v5418
    %5704 = vmatmul.bf16.gmra.mxu0 %v5019
    %v5705 = vpop.f32.mrf.mxu0
    %v5706 = vadd.f32 %v5692, %v5705
    %v5707 = vpop.f32.mrf.mxu0
    %v5708 = vadd.f32 %v5694, %v5707
    %5709 = vdwg.mxu0
    %5710 = vmatpush.bf16.msra.mxu0 %v5463
    %5711 = vmatpush.bf16.msra.mxu0 %v5460
    %5712 = vmatpush.bf16.msra.mxu0 %v5457
    %5713 = vmatpush.bf16.msra.mxu0 %v5454
    %5714 = vmatpush.bf16.msra.mxu0 %v5451
    %5715 = vmatpush.bf16.msra.mxu0 %v5448
    %5716 = vmatpush.bf16.msra.mxu0 %v5445
    %5717 = vmatpush.bf16.msra.mxu0 %v5442
    %5718 = vmatmul.bf16.gmra.mxu0 %v5022
    %v5719 = vpop.f32.mrf.mxu0
    %v5720 = vadd.f32 %v5706, %v5719
    %v5721 = vpop.f32.mrf.mxu0
    %v5722 = vadd.f32 %v5708, %v5721
    %5723 = vdwg.mxu0
    %5724 = vmatpush.bf16.msra.mxu0 %v5487
    %5725 = vmatpush.bf16.msra.mxu0 %v5484
    %5726 = vmatpush.bf16.msra.mxu0 %v5481
    %5727 = vmatpush.bf16.msra.mxu0 %v5478
    %5728 = vmatpush.bf16.msra.mxu0 %v5475
    %5729 = vmatpush.bf16.msra.mxu0 %v5472
    %5730 = vmatpush.bf16.msra.mxu0 %v5469
    %5731 = vmatpush.bf16.msra.mxu0 %v5466
    %5732 = vmatmul.bf16.gmra.mxu0 %v5025
    %v5733 = vpop.f32.mrf.mxu0
    %v5734 = vadd.f32 %v5720, %v5733
    %v5735 = vpop.f32.mrf.mxu0
    %v5736 = vadd.f32 %v5722, %v5735
    %5737 = vdwg.mxu0
    %5738 = vmatpush.bf16.msra.mxu0 0
    %5739 = vmatpush.bf16.msra.mxu0 0
    %5740 = vmatpush.bf16.msra.mxu0 0
    %5741 = vmatpush.bf16.msra.mxu0 0
    %5742 = vmatpush.bf16.msra.mxu0 %v5499
    %5743 = vmatpush.bf16.msra.mxu0 %v5496
    %5744 = vmatpush.bf16.msra.mxu0 %v5493
    %5745 = vmatpush.bf16.msra.mxu0 %v5490
    %5746 = vmatmul.bf16.gmra.mxu0 %v5610
    %v5747 = vpop.f32.mrf.mxu0
    %v5748 = vadd.f32 %v5734, %v5747
    %v5749 = vpop.f32.mrf.mxu0
    %v5750 = vadd.f32 %v5736, %v5749
    %5751 = vdwg.mxu0
    %5752 = vmatpush.bf16.msra.mxu0 %v5416
    %5753 = vmatpush.bf16.msra.mxu0 %v5413
    %5754 = vmatpush.bf16.msra.mxu0 %v5410
    %5755 = vmatpush.bf16.msra.mxu0 %v5407
    %5756 = vmatpush.bf16.msra.mxu0 %v5404
    %5757 = vmatpush.bf16.msra.mxu0 %v5401
    %5758 = vmatpush.bf16.msra.mxu0 %v5398
    %5759 = vmatpush.bf16.msra.mxu0 %v5395
    %5760 = vmatmul.bf16.gmra.mxu0 %v5016
    %v5761 = vpop.f32.mrf.mxu0
    %v5762 = vadd.f32 0.0, %v5761
    %v5763 = vpop.f32.mrf.mxu0
    %v5764 = vadd.f32 0.0, %v5763
    %5765 = vdwg.mxu0
    %5766 = vmatpush.bf16.msra.mxu0 %v5440
    %5767 = vmatpush.bf16.msra.mxu0 %v5437
    %5768 = vmatpush.bf16.msra.mxu0 %v5434
    %5769 = vmatpush.bf16.msra.mxu0 %v5431
    %5770 = vmatpush.bf16.msra.mxu0 %v5428
    %5771 = vmatpush.bf16.msra.mxu0 %v5425
    %5772 = vmatpush.bf16.msra.mxu0 %v5422
    %5773 = vmatpush.bf16.msra.mxu0 %v5419
    %5774 = vmatmul.bf16.gmra.mxu0 %v5019
    %v5775 = vpop.f32.mrf.mxu0
    %v5776 = vadd.f32 %v5762, %v5775
    %v5777 = vpop.f32.mrf.mxu0
    %v5778 = vadd.f32 %v5764, %v5777
    %5779 = vdwg.mxu0
    %5780 = vmatpush.bf16.msra.mxu0 %v5464
    %5781 = vmatpush.bf16.msra.mxu0 %v5461
    %5782 = vmatpush.bf16.msra.mxu0 %v5458
    %5783 = vmatpush.bf16.msra.mxu0 %v5455
    %5784 = vmatpush.bf16.msra.mxu0 %v5452
    %5785 = vmatpush.bf16.msra.mxu0 %v5449
    %5786 = vmatpush.bf16.msra.mxu0 %v5446
    %5787 = vmatpush.bf16.msra.mxu0 %v5443
    %5788 = vmatmul.bf16.gmra.mxu0 %v5022
    %v5789 = vpop.f32.mrf.mxu0
    %v5790 = vadd.f32 %v5776, %v5789
    %v5791 = vpop.f32.mrf.mxu0
    %v5792 = vadd.f32 %v5778, %v5791
    %5793 = vdwg.mxu0
    %5794 = vmatpush.bf16.msra.mxu0 %v5488
    %5795 = vmatpush.bf16.msra.mxu0 %v5485
    %5796 = vmatpush.bf16.msra.mxu0 %v5482
    %5797 = vmatpush.bf16.msra.mxu0 %v5479
    %5798 = vmatpush.bf16.msra.mxu0 %v5476
    %5799 = vmatpush.bf16.msra.mxu0 %v5473
    %5800 = vmatpush.bf16.msra.mxu0 %v5470
    %5801 = vmatpush.bf16.msra.mxu0 %v5467
    %5802 = vmatmul.bf16.gmra.mxu0 %v5025
    %v5803 = vpop.f32.mrf.mxu0
    %v5804 = vadd.f32 %v5790, %v5803
    %v5805 = vpop.f32.mrf.mxu0
    %v5806 = vadd.f32 %v5792, %v5805
    %5807 = vdwg.mxu0
    %5808 = vmatpush.bf16.msra.mxu0 0
    %5809 = vmatpush.bf16.msra.mxu0 0
    %5810 = vmatpush.bf16.msra.mxu0 0
    %5811 = vmatpush.bf16.msra.mxu0 0
    %5812 = vmatpush.bf16.msra.mxu0 %v5500
    %5813 = vmatpush.bf16.msra.mxu0 %v5497
    %5814 = vmatpush.bf16.msra.mxu0 %v5494
    %5815 = vmatpush.bf16.msra.mxu0 %v5491
    %5816 = vmatmul.bf16.gmra.mxu0 %v5610
    %v5817 = vpop.f32.mrf.mxu0
    %v5818 = vadd.f32 %v5804, %v5817
    %v5819 = vpop.f32.mrf.mxu0
    %v5820 = vadd.f32 %v5806, %v5819
    %5821 = vdwg.mxu0
    %v5822 = vadd.f32 %v4819, %v5678
    %v5823 = vadd.f32 %v4820, %v5748
    %v5824 = vadd.f32 %v4821, %v5818
    %v5825 = vadd.f32 %v4822, %v5680
    %v5826 = vadd.f32 %v4823, %v5750
    %v5827 = vadd.f32 %v4824, %v5820
    %v5828 = vld [vmem:[#allocation2 + $0x28] sm:$0x33]
    %v5829 = vld [vmem:[#allocation2 + $0x30] sm:$0x33]
    %v5830 = vld [vmem:[#allocation2 + $0x38] sm:$0x3]
    %s5831 = scalar_lea.vmem %s12, 3456
    %v5832 = vld [vmem:[%s5831] sm:$0xff]
    %v5833 = vld [vmem:[%s5831 + $0x8] sm:$0xf]
    %v5834 = vld [vmem:[%s5831 + $0xc] sm:$0xff]
    %v5835 = vld [vmem:[%s5831 + $0x14] sm:$0xf]
    %v5836 = vld [vmem:[%s5831 + $0x18] sm:$0xff]
    %v5837 = vld [vmem:[%s5831 + $0x20] sm:$0xf]
    %v5838 = vld [vmem:[%s5831 + $0x24] sm:$0xff]
    %v5839 = vld [vmem:[%s5831 + $0x2c] sm:$0xf]
    %v5840 = vld [vmem:[%s5831 + $0x30] sm:$0xff]
    %v5841 = vld [vmem:[%s5831 + $0x38] sm:$0xf]
    %v5842 = vld [vmem:[%s5831 + $0x3c] sm:$0xff]
    %v5843 = vld [vmem:[%s5831 + $0x44] sm:$0xf]
    %v5844 = vld [vmem:[%s5831 + $0x48] sm:$0xff]
    %v5845 = vld [vmem:[%s5831 + $0x50] sm:$0xf]
    %v5846 = vld [vmem:[%s5831 + $0x54] sm:$0xff]
    %v5847 = vld [vmem:[%s5831 + $0x5c] sm:$0xf]
    %v5848 = vld [vmem:[%s5831 + $0x60] sm:$0xff]
    %v5849 = vld [vmem:[%s5831 + $0x68] sm:$0xf]
    %v5850 = vld [vmem:[%s5831 + $0x6c] sm:$0xff]
    %v5851 = vld [vmem:[%s5831 + $0x74] sm:$0xf]
    %v5852 = vld [vmem:[%s5831 + $0x78] sm:$0xff]
    %v5853 = vld [vmem:[%s5831 + $0x80] sm:$0xf]
    %v5854 = vld [vmem:[%s5831 + $0x84] sm:$0xff]
    %v5855 = vld [vmem:[%s5831 + $0x8c] sm:$0xf]
    %v5856 = vld [vmem:[%s5831 + $0x90] sm:$0xff]
    %v5857 = vld [vmem:[%s5831 + $0x98] sm:$0xf]
    %v5858 = vld [vmem:[%s5831 + $0x9c] sm:$0xff]
    %v5859 = vld [vmem:[%s5831 + $0xa4] sm:$0xf]
    %v5860 = vld [vmem:[%s5831 + $0xa8] sm:$0xff]
    %v5861 = vld [vmem:[%s5831 + $0xb0] sm:$0xf]
    %v5862 = vld [vmem:[%s5831 + $0xb4] sm:$0xff]
    %v5863 = vld [vmem:[%s5831 + $0xbc] sm:$0xf]
    %v5864 = vld [vmem:[%s5831 + $0xc0] sm:$0xff]
    %v5865 = vld [vmem:[%s5831 + $0xc8] sm:$0xf]
    %v5866 = vld [vmem:[%s5831 + $0xcc] sm:$0xff]
    %v5867 = vld [vmem:[%s5831 + $0xd4] sm:$0xf]
    %v5868 = vld [vmem:[%s5831 + $0xd8] sm:$0xff]
    %v5869 = vld [vmem:[%s5831 + $0xe0] sm:$0xf]
    %v5870 = vld [vmem:[%s5831 + $0xe4] sm:$0xff]
    %v5871 = vld [vmem:[%s5831 + $0xec] sm:$0xf]
    %v5872 = vld [vmem:[%s5831 + $0xf0] sm:$0xff]
    %v5873 = vld [vmem:[%s5831 + $0xf8] sm:$0xf]
    %v5874 = vld [vmem:[%s5831 + $0xfc] sm:$0xff]
    %v5875 = vld [vmem:[%s5831 + $0x104] sm:$0xf]
    %v5876 = vld [vmem:[%s5831 + $0x108] sm:$0xff]
    %v5877 = vld [vmem:[%s5831 + $0x110] sm:$0xf]
    %v5878 = vld [vmem:[%s5831 + $0x114] sm:$0xff]
    %v5879 = vld [vmem:[%s5831 + $0x11c] sm:$0xf]
    %v5880 = vld [vmem:[%s5831 + $0x120] sm:$0xff]
    %v5881 = vld [vmem:[%s5831 + $0x128] sm:$0xf]
    %v5882 = vld [vmem:[%s5831 + $0x12c] sm:$0xff]
    %v5883 = vld [vmem:[%s5831 + $0x134] sm:$0xf]
    %v5884 = vld [vmem:[%s5831 + $0x138] sm:$0xff]
    %v5885 = vld [vmem:[%s5831 + $0x140] sm:$0xf]
    %v5886 = vld [vmem:[%s5831 + $0x144] sm:$0xff]
    %v5887 = vld [vmem:[%s5831 + $0x14c] sm:$0xf]
    %v5888 = vld [vmem:[%s5831 + $0x150] sm:$0xff]
    %v5889 = vld [vmem:[%s5831 + $0x158] sm:$0xf]
    %v5890 = vld [vmem:[%s5831 + $0x15c] sm:$0xff]
    %v5891 = vld [vmem:[%s5831 + $0x164] sm:$0xf]
    %v5892 = vld [vmem:[%s5831 + $0x168] sm:$0xff]
    %v5893 = vld [vmem:[%s5831 + $0x170] sm:$0xf]
    %v5894 = vld [vmem:[%s5831 + $0x174] sm:$0xff]
    %v5895 = vld [vmem:[%s5831 + $0x17c] sm:$0xf]
    %v5896 = vld [vmem:[%s5831 + $0x180] sm:$0xff]
    %v5897 = vld [vmem:[%s5831 + $0x188] sm:$0xf]
    %v5898 = vld [vmem:[%s5831 + $0x18c] sm:$0xff]
    %v5899 = vld [vmem:[%s5831 + $0x194] sm:$0xf]
    %v5900 = vld [vmem:[%s5831 + $0x198] sm:$0xff]
    %v5901 = vld [vmem:[%s5831 + $0x1a0] sm:$0xf]
    %v5902 = vld [vmem:[%s5831 + $0x1a4] sm:$0xff]
    %v5903 = vld [vmem:[%s5831 + $0x1ac] sm:$0xf]
    %v5904 = vld [vmem:[%s5831 + $0x1b0] sm:$0xff]
    %v5905 = vld [vmem:[%s5831 + $0x1b8] sm:$0xf]
    %v5906 = vld [vmem:[%s5831 + $0x1bc] sm:$0xff]
    %v5907 = vld [vmem:[%s5831 + $0x1c4] sm:$0xf]
    %v5908 = vld [vmem:[%s5831 + $0x1c8] sm:$0xff]
    %v5909 = vld [vmem:[%s5831 + $0x1d0] sm:$0xf]
    %v5910 = vld [vmem:[%s5831 + $0x1d4] sm:$0xff]
    %v5911 = vld [vmem:[%s5831 + $0x1dc] sm:$0xf]
    %v5912 = vld [vmem:[%s5831 + $0x1e0] sm:$0xff]
    %v5913 = vld [vmem:[%s5831 + $0x1e8] sm:$0xf]
    %v5914 = vld [vmem:[%s5831 + $0x1ec] sm:$0xff]
    %v5915 = vld [vmem:[%s5831 + $0x1f4] sm:$0xf]
    %v5916 = vld [vmem:[%s5831 + $0x1f8] sm:$0xff]
    %v5917 = vld [vmem:[%s5831 + $0x200] sm:$0xf]
    %v5918 = vld [vmem:[%s5831 + $0x204] sm:$0xff]
    %v5919 = vld [vmem:[%s5831 + $0x20c] sm:$0xf]
    %v5920 = vld [vmem:[%s5831 + $0x210] sm:$0xff]
    %v5921 = vld [vmem:[%s5831 + $0x218] sm:$0xf]
    %v5922 = vld [vmem:[%s5831 + $0x21c] sm:$0xff]
    %v5923 = vld [vmem:[%s5831 + $0x224] sm:$0xf]
    %v5924 = vld [vmem:[%s5831 + $0x228] sm:$0xff]
    %v5925 = vld [vmem:[%s5831 + $0x230] sm:$0xf]
    %v5926 = vld [vmem:[%s5831 + $0x234] sm:$0xff]
    %v5927 = vld [vmem:[%s5831 + $0x23c] sm:$0xf]
    %v5928 = vld [vmem:[%s5831 + $0x240] sm:$0xff]
    %v5929 = vld [vmem:[%s5831 + $0x248] sm:$0xf]
    %v5930 = vld [vmem:[%s5831 + $0x24c] sm:$0xff]
    %v5931 = vld [vmem:[%s5831 + $0x254] sm:$0xf]
    %v5932 = vld [vmem:[%s5831 + $0x258] sm:$0xff]
    %v5933 = vld [vmem:[%s5831 + $0x260] sm:$0xf]
    %v5934 = vld [vmem:[%s5831 + $0x264] sm:$0xff]
    %v5935 = vld [vmem:[%s5831 + $0x26c] sm:$0xf]
    %v5936 = vld [vmem:[%s5831 + $0x270] sm:$0xff]
    %v5937 = vld [vmem:[%s5831 + $0x278] sm:$0xf]
    %v5938 = vld [vmem:[%s5831 + $0x27c] sm:$0xff]
    %v5939 = vld [vmem:[%s5831 + $0x284] sm:$0xf]
    %v5940 = vld [vmem:[%s5831 + $0x288] sm:$0xff]
    %v5941 = vld [vmem:[%s5831 + $0x290] sm:$0xf]
    %v5942 = vld [vmem:[%s5831 + $0x294] sm:$0xff]
    %v5943 = vld [vmem:[%s5831 + $0x29c] sm:$0xf]
    %v5944 = vld [vmem:[%s5831 + $0x2a0] sm:$0xff]
    %v5945 = vld [vmem:[%s5831 + $0x2a8] sm:$0xf]
    %v5946 = vld [vmem:[%s5831 + $0x2ac] sm:$0xff]
    %v5947 = vld [vmem:[%s5831 + $0x2b4] sm:$0xf]
    %v5948 = vld [vmem:[%s5831 + $0x2b8] sm:$0xff]
    %v5949 = vld [vmem:[%s5831 + $0x2c0] sm:$0xf]
    %v5950 = vld [vmem:[%s5831 + $0x2c4] sm:$0xff]
    %v5951 = vld [vmem:[%s5831 + $0x2cc] sm:$0xf]
    %v5952 = vld [vmem:[%s5831 + $0x2d0] sm:$0xff]
    %v5953 = vld [vmem:[%s5831 + $0x2d8] sm:$0xf]
    %v5954 = vld [vmem:[%s5831 + $0x2dc] sm:$0xff]
    %v5955 = vld [vmem:[%s5831 + $0x2e4] sm:$0xf]
    %v5956 = vld [vmem:[%s5831 + $0x2e8] sm:$0xff]
    %v5957 = vld [vmem:[%s5831 + $0x2f0] sm:$0xf]
    %v5958 = vld [vmem:[%s5831 + $0x2f4] sm:$0xff]
    %v5959 = vld [vmem:[%s5831 + $0x2fc] sm:$0xf]
    %v5960 = vld [vmem:[%s5831 + $0x300] sm:$0xff]
    %v5961 = vld [vmem:[%s5831 + $0x308] sm:$0xf]
    %v5962 = vld [vmem:[%s5831 + $0x30c] sm:$0xff]
    %v5963 = vld [vmem:[%s5831 + $0x314] sm:$0xf]
    %v5964 = vld [vmem:[%s5831 + $0x318] sm:$0xff]
    %v5965 = vld [vmem:[%s5831 + $0x320] sm:$0xf]
    %v5966 = vld [vmem:[%s5831 + $0x324] sm:$0xff]
    %v5967 = vld [vmem:[%s5831 + $0x32c] sm:$0xf]
    %v5968 = vld [vmem:[%s5831 + $0x330] sm:$0xff]
    %v5969 = vld [vmem:[%s5831 + $0x338] sm:$0xf]
    %v5970 = vld [vmem:[%s5831 + $0x33c] sm:$0xff]
    %v5971 = vld [vmem:[%s5831 + $0x344] sm:$0xf]
    %v5972 = vld [vmem:[%s5831 + $0x348] sm:$0xff]
    %v5973 = vld [vmem:[%s5831 + $0x350] sm:$0xf]
    %v5974 = vld [vmem:[%s5831 + $0x354] sm:$0xff]
    %v5975 = vld [vmem:[%s5831 + $0x35c] sm:$0xf]
    %v5979 = vunpack.c.l.b16 %v5828
    %v5980 = vunpack.c.h.b16 %v5828
    %v5981 = vunpack.c.l.b16 %v5829
    %v5982 = vunpack.c.h.b16 %v5829
    %v5983 = vunpack.c.l.b16 %v5830
    %v5984 = vpack.c.b16 %v5979, %v4993
    %v5985 = vpack.c.b16 %v5980, %v4994
    %v5986 = vpack.c.b16 %v5981, %v4995
    %v5987 = vpack.c.b16 %v5982, %v4996
    %v5988 = vpack.c.b16 %v5983, %v4997
    %v6137 = vunpack.c.l.b16 %v5832
    %v6138 = vunpack.c.h.b16 %v5832
    %v6139 = vunpack.c.l.b16 %v5833
    %v6140 = vunpack.c.l.b16 %v5834
    %v6141 = vunpack.c.h.b16 %v5834
    %v6142 = vunpack.c.l.b16 %v5835
    %v6143 = vunpack.c.l.b16 %v5836
    %v6144 = vunpack.c.h.b16 %v5836
    %v6145 = vunpack.c.l.b16 %v5837
    %v6146 = vunpack.c.l.b16 %v5838
    %v6147 = vunpack.c.h.b16 %v5838
    %v6148 = vunpack.c.l.b16 %v5839
    %v6149 = vunpack.c.l.b16 %v5840
    %v6150 = vunpack.c.h.b16 %v5840
    %v6151 = vunpack.c.l.b16 %v5841
    %v6152 = vunpack.c.l.b16 %v5842
    %v6153 = vunpack.c.h.b16 %v5842
    %v6154 = vunpack.c.l.b16 %v5843
    %v6155 = vunpack.c.l.b16 %v5844
    %v6156 = vunpack.c.h.b16 %v5844
    %v6157 = vunpack.c.l.b16 %v5845
    %v6158 = vunpack.c.l.b16 %v5846
    %v6159 = vunpack.c.h.b16 %v5846
    %v6160 = vunpack.c.l.b16 %v5847
    %v6161 = vunpack.c.l.b16 %v5848
    %v6162 = vunpack.c.h.b16 %v5848
    %v6163 = vunpack.c.l.b16 %v5849
    %v6164 = vunpack.c.l.b16 %v5850
    %v6165 = vunpack.c.h.b16 %v5850
    %v6166 = vunpack.c.l.b16 %v5851
    %v6167 = vunpack.c.l.b16 %v5852
    %v6168 = vunpack.c.h.b16 %v5852
    %v6169 = vunpack.c.l.b16 %v5853
    %v6170 = vunpack.c.l.b16 %v5854
    %v6171 = vunpack.c.h.b16 %v5854
    %v6172 = vunpack.c.l.b16 %v5855
    %v6173 = vunpack.c.l.b16 %v5856
    %v6174 = vunpack.c.h.b16 %v5856
    %v6175 = vunpack.c.l.b16 %v5857
    %v6176 = vunpack.c.l.b16 %v5858
    %v6177 = vunpack.c.h.b16 %v5858
    %v6178 = vunpack.c.l.b16 %v5859
    %v6179 = vunpack.c.l.b16 %v5860
    %v6180 = vunpack.c.h.b16 %v5860
    %v6181 = vunpack.c.l.b16 %v5861
    %v6182 = vunpack.c.l.b16 %v5862
    %v6183 = vunpack.c.h.b16 %v5862
    %v6184 = vunpack.c.l.b16 %v5863
    %v6185 = vunpack.c.l.b16 %v5864
    %v6186 = vunpack.c.h.b16 %v5864
    %v6187 = vunpack.c.l.b16 %v5865
    %v6188 = vunpack.c.l.b16 %v5866
    %v6189 = vunpack.c.h.b16 %v5866
    %v6190 = vunpack.c.l.b16 %v5867
    %v6191 = vunpack.c.l.b16 %v5868
    %v6192 = vunpack.c.h.b16 %v5868
    %v6193 = vunpack.c.l.b16 %v5869
    %v6194 = vunpack.c.l.b16 %v5870
    %v6195 = vunpack.c.h.b16 %v5870
    %v6196 = vunpack.c.l.b16 %v5871
    %v6197 = vunpack.c.l.b16 %v5872
    %v6198 = vunpack.c.h.b16 %v5872
    %v6199 = vunpack.c.l.b16 %v5873
    %v6200 = vunpack.c.l.b16 %v5874
    %v6201 = vunpack.c.h.b16 %v5874
    %v6202 = vunpack.c.l.b16 %v5875
    %v6203 = vunpack.c.l.b16 %v5876
    %v6204 = vunpack.c.h.b16 %v5876
    %v6205 = vunpack.c.l.b16 %v5877
    %v6206 = vunpack.c.l.b16 %v5878
    %v6207 = vunpack.c.h.b16 %v5878
    %v6208 = vunpack.c.l.b16 %v5879
    %v6209 = vunpack.c.l.b16 %v5880
    %v6210 = vunpack.c.h.b16 %v5880
    %v6211 = vunpack.c.l.b16 %v5881
    %v6212 = vunpack.c.l.b16 %v5882
    %v6213 = vunpack.c.h.b16 %v5882
    %v6214 = vunpack.c.l.b16 %v5883
    %v6215 = vunpack.c.l.b16 %v5884
    %v6216 = vunpack.c.h.b16 %v5884
    %v6217 = vunpack.c.l.b16 %v5885
    %v6218 = vunpack.c.l.b16 %v5886
    %v6219 = vunpack.c.h.b16 %v5886
    %v6220 = vunpack.c.l.b16 %v5887
    %v6221 = vunpack.c.l.b16 %v5888
    %v6222 = vunpack.c.h.b16 %v5888
    %v6223 = vunpack.c.l.b16 %v5889
    %v6224 = vunpack.c.l.b16 %v5890
    %v6225 = vunpack.c.h.b16 %v5890
    %v6226 = vunpack.c.l.b16 %v5891
    %v6227 = vunpack.c.l.b16 %v5892
    %v6228 = vunpack.c.h.b16 %v5892
    %v6229 = vunpack.c.l.b16 %v5893
    %v6230 = vunpack.c.l.b16 %v5894
    %v6231 = vunpack.c.h.b16 %v5894
    %v6232 = vunpack.c.l.b16 %v5895
    %v6233 = vunpack.c.l.b16 %v5896
    %v6234 = vunpack.c.h.b16 %v5896
    %v6235 = vunpack.c.l.b16 %v5897
    %v6236 = vunpack.c.l.b16 %v5898
    %v6237 = vunpack.c.h.b16 %v5898
    %v6238 = vunpack.c.l.b16 %v5899
    %v6239 = vunpack.c.l.b16 %v5900
    %v6240 = vunpack.c.h.b16 %v5900
    %v6241 = vunpack.c.l.b16 %v5901
    %v6242 = vunpack.c.l.b16 %v5902
    %v6243 = vunpack.c.h.b16 %v5902
    %v6244 = vunpack.c.l.b16 %v5903
    %v6245 = vunpack.c.l.b16 %v5904
    %v6246 = vunpack.c.h.b16 %v5904
    %v6247 = vunpack.c.l.b16 %v5905
    %v6248 = vunpack.c.l.b16 %v5906
    %v6249 = vunpack.c.h.b16 %v5906
    %v6250 = vunpack.c.l.b16 %v5907
    %v6251 = vunpack.c.l.b16 %v5908
    %v6252 = vunpack.c.h.b16 %v5908
    %v6253 = vunpack.c.l.b16 %v5909
    %v6254 = vunpack.c.l.b16 %v5910
    %v6255 = vunpack.c.h.b16 %v5910
    %v6256 = vunpack.c.l.b16 %v5911
    %v6257 = vunpack.c.l.b16 %v5912
    %v6258 = vunpack.c.h.b16 %v5912
    %v6259 = vunpack.c.l.b16 %v5913
    %v6260 = vunpack.c.l.b16 %v5914
    %v6261 = vunpack.c.h.b16 %v5914
    %v6262 = vunpack.c.l.b16 %v5915
    %v6263 = vunpack.c.l.b16 %v5916
    %v6264 = vunpack.c.h.b16 %v5916
    %v6265 = vunpack.c.l.b16 %v5917
    %v6266 = vunpack.c.l.b16 %v5918
    %v6267 = vunpack.c.h.b16 %v5918
    %v6268 = vunpack.c.l.b16 %v5919
    %v6269 = vunpack.c.l.b16 %v5920
    %v6270 = vunpack.c.h.b16 %v5920
    %v6271 = vunpack.c.l.b16 %v5921
    %v6272 = vunpack.c.l.b16 %v5922
    %v6273 = vunpack.c.h.b16 %v5922
    %v6274 = vunpack.c.l.b16 %v5923
    %v6275 = vunpack.c.l.b16 %v5924
    %v6276 = vunpack.c.h.b16 %v5924
    %v6277 = vunpack.c.l.b16 %v5925
    %v6278 = vunpack.c.l.b16 %v5926
    %v6279 = vunpack.c.h.b16 %v5926
    %v6280 = vunpack.c.l.b16 %v5927
    %v6281 = vunpack.c.l.b16 %v5928
    %v6282 = vunpack.c.h.b16 %v5928
    %v6283 = vunpack.c.l.b16 %v5929
    %v6284 = vunpack.c.l.b16 %v5930
    %v6285 = vunpack.c.h.b16 %v5930
    %v6286 = vunpack.c.l.b16 %v5931
    %v6287 = vunpack.c.l.b16 %v5932
    %v6288 = vunpack.c.h.b16 %v5932
    %v6289 = vunpack.c.l.b16 %v5933
    %v6290 = vunpack.c.l.b16 %v5934
    %v6291 = vunpack.c.h.b16 %v5934
    %v6292 = vunpack.c.l.b16 %v5935
    %v6293 = vunpack.c.l.b16 %v5936
    %v6294 = vunpack.c.h.b16 %v5936
    %v6295 = vunpack.c.l.b16 %v5937
    %v6296 = vunpack.c.l.b16 %v5938
    %v6297 = vunpack.c.h.b16 %v5938
    %v6298 = vunpack.c.l.b16 %v5939
    %v6299 = vunpack.c.l.b16 %v5940
    %v6300 = vunpack.c.h.b16 %v5940
    %v6301 = vunpack.c.l.b16 %v5941
    %v6302 = vunpack.c.l.b16 %v5942
    %v6303 = vunpack.c.h.b16 %v5942
    %v6304 = vunpack.c.l.b16 %v5943
    %v6305 = vunpack.c.l.b16 %v5944
    %v6306 = vunpack.c.h.b16 %v5944
    %v6307 = vunpack.c.l.b16 %v5945
    %v6308 = vunpack.c.l.b16 %v5946
    %v6309 = vunpack.c.h.b16 %v5946
    %v6310 = vunpack.c.l.b16 %v5947
    %v6311 = vunpack.c.l.b16 %v5948
    %v6312 = vunpack.c.h.b16 %v5948
    %v6313 = vunpack.c.l.b16 %v5949
    %v6314 = vunpack.c.l.b16 %v5950
    %v6315 = vunpack.c.h.b16 %v5950
    %v6316 = vunpack.c.l.b16 %v5951
    %v6317 = vunpack.c.l.b16 %v5952
    %v6318 = vunpack.c.h.b16 %v5952
    %v6319 = vunpack.c.l.b16 %v5953
    %v6320 = vunpack.c.l.b16 %v5954
    %v6321 = vunpack.c.h.b16 %v5954
    %v6322 = vunpack.c.l.b16 %v5955
    %v6323 = vunpack.c.l.b16 %v5956
    %v6324 = vunpack.c.h.b16 %v5956
    %v6325 = vunpack.c.l.b16 %v5957
    %v6326 = vunpack.c.l.b16 %v5958
    %v6327 = vunpack.c.h.b16 %v5958
    %v6328 = vunpack.c.l.b16 %v5959
    %v6329 = vunpack.c.l.b16 %v5960
    %v6330 = vunpack.c.h.b16 %v5960
    %v6331 = vunpack.c.l.b16 %v5961
    %v6332 = vunpack.c.l.b16 %v5962
    %v6333 = vunpack.c.h.b16 %v5962
    %v6334 = vunpack.c.l.b16 %v5963
    %v6335 = vunpack.c.l.b16 %v5964
    %v6336 = vunpack.c.h.b16 %v5964
    %v6337 = vunpack.c.l.b16 %v5965
    %v6338 = vunpack.c.l.b16 %v5966
    %v6339 = vunpack.c.h.b16 %v5966
    %v6340 = vunpack.c.l.b16 %v5967
    %v6341 = vunpack.c.l.b16 %v5968
    %v6342 = vunpack.c.h.b16 %v5968
    %v6343 = vunpack.c.l.b16 %v5969
    %v6344 = vunpack.c.l.b16 %v5970
    %v6345 = vunpack.c.h.b16 %v5970
    %v6346 = vunpack.c.l.b16 %v5971
    %v6347 = vunpack.c.l.b16 %v5972
    %v6348 = vunpack.c.h.b16 %v5972
    %v6349 = vunpack.c.l.b16 %v5973
    %v6350 = vunpack.c.l.b16 %v5974
    %v6351 = vunpack.c.h.b16 %v5974
    %v6352 = vunpack.c.l.b16 %v5975
    %v6353 = vpack.c.b16 %v6140, %v6137
    %v6354 = vpack.c.b16 %v6141, %v6138
    %v6355 = vpack.c.b16 %v6142, %v6139
    %v6356 = vpack.c.b16 %v6146, %v6143
    %v6357 = vpack.c.b16 %v6147, %v6144
    %v6358 = vpack.c.b16 %v6148, %v6145
    %v6359 = vpack.c.b16 %v6152, %v6149
    %v6360 = vpack.c.b16 %v6153, %v6150
    %v6361 = vpack.c.b16 %v6154, %v6151
    %v6362 = vpack.c.b16 %v6158, %v6155
    %v6363 = vpack.c.b16 %v6159, %v6156
    %v6364 = vpack.c.b16 %v6160, %v6157
    %v6365 = vpack.c.b16 %v6164, %v6161
    %v6366 = vpack.c.b16 %v6165, %v6162
    %v6367 = vpack.c.b16 %v6166, %v6163
    %v6368 = vpack.c.b16 %v6170, %v6167
    %v6369 = vpack.c.b16 %v6171, %v6168
    %v6370 = vpack.c.b16 %v6172, %v6169
    %v6371 = vpack.c.b16 %v6176, %v6173
    %v6372 = vpack.c.b16 %v6177, %v6174
    %v6373 = vpack.c.b16 %v6178, %v6175
    %v6374 = vpack.c.b16 %v6182, %v6179
    %v6375 = vpack.c.b16 %v6183, %v6180
    %v6376 = vpack.c.b16 %v6184, %v6181
    %v6377 = vpack.c.b16 %v6188, %v6185
    %v6378 = vpack.c.b16 %v6189, %v6186
    %v6379 = vpack.c.b16 %v6190, %v6187
    %v6380 = vpack.c.b16 %v6194, %v6191
    %v6381 = vpack.c.b16 %v6195, %v6192
    %v6382 = vpack.c.b16 %v6196, %v6193
    %v6383 = vpack.c.b16 %v6200, %v6197
    %v6384 = vpack.c.b16 %v6201, %v6198
    %v6385 = vpack.c.b16 %v6202, %v6199
    %v6386 = vpack.c.b16 %v6206, %v6203
    %v6387 = vpack.c.b16 %v6207, %v6204
    %v6388 = vpack.c.b16 %v6208, %v6205
    %v6389 = vpack.c.b16 %v6212, %v6209
    %v6390 = vpack.c.b16 %v6213, %v6210
    %v6391 = vpack.c.b16 %v6214, %v6211
    %v6392 = vpack.c.b16 %v6218, %v6215
    %v6393 = vpack.c.b16 %v6219, %v6216
    %v6394 = vpack.c.b16 %v6220, %v6217
    %v6395 = vpack.c.b16 %v6224, %v6221
    %v6396 = vpack.c.b16 %v6225, %v6222
    %v6397 = vpack.c.b16 %v6226, %v6223
    %v6398 = vpack.c.b16 %v6230, %v6227
    %v6399 = vpack.c.b16 %v6231, %v6228
    %v6400 = vpack.c.b16 %v6232, %v6229
    %v6401 = vpack.c.b16 %v6236, %v6233
    %v6402 = vpack.c.b16 %v6237, %v6234
    %v6403 = vpack.c.b16 %v6238, %v6235
    %v6404 = vpack.c.b16 %v6242, %v6239
    %v6405 = vpack.c.b16 %v6243, %v6240
    %v6406 = vpack.c.b16 %v6244, %v6241
    %v6407 = vpack.c.b16 %v6248, %v6245
    %v6408 = vpack.c.b16 %v6249, %v6246
    %v6409 = vpack.c.b16 %v6250, %v6247
    %v6410 = vpack.c.b16 %v6254, %v6251
    %v6411 = vpack.c.b16 %v6255, %v6252
    %v6412 = vpack.c.b16 %v6256, %v6253
    %v6413 = vpack.c.b16 %v6260, %v6257
    %v6414 = vpack.c.b16 %v6261, %v6258
    %v6415 = vpack.c.b16 %v6262, %v6259
    %v6416 = vpack.c.b16 %v6266, %v6263
    %v6417 = vpack.c.b16 %v6267, %v6264
    %v6418 = vpack.c.b16 %v6268, %v6265
    %v6419 = vpack.c.b16 %v6272, %v6269
    %v6420 = vpack.c.b16 %v6273, %v6270
    %v6421 = vpack.c.b16 %v6274, %v6271
    %v6422 = vpack.c.b16 %v6278, %v6275
    %v6423 = vpack.c.b16 %v6279, %v6276
    %v6424 = vpack.c.b16 %v6280, %v6277
    %v6425 = vpack.c.b16 %v6284, %v6281
    %v6426 = vpack.c.b16 %v6285, %v6282
    %v6427 = vpack.c.b16 %v6286, %v6283
    %v6428 = vpack.c.b16 %v6290, %v6287
    %v6429 = vpack.c.b16 %v6291, %v6288
    %v6430 = vpack.c.b16 %v6292, %v6289
    %v6431 = vpack.c.b16 %v6296, %v6293
    %v6432 = vpack.c.b16 %v6297, %v6294
    %v6433 = vpack.c.b16 %v6298, %v6295
    %v6434 = vpack.c.b16 %v6302, %v6299
    %v6435 = vpack.c.b16 %v6303, %v6300
    %v6436 = vpack.c.b16 %v6304, %v6301
    %v6437 = vpack.c.b16 %v6308, %v6305
    %v6438 = vpack.c.b16 %v6309, %v6306
    %v6439 = vpack.c.b16 %v6310, %v6307
    %v6440 = vpack.c.b16 %v6314, %v6311
    %v6441 = vpack.c.b16 %v6315, %v6312
    %v6442 = vpack.c.b16 %v6316, %v6313
    %v6443 = vpack.c.b16 %v6320, %v6317
    %v6444 = vpack.c.b16 %v6321, %v6318
    %v6445 = vpack.c.b16 %v6322, %v6319
    %v6446 = vpack.c.b16 %v6326, %v6323
    %v6447 = vpack.c.b16 %v6327, %v6324
    %v6448 = vpack.c.b16 %v6328, %v6325
    %v6449 = vpack.c.b16 %v6332, %v6329
    %v6450 = vpack.c.b16 %v6333, %v6330
    %v6451 = vpack.c.b16 %v6334, %v6331
    %v6452 = vpack.c.b16 %v6338, %v6335
    %v6453 = vpack.c.b16 %v6339, %v6336
    %v6454 = vpack.c.b16 %v6340, %v6337
    %v6455 = vpack.c.b16 %v6344, %v6341
    %v6456 = vpack.c.b16 %v6345, %v6342
    %v6457 = vpack.c.b16 %v6346, %v6343
    %v6458 = vpack.c.b16 %v6350, %v6347
    %v6459 = vpack.c.b16 %v6351, %v6348
    %v6460 = vpack.c.b16 %v6352, %v6349
    %v6570 = vsel %vm687, %v5988, 0
    %6572 = vmatpush.bf16.msra.mxu0 %v6374
    %6573 = vmatpush.bf16.msra.mxu0 %v6371
    %6574 = vmatpush.bf16.msra.mxu0 %v6368
    %6575 = vmatpush.bf16.msra.mxu0 %v6365
    %6576 = vmatpush.bf16.msra.mxu0 %v6362
    %6577 = vmatpush.bf16.msra.mxu0 %v6359
    %6578 = vmatpush.bf16.msra.mxu0 %v6356
    %6579 = vmatpush.bf16.msra.mxu0 %v6353
    %6580 = vmatmul.bf16.gmra.mxu0 %v5984
    %v6581 = vpop.f32.mrf.mxu0
    %v6582 = vadd.f32 0.0, %v6581
    %v6583 = vpop.f32.mrf.mxu0
    %v6584 = vadd.f32 0.0, %v6583
    %6585 = vdwg.mxu0
    %6586 = vmatpush.bf16.msra.mxu0 %v6398
    %6587 = vmatpush.bf16.msra.mxu0 %v6395
    %6588 = vmatpush.bf16.msra.mxu0 %v6392
    %6589 = vmatpush.bf16.msra.mxu0 %v6389
    %6590 = vmatpush.bf16.msra.mxu0 %v6386
    %6591 = vmatpush.bf16.msra.mxu0 %v6383
    %6592 = vmatpush.bf16.msra.mxu0 %v6380
    %6593 = vmatpush.bf16.msra.mxu0 %v6377
    %6594 = vmatmul.bf16.gmra.mxu0 %v5985
    %v6595 = vpop.f32.mrf.mxu0
    %v6596 = vadd.f32 %v6582, %v6595
    %v6597 = vpop.f32.mrf.mxu0
    %v6598 = vadd.f32 %v6584, %v6597
    %6599 = vdwg.mxu0
    %6600 = vmatpush.bf16.msra.mxu0 %v6422
    %6601 = vmatpush.bf16.msra.mxu0 %v6419
    %6602 = vmatpush.bf16.msra.mxu0 %v6416
    %6603 = vmatpush.bf16.msra.mxu0 %v6413
    %6604 = vmatpush.bf16.msra.mxu0 %v6410
    %6605 = vmatpush.bf16.msra.mxu0 %v6407
    %6606 = vmatpush.bf16.msra.mxu0 %v6404
    %6607 = vmatpush.bf16.msra.mxu0 %v6401
    %6608 = vmatmul.bf16.gmra.mxu0 %v5986
    %v6609 = vpop.f32.mrf.mxu0
    %v6610 = vadd.f32 %v6596, %v6609
    %v6611 = vpop.f32.mrf.mxu0
    %v6612 = vadd.f32 %v6598, %v6611
    %6613 = vdwg.mxu0
    %6614 = vmatpush.bf16.msra.mxu0 %v6446
    %6615 = vmatpush.bf16.msra.mxu0 %v6443
    %6616 = vmatpush.bf16.msra.mxu0 %v6440
    %6617 = vmatpush.bf16.msra.mxu0 %v6437
    %6618 = vmatpush.bf16.msra.mxu0 %v6434
    %6619 = vmatpush.bf16.msra.mxu0 %v6431
    %6620 = vmatpush.bf16.msra.mxu0 %v6428
    %6621 = vmatpush.bf16.msra.mxu0 %v6425
    %6622 = vmatmul.bf16.gmra.mxu0 %v5987
    %v6623 = vpop.f32.mrf.mxu0
    %v6624 = vadd.f32 %v6610, %v6623
    %v6625 = vpop.f32.mrf.mxu0
    %v6626 = vadd.f32 %v6612, %v6625
    %6627 = vdwg.mxu0
    %6628 = vmatpush.bf16.msra.mxu0 0
    %6629 = vmatpush.bf16.msra.mxu0 0
    %6630 = vmatpush.bf16.msra.mxu0 0
    %6631 = vmatpush.bf16.msra.mxu0 0
    %6632 = vmatpush.bf16.msra.mxu0 %v6458
    %6633 = vmatpush.bf16.msra.mxu0 %v6455
    %6634 = vmatpush.bf16.msra.mxu0 %v6452
    %6635 = vmatpush.bf16.msra.mxu0 %v6449
    %6636 = vmatmul.bf16.gmra.mxu0 %v6570
    %v6637 = vpop.f32.mrf.mxu0
    %v6638 = vadd.f32 %v6624, %v6637
    %v6639 = vpop.f32.mrf.mxu0
    %v6640 = vadd.f32 %v6626, %v6639
    %6641 = vdwg.mxu0
    %6642 = vmatpush.bf16.msra.mxu0 %v6375
    %6643 = vmatpush.bf16.msra.mxu0 %v6372
    %6644 = vmatpush.bf16.msra.mxu0 %v6369
    %6645 = vmatpush.bf16.msra.mxu0 %v6366
    %6646 = vmatpush.bf16.msra.mxu0 %v6363
    %6647 = vmatpush.bf16.msra.mxu0 %v6360
    %6648 = vmatpush.bf16.msra.mxu0 %v6357
    %6649 = vmatpush.bf16.msra.mxu0 %v6354
    %6650 = vmatmul.bf16.gmra.mxu0 %v5984
    %v6651 = vpop.f32.mrf.mxu0
    %v6652 = vadd.f32 0.0, %v6651
    %v6653 = vpop.f32.mrf.mxu0
    %v6654 = vadd.f32 0.0, %v6653
    %6655 = vdwg.mxu0
    %6656 = vmatpush.bf16.msra.mxu0 %v6399
    %6657 = vmatpush.bf16.msra.mxu0 %v6396
    %6658 = vmatpush.bf16.msra.mxu0 %v6393
    %6659 = vmatpush.bf16.msra.mxu0 %v6390
    %6660 = vmatpush.bf16.msra.mxu0 %v6387
    %6661 = vmatpush.bf16.msra.mxu0 %v6384
    %6662 = vmatpush.bf16.msra.mxu0 %v6381
    %6663 = vmatpush.bf16.msra.mxu0 %v6378
    %6664 = vmatmul.bf16.gmra.mxu0 %v5985
    %v6665 = vpop.f32.mrf.mxu0
    %v6666 = vadd.f32 %v6652, %v6665
    %v6667 = vpop.f32.mrf.mxu0
    %v6668 = vadd.f32 %v6654, %v6667
    %6669 = vdwg.mxu0
    %6670 = vmatpush.bf16.msra.mxu0 %v6423
    %6671 = vmatpush.bf16.msra.mxu0 %v6420
    %6672 = vmatpush.bf16.msra.mxu0 %v6417
    %6673 = vmatpush.bf16.msra.mxu0 %v6414
    %6674 = vmatpush.bf16.msra.mxu0 %v6411
    %6675 = vmatpush.bf16.msra.mxu0 %v6408
    %6676 = vmatpush.bf16.msra.mxu0 %v6405
    %6677 = vmatpush.bf16.msra.mxu0 %v6402
    %6678 = vmatmul.bf16.gmra.mxu0 %v5986
    %v6679 = vpop.f32.mrf.mxu0
    %v6680 = vadd.f32 %v6666, %v6679
    %v6681 = vpop.f32.mrf.mxu0
    %v6682 = vadd.f32 %v6668, %v6681
    %6683 = vdwg.mxu0
    %6684 = vmatpush.bf16.msra.mxu0 %v6447
    %6685 = vmatpush.bf16.msra.mxu0 %v6444
    %6686 = vmatpush.bf16.msra.mxu0 %v6441
    %6687 = vmatpush.bf16.msra.mxu0 %v6438
    %6688 = vmatpush.bf16.msra.mxu0 %v6435
    %6689 = vmatpush.bf16.msra.mxu0 %v6432
    %6690 = vmatpush.bf16.msra.mxu0 %v6429
    %6691 = vmatpush.bf16.msra.mxu0 %v6426
    %6692 = vmatmul.bf16.gmra.mxu0 %v5987
    %v6693 = vpop.f32.mrf.mxu0
    %v6694 = vadd.f32 %v6680, %v6693
    %v6695 = vpop.f32.mrf.mxu0
    %v6696 = vadd.f32 %v6682, %v6695
    %6697 = vdwg.mxu0
    %6698 = vmatpush.bf16.msra.mxu0 0
    %6699 = vmatpush.bf16.msra.mxu0 0
    %6700 = vmatpush.bf16.msra.mxu0 0
    %6701 = vmatpush.bf16.msra.mxu0 0
    %6702 = vmatpush.bf16.msra.mxu0 %v6459
    %6703 = vmatpush.bf16.msra.mxu0 %v6456
    %6704 = vmatpush.bf16.msra.mxu0 %v6453
    %6705 = vmatpush.bf16.msra.mxu0 %v6450
    %6706 = vmatmul.bf16.gmra.mxu0 %v6570
    %v6707 = vpop.f32.mrf.mxu0
    %v6708 = vadd.f32 %v6694, %v6707
    %v6709 = vpop.f32.mrf.mxu0
    %v6710 = vadd.f32 %v6696, %v6709
    %6711 = vdwg.mxu0
    %6712 = vmatpush.bf16.msra.mxu0 %v6376
    %6713 = vmatpush.bf16.msra.mxu0 %v6373
    %6714 = vmatpush.bf16.msra.mxu0 %v6370
    %6715 = vmatpush.bf16.msra.mxu0 %v6367
    %6716 = vmatpush.bf16.msra.mxu0 %v6364
    %6717 = vmatpush.bf16.msra.mxu0 %v6361
    %6718 = vmatpush.bf16.msra.mxu0 %v6358
    %6719 = vmatpush.bf16.msra.mxu0 %v6355
    %6720 = vmatmul.bf16.gmra.mxu0 %v5984
    %v6721 = vpop.f32.mrf.mxu0
    %v6722 = vadd.f32 0.0, %v6721
    %v6723 = vpop.f32.mrf.mxu0
    %v6724 = vadd.f32 0.0, %v6723
    %6725 = vdwg.mxu0
    %6726 = vmatpush.bf16.msra.mxu0 %v6400
    %6727 = vmatpush.bf16.msra.mxu0 %v6397
    %6728 = vmatpush.bf16.msra.mxu0 %v6394
    %6729 = vmatpush.bf16.msra.mxu0 %v6391
    %6730 = vmatpush.bf16.msra.mxu0 %v6388
    %6731 = vmatpush.bf16.msra.mxu0 %v6385
    %6732 = vmatpush.bf16.msra.mxu0 %v6382
    %6733 = vmatpush.bf16.msra.mxu0 %v6379
    %6734 = vmatmul.bf16.gmra.mxu0 %v5985
    %v6735 = vpop.f32.mrf.mxu0
    %v6736 = vadd.f32 %v6722, %v6735
    %v6737 = vpop.f32.mrf.mxu0
    %v6738 = vadd.f32 %v6724, %v6737
    %6739 = vdwg.mxu0
    %6740 = vmatpush.bf16.msra.mxu0 %v6424
    %6741 = vmatpush.bf16.msra.mxu0 %v6421
    %6742 = vmatpush.bf16.msra.mxu0 %v6418
    %6743 = vmatpush.bf16.msra.mxu0 %v6415
    %6744 = vmatpush.bf16.msra.mxu0 %v6412
    %6745 = vmatpush.bf16.msra.mxu0 %v6409
    %6746 = vmatpush.bf16.msra.mxu0 %v6406
    %6747 = vmatpush.bf16.msra.mxu0 %v6403
    %6748 = vmatmul.bf16.gmra.mxu0 %v5986
    %v6749 = vpop.f32.mrf.mxu0
    %v6750 = vadd.f32 %v6736, %v6749
    %v6751 = vpop.f32.mrf.mxu0
    %v6752 = vadd.f32 %v6738, %v6751
    %6753 = vdwg.mxu0
    %6754 = vmatpush.bf16.msra.mxu0 %v6448
    %6755 = vmatpush.bf16.msra.mxu0 %v6445
    %6756 = vmatpush.bf16.msra.mxu0 %v6442
    %6757 = vmatpush.bf16.msra.mxu0 %v6439
    %6758 = vmatpush.bf16.msra.mxu0 %v6436
    %6759 = vmatpush.bf16.msra.mxu0 %v6433
    %6760 = vmatpush.bf16.msra.mxu0 %v6430
    %6761 = vmatpush.bf16.msra.mxu0 %v6427
    %6762 = vmatmul.bf16.gmra.mxu0 %v5987
    %v6763 = vpop.f32.mrf.mxu0
    %v6764 = vadd.f32 %v6750, %v6763
    %v6765 = vpop.f32.mrf.mxu0
    %v6766 = vadd.f32 %v6752, %v6765
    %6767 = vdwg.mxu0
    %6768 = vmatpush.bf16.msra.mxu0 0
    %6769 = vmatpush.bf16.msra.mxu0 0
    %6770 = vmatpush.bf16.msra.mxu0 0
    %6771 = vmatpush.bf16.msra.mxu0 0
    %6772 = vmatpush.bf16.msra.mxu0 %v6460
    %6773 = vmatpush.bf16.msra.mxu0 %v6457
    %6774 = vmatpush.bf16.msra.mxu0 %v6454
    %6775 = vmatpush.bf16.msra.mxu0 %v6451
    %6776 = vmatmul.bf16.gmra.mxu0 %v6570
    %v6777 = vpop.f32.mrf.mxu0
    %v6778 = vadd.f32 %v6764, %v6777
    %v6779 = vpop.f32.mrf.mxu0
    %v6780 = vadd.f32 %v6766, %v6779
    %6781 = vdwg.mxu0
    %v6782 = vadd.f32 %v5822, %v6638
    %v6783 = vadd.f32 %v5823, %v6708
    %v6784 = vadd.f32 %v5824, %v6778
    %v6785 = vadd.f32 %v5825, %v6640
    %v6786 = vadd.f32 %v5826, %v6710
    %v6787 = vadd.f32 %v5827, %v6780
    %v6788 = vmax.f32 %v6782, 0.0
    %v6789 = vmax.f32 %v6783, 0.0
    %v6790 = vmax.f32 %v6784, 0.0
    %v6791 = vmax.f32 %v6785, 0.0
    %v6792 = vmax.f32 %v6786, 0.0
    %v6793 = vmax.f32 %v6787, 0.0
    %v6794 = vpack.c.bf16 %v6789, %v6788
    %v6795 = vpack.c.bf16 %v6790, %v6790
    %v6796 = vpack.c.bf16 %v6792, %v6791
    %v6797 = vpack.c.bf16 %v6793, %v6793
    %6798 = vst [vmem:[#allocation3] sm:$0xff] %v6794
    %vm6799 = vcmask 257024
    %6800 = vst.msk [vmem:[#allocation3 + $0x8] sm:$0xf] %vm6799, %v6795
    %6801 = vst [vmem:[#allocation3 + $0xc] sm:$0x33] %v6796
    %vm6802 = vcmask 254976
    %6803 = vst.msk [vmem:[#allocation3 + $0x14] sm:$0x3] %vm6802, %v6797
    %v6804 = vld [vmem:[%s15] sm:$0x3]
    %v6805 = vld [vmem:[#allocation3] sm:$0xff]
    %v6806 = vld [vmem:[#allocation3 + $0x8] sm:$0xf]
    %v6807 = vld [vmem:[%s14] sm:$0xff]
    %v6808 = vld [vmem:[%s14 + $0x8] sm:$0xff]
    %v6809 = vld [vmem:[%s14 + $0x10] sm:$0xff]
    %v6810 = vld [vmem:[%s14 + $0x18] sm:$0xff]
    %v6811 = vld [vmem:[%s14 + $0x20] sm:$0xff]
    %v6812 = vld [vmem:[%s14 + $0x28] sm:$0xff]
    %v6813 = vld [vmem:[%s14 + $0x30] sm:$0xff]
    %v6814 = vld [vmem:[%s14 + $0x38] sm:$0xff]
    %v6815 = vld [vmem:[%s14 + $0x40] sm:$0xff]
    %v6816 = vld [vmem:[%s14 + $0x48] sm:$0xff]
    %v6817 = vld [vmem:[%s14 + $0x50] sm:$0xff]
    %v6818 = vld [vmem:[%s14 + $0x58] sm:$0xff]
    %v6819 = vld [vmem:[%s14 + $0x60] sm:$0xff]
    %v6820 = vld [vmem:[%s14 + $0x68] sm:$0xff]
    %v6821 = vld [vmem:[%s14 + $0x70] sm:$0xff]
    %v6822 = vld [vmem:[%s14 + $0x78] sm:$0xff]
    %v6823 = vld [vmem:[%s14 + $0x80] sm:$0xff]
    %v6824 = vld [vmem:[%s14 + $0x88] sm:$0xff]
    %v6825 = vld [vmem:[%s14 + $0x90] sm:$0xff]
    %v6826 = vld [vmem:[%s14 + $0x98] sm:$0xff]
    %v6827 = vld [vmem:[%s14 + $0xa0] sm:$0xff]
    %v6828 = vld [vmem:[%s14 + $0xa8] sm:$0xff]
    %v6829 = vld [vmem:[%s14 + $0xb0] sm:$0xff]
    %v6830 = vld [vmem:[%s14 + $0xb8] sm:$0xff]
    %v6831 = vld [vmem:[%s14 + $0xc0] sm:$0xff]
    %v6832 = vld [vmem:[%s14 + $0xc8] sm:$0xff]
    %v6833 = vld [vmem:[%s14 + $0xd0] sm:$0xff]
    %v6834 = vld [vmem:[%s14 + $0xd8] sm:$0xff]
    %v6835 = vld [vmem:[%s14 + $0xe0] sm:$0xff]
    %v6836 = vld [vmem:[%s14 + $0xe8] sm:$0xff]
    %v6837 = vld [vmem:[%s14 + $0xf0] sm:$0xff]
    %v6838 = vld [vmem:[%s14 + $0xf8] sm:$0xff]
    %v6839 = vld [vmem:[%s14 + $0x100] sm:$0xff]
    %v6840 = vld [vmem:[%s14 + $0x108] sm:$0xff]
    %v6841 = vld [vmem:[%s14 + $0x110] sm:$0xff]
    %v6842 = vld [vmem:[%s14 + $0x118] sm:$0xff]
    %v6845 = vunpack.c.l.b16 %v6805
    %v6846 = vunpack.c.h.b16 %v6805
    %v6847 = vunpack.c.l.b16 %v6806
    %v6848 = vpack.c.b16 %v6845, %v6845
    %v6849 = vpack.c.b16 %v6846, %v6846
    %v6850 = vpack.c.b16 %v6847, %v6847
    %v6889 = vunpack.c.l.b16 %v6807
    %v6890 = vunpack.c.h.b16 %v6807
    %v6891 = vunpack.c.l.b16 %v6808
    %v6892 = vunpack.c.h.b16 %v6808
    %v6893 = vunpack.c.l.b16 %v6809
    %v6894 = vunpack.c.h.b16 %v6809
    %v6895 = vunpack.c.l.b16 %v6810
    %v6896 = vunpack.c.h.b16 %v6810
    %v6897 = vunpack.c.l.b16 %v6811
    %v6898 = vunpack.c.h.b16 %v6811
    %v6899 = vunpack.c.l.b16 %v6812
    %v6900 = vunpack.c.h.b16 %v6812
    %v6901 = vunpack.c.l.b16 %v6813
    %v6902 = vunpack.c.h.b16 %v6813
    %v6903 = vunpack.c.l.b16 %v6814
    %v6904 = vunpack.c.h.b16 %v6814
    %v6905 = vunpack.c.l.b16 %v6815
    %v6906 = vunpack.c.h.b16 %v6815
    %v6907 = vunpack.c.l.b16 %v6816
    %v6908 = vunpack.c.h.b16 %v6816
    %v6909 = vunpack.c.l.b16 %v6817
    %v6910 = vunpack.c.h.b16 %v6817
    %v6911 = vunpack.c.l.b16 %v6818
    %v6912 = vunpack.c.h.b16 %v6818
    %v6913 = vunpack.c.l.b16 %v6819
    %v6914 = vunpack.c.h.b16 %v6819
    %v6915 = vunpack.c.l.b16 %v6820
    %v6916 = vunpack.c.h.b16 %v6820
    %v6917 = vunpack.c.l.b16 %v6821
    %v6918 = vunpack.c.h.b16 %v6821
    %v6919 = vunpack.c.l.b16 %v6822
    %v6920 = vunpack.c.h.b16 %v6822
    %v6921 = vunpack.c.l.b16 %v6823
    %v6922 = vunpack.c.h.b16 %v6823
    %v6923 = vunpack.c.l.b16 %v6824
    %v6924 = vunpack.c.h.b16 %v6824
    %v6925 = vunpack.c.l.b16 %v6825
    %v6926 = vunpack.c.h.b16 %v6825
    %v6927 = vunpack.c.l.b16 %v6826
    %v6928 = vunpack.c.h.b16 %v6826
    %v6929 = vunpack.c.l.b16 %v6827
    %v6930 = vunpack.c.h.b16 %v6827
    %v6931 = vunpack.c.l.b16 %v6828
    %v6932 = vunpack.c.h.b16 %v6828
    %v6933 = vunpack.c.l.b16 %v6829
    %v6934 = vunpack.c.h.b16 %v6829
    %v6935 = vunpack.c.l.b16 %v6830
    %v6936 = vunpack.c.h.b16 %v6830
    %v6937 = vunpack.c.l.b16 %v6831
    %v6938 = vunpack.c.h.b16 %v6831
    %v6939 = vunpack.c.l.b16 %v6832
    %v6940 = vunpack.c.h.b16 %v6832
    %v6941 = vunpack.c.l.b16 %v6833
    %v6942 = vunpack.c.h.b16 %v6833
    %v6943 = vunpack.c.l.b16 %v6834
    %v6944 = vunpack.c.h.b16 %v6834
    %v6945 = vunpack.c.l.b16 %v6835
    %v6946 = vunpack.c.h.b16 %v6835
    %v6947 = vunpack.c.l.b16 %v6836
    %v6948 = vunpack.c.h.b16 %v6836
    %v6949 = vunpack.c.l.b16 %v6837
    %v6950 = vunpack.c.h.b16 %v6837
    %v6951 = vunpack.c.l.b16 %v6838
    %v6952 = vunpack.c.h.b16 %v6838
    %v6953 = vunpack.c.l.b16 %v6839
    %v6954 = vunpack.c.h.b16 %v6839
    %v6955 = vunpack.c.l.b16 %v6840
    %v6956 = vunpack.c.h.b16 %v6840
    %v6957 = vunpack.c.l.b16 %v6841
    %v6958 = vunpack.c.h.b16 %v6841
    %v6959 = vunpack.c.l.b16 %v6842
    %v6960 = vunpack.c.h.b16 %v6842
    %v6961 = vpack.c.b16 %v6891, %v6889
    %v6962 = vpack.c.b16 %v6892, %v6890
    %v6963 = vpack.c.b16 %v6895, %v6893
    %v6964 = vpack.c.b16 %v6896, %v6894
    %v6965 = vpack.c.b16 %v6899, %v6897
    %v6966 = vpack.c.b16 %v6900, %v6898
    %v6967 = vpack.c.b16 %v6903, %v6901
    %v6968 = vpack.c.b16 %v6904, %v6902
    %v6969 = vpack.c.b16 %v6907, %v6905
    %v6970 = vpack.c.b16 %v6908, %v6906
    %v6971 = vpack.c.b16 %v6911, %v6909
    %v6972 = vpack.c.b16 %v6912, %v6910
    %v6973 = vpack.c.b16 %v6915, %v6913
    %v6974 = vpack.c.b16 %v6916, %v6914
    %v6975 = vpack.c.b16 %v6919, %v6917
    %v6976 = vpack.c.b16 %v6920, %v6918
    %v6977 = vpack.c.b16 %v6923, %v6921
    %v6978 = vpack.c.b16 %v6924, %v6922
    %v6979 = vpack.c.b16 %v6927, %v6925
    %v6980 = vpack.c.b16 %v6928, %v6926
    %v6981 = vpack.c.b16 %v6931, %v6929
    %v6982 = vpack.c.b16 %v6932, %v6930
    %v6983 = vpack.c.b16 %v6935, %v6933
    %v6984 = vpack.c.b16 %v6936, %v6934
    %v6985 = vpack.c.b16 %v6939, %v6937
    %v6986 = vpack.c.b16 %v6940, %v6938
    %v6987 = vpack.c.b16 %v6943, %v6941
    %v6988 = vpack.c.b16 %v6944, %v6942
    %v6989 = vpack.c.b16 %v6947, %v6945
    %v6990 = vpack.c.b16 %v6948, %v6946
    %v6991 = vpack.c.b16 %v6951, %v6949
    %v6992 = vpack.c.b16 %v6952, %v6950
    %v6993 = vpack.c.b16 %v6955, %v6953
    %v6994 = vpack.c.b16 %v6956, %v6954
    %v6995 = vpack.c.b16 %v6959, %v6957
    %v6996 = vpack.c.b16 %v6960, %v6958
    %v7034 = vsel %vm435, %v6850, 0
    %7036 = vmatpush.bf16.msra.mxu0 %v6975
    %7037 = vmatpush.bf16.msra.mxu0 %v6973
    %7038 = vmatpush.bf16.msra.mxu0 %v6971
    %7039 = vmatpush.bf16.msra.mxu0 %v6969
    %7040 = vmatpush.bf16.msra.mxu0 %v6967
    %7041 = vmatpush.bf16.msra.mxu0 %v6965
    %7042 = vmatpush.bf16.msra.mxu0 %v6963
    %7043 = vmatpush.bf16.msra.mxu0 %v6961
    %7044 = vmatmul.bf16.gmra.mxu0 %v6848
    %v7045 = vpop.f32.mrf.mxu0
    %v7046 = vadd.f32 0.0, %v7045
    %v7047 = vpop.f32.mrf.mxu0
    %7048 = vdwg.mxu0
    %7049 = vmatpush.bf16.msra.mxu0 %v6991
    %7050 = vmatpush.bf16.msra.mxu0 %v6989
    %7051 = vmatpush.bf16.msra.mxu0 %v6987
    %7052 = vmatpush.bf16.msra.mxu0 %v6985
    %7053 = vmatpush.bf16.msra.mxu0 %v6983
    %7054 = vmatpush.bf16.msra.mxu0 %v6981
    %7055 = vmatpush.bf16.msra.mxu0 %v6979
    %7056 = vmatpush.bf16.msra.mxu0 %v6977
    %7057 = vmatmul.bf16.gmra.mxu0 %v6849
    %v7058 = vpop.f32.mrf.mxu0
    %v7059 = vadd.f32 %v7046, %v7058
    %v7060 = vpop.f32.mrf.mxu0
    %7061 = vdwg.mxu0
    %7062 = vmatpush.bf16.msra.mxu0 0
    %7063 = vmatpush.bf16.msra.mxu0 0
    %7064 = vmatpush.bf16.msra.mxu0 0
    %7065 = vmatpush.bf16.msra.mxu0 0
    %7066 = vmatpush.bf16.msra.mxu0 0
    %7067 = vmatpush.bf16.msra.mxu0 0
    %7068 = vmatpush.bf16.msra.mxu0 %v6995
    %7069 = vmatpush.bf16.msra.mxu0 %v6993
    %7070 = vmatmul.bf16.gmra.mxu0 %v7034
    %v7071 = vpop.f32.mrf.mxu0
    %v7072 = vadd.f32 %v7059, %v7071
    %v7073 = vpop.f32.mrf.mxu0
    %7074 = vdwg.mxu0
    %7075 = vmatpush.bf16.msra.mxu0 %v6976
    %7076 = vmatpush.bf16.msra.mxu0 %v6974
    %7077 = vmatpush.bf16.msra.mxu0 %v6972
    %7078 = vmatpush.bf16.msra.mxu0 %v6970
    %7079 = vmatpush.bf16.msra.mxu0 %v6968
    %7080 = vmatpush.bf16.msra.mxu0 %v6966
    %7081 = vmatpush.bf16.msra.mxu0 %v6964
    %7082 = vmatpush.bf16.msra.mxu0 %v6962
    %7083 = vmatmul.bf16.gmra.mxu0 %v6848
    %v7084 = vpop.f32.mrf.mxu0
    %v7085 = vadd.f32 0.0, %v7084
    %v7086 = vpop.f32.mrf.mxu0
    %7087 = vdwg.mxu0
    %7088 = vmatpush.bf16.msra.mxu0 %v6992
    %7089 = vmatpush.bf16.msra.mxu0 %v6990
    %7090 = vmatpush.bf16.msra.mxu0 %v6988
    %7091 = vmatpush.bf16.msra.mxu0 %v6986
    %7092 = vmatpush.bf16.msra.mxu0 %v6984
    %7093 = vmatpush.bf16.msra.mxu0 %v6982
    %7094 = vmatpush.bf16.msra.mxu0 %v6980
    %7095 = vmatpush.bf16.msra.mxu0 %v6978
    %7096 = vmatmul.bf16.gmra.mxu0 %v6849
    %v7097 = vpop.f32.mrf.mxu0
    %v7098 = vadd.f32 %v7085, %v7097
    %v7099 = vpop.f32.mrf.mxu0
    %7100 = vdwg.mxu0
    %7101 = vmatpush.bf16.msra.mxu0 0
    %7102 = vmatpush.bf16.msra.mxu0 0
    %7103 = vmatpush.bf16.msra.mxu0 0
    %7104 = vmatpush.bf16.msra.mxu0 0
    %7105 = vmatpush.bf16.msra.mxu0 0
    %7106 = vmatpush.bf16.msra.mxu0 0
    %7107 = vmatpush.bf16.msra.mxu0 %v6996
    %7108 = vmatpush.bf16.msra.mxu0 %v6994
    %7109 = vmatmul.bf16.gmra.mxu0 %v7034
    %v7110 = vpop.f32.mrf.mxu0
    %v7111 = vadd.f32 %v7098, %v7110
    %v7112 = vpop.f32.mrf.mxu0
    %7113 = vdwg.mxu0
    %v7115 = vperm.slane %v6804, 0
    %v7116 = vperm.slane %v6804, 1
    %v7119 = vadd.f32 %v7115, %v7072
    %v7120 = vadd.f32 %v7116, %v7111
    %v7121 = vld [vmem:[#allocation3] sm:$0xee]
    %v7122 = vld [vmem:[#allocation3 + $0x8] sm:$0xe]
    %v7123 = vld [vmem:[#allocation3 + $0xc] sm:$0x11]
    %v7124 = vld [vmem:[#allocation3 + $0x14] sm:$0x1]
    %s7125 = scalar_lea.vmem %s14, 288
    %v7126 = vld [vmem:[%s7125] sm:$0xff]
    %v7127 = vld [vmem:[%s7125 + $0x8] sm:$0xff]
    %v7128 = vld [vmem:[%s7125 + $0x10] sm:$0xff]
    %v7129 = vld [vmem:[%s7125 + $0x18] sm:$0xff]
    %v7130 = vld [vmem:[%s7125 + $0x20] sm:$0xff]
    %v7131 = vld [vmem:[%s7125 + $0x28] sm:$0xff]
    %v7132 = vld [vmem:[%s7125 + $0x30] sm:$0xff]
    %v7133 = vld [vmem:[%s7125 + $0x38] sm:$0xff]
    %v7134 = vld [vmem:[%s7125 + $0x40] sm:$0xff]
    %v7135 = vld [vmem:[%s7125 + $0x48] sm:$0xff]
    %v7136 = vld [vmem:[%s7125 + $0x50] sm:$0xff]
    %v7137 = vld [vmem:[%s7125 + $0x58] sm:$0xff]
    %v7138 = vld [vmem:[%s7125 + $0x60] sm:$0xff]
    %v7139 = vld [vmem:[%s7125 + $0x68] sm:$0xff]
    %v7140 = vld [vmem:[%s7125 + $0x70] sm:$0xff]
    %v7141 = vld [vmem:[%s7125 + $0x78] sm:$0xff]
    %v7142 = vld [vmem:[%s7125 + $0x80] sm:$0xff]
    %v7143 = vld [vmem:[%s7125 + $0x88] sm:$0xff]
    %v7144 = vld [vmem:[%s7125 + $0x90] sm:$0xff]
    %v7145 = vld [vmem:[%s7125 + $0x98] sm:$0xff]
    %v7146 = vld [vmem:[%s7125 + $0xa0] sm:$0xff]
    %v7147 = vld [vmem:[%s7125 + $0xa8] sm:$0xff]
    %v7148 = vld [vmem:[%s7125 + $0xb0] sm:$0xff]
    %v7149 = vld [vmem:[%s7125 + $0xb8] sm:$0xff]
    %v7150 = vld [vmem:[%s7125 + $0xc0] sm:$0xff]
    %v7151 = vld [vmem:[%s7125 + $0xc8] sm:$0xff]
    %v7152 = vld [vmem:[%s7125 + $0xd0] sm:$0xff]
    %v7153 = vld [vmem:[%s7125 + $0xd8] sm:$0xff]
    %v7154 = vld [vmem:[%s7125 + $0xe0] sm:$0xff]
    %v7155 = vld [vmem:[%s7125 + $0xe8] sm:$0xff]
    %v7156 = vld [vmem:[%s7125 + $0xf0] sm:$0xff]
    %v7157 = vld [vmem:[%s7125 + $0xf8] sm:$0xff]
    %v7158 = vld [vmem:[%s7125 + $0x100] sm:$0xff]
    %v7159 = vld [vmem:[%s7125 + $0x108] sm:$0xff]
    %v7160 = vld [vmem:[%s7125 + $0x110] sm:$0xff]
    %v7161 = vld [vmem:[%s7125 + $0x118] sm:$0xff]
    %v7166 = vunpack.c.l.b16 %v7121
    %v7167 = vunpack.c.h.b16 %v7121
    %v7168 = vunpack.c.l.b16 %v7122
    %v7169 = vunpack.c.l.b16 %v7123
    %v7170 = vunpack.c.h.b16 %v7123
    %v7171 = vunpack.c.l.b16 %v7124
    %v7172 = vpack.c.b16 %v7169, %v7166
    %v7173 = vpack.c.b16 %v7170, %v7167
    %v7174 = vpack.c.b16 %v7171, %v7168
    %v7175 = vrot.slane %v7172, 1
    %v7176 = vrot.slane %v7173, 1
    %v7177 = vrot.slane %v7174, 1
    %v7216 = vunpack.c.l.b16 %v7126
    %v7217 = vunpack.c.h.b16 %v7126
    %v7218 = vunpack.c.l.b16 %v7127
    %v7219 = vunpack.c.h.b16 %v7127
    %v7220 = vunpack.c.l.b16 %v7128
    %v7221 = vunpack.c.h.b16 %v7128
    %v7222 = vunpack.c.l.b16 %v7129
    %v7223 = vunpack.c.h.b16 %v7129
    %v7224 = vunpack.c.l.b16 %v7130
    %v7225 = vunpack.c.h.b16 %v7130
    %v7226 = vunpack.c.l.b16 %v7131
    %v7227 = vunpack.c.h.b16 %v7131
    %v7228 = vunpack.c.l.b16 %v7132
    %v7229 = vunpack.c.h.b16 %v7132
    %v7230 = vunpack.c.l.b16 %v7133
    %v7231 = vunpack.c.h.b16 %v7133
    %v7232 = vunpack.c.l.b16 %v7134
    %v7233 = vunpack.c.h.b16 %v7134
    %v7234 = vunpack.c.l.b16 %v7135
    %v7235 = vunpack.c.h.b16 %v7135
    %v7236 = vunpack.c.l.b16 %v7136
    %v7237 = vunpack.c.h.b16 %v7136
    %v7238 = vunpack.c.l.b16 %v7137
    %v7239 = vunpack.c.h.b16 %v7137
    %v7240 = vunpack.c.l.b16 %v7138
    %v7241 = vunpack.c.h.b16 %v7138
    %v7242 = vunpack.c.l.b16 %v7139
    %v7243 = vunpack.c.h.b16 %v7139
    %v7244 = vunpack.c.l.b16 %v7140
    %v7245 = vunpack.c.h.b16 %v7140
    %v7246 = vunpack.c.l.b16 %v7141
    %v7247 = vunpack.c.h.b16 %v7141
    %v7248 = vunpack.c.l.b16 %v7142
    %v7249 = vunpack.c.h.b16 %v7142
    %v7250 = vunpack.c.l.b16 %v7143
    %v7251 = vunpack.c.h.b16 %v7143
    %v7252 = vunpack.c.l.b16 %v7144
    %v7253 = vunpack.c.h.b16 %v7144
    %v7254 = vunpack.c.l.b16 %v7145
    %v7255 = vunpack.c.h.b16 %v7145
    %v7256 = vunpack.c.l.b16 %v7146
    %v7257 = vunpack.c.h.b16 %v7146
    %v7258 = vunpack.c.l.b16 %v7147
    %v7259 = vunpack.c.h.b16 %v7147
    %v7260 = vunpack.c.l.b16 %v7148
    %v7261 = vunpack.c.h.b16 %v7148
    %v7262 = vunpack.c.l.b16 %v7149
    %v7263 = vunpack.c.h.b16 %v7149
    %v7264 = vunpack.c.l.b16 %v7150
    %v7265 = vunpack.c.h.b16 %v7150
    %v7266 = vunpack.c.l.b16 %v7151
    %v7267 = vunpack.c.h.b16 %v7151
    %v7268 = vunpack.c.l.b16 %v7152
    %v7269 = vunpack.c.h.b16 %v7152
    %v7270 = vunpack.c.l.b16 %v7153
    %v7271 = vunpack.c.h.b16 %v7153
    %v7272 = vunpack.c.l.b16 %v7154
    %v7273 = vunpack.c.h.b16 %v7154
    %v7274 = vunpack.c.l.b16 %v7155
    %v7275 = vunpack.c.h.b16 %v7155
    %v7276 = vunpack.c.l.b16 %v7156
    %v7277 = vunpack.c.h.b16 %v7156
    %v7278 = vunpack.c.l.b16 %v7157
    %v7279 = vunpack.c.h.b16 %v7157
    %v7280 = vunpack.c.l.b16 %v7158
    %v7281 = vunpack.c.h.b16 %v7158
    %v7282 = vunpack.c.l.b16 %v7159
    %v7283 = vunpack.c.h.b16 %v7159
    %v7284 = vunpack.c.l.b16 %v7160
    %v7285 = vunpack.c.h.b16 %v7160
    %v7286 = vunpack.c.l.b16 %v7161
    %v7287 = vunpack.c.h.b16 %v7161
    %v7288 = vpack.c.b16 %v7218, %v7216
    %v7289 = vpack.c.b16 %v7219, %v7217
    %v7290 = vpack.c.b16 %v7222, %v7220
    %v7291 = vpack.c.b16 %v7223, %v7221
    %v7292 = vpack.c.b16 %v7226, %v7224
    %v7293 = vpack.c.b16 %v7227, %v7225
    %v7294 = vpack.c.b16 %v7230, %v7228
    %v7295 = vpack.c.b16 %v7231, %v7229
    %v7296 = vpack.c.b16 %v7234, %v7232
    %v7297 = vpack.c.b16 %v7235, %v7233
    %v7298 = vpack.c.b16 %v7238, %v7236
    %v7299 = vpack.c.b16 %v7239, %v7237
    %v7300 = vpack.c.b16 %v7242, %v7240
    %v7301 = vpack.c.b16 %v7243, %v7241
    %v7302 = vpack.c.b16 %v7246, %v7244
    %v7303 = vpack.c.b16 %v7247, %v7245
    %v7304 = vpack.c.b16 %v7250, %v7248
    %v7305 = vpack.c.b16 %v7251, %v7249
    %v7306 = vpack.c.b16 %v7254, %v7252
    %v7307 = vpack.c.b16 %v7255, %v7253
    %v7308 = vpack.c.b16 %v7258, %v7256
    %v7309 = vpack.c.b16 %v7259, %v7257
    %v7310 = vpack.c.b16 %v7262, %v7260
    %v7311 = vpack.c.b16 %v7263, %v7261
    %v7312 = vpack.c.b16 %v7266, %v7264
    %v7313 = vpack.c.b16 %v7267, %v7265
    %v7314 = vpack.c.b16 %v7270, %v7268
    %v7315 = vpack.c.b16 %v7271, %v7269
    %v7316 = vpack.c.b16 %v7274, %v7272
    %v7317 = vpack.c.b16 %v7275, %v7273
    %v7318 = vpack.c.b16 %v7278, %v7276
    %v7319 = vpack.c.b16 %v7279, %v7277
    %v7320 = vpack.c.b16 %v7282, %v7280
    %v7321 = vpack.c.b16 %v7283, %v7281
    %v7322 = vpack.c.b16 %v7286, %v7284
    %v7323 = vpack.c.b16 %v7287, %v7285
    %v7361 = vsel %vm435, %v7177, 0
    %7363 = vmatpush.bf16.msra.mxu0 %v7302
    %7364 = vmatpush.bf16.msra.mxu0 %v7300
    %7365 = vmatpush.bf16.msra.mxu0 %v7298
    %7366 = vmatpush.bf16.msra.mxu0 %v7296
    %7367 = vmatpush.bf16.msra.mxu0 %v7294
    %7368 = vmatpush.bf16.msra.mxu0 %v7292
    %7369 = vmatpush.bf16.msra.mxu0 %v7290
    %7370 = vmatpush.bf16.msra.mxu0 %v7288
    %7371 = vmatmul.bf16.gmra.mxu0 %v7175
    %v7372 = vpop.f32.mrf.mxu0
    %v7373 = vadd.f32 0.0, %v7372
    %v7374 = vpop.f32.mrf.mxu0
    %7375 = vdwg.mxu0
    %7376 = vmatpush.bf16.msra.mxu0 %v7318
    %7377 = vmatpush.bf16.msra.mxu0 %v7316
    %7378 = vmatpush.bf16.msra.mxu0 %v7314
    %7379 = vmatpush.bf16.msra.mxu0 %v7312
    %7380 = vmatpush.bf16.msra.mxu0 %v7310
    %7381 = vmatpush.bf16.msra.mxu0 %v7308
    %7382 = vmatpush.bf16.msra.mxu0 %v7306
    %7383 = vmatpush.bf16.msra.mxu0 %v7304
    %7384 = vmatmul.bf16.gmra.mxu0 %v7176
    %v7385 = vpop.f32.mrf.mxu0
    %v7386 = vadd.f32 %v7373, %v7385
    %v7387 = vpop.f32.mrf.mxu0
    %7388 = vdwg.mxu0
    %7389 = vmatpush.bf16.msra.mxu0 0
    %7390 = vmatpush.bf16.msra.mxu0 0
    %7391 = vmatpush.bf16.msra.mxu0 0
    %7392 = vmatpush.bf16.msra.mxu0 0
    %7393 = vmatpush.bf16.msra.mxu0 0
    %7394 = vmatpush.bf16.msra.mxu0 0
    %7395 = vmatpush.bf16.msra.mxu0 %v7322
    %7396 = vmatpush.bf16.msra.mxu0 %v7320
    %7397 = vmatmul.bf16.gmra.mxu0 %v7361
    %v7398 = vpop.f32.mrf.mxu0
    %v7399 = vadd.f32 %v7386, %v7398
    %v7400 = vpop.f32.mrf.mxu0
    %7401 = vdwg.mxu0
    %7402 = vmatpush.bf16.msra.mxu0 %v7303
    %7403 = vmatpush.bf16.msra.mxu0 %v7301
    %7404 = vmatpush.bf16.msra.mxu0 %v7299
    %7405 = vmatpush.bf16.msra.mxu0 %v7297
    %7406 = vmatpush.bf16.msra.mxu0 %v7295
    %7407 = vmatpush.bf16.msra.mxu0 %v7293
    %7408 = vmatpush.bf16.msra.mxu0 %v7291
    %7409 = vmatpush.bf16.msra.mxu0 %v7289
    %7410 = vmatmul.bf16.gmra.mxu0 %v7175
    %v7411 = vpop.f32.mrf.mxu0
    %v7412 = vadd.f32 0.0, %v7411
    %v7413 = vpop.f32.mrf.mxu0
    %7414 = vdwg.mxu0
    %7415 = vmatpush.bf16.msra.mxu0 %v7319
    %7416 = vmatpush.bf16.msra.mxu0 %v7317
    %7417 = vmatpush.bf16.msra.mxu0 %v7315
    %7418 = vmatpush.bf16.msra.mxu0 %v7313
    %7419 = vmatpush.bf16.msra.mxu0 %v7311
    %7420 = vmatpush.bf16.msra.mxu0 %v7309
    %7421 = vmatpush.bf16.msra.mxu0 %v7307
    %7422 = vmatpush.bf16.msra.mxu0 %v7305
    %7423 = vmatmul.bf16.gmra.mxu0 %v7176
    %v7424 = vpop.f32.mrf.mxu0
    %v7425 = vadd.f32 %v7412, %v7424
    %v7426 = vpop.f32.mrf.mxu0
    %7427 = vdwg.mxu0
    %7428 = vmatpush.bf16.msra.mxu0 0
    %7429 = vmatpush.bf16.msra.mxu0 0
    %7430 = vmatpush.bf16.msra.mxu0 0
    %7431 = vmatpush.bf16.msra.mxu0 0
    %7432 = vmatpush.bf16.msra.mxu0 0
    %7433 = vmatpush.bf16.msra.mxu0 0
    %7434 = vmatpush.bf16.msra.mxu0 %v7323
    %7435 = vmatpush.bf16.msra.mxu0 %v7321
    %7436 = vmatmul.bf16.gmra.mxu0 %v7361
    %v7437 = vpop.f32.mrf.mxu0
    %v7438 = vadd.f32 %v7425, %v7437
    %v7439 = vpop.f32.mrf.mxu0
    %7440 = vdwg.mxu0
    %v7441 = vadd.f32 %v7119, %v7399
    %v7442 = vadd.f32 %v7120, %v7438
    %v7443 = vld [vmem:[#allocation3] sm:$0xcc]
    %v7444 = vld [vmem:[#allocation3 + $0x8] sm:$0xc]
    %v7445 = vld [vmem:[#allocation3 + $0xc] sm:$0x33]
    %v7446 = vld [vmem:[#allocation3 + $0x14] sm:$0x3]
    %s7447 = scalar_lea.vmem %s14, 576
    %v7448 = vld [vmem:[%s7447] sm:$0xff]
    %v7449 = vld [vmem:[%s7447 + $0x8] sm:$0xff]
    %v7450 = vld [vmem:[%s7447 + $0x10] sm:$0xff]
    %v7451 = vld [vmem:[%s7447 + $0x18] sm:$0xff]
    %v7452 = vld [vmem:[%s7447 + $0x20] sm:$0xff]
    %v7453 = vld [vmem:[%s7447 + $0x28] sm:$0xff]
    %v7454 = vld [vmem:[%s7447 + $0x30] sm:$0xff]
    %v7455 = vld [vmem:[%s7447 + $0x38] sm:$0xff]
    %v7456 = vld [vmem:[%s7447 + $0x40] sm:$0xff]
    %v7457 = vld [vmem:[%s7447 + $0x48] sm:$0xff]
    %v7458 = vld [vmem:[%s7447 + $0x50] sm:$0xff]
    %v7459 = vld [vmem:[%s7447 + $0x58] sm:$0xff]
    %v7460 = vld [vmem:[%s7447 + $0x60] sm:$0xff]
    %v7461 = vld [vmem:[%s7447 + $0x68] sm:$0xff]
    %v7462 = vld [vmem:[%s7447 + $0x70] sm:$0xff]
    %v7463 = vld [vmem:[%s7447 + $0x78] sm:$0xff]
    %v7464 = vld [vmem:[%s7447 + $0x80] sm:$0xff]
    %v7465 = vld [vmem:[%s7447 + $0x88] sm:$0xff]
    %v7466 = vld [vmem:[%s7447 + $0x90] sm:$0xff]
    %v7467 = vld [vmem:[%s7447 + $0x98] sm:$0xff]
    %v7468 = vld [vmem:[%s7447 + $0xa0] sm:$0xff]
    %v7469 = vld [vmem:[%s7447 + $0xa8] sm:$0xff]
    %v7470 = vld [vmem:[%s7447 + $0xb0] sm:$0xff]
    %v7471 = vld [vmem:[%s7447 + $0xb8] sm:$0xff]
    %v7472 = vld [vmem:[%s7447 + $0xc0] sm:$0xff]
    %v7473 = vld [vmem:[%s7447 + $0xc8] sm:$0xff]
    %v7474 = vld [vmem:[%s7447 + $0xd0] sm:$0xff]
    %v7475 = vld [vmem:[%s7447 + $0xd8] sm:$0xff]
    %v7476 = vld [vmem:[%s7447 + $0xe0] sm:$0xff]
    %v7477 = vld [vmem:[%s7447 + $0xe8] sm:$0xff]
    %v7478 = vld [vmem:[%s7447 + $0xf0] sm:$0xff]
    %v7479 = vld [vmem:[%s7447 + $0xf8] sm:$0xff]
    %v7480 = vld [vmem:[%s7447 + $0x100] sm:$0xff]
    %v7481 = vld [vmem:[%s7447 + $0x108] sm:$0xff]
    %v7482 = vld [vmem:[%s7447 + $0x110] sm:$0xff]
    %v7483 = vld [vmem:[%s7447 + $0x118] sm:$0xff]
    %v7488 = vunpack.c.l.b16 %v7443
    %v7489 = vunpack.c.h.b16 %v7443
    %v7490 = vunpack.c.l.b16 %v7444
    %v7491 = vunpack.c.l.b16 %v7445
    %v7492 = vunpack.c.h.b16 %v7445
    %v7493 = vunpack.c.l.b16 %v7446
    %v7494 = vpack.c.b16 %v7491, %v7488
    %v7495 = vpack.c.b16 %v7492, %v7489
    %v7496 = vpack.c.b16 %v7493, %v7490
    %v7497 = vrot.slane %v7494, 2
    %v7498 = vrot.slane %v7495, 2
    %v7499 = vrot.slane %v7496, 2
    %v7538 = vunpack.c.l.b16 %v7448
    %v7539 = vunpack.c.h.b16 %v7448
    %v7540 = vunpack.c.l.b16 %v7449
    %v7541 = vunpack.c.h.b16 %v7449
    %v7542 = vunpack.c.l.b16 %v7450
    %v7543 = vunpack.c.h.b16 %v7450
    %v7544 = vunpack.c.l.b16 %v7451
    %v7545 = vunpack.c.h.b16 %v7451
    %v7546 = vunpack.c.l.b16 %v7452
    %v7547 = vunpack.c.h.b16 %v7452
    %v7548 = vunpack.c.l.b16 %v7453
    %v7549 = vunpack.c.h.b16 %v7453
    %v7550 = vunpack.c.l.b16 %v7454
    %v7551 = vunpack.c.h.b16 %v7454
    %v7552 = vunpack.c.l.b16 %v7455
    %v7553 = vunpack.c.h.b16 %v7455
    %v7554 = vunpack.c.l.b16 %v7456
    %v7555 = vunpack.c.h.b16 %v7456
    %v7556 = vunpack.c.l.b16 %v7457
    %v7557 = vunpack.c.h.b16 %v7457
    %v7558 = vunpack.c.l.b16 %v7458
    %v7559 = vunpack.c.h.b16 %v7458
    %v7560 = vunpack.c.l.b16 %v7459
    %v7561 = vunpack.c.h.b16 %v7459
    %v7562 = vunpack.c.l.b16 %v7460
    %v7563 = vunpack.c.h.b16 %v7460
    %v7564 = vunpack.c.l.b16 %v7461
    %v7565 = vunpack.c.h.b16 %v7461
    %v7566 = vunpack.c.l.b16 %v7462
    %v7567 = vunpack.c.h.b16 %v7462
    %v7568 = vunpack.c.l.b16 %v7463
    %v7569 = vunpack.c.h.b16 %v7463
    %v7570 = vunpack.c.l.b16 %v7464
    %v7571 = vunpack.c.h.b16 %v7464
    %v7572 = vunpack.c.l.b16 %v7465
    %v7573 = vunpack.c.h.b16 %v7465
    %v7574 = vunpack.c.l.b16 %v7466
    %v7575 = vunpack.c.h.b16 %v7466
    %v7576 = vunpack.c.l.b16 %v7467
    %v7577 = vunpack.c.h.b16 %v7467
    %v7578 = vunpack.c.l.b16 %v7468
    %v7579 = vunpack.c.h.b16 %v7468
    %v7580 = vunpack.c.l.b16 %v7469
    %v7581 = vunpack.c.h.b16 %v7469
    %v7582 = vunpack.c.l.b16 %v7470
    %v7583 = vunpack.c.h.b16 %v7470
    %v7584 = vunpack.c.l.b16 %v7471
    %v7585 = vunpack.c.h.b16 %v7471
    %v7586 = vunpack.c.l.b16 %v7472
    %v7587 = vunpack.c.h.b16 %v7472
    %v7588 = vunpack.c.l.b16 %v7473
    %v7589 = vunpack.c.h.b16 %v7473
    %v7590 = vunpack.c.l.b16 %v7474
    %v7591 = vunpack.c.h.b16 %v7474
    %v7592 = vunpack.c.l.b16 %v7475
    %v7593 = vunpack.c.h.b16 %v7475
    %v7594 = vunpack.c.l.b16 %v7476
    %v7595 = vunpack.c.h.b16 %v7476
    %v7596 = vunpack.c.l.b16 %v7477
    %v7597 = vunpack.c.h.b16 %v7477
    %v7598 = vunpack.c.l.b16 %v7478
    %v7599 = vunpack.c.h.b16 %v7478
    %v7600 = vunpack.c.l.b16 %v7479
    %v7601 = vunpack.c.h.b16 %v7479
    %v7602 = vunpack.c.l.b16 %v7480
    %v7603 = vunpack.c.h.b16 %v7480
    %v7604 = vunpack.c.l.b16 %v7481
    %v7605 = vunpack.c.h.b16 %v7481
    %v7606 = vunpack.c.l.b16 %v7482
    %v7607 = vunpack.c.h.b16 %v7482
    %v7608 = vunpack.c.l.b16 %v7483
    %v7609 = vunpack.c.h.b16 %v7483
    %v7610 = vpack.c.b16 %v7540, %v7538
    %v7611 = vpack.c.b16 %v7541, %v7539
    %v7612 = vpack.c.b16 %v7544, %v7542
    %v7613 = vpack.c.b16 %v7545, %v7543
    %v7614 = vpack.c.b16 %v7548, %v7546
    %v7615 = vpack.c.b16 %v7549, %v7547
    %v7616 = vpack.c.b16 %v7552, %v7550
    %v7617 = vpack.c.b16 %v7553, %v7551
    %v7618 = vpack.c.b16 %v7556, %v7554
    %v7619 = vpack.c.b16 %v7557, %v7555
    %v7620 = vpack.c.b16 %v7560, %v7558
    %v7621 = vpack.c.b16 %v7561, %v7559
    %v7622 = vpack.c.b16 %v7564, %v7562
    %v7623 = vpack.c.b16 %v7565, %v7563
    %v7624 = vpack.c.b16 %v7568, %v7566
    %v7625 = vpack.c.b16 %v7569, %v7567
    %v7626 = vpack.c.b16 %v7572, %v7570
    %v7627 = vpack.c.b16 %v7573, %v7571
    %v7628 = vpack.c.b16 %v7576, %v7574
    %v7629 = vpack.c.b16 %v7577, %v7575
    %v7630 = vpack.c.b16 %v7580, %v7578
    %v7631 = vpack.c.b16 %v7581, %v7579
    %v7632 = vpack.c.b16 %v7584, %v7582
    %v7633 = vpack.c.b16 %v7585, %v7583
    %v7634 = vpack.c.b16 %v7588, %v7586
    %v7635 = vpack.c.b16 %v7589, %v7587
    %v7636 = vpack.c.b16 %v7592, %v7590
    %v7637 = vpack.c.b16 %v7593, %v7591
    %v7638 = vpack.c.b16 %v7596, %v7594
    %v7639 = vpack.c.b16 %v7597, %v7595
    %v7640 = vpack.c.b16 %v7600, %v7598
    %v7641 = vpack.c.b16 %v7601, %v7599
    %v7642 = vpack.c.b16 %v7604, %v7602
    %v7643 = vpack.c.b16 %v7605, %v7603
    %v7644 = vpack.c.b16 %v7608, %v7606
    %v7645 = vpack.c.b16 %v7609, %v7607
    %v7683 = vsel %vm435, %v7499, 0
    %7685 = vmatpush.bf16.msra.mxu0 %v7624
    %7686 = vmatpush.bf16.msra.mxu0 %v7622
    %7687 = vmatpush.bf16.msra.mxu0 %v7620
    %7688 = vmatpush.bf16.msra.mxu0 %v7618
    %7689 = vmatpush.bf16.msra.mxu0 %v7616
    %7690 = vmatpush.bf16.msra.mxu0 %v7614
    %7691 = vmatpush.bf16.msra.mxu0 %v7612
    %7692 = vmatpush.bf16.msra.mxu0 %v7610
    %7693 = vmatmul.bf16.gmra.mxu0 %v7497
    %v7694 = vpop.f32.mrf.mxu0
    %v7695 = vadd.f32 0.0, %v7694
    %v7696 = vpop.f32.mrf.mxu0
    %7697 = vdwg.mxu0
    %7698 = vmatpush.bf16.msra.mxu0 %v7640
    %7699 = vmatpush.bf16.msra.mxu0 %v7638
    %7700 = vmatpush.bf16.msra.mxu0 %v7636
    %7701 = vmatpush.bf16.msra.mxu0 %v7634
    %7702 = vmatpush.bf16.msra.mxu0 %v7632
    %7703 = vmatpush.bf16.msra.mxu0 %v7630
    %7704 = vmatpush.bf16.msra.mxu0 %v7628
    %7705 = vmatpush.bf16.msra.mxu0 %v7626
    %7706 = vmatmul.bf16.gmra.mxu0 %v7498
    %v7707 = vpop.f32.mrf.mxu0
    %v7708 = vadd.f32 %v7695, %v7707
    %v7709 = vpop.f32.mrf.mxu0
    %7710 = vdwg.mxu0
    %7711 = vmatpush.bf16.msra.mxu0 0
    %7712 = vmatpush.bf16.msra.mxu0 0
    %7713 = vmatpush.bf16.msra.mxu0 0
    %7714 = vmatpush.bf16.msra.mxu0 0
    %7715 = vmatpush.bf16.msra.mxu0 0
    %7716 = vmatpush.bf16.msra.mxu0 0
    %7717 = vmatpush.bf16.msra.mxu0 %v7644
    %7718 = vmatpush.bf16.msra.mxu0 %v7642
    %7719 = vmatmul.bf16.gmra.mxu0 %v7683
    %v7720 = vpop.f32.mrf.mxu0
    %v7721 = vadd.f32 %v7708, %v7720
    %v7722 = vpop.f32.mrf.mxu0
    %7723 = vdwg.mxu0
    %7724 = vmatpush.bf16.msra.mxu0 %v7625
    %7725 = vmatpush.bf16.msra.mxu0 %v7623
    %7726 = vmatpush.bf16.msra.mxu0 %v7621
    %7727 = vmatpush.bf16.msra.mxu0 %v7619
    %7728 = vmatpush.bf16.msra.mxu0 %v7617
    %7729 = vmatpush.bf16.msra.mxu0 %v7615
    %7730 = vmatpush.bf16.msra.mxu0 %v7613
    %7731 = vmatpush.bf16.msra.mxu0 %v7611
    %7732 = vmatmul.bf16.gmra.mxu0 %v7497
    %v7733 = vpop.f32.mrf.mxu0
    %v7734 = vadd.f32 0.0, %v7733
    %v7735 = vpop.f32.mrf.mxu0
    %7736 = vdwg.mxu0
    %7737 = vmatpush.bf16.msra.mxu0 %v7641
    %7738 = vmatpush.bf16.msra.mxu0 %v7639
    %7739 = vmatpush.bf16.msra.mxu0 %v7637
    %7740 = vmatpush.bf16.msra.mxu0 %v7635
    %7741 = vmatpush.bf16.msra.mxu0 %v7633
    %7742 = vmatpush.bf16.msra.mxu0 %v7631
    %7743 = vmatpush.bf16.msra.mxu0 %v7629
    %7744 = vmatpush.bf16.msra.mxu0 %v7627
    %7745 = vmatmul.bf16.gmra.mxu0 %v7498
    %v7746 = vpop.f32.mrf.mxu0
    %v7747 = vadd.f32 %v7734, %v7746
    %v7748 = vpop.f32.mrf.mxu0
    %7749 = vdwg.mxu0
    %7750 = vmatpush.bf16.msra.mxu0 0
    %7751 = vmatpush.bf16.msra.mxu0 0
    %7752 = vmatpush.bf16.msra.mxu0 0
    %7753 = vmatpush.bf16.msra.mxu0 0
    %7754 = vmatpush.bf16.msra.mxu0 0
    %7755 = vmatpush.bf16.msra.mxu0 0
    %7756 = vmatpush.bf16.msra.mxu0 %v7645
    %7757 = vmatpush.bf16.msra.mxu0 %v7643
    %7758 = vmatmul.bf16.gmra.mxu0 %v7683
    %v7759 = vpop.f32.mrf.mxu0
    %v7760 = vadd.f32 %v7747, %v7759
    %v7761 = vpop.f32.mrf.mxu0
    %7762 = vdwg.mxu0
    %v7763 = vadd.f32 %v7441, %v7721
    %v7764 = vadd.f32 %v7442, %v7760
    %v7765 = vmax.f32 %v7763, 0.0
    %v7766 = vmax.f32 %v7764, 0.0
    %7767 = vst [vmem:[#allocation4] sm:$0xff] %v7765
    %7768 = vst.msk [vmem:[#allocation4 + $0x8] sm:$0xff] %vm96, %v7766
    %v7769 = vld [vmem:[%s17] sm:$0x1]
    %v7770 = vld [vmem:[#allocation4] sm:$0x3]
    %v7771 = vld [vmem:[#allocation4 + $0x8] sm:$0x3]
    %v7772 = vld [vmem:[%s16] sm:$0xff]
    %v7773 = vld [vmem:[%s16 + $0x8] sm:$0xff]
    %v7774 = vld [vmem:[%s16 + $0x10] sm:$0xff]
    %v7775 = vld [vmem:[%s16 + $0x18] sm:$0xff]
    %v7776 = vld [vmem:[%s16 + $0x20] sm:$0xff]
    %v7777 = vld [vmem:[%s16 + $0x28] sm:$0xff]
    %v7778 = vld [vmem:[%s16 + $0x30] sm:$0xff]
    %v7779 = vld [vmem:[%s16 + $0x38] sm:$0xff]
    %v7780 = vld [vmem:[%s16 + $0x40] sm:$0xff]
    %v7781 = vld [vmem:[%s16 + $0x48] sm:$0xff]
    %v7782 = vld [vmem:[%s16 + $0x50] sm:$0xff]
    %v7783 = vld [vmem:[%s16 + $0x58] sm:$0xff]
    %v7784 = vld [vmem:[%s16 + $0x60] sm:$0xff]
    %v7785 = vld [vmem:[%s16 + $0x68] sm:$0xff]
    %v7786 = vld [vmem:[%s16 + $0x70] sm:$0xff]
    %v7787 = vld [vmem:[%s16 + $0x78] sm:$0xff]
    %v7788 = vld [vmem:[%s16 + $0x80] sm:$0xff]
    %v7789 = vld [vmem:[%s16 + $0x88] sm:$0xff]
    %v7791 = vsel %vm96, %v7771, 0
    %7793 = vmatpush.msra.mxu0 %v7787
    %7794 = vmatpush.msra.mxu0 %v7786
    %7795 = vmatpush.msra.mxu0 %v7785
    %7796 = vmatpush.msra.mxu0 %v7784
    %7797 = vmatpush.msra.mxu0 %v7783
    %7798 = vmatpush.msra.mxu0 %v7782
    %7799 = vmatpush.msra.mxu0 %v7781
    %7800 = vmatpush.msra.mxu0 %v7780
    %7801 = vmatpush.msra.mxu0 %v7779
    %7802 = vmatpush.msra.mxu0 %v7778
    %7803 = vmatpush.msra.mxu0 %v7777
    %7804 = vmatpush.msra.mxu0 %v7776
    %7805 = vmatpush.msra.mxu0 %v7775
    %7806 = vmatpush.msra.mxu0 %v7774
    %7807 = vmatpush.msra.mxu0 %v7773
    %7808 = vmatpush.msra.mxu0 %v7772
    %7809 = vmatmul.f32.gmra.mxu0 %v7770
    %v7810 = vpop.f32.mrf.mxu0
    %v7811 = vadd.f32 0.0, %v7810
    %7812 = vdwg.mxu0
    %7813 = vmatpush.msra.mxu0 0.0
    %7814 = vmatpush.msra.mxu0 0.0
    %7815 = vmatpush.msra.mxu0 0.0
    %7816 = vmatpush.msra.mxu0 0.0
    %7817 = vmatpush.msra.mxu0 0.0
    %7818 = vmatpush.msra.mxu0 0.0
    %7819 = vmatpush.msra.mxu0 0.0
    %7820 = vmatpush.msra.mxu0 0.0
    %7821 = vmatpush.msra.mxu0 0.0
    %7822 = vmatpush.msra.mxu0 0.0
    %7823 = vmatpush.msra.mxu0 0.0
    %7824 = vmatpush.msra.mxu0 0.0
    %7825 = vmatpush.msra.mxu0 0.0
    %7826 = vmatpush.msra.mxu0 0.0
    %7827 = vmatpush.msra.mxu0 %v7789
    %7828 = vmatpush.msra.mxu0 %v7788
    %7829 = vmatmul.f32.gmra.mxu0 %v7791
    %v7830 = vpop.f32.mrf.mxu0
    %v7831 = vadd.f32 %v7811, %v7830
    %7832 = vdwg.mxu0
    %v7834 = vperm.slane %v7769, 0
    %v7836 = vadd.f32 %v7834, %v7831
    %v7837 = vld [vmem:[#allocation4] sm:$0xc]
    %v7838 = vld [vmem:[#allocation4 + $0x8] sm:$0xc]
    %s7839 = scalar_lea.vmem %s16, 144
    %v7840 = vld [vmem:[%s7839] sm:$0xff]
    %v7841 = vld [vmem:[%s7839 + $0x8] sm:$0xff]
    %v7842 = vld [vmem:[%s7839 + $0x10] sm:$0xff]
    %v7843 = vld [vmem:[%s7839 + $0x18] sm:$0xff]
    %v7844 = vld [vmem:[%s7839 + $0x20] sm:$0xff]
    %v7845 = vld [vmem:[%s7839 + $0x28] sm:$0xff]
    %v7846 = vld [vmem:[%s7839 + $0x30] sm:$0xff]
    %v7847 = vld [vmem:[%s7839 + $0x38] sm:$0xff]
    %v7848 = vld [vmem:[%s7839 + $0x40] sm:$0xff]
    %v7849 = vld [vmem:[%s7839 + $0x48] sm:$0xff]
    %v7850 = vld [vmem:[%s7839 + $0x50] sm:$0xff]
    %v7851 = vld [vmem:[%s7839 + $0x58] sm:$0xff]
    %v7852 = vld [vmem:[%s7839 + $0x60] sm:$0xff]
    %v7853 = vld [vmem:[%s7839 + $0x68] sm:$0xff]
    %v7854 = vld [vmem:[%s7839 + $0x70] sm:$0xff]
    %v7855 = vld [vmem:[%s7839 + $0x78] sm:$0xff]
    %v7856 = vld [vmem:[%s7839 + $0x80] sm:$0xff]
    %v7857 = vld [vmem:[%s7839 + $0x88] sm:$0xff]
    %v7860 = vrot.slane %v7837, 2
    %v7861 = vrot.slane %v7838, 2
    %v7863 = vsel %vm96, %v7861, 0
    %7865 = vmatpush.msra.mxu0 %v7855
    %7866 = vmatpush.msra.mxu0 %v7854
    %7867 = vmatpush.msra.mxu0 %v7853
    %7868 = vmatpush.msra.mxu0 %v7852
    %7869 = vmatpush.msra.mxu0 %v7851
    %7870 = vmatpush.msra.mxu0 %v7850
    %7871 = vmatpush.msra.mxu0 %v7849
    %7872 = vmatpush.msra.mxu0 %v7848
    %7873 = vmatpush.msra.mxu0 %v7847
    %7874 = vmatpush.msra.mxu0 %v7846
    %7875 = vmatpush.msra.mxu0 %v7845
    %7876 = vmatpush.msra.mxu0 %v7844
    %7877 = vmatpush.msra.mxu0 %v7843
    %7878 = vmatpush.msra.mxu0 %v7842
    %7879 = vmatpush.msra.mxu0 %v7841
    %7880 = vmatpush.msra.mxu0 %v7840
    %7881 = vmatmul.f32.gmra.mxu0 %v7860
    %v7882 = vpop.f32.mrf.mxu0
    %v7883 = vadd.f32 0.0, %v7882
    %7884 = vdwg.mxu0
    %7885 = vmatpush.msra.mxu0 0.0
    %7886 = vmatpush.msra.mxu0 0.0
    %7887 = vmatpush.msra.mxu0 0.0
    %7888 = vmatpush.msra.mxu0 0.0
    %7889 = vmatpush.msra.mxu0 0.0
    %7890 = vmatpush.msra.mxu0 0.0
    %7891 = vmatpush.msra.mxu0 0.0
    %7892 = vmatpush.msra.mxu0 0.0
    %7893 = vmatpush.msra.mxu0 0.0
    %7894 = vmatpush.msra.mxu0 0.0
    %7895 = vmatpush.msra.mxu0 0.0
    %7896 = vmatpush.msra.mxu0 0.0
    %7897 = vmatpush.msra.mxu0 0.0
    %7898 = vmatpush.msra.mxu0 0.0
    %7899 = vmatpush.msra.mxu0 %v7857
    %7900 = vmatpush.msra.mxu0 %v7856
    %7901 = vmatmul.f32.gmra.mxu0 %v7863
    %v7902 = vpop.f32.mrf.mxu0
    %v7903 = vadd.f32 %v7883, %v7902
    %7904 = vdwg.mxu0
    %v7905 = vadd.f32 %v7836, %v7903
    %v7906 = vld [vmem:[#allocation4] sm:$0x30]
    %v7907 = vld [vmem:[#allocation4 + $0x8] sm:$0x30]
    %s7908 = scalar_lea.vmem %s16, 288
    %v7909 = vld [vmem:[%s7908] sm:$0xff]
    %v7910 = vld [vmem:[%s7908 + $0x8] sm:$0xff]
    %v7911 = vld [vmem:[%s7908 + $0x10] sm:$0xff]
    %v7912 = vld [vmem:[%s7908 + $0x18] sm:$0xff]
    %v7913 = vld [vmem:[%s7908 + $0x20] sm:$0xff]
    %v7914 = vld [vmem:[%s7908 + $0x28] sm:$0xff]
    %v7915 = vld [vmem:[%s7908 + $0x30] sm:$0xff]
    %v7916 = vld [vmem:[%s7908 + $0x38] sm:$0xff]
    %v7917 = vld [vmem:[%s7908 + $0x40] sm:$0xff]
    %v7918 = vld [vmem:[%s7908 + $0x48] sm:$0xff]
    %v7919 = vld [vmem:[%s7908 + $0x50] sm:$0xff]
    %v7920 = vld [vmem:[%s7908 + $0x58] sm:$0xff]
    %v7921 = vld [vmem:[%s7908 + $0x60] sm:$0xff]
    %v7922 = vld [vmem:[%s7908 + $0x68] sm:$0xff]
    %v7923 = vld [vmem:[%s7908 + $0x70] sm:$0xff]
    %v7924 = vld [vmem:[%s7908 + $0x78] sm:$0xff]
    %v7925 = vld [vmem:[%s7908 + $0x80] sm:$0xff]
    %v7926 = vld [vmem:[%s7908 + $0x88] sm:$0xff]
    %v7929 = vrot.slane %v7906, 4
    %v7930 = vrot.slane %v7907, 4
    %v7932 = vsel %vm96, %v7930, 0
    %7934 = vmatpush.msra.mxu0 %v7924
    %7935 = vmatpush.msra.mxu0 %v7923
    %7936 = vmatpush.msra.mxu0 %v7922
    %7937 = vmatpush.msra.mxu0 %v7921
    %7938 = vmatpush.msra.mxu0 %v7920
    %7939 = vmatpush.msra.mxu0 %v7919
    %7940 = vmatpush.msra.mxu0 %v7918
    %7941 = vmatpush.msra.mxu0 %v7917
    %7942 = vmatpush.msra.mxu0 %v7916
    %7943 = vmatpush.msra.mxu0 %v7915
    %7944 = vmatpush.msra.mxu0 %v7914
    %7945 = vmatpush.msra.mxu0 %v7913
    %7946 = vmatpush.msra.mxu0 %v7912
    %7947 = vmatpush.msra.mxu0 %v7911
    %7948 = vmatpush.msra.mxu0 %v7910
    %7949 = vmatpush.msra.mxu0 %v7909
    %7950 = vmatmul.f32.gmra.mxu0 %v7929
    %v7951 = vpop.f32.mrf.mxu0
    %v7952 = vadd.f32 0.0, %v7951
    %7953 = vdwg.mxu0
    %7954 = vmatpush.msra.mxu0 0.0
    %7955 = vmatpush.msra.mxu0 0.0
    %7956 = vmatpush.msra.mxu0 0.0
    %7957 = vmatpush.msra.mxu0 0.0
    %7958 = vmatpush.msra.mxu0 0.0
    %7959 = vmatpush.msra.mxu0 0.0
    %7960 = vmatpush.msra.mxu0 0.0
    %7961 = vmatpush.msra.mxu0 0.0
    %7962 = vmatpush.msra.mxu0 0.0
    %7963 = vmatpush.msra.mxu0 0.0
    %7964 = vmatpush.msra.mxu0 0.0
    %7965 = vmatpush.msra.mxu0 0.0
    %7966 = vmatpush.msra.mxu0 0.0
    %7967 = vmatpush.msra.mxu0 0.0
    %7968 = vmatpush.msra.mxu0 %v7926
    %7969 = vmatpush.msra.mxu0 %v7925
    %7970 = vmatmul.f32.gmra.mxu0 %v7932
    %v7971 = vpop.f32.mrf.mxu0
    %v7972 = vadd.f32 %v7952, %v7971
    %7973 = vdwg.mxu0
    %v7974 = vadd.f32 %v7905, %v7972
    %v7975 = vld [vmem:[#allocation4] sm:$0xc0]
    %v7976 = vld [vmem:[#allocation4 + $0x8] sm:$0xc0]
    %s7977 = scalar_lea.vmem %s16, 432
    %v7978 = vld [vmem:[%s7977] sm:$0xff]
    %v7979 = vld [vmem:[%s7977 + $0x8] sm:$0xff]
    %v7980 = vld [vmem:[%s7977 + $0x10] sm:$0xff]
    %v7981 = vld [vmem:[%s7977 + $0x18] sm:$0xff]
    %v7982 = vld [vmem:[%s7977 + $0x20] sm:$0xff]
    %v7983 = vld [vmem:[%s7977 + $0x28] sm:$0xff]
    %v7984 = vld [vmem:[%s7977 + $0x30] sm:$0xff]
    %v7985 = vld [vmem:[%s7977 + $0x38] sm:$0xff]
    %v7986 = vld [vmem:[%s7977 + $0x40] sm:$0xff]
    %v7987 = vld [vmem:[%s7977 + $0x48] sm:$0xff]
    %v7988 = vld [vmem:[%s7977 + $0x50] sm:$0xff]
    %v7989 = vld [vmem:[%s7977 + $0x58] sm:$0xff]
    %v7990 = vld [vmem:[%s7977 + $0x60] sm:$0xff]
    %v7991 = vld [vmem:[%s7977 + $0x68] sm:$0xff]
    %v7992 = vld [vmem:[%s7977 + $0x70] sm:$0xff]
    %v7993 = vld [vmem:[%s7977 + $0x78] sm:$0xff]
    %v7994 = vld [vmem:[%s7977 + $0x80] sm:$0xff]
    %v7995 = vld [vmem:[%s7977 + $0x88] sm:$0xff]
    %v7998 = vrot.slane %v7975, 6
    %v7999 = vrot.slane %v7976, 6
    %v8001 = vsel %vm96, %v7999, 0
    %8003 = vmatpush.msra.mxu0 %v7993
    %8004 = vmatpush.msra.mxu0 %v7992
    %8005 = vmatpush.msra.mxu0 %v7991
    %8006 = vmatpush.msra.mxu0 %v7990
    %8007 = vmatpush.msra.mxu0 %v7989
    %8008 = vmatpush.msra.mxu0 %v7988
    %8009 = vmatpush.msra.mxu0 %v7987
    %8010 = vmatpush.msra.mxu0 %v7986
    %8011 = vmatpush.msra.mxu0 %v7985
    %8012 = vmatpush.msra.mxu0 %v7984
    %8013 = vmatpush.msra.mxu0 %v7983
    %8014 = vmatpush.msra.mxu0 %v7982
    %8015 = vmatpush.msra.mxu0 %v7981
    %8016 = vmatpush.msra.mxu0 %v7980
    %8017 = vmatpush.msra.mxu0 %v7979
    %8018 = vmatpush.msra.mxu0 %v7978
    %8019 = vmatmul.f32.gmra.mxu0 %v7998
    %v8020 = vpop.f32.mrf.mxu0
    %v8021 = vadd.f32 0.0, %v8020
    %8022 = vdwg.mxu0
    %8023 = vmatpush.msra.mxu0 0.0
    %8024 = vmatpush.msra.mxu0 0.0
    %8025 = vmatpush.msra.mxu0 0.0
    %8026 = vmatpush.msra.mxu0 0.0
    %8027 = vmatpush.msra.mxu0 0.0
    %8028 = vmatpush.msra.mxu0 0.0
    %8029 = vmatpush.msra.mxu0 0.0
    %8030 = vmatpush.msra.mxu0 0.0
    %8031 = vmatpush.msra.mxu0 0.0
    %8032 = vmatpush.msra.mxu0 0.0
    %8033 = vmatpush.msra.mxu0 0.0
    %8034 = vmatpush.msra.mxu0 0.0
    %8035 = vmatpush.msra.mxu0 0.0
    %8036 = vmatpush.msra.mxu0 0.0
    %8037 = vmatpush.msra.mxu0 %v7995
    %8038 = vmatpush.msra.mxu0 %v7994
    %8039 = vmatmul.f32.gmra.mxu0 %v8001
    %v8040 = vpop.f32.mrf.mxu0
    %v8041 = vadd.f32 %v8021, %v8040
    %8042 = vdwg.mxu0
    %v8043 = vadd.f32 %v7974, %v8041
    %v8044 = vmax.f32 %v8043, 0.0
    %v8045 = vld [vmem:[%s18] sm:$0xff]
    %v8046 = vld [vmem:[%s18 + $0x8] sm:$0xff]
    %v8047 = vld [vmem:[%s18 + $0x10] sm:$0xff]
    %v8048 = vld [vmem:[%s18 + $0x18] sm:$0xff]
    %v8049 = vld [vmem:[%s18 + $0x20] sm:$0xff]
    %v8050 = vld [vmem:[%s18 + $0x28] sm:$0xff]
    %v8051 = vld [vmem:[%s18 + $0x30] sm:$0xff]
    %v8052 = vld [vmem:[%s18 + $0x38] sm:$0xff]
    %v8053 = vld [vmem:[%s18 + $0x40] sm:$0xff]
    %v8054 = vld [vmem:[%s18 + $0x48] sm:$0xff]
    %v8055 = vld [vmem:[%s18 + $0x50] sm:$0xff]
    %v8056 = vld [vmem:[%s18 + $0x58] sm:$0xff]
    %v8057 = vld [vmem:[%s18 + $0x60] sm:$0xff]
    %v8058 = vld [vmem:[%s18 + $0x68] sm:$0xff]
    %v8059 = vld [vmem:[%s18 + $0x70] sm:$0xff]
    %v8060 = vld [vmem:[%s18 + $0x78] sm:$0xff]
    %v8061 = vld [vmem:[%s19] sm:$0xff]
    %v8062 = vld [vmem:[%s19 + $0x8] sm:$0xff]
    %v8063 = vld [vmem:[%s19 + $0x10] sm:$0xff]
    %v8064 = vld [vmem:[%s19 + $0x18] sm:$0xff]
    %v8065 = vld [vmem:[%s19 + $0x20] sm:$0xff]
    %v8066 = vld [vmem:[%s19 + $0x28] sm:$0xff]
    %v8067 = vld [vmem:[%s19 + $0x30] sm:$0xff]
    %v8068 = vld [vmem:[%s19 + $0x38] sm:$0xff]
    %v8069 = vld [vmem:[%s19 + $0x40] sm:$0xff]
    %v8070 = vld [vmem:[%s19 + $0x48] sm:$0xff]
    %v8071 = vld [vmem:[%s19 + $0x50] sm:$0xff]
    %v8072 = vld [vmem:[%s19 + $0x58] sm:$0xff]
    %v8073 = vld [vmem:[%s19 + $0x60] sm:$0xff]
    %v8074 = vld [vmem:[%s19 + $0x68] sm:$0xff]
    %v8075 = vld [vmem:[%s19 + $0x70] sm:$0xff]
    %v8076 = vld [vmem:[%s19 + $0x78] sm:$0xff]
    %v8078 = vsel %vm687, %v8044, 0
    %8080 = vmatpush.msra.mxu0 0.0
    %8081 = vmatpush.msra.mxu0 0.0
    %8082 = vmatpush.msra.mxu0 0.0
    %8083 = vmatpush.msra.mxu0 0.0
    %8084 = vmatpush.msra.mxu0 0.0
    %8085 = vmatpush.msra.mxu0 0.0
    %8086 = vmatpush.msra.mxu0 0.0
    %8087 = vmatpush.msra.mxu0 0.0
    %8088 = vmatpush.msra.mxu0 %v8075
    %8089 = vmatpush.msra.mxu0 %v8073
    %8090 = vmatpush.msra.mxu0 %v8071
    %8091 = vmatpush.msra.mxu0 %v8069
    %8092 = vmatpush.msra.mxu0 %v8067
    %8093 = vmatpush.msra.mxu0 %v8065
    %8094 = vmatpush.msra.mxu0 %v8063
    %8095 = vmatpush.msra.mxu0 %v8061
    %8096 = vmatmul.f32.gmra.mxu0 %v8078
    %v8097 = vpop.f32.mrf.mxu0
    %v8098 = vadd.f32 0.0, %v8097
    %8099 = vdwg.mxu0
    %8100 = vmatpush.msra.mxu0 0.0
    %8101 = vmatpush.msra.mxu0 0.0
    %8102 = vmatpush.msra.mxu0 0.0
    %8103 = vmatpush.msra.mxu0 0.0
    %8104 = vmatpush.msra.mxu0 0.0
    %8105 = vmatpush.msra.mxu0 0.0
    %8106 = vmatpush.msra.mxu0 0.0
    %8107 = vmatpush.msra.mxu0 0.0
    %8108 = vmatpush.msra.mxu0 %v8076
    %8109 = vmatpush.msra.mxu0 %v8074
    %8110 = vmatpush.msra.mxu0 %v8072
    %8111 = vmatpush.msra.mxu0 %v8070
    %8112 = vmatpush.msra.mxu0 %v8068
    %8113 = vmatpush.msra.mxu0 %v8066
    %8114 = vmatpush.msra.mxu0 %v8064
    %8115 = vmatpush.msra.mxu0 %v8062
    %8116 = vmatmul.f32.gmra.mxu0 %v8078
    %v8117 = vpop.f32.mrf.mxu0
    %v8118 = vadd.f32 0.0, %v8117
    %8119 = vdwg.mxu0
    %v8121 = vsel %vm687, %v730, 0
    %8123 = vmatpush.msra.mxu0 0.0
    %8124 = vmatpush.msra.mxu0 0.0
    %8125 = vmatpush.msra.mxu0 0.0
    %8126 = vmatpush.msra.mxu0 0.0
    %8127 = vmatpush.msra.mxu0 0.0
    %8128 = vmatpush.msra.mxu0 0.0
    %8129 = vmatpush.msra.mxu0 0.0
    %8130 = vmatpush.msra.mxu0 0.0
    %8131 = vmatpush.msra.mxu0 %v8059
    %8132 = vmatpush.msra.mxu0 %v8057
    %8133 = vmatpush.msra.mxu0 %v8055
    %8134 = vmatpush.msra.mxu0 %v8053
    %8135 = vmatpush.msra.mxu0 %v8051
    %8136 = vmatpush.msra.mxu0 %v8049
    %8137 = vmatpush.msra.mxu0 %v8047
    %8138 = vmatpush.msra.mxu0 %v8045
    %8139 = vmatmul.f32.gmra.mxu0 %v8121
    %v8140 = vpop.f32.mrf.mxu0
    %v8141 = vadd.f32 %v8098, %v8140
    %8142 = vdwg.mxu0
    %8143 = vmatpush.msra.mxu0 0.0
    %8144 = vmatpush.msra.mxu0 0.0
    %8145 = vmatpush.msra.mxu0 0.0
    %8146 = vmatpush.msra.mxu0 0.0
    %8147 = vmatpush.msra.mxu0 0.0
    %8148 = vmatpush.msra.mxu0 0.0
    %8149 = vmatpush.msra.mxu0 0.0
    %8150 = vmatpush.msra.mxu0 0.0
    %8151 = vmatpush.msra.mxu0 %v8060
    %8152 = vmatpush.msra.mxu0 %v8058
    %8153 = vmatpush.msra.mxu0 %v8056
    %8154 = vmatpush.msra.mxu0 %v8054
    %8155 = vmatpush.msra.mxu0 %v8052
    %8156 = vmatpush.msra.mxu0 %v8050
    %8157 = vmatpush.msra.mxu0 %v8048
    %8158 = vmatpush.msra.mxu0 %v8046
    %8159 = vmatmul.f32.gmra.mxu0 %v8121
    %v8160 = vpop.f32.mrf.mxu0
    %v8161 = vadd.f32 %v8118, %v8160
    %8162 = vdwg.mxu0
    %v8163 = vld [vmem:[%s20] sm:$0x3]
    %v8165 = vperm.slane %v8163, 0
    %v8166 = vperm.slane %v8163, 1
    %v8169 = vadd.f32 %v8141, %v8165
    %v8170 = vadd.f32 %v8161, %v8166
    %v8171 = vmax.f32 %v8169, 0.0
    %v8172 = vmax.f32 %v8170, 0.0
    %v8173 = vld [vmem:[%s21] sm:$0xff]
    %v8174 = vld [vmem:[%s21 + $0x8] sm:$0xff]
    %v8175 = vld [vmem:[%s21 + $0x10] sm:$0xff]
    %v8176 = vld [vmem:[%s21 + $0x18] sm:$0xff]
    %v8177 = vld [vmem:[%s21 + $0x20] sm:$0xff]
    %v8178 = vld [vmem:[%s21 + $0x28] sm:$0xff]
    %v8179 = vld [vmem:[%s21 + $0x30] sm:$0xff]
    %v8180 = vld [vmem:[%s21 + $0x38] sm:$0xff]
    %v8181 = vld [vmem:[%s21 + $0x40] sm:$0xff]
    %v8182 = vld [vmem:[%s21 + $0x48] sm:$0xff]
    %v8183 = vld [vmem:[%s21 + $0x50] sm:$0xff]
    %v8184 = vld [vmem:[%s21 + $0x58] sm:$0xff]
    %v8185 = vld [vmem:[%s21 + $0x60] sm:$0xff]
    %v8186 = vld [vmem:[%s21 + $0x68] sm:$0xff]
    %v8187 = vld [vmem:[%s21 + $0x70] sm:$0xff]
    %v8188 = vld [vmem:[%s21 + $0x78] sm:$0xff]
    %v8189 = vld [vmem:[%s21 + $0x80] sm:$0xff]
    %v8190 = vld [vmem:[%s21 + $0x88] sm:$0xff]
    %v8191 = vld [vmem:[%s21 + $0x90] sm:$0xff]
    %v8192 = vld [vmem:[%s21 + $0x98] sm:$0xff]
    %v8193 = vld [vmem:[%s21 + $0xa0] sm:$0xff]
    %v8194 = vld [vmem:[%s21 + $0xa8] sm:$0xff]
    %v8195 = vld [vmem:[%s21 + $0xb0] sm:$0xff]
    %v8196 = vld [vmem:[%s21 + $0xb8] sm:$0xff]
    %v8197 = vld [vmem:[%s21 + $0xc0] sm:$0xff]
    %v8198 = vld [vmem:[%s21 + $0xc8] sm:$0xff]
    %v8199 = vld [vmem:[%s21 + $0xd0] sm:$0xff]
    %v8200 = vld [vmem:[%s21 + $0xd8] sm:$0xff]
    %v8201 = vld [vmem:[%s21 + $0xe0] sm:$0xff]
    %v8202 = vld [vmem:[%s21 + $0xe8] sm:$0xff]
    %v8203 = vld [vmem:[%s21 + $0xf0] sm:$0xff]
    %v8204 = vld [vmem:[%s21 + $0xf8] sm:$0xff]
    %v8205 = vld [vmem:[%s22] sm:$0x1]
    %v8207 = vperm.slane %v8205, 0
    %8209 = vmatpush.msra.mxu0 %v8188
    %8210 = vmatpush.msra.mxu0 %v8187
    %8211 = vmatpush.msra.mxu0 %v8186
    %8212 = vmatpush.msra.mxu0 %v8185
    %8213 = vmatpush.msra.mxu0 %v8184
    %8214 = vmatpush.msra.mxu0 %v8183
    %8215 = vmatpush.msra.mxu0 %v8182
    %8216 = vmatpush.msra.mxu0 %v8181
    %8217 = vmatpush.msra.mxu0 %v8180
    %8218 = vmatpush.msra.mxu0 %v8179
    %8219 = vmatpush.msra.mxu0 %v8178
    %8220 = vmatpush.msra.mxu0 %v8177
    %8221 = vmatpush.msra.mxu0 %v8176
    %8222 = vmatpush.msra.mxu0 %v8175
    %8223 = vmatpush.msra.mxu0 %v8174
    %8224 = vmatpush.msra.mxu0 %v8173
    %8225 = vmatmul.f32.gmra.mxu0 %v8171
    %v8226 = vpop.f32.mrf.mxu0
    %v8227 = vadd.f32 %v8207, %v8226
    %8228 = vdwg.mxu0
    %8229 = vmatpush.msra.mxu0 %v8204
    %8230 = vmatpush.msra.mxu0 %v8203
    %8231 = vmatpush.msra.mxu0 %v8202
    %8232 = vmatpush.msra.mxu0 %v8201
    %8233 = vmatpush.msra.mxu0 %v8200
    %8234 = vmatpush.msra.mxu0 %v8199
    %8235 = vmatpush.msra.mxu0 %v8198
    %8236 = vmatpush.msra.mxu0 %v8197
    %8237 = vmatpush.msra.mxu0 %v8196
    %8238 = vmatpush.msra.mxu0 %v8195
    %8239 = vmatpush.msra.mxu0 %v8194
    %8240 = vmatpush.msra.mxu0 %v8193
    %8241 = vmatpush.msra.mxu0 %v8192
    %8242 = vmatpush.msra.mxu0 %v8191
    %8243 = vmatpush.msra.mxu0 %v8190
    %8244 = vmatpush.msra.mxu0 %v8189
    %8245 = vmatmul.f32.gmra.mxu0 %v8172
    %v8246 = vpop.f32.mrf.mxu0
    %v8247 = vadd.f32 %v8227, %v8246
    %8248 = vdwg.mxu0
    %v8249 = vmax.f32 %v8247, 0.0
    %v8250 = vld [vmem:[%s23] sm:$0xff]
    %v8251 = vld [vmem:[%s23 + $0x8] sm:$0xff]
    %v8252 = vld [vmem:[%s23 + $0x10] sm:$0xff]
    %v8253 = vld [vmem:[%s23 + $0x18] sm:$0xff]
    %v8254 = vld [vmem:[%s23 + $0x20] sm:$0xff]
    %v8255 = vld [vmem:[%s23 + $0x28] sm:$0xff]
    %v8256 = vld [vmem:[%s23 + $0x30] sm:$0xff]
    %v8257 = vld [vmem:[%s23 + $0x38] sm:$0xff]
    %v8258 = vld [vmem:[%s23 + $0x40] sm:$0xff]
    %v8259 = vld [vmem:[%s23 + $0x48] sm:$0xff]
    %v8260 = vld [vmem:[%s23 + $0x50] sm:$0xff]
    %v8261 = vld [vmem:[%s23 + $0x58] sm:$0xff]
    %v8262 = vld [vmem:[%s23 + $0x60] sm:$0xff]
    %v8263 = vld [vmem:[%s23 + $0x68] sm:$0xff]
    %v8264 = vld [vmem:[%s23 + $0x70] sm:$0xff]
    %v8265 = vld [vmem:[%s23 + $0x78] sm:$0xff]
    %v8266 = vld [vmem:[%s24] sm:$0x1]
    %v8268 = vperm.slane %v8266, 0
    %8270 = vmatpush.msra.mxu0 %v8265
    %8271 = vmatpush.msra.mxu0 %v8264
    %8272 = vmatpush.msra.mxu0 %v8263
    %8273 = vmatpush.msra.mxu0 %v8262
    %8274 = vmatpush.msra.mxu0 %v8261
    %8275 = vmatpush.msra.mxu0 %v8260
    %8276 = vmatpush.msra.mxu0 %v8259
    %8277 = vmatpush.msra.mxu0 %v8258
    %8278 = vmatpush.msra.mxu0 %v8257
    %8279 = vmatpush.msra.mxu0 %v8256
    %8280 = vmatpush.msra.mxu0 %v8255
    %8281 = vmatpush.msra.mxu0 %v8254
    %8282 = vmatpush.msra.mxu0 %v8253
    %8283 = vmatpush.msra.mxu0 %v8252
    %8284 = vmatpush.msra.mxu0 %v8251
    %8285 = vmatpush.msra.mxu0 %v8250
    %8286 = vmatmul.f32.gmra.mxu0 %v8249
    %v8287 = vpop.f32.mrf.mxu0
    %v8288 = vadd.f32 %v8268, %v8287
    %8289 = vdwg.mxu0
    %vm8290 = vcmask 74752
    %8291 = vst.msk [vmem:[#allocation5] sm:$0x3] %vm8290, %v8288
    // Predicated region
    $region102: #{mynet_forward.1} parent=1 // pred_check
      _
    $region103: #{mynet_forward.1} parent=1 // pred_check_branch
      %8293 = sbr.rel (0) target = $region105
    $region104: #{mynet_forward.1} parent=1 // pred_region
      %8295 = vsyncadd [#allocation6], 0
      %s8297 = sshll.u32 [#allocation5], 4
      %s8298 = int_to_ptr.vmem [resolvable:$true] %s8297
      %s8299 = sshll.u32 %s25, 4
      %s8300 = int_to_ptr.hbm [resolvable:$true] %s8299
      %8302 = dma.vmem_to_hbm [thread:$0]  %s8298, 32, %s8300, [#allocation6]
    $region105: #{mynet_forward.1} parent=1 // pred_fallthru
      _
    // Predicated region
    $region106: #{mynet_forward.1} parent=1 // pred_check
      _
    $region107: #{mynet_forward.1} parent=1 // pred_check_branch
      %8304 = sbr.rel (0) target = $region109
    $region108: #{mynet_forward.1} parent=1 // pred_region
      %8306 = dma.done [#allocation6], 32
    $region109: #{mynet_forward.1} parent=1 // pred_fallthru
      _
    %8307 = vsyncpa [#allocation6], 1

</llo_original>
